<compile_context>
chip_gen: v5e
topology: v5e:2x2
jax: 0.10.0
libtpu: 0.0.40
codegen_flags: <defaults>
</compile_context>

<pallas_src>
import functools

import jax
import jax.numpy as jnp
from jax.experimental import pallas as pl
from jax.experimental.pallas import tpu as pltpu


def attention_pooling_kernel(x_ref, pos0_ref, posr_ref, w_kvq_ref, b_kvq_ref,
                             wc_ref, bc_ref, hsum_ref, hexp_ref, smask_ref,
                             o_ref, *, num_heads, hw_valid):
    f32 = jnp.float32
    Bblk, HWp, C = x_ref.shape
    hd = C // num_heads
    scale = hd ** -0.5
    cdt = w_kvq_ref.dtype                               # compute dtype (bf16)

    # ---- tokens (mean/query token kept separate; no L = HW+1 concat) -------
    xb = x_ref[...]                                     # (Bblk, HWp, C) bf16
    # mean over the *valid* HW rows, f32 accumulation (padded rows are zero)
    mean_tok = jnp.sum(xb, axis=1, dtype=f32) * (1.0 / hw_valid)       # (Bblk, C)
    t0_c = (mean_tok + pos0_ref[...].astype(f32)).astype(cdt)          # (Bblk, C)
    # spatial tokens: bf16 add, flattened for the projection matmul
    tr_c = (xb + posr_ref[...][None, :, :]).reshape(Bblk * HWp, C)     # bf16

    # ---- fused projections (weights packed [Wk | Wv | Wq], stored (in,out)) -
    b_kvq = b_kvq_ref[...].astype(f32)                                 # (1, 3C)
    kvq0 = jnp.dot(t0_c, w_kvq_ref[...], preferred_element_type=f32) + b_kvq
    k0_c = kvq0[:, :C].astype(cdt)                                     # (Bblk, C)
    v0_c = kvq0[:, C:2 * C].astype(cdt)
    q_c = (kvq0[:, 2 * C:] * scale).astype(cdt)                        # (Bblk, C)

    kv_r = (jnp.dot(tr_c, w_kvq_ref[:, :2 * C], preferred_element_type=f32)
            + b_kvq[:, :2 * C]).reshape(Bblk, HWp, 2 * C)              # f32
    kr_c = kv_r[:, :, :C].astype(cdt)                                  # (Bblk, HWp, C)
    vr_c = kv_r[:, :, C:].astype(cdt)

    # ---- per-head scores via the bf16 0/1 head-sum matmul (f32 accumulate) --
    hsum = hsum_ref[...]                                               # (C, nh) bf16
    hexp = hexp_ref[...]                                               # (nh, C) bf16
    qk_r = (q_c[:, None, :] * kr_c).reshape(Bblk * HWp, C)             # bf16 product
    s_r = jnp.dot(qk_r, hsum, preferred_element_type=f32
                  ).reshape(Bblk, HWp, num_heads)
    s_r = s_r + smask_ref[...]                       # padded token rows -> -1e30
    s_0 = jnp.dot(q_c * k0_c, hsum, preferred_element_type=f32)[:, None, :]

    # ---- stable softmax over the L = HW + 1 tokens (f32) --------------------
    m = jnp.maximum(jnp.max(s_r, axis=1, keepdims=True), s_0)          # (Bblk,1,nh)
    p_r = jnp.exp(s_r - m)
    p_0 = jnp.exp(s_0 - m)
    inv = pl.reciprocal(jnp.sum(p_r, axis=1, keepdims=True) + p_0, approx=True)
    p_r = p_r * inv
    p_0 = p_0 * inv

    # ---- weighted value sum: expand probs per head (bf16 mask matmul), ------
    # ---- bf16 multiply, f32 reduce over tokens -------------------------------
    pf_r = jnp.dot(p_r.reshape(Bblk * HWp, num_heads).astype(cdt), hexp,
                   preferred_element_type=f32
                   ).reshape(Bblk, HWp, C).astype(cdt)
    pf_0 = jnp.dot(p_0[:, 0, :].astype(cdt), hexp,
                   preferred_element_type=f32).astype(cdt)             # (Bblk, C)
    attn = (jnp.sum(pf_r * vr_c, axis=1, dtype=f32)
            + (pf_0 * v0_c).astype(f32))                               # (Bblk, C)

    # ---- output projection ---------------------------------------------------
    out = jnp.dot(attn.astype(cdt), wc_ref[...], preferred_element_type=f32)
    o_ref[...] = (out + bc_ref[...].astype(f32)).astype(o_ref.dtype)   # (Bblk, Dout)


def attention_pooling(x_nchw, params, num_heads, compute_dtype=jnp.bfloat16):
    pos, wq, bq, wk, bk, wv, bv, wc, bc = params
    f32 = jnp.float32
    cdt = compute_dtype
    B, C, H, W = x_nchw.shape
    HW = H * W
    Dout = wc.shape[1]
    nh = num_heads
    assert C % nh == 0
    hd = C // nh
    cbytes = jnp.dtype(cdt).itemsize

    # ---- alignment: pad HW to the sublane-packing tile of the compute dtype --
    row_align = 16 if cbytes < 4 else 8
    HWp = ((HW + row_align - 1) // row_align) * row_align

    # ---- generation-aware VMEM budget and batch block -------------------------
    try:
        vmem_cap = int(pltpu.get_tpu_info().vmem_capacity_bytes)
    except Exception:                                   # no query available
        vmem_cap = 64 * 2 ** 20                         # conservative (v7x per-TC)

    def _step_bytes(bblk):
        rows = bblk * HWp
        x_blk = 2 * rows * C * cbytes                   # double-buffered input
        out_blk = 2 * bblk * Dout * 4
        weights = (C * 3 * C + C * Dout) * cbytes       # single-buffered constants
        fixed = (HWp * C + 3 * C + Dout + 2 * C * nh + HWp * nh) * 4
        inter = rows * (2 * C) * 4 + 5 * rows * C * cbytes + 8 * rows * nh
        return x_blk + out_blk + weights + fixed + inter

    budget = int(vmem_cap * 0.55)
    bblk = 8
    for cand in (64, 32, 16, 8):
        if _step_bytes(cand) <= budget:
            bblk = cand
            break
    # prefer >=2 grid steps (feeds both v7x TensorCores) when the batch allows
    while bblk > 8 and pl.cdiv(B, bblk) < 2:
        bblk //= 2
    Bpad = pl.cdiv(B, bblk) * bblk
    vmem_limit = int(min(vmem_cap * 3 // 4,
                         max(32 * 2 ** 20, 2 * _step_bytes(bblk))))

    # ---- operand preparation ---------------------------------------------------
    # NCHW -> (Bpad, HWp, C) token-major glue, zero-padded, in the compute dtype.
    # TODO(synk): consume channel-major (B, C, HW) directly in-kernel to remove
    # this wrapper transpose entirely.
    x_tok = jnp.transpose(x_nchw.reshape(B, C, HW), (0, 2, 1)).astype(cdt)
    x_tok = jnp.pad(x_tok, ((0, Bpad - B), (0, HWp - HW), (0, 0)))

    pos0 = pos[:1].astype(cdt)                                        # (1, C)
    posr = jnp.pad(pos[1:], ((0, HWp - HW), (0, 0))).astype(cdt)      # (HWp, C)

    # fused projection weights [Wk | Wv | Wq] stored transposed (in, out)
    w_kvq = jnp.concatenate([wk, wv, wq], axis=1).astype(cdt)         # (C, 3C)
    b_kvq = jnp.concatenate([bk, bv, bq], axis=1).astype(f32)         # (1, 3C)
    wc_c = wc.astype(cdt)                                             # (C, Dout)
    bc_f = bc.astype(f32)                                             # (1, Dout)

    # static 0/1 head-selection matrices (exact in bf16)
    ch_head = jnp.arange(C, dtype=jnp.int32) // hd
    hsum = (ch_head[:, None] == jnp.arange(nh, dtype=jnp.int32)[None, :]
            ).astype(cdt)                                             # (C, nh)
    hexp = hsum.T                                                     # (nh, C)

    # additive score mask that removes the padded token rows from the softmax
    smask = jnp.where(jnp.arange(HWp)[:, None] < HW,
                      jnp.zeros((HWp, nh), f32),
                      jnp.full((HWp, nh), -1e30, f32))                # (HWp, nh)

    # ---- cost estimate (advisory) ----------------------------------------------
    flops = (2 * Bpad * HWp * C * (2 * C)       # spatial K|V projection
             + 2 * Bpad * C * (3 * C)           # mean-token K|V|Q projection
             + 4 * Bpad * HWp * C * nh          # score + prob-expand mask matmuls
             + 4 * Bpad * HWp * C               # q*k and p*v elementwise
             + 2 * Bpad * C * Dout)             # output projection
    cost = pl.CostEstimate(
        flops=int(flops),
        transcendentals=int(Bpad * (HWp + 1) * nh),
        bytes_accessed=int(Bpad * HWp * C * cbytes
                           + (C * 3 * C + C * Dout) * cbytes
                           + Bpad * Dout * 4))

    kernel = functools.partial(attention_pooling_kernel,
                               num_heads=nh, hw_valid=HW)

    def _call(single_buffer_consts):
        def cspec(shape):
            nd = len(shape)
            kwargs = ({"pipeline_mode": pl.Buffered(1)}
                      if single_buffer_consts else {})
            return pl.BlockSpec(shape, lambda i, _nd=nd: (0,) * _nd, **kwargs)

        grid_spec = pltpu.PrefetchScalarGridSpec(
            num_scalar_prefetch=0,
            grid=(Bpad // bblk,),
            in_specs=[
                pl.BlockSpec((bblk, HWp, C), lambda i: (i, 0, 0)),  # x tokens
                cspec((1, C)),              # pos row 0 (mean token)
                cspec((HWp, C)),            # pos rows 1..HW (padded)
                cspec((C, 3 * C)),          # fused Wk|Wv|Wq (bf16)
                cspec((1, 3 * C)),          # fused bk|bv|bq (f32)
                cspec((C, Dout)),           # Wc (bf16)
                cspec((1, Dout)),           # bc (f32)
                cspec((C, nh)),             # head-sum 0/1 (bf16)
                cspec((nh, C)),             # head-expand 0/1 (bf16)
                cspec((HWp, nh)),           # padded-row score mask (f32)
            ],
            out_specs=pl.BlockSpec((bblk, Dout), lambda i: (i, 0)),
        )
        return pl.pallas_call(
            kernel,
            out_shape=jax.ShapeDtypeStruct((Bpad, Dout), jnp.float32),
            grid_spec=grid_spec,
            compiler_params=pltpu.CompilerParams(
                dimension_semantics=("parallel",),
                vmem_limit_bytes=vmem_limit,
            ),
            cost_estimate=cost,
        )(x_tok, pos0, posr, w_kvq, b_kvq, wc_c, bc_f, hsum, hexp, smask)

    try:
        out = _call(True)          # single-buffered constant operands
    except Exception:
        out = _call(False)         # this JAX rejects pipeline_mode -> default buffering
    return out[:B]


def attention_pooling_reference(x_nchw, params, num_heads,
                                compute_dtype=jnp.bfloat16):
    # Pure-JAX mirror of F.multi_head_attention_forward with the kernel's
    # rounding points (bf16 tokens/weights/products, f32 accumulation/softmax),
    # so the check isolates kernel logic from expected bf16 quantization.
    pos, wq, bq, wk, bk, wv, bv, wc, bc = params
    f32 = jnp.float32
    cdt = compute_dtype
    B, C, H, W = x_nchw.shape
    HW = H * W
    L = HW + 1
    hd = C // num_heads

    x_tok = jnp.transpose(x_nchw.reshape(B, C, HW), (0, 2, 1)).astype(cdt)
    mean_tok = jnp.mean(x_tok.astype(f32), axis=1)                        # (B, C)
    t0 = (mean_tok + pos[:1].astype(cdt).astype(f32)).astype(cdt)         # (B, C)
    tr = x_tok + pos[1:].astype(cdt)[None, :, :]                          # (B, HW, C)
    tok = jnp.concatenate([t0[:, None, :], tr], axis=1)                   # (B, L, C)

    wq_c, wk_c, wv_c, wc_c = (w.astype(cdt) for w in (wq, wk, wv, wc))
    q = (jnp.dot(t0, wq_c, preferred_element_type=f32) + bq) * hd ** -0.5
    k = jnp.einsum('blc,cd->bld', tok, wk_c, preferred_element_type=f32) + bk
    v = jnp.einsum('blc,cd->bld', tok, wv_c, preferred_element_type=f32) + bv
    q_c, k_c, v_c = q.astype(cdt), k.astype(cdt), v.astype(cdt)

    prod = (q_c[:, None, :] * k_c).astype(f32)                            # (B, L, C)
    s = prod.reshape(B, L, num_heads, hd).sum(axis=-1)                    # (B, L, nh)
    p = jax.nn.softmax(s, axis=1)
    pf = jnp.repeat(p.astype(cdt), hd, axis=-1)                           # (B, L, C)
    attn = jnp.sum((pf * v_c).astype(f32), axis=1)                        # (B, C)
    return jnp.dot(attn.astype(cdt), wc_c, preferred_element_type=f32) + bc


def make_params(key, L, C, Dout):
    ks = jax.random.split(key, 10)
    std = C ** -0.5
    pos = jax.random.normal(ks[0], (L, C), jnp.float32) / C ** 0.5
    # Linear weights stored transposed as (in, out); biases as (1, dim).
    wq = jax.random.normal(ks[1], (C, C), jnp.float32) * std
    wk = jax.random.normal(ks[2], (C, C), jnp.float32) * std
    wv = jax.random.normal(ks[3], (C, C), jnp.float32) * std
    wc = jax.random.normal(ks[4], (C, Dout), jnp.float32) * std
    bq = jax.random.uniform(ks[5], (1, C), jnp.float32, -std, std)
    bk = jax.random.uniform(ks[6], (1, C), jnp.float32, -std, std)
    bv = jax.random.uniform(ks[7], (1, C), jnp.float32, -std, std)
    bc = jax.random.uniform(ks[8], (1, Dout), jnp.float32, -std, std)
    return (pos, wq, bq, wk, bk, wv, bv, wc, bc)


if __name__ == "__main__":
    B, C, H, W = 2, 32, 7, 7          # embed_dim = 32, canonical 7x7 grid
    num_heads = 4                     # head_dim = 8
    Dout = 16                         # output_dim != embed_dim
    L = H * W + 1

    key = jax.random.PRNGKey(0)
    kx, kp = jax.random.split(key)
    x = jax.random.normal(kx, (B, C, H, W), jnp.float32)
    params = make_params(kp, L, C, Dout)

    out = attention_pooling(x, params, num_heads)
    out = jax.block_until_ready(out)

    ref = attention_pooling_reference(x, params, num_heads)
    assert out.shape == (B, Dout)
    err = float(jnp.max(jnp.abs(out - ref)))
    assert jnp.allclose(out, ref, atol=1e-2, rtol=1e-2), (
        "max abs diff = %f" % err)

    print("KERNEL_OK")
</pallas_src>

<mosaic_0001>
module attributes {stable_mosaic.version = 11 : i64} {
  func.func @attention_pooling_kernel(%arg0: i32, %arg1: memref<8x64x32xbf16, #tpu.memory_space<vmem>>, %arg2: memref<1x32xbf16, #tpu.memory_space<vmem>>, %arg3: memref<64x32xbf16, #tpu.memory_space<vmem>>, %arg4: memref<32x96xbf16, #tpu.memory_space<vmem>>, %arg5: memref<1x96xf32, #tpu.memory_space<vmem>>, %arg6: memref<32x16xbf16, #tpu.memory_space<vmem>>, %arg7: memref<1x16xf32, #tpu.memory_space<vmem>>, %arg8: memref<32x4xbf16, #tpu.memory_space<vmem>>, %arg9: memref<4x32xbf16, #tpu.memory_space<vmem>>, %arg10: memref<64x4xf32, #tpu.memory_space<vmem>>, %arg11: memref<8x16xf32, #tpu.memory_space<vmem>>) attributes {dimension_semantics = [#tpu.dimension_semantics<parallel>], iteration_bounds = array<i64: 1>, scalar_prefetch = 0 : i64, scratch_operands = 0 : i64, tpu.core_type = #tpu.core_type<tc>, window_params = [{transform_indices = @transform_0, window_bounds = array<i64: 8, 64, 32>}, {pipeline_mode = #tpu.pipeline_mode<synchronous>, transform_indices = @transform_1, window_bounds = array<i64: 1, 32>}, {pipeline_mode = #tpu.pipeline_mode<synchronous>, transform_indices = @transform_2, window_bounds = array<i64: 64, 32>}, {pipeline_mode = #tpu.pipeline_mode<synchronous>, transform_indices = @transform_3, window_bounds = array<i64: 32, 96>}, {pipeline_mode = #tpu.pipeline_mode<synchronous>, transform_indices = @transform_4, window_bounds = array<i64: 1, 96>}, {pipeline_mode = #tpu.pipeline_mode<synchronous>, transform_indices = @transform_5, window_bounds = array<i64: 32, 16>}, {pipeline_mode = #tpu.pipeline_mode<synchronous>, transform_indices = @transform_6, window_bounds = array<i64: 1, 16>}, {pipeline_mode = #tpu.pipeline_mode<synchronous>, transform_indices = @transform_7, window_bounds = array<i64: 32, 4>}, {pipeline_mode = #tpu.pipeline_mode<synchronous>, transform_indices = @transform_8, window_bounds = array<i64: 4, 32>}, {pipeline_mode = #tpu.pipeline_mode<synchronous>, transform_indices = @transform_9, window_bounds = array<i64: 64, 4>}, {transform_indices = @transform_10, window_bounds = array<i64: 8, 16>}]} {
    %c0 = arith.constant 0 : index
    %c0_0 = arith.constant 0 : index
    %c0_1 = arith.constant 0 : index
    %0 = vector.load %arg1[%c0, %c0_0, %c0_1] : memref<8x64x32xbf16, #tpu.memory_space<vmem>>, vector<8x64x32xbf16>
    %1 = arith.extf %0 : vector<8x64x32xbf16> to vector<8x64x32xf32>
    %cst = arith.constant dense<0.000000e+00> : vector<8x32xf32>
    %2 = vector.multi_reduction <add>, %1, %cst [1] : vector<8x64x32xf32> to vector<8x32xf32>
    %cst_2 = arith.constant 0.0204081628 : f32
    %3 = vector.broadcast %cst_2 : f32 to vector<8x32xf32>
    %4 = arith.mulf %2, %3 : vector<8x32xf32>
    %c0_3 = arith.constant 0 : index
    %c0_4 = arith.constant 0 : index
    %5 = vector.load %arg2[%c0_3, %c0_4] : memref<1x32xbf16, #tpu.memory_space<vmem>>, vector<1x32xbf16>
    %6 = arith.extf %5 : vector<1x32xbf16> to vector<1x32xf32>
    %7 = vector.broadcast %6 : vector<1x32xf32> to vector<8x32xf32>
    %8 = arith.addf %4, %7 : vector<8x32xf32>
    %9 = arith.truncf %8 : vector<8x32xf32> to vector<8x32xbf16>
    %c0_5 = arith.constant 0 : index
    %c0_6 = arith.constant 0 : index
    %10 = vector.load %arg3[%c0_5, %c0_6] : memref<64x32xbf16, #tpu.memory_space<vmem>>, vector<64x32xbf16>
    %11 = vector.shape_cast %10 : vector<64x32xbf16> to vector<1x64x32xbf16>
    %12 = vector.broadcast %11 : vector<1x64x32xbf16> to vector<8x64x32xbf16>
    %13 = arith.addf %0, %12 : vector<8x64x32xbf16>
    %14 = vector.shape_cast %13 : vector<8x64x32xbf16> to vector<512x32xbf16>
    %c0_7 = arith.constant 0 : index
    %c0_8 = arith.constant 0 : index
    %15 = vector.load %arg5[%c0_7, %c0_8] : memref<1x96xf32, #tpu.memory_space<vmem>>, vector<1x96xf32>
    %c0_9 = arith.constant 0 : index
    %c0_10 = arith.constant 0 : index
    %16 = vector.load %arg4[%c0_9, %c0_10] : memref<32x96xbf16, #tpu.memory_space<vmem>>, vector<32x96xbf16>
    %cst_11 = arith.constant dense<0.000000e+00> : vector<8x96xf32>
    %17 = tpu.matmul %9, %16, %cst_11 {dimension_numbers = #tpu.dot_dimension_numbers<[1], [0], [0], [1], [0, 0, 1, 1], [], []>} : vector<8x32xbf16>, vector<32x96xbf16>, vector<8x96xf32> -> vector<8x96xf32>
    %18 = vector.broadcast %15 : vector<1x96xf32> to vector<8x96xf32>
    %19 = arith.addf %17, %18 : vector<8x96xf32>
    %20 = vector.extract_strided_slice %19 {offsets = [0, 0], sizes = [8, 32], strides = [1, 1]} : vector<8x96xf32> to vector<8x32xf32>
    %21 = arith.truncf %20 : vector<8x32xf32> to vector<8x32xbf16>
    %22 = vector.extract_strided_slice %19 {offsets = [0, 32], sizes = [8, 32], strides = [1, 1]} : vector<8x96xf32> to vector<8x32xf32>
    %23 = arith.truncf %22 : vector<8x32xf32> to vector<8x32xbf16>
    %24 = vector.extract_strided_slice %19 {offsets = [0, 64], sizes = [8, 32], strides = [1, 1]} : vector<8x96xf32> to vector<8x32xf32>
    %cst_12 = arith.constant 0.353553385 : f32
    %25 = vector.broadcast %cst_12 : f32 to vector<8x32xf32>
    %26 = arith.mulf %24, %25 : vector<8x32xf32>
    %27 = arith.truncf %26 : vector<8x32xf32> to vector<8x32xbf16>
    %c0_13 = arith.constant 0 : index
    %c0_14 = arith.constant 0 : index
    %28 = vector.load %arg4[%c0_13, %c0_14] : memref<32x96xbf16, #tpu.memory_space<vmem>>, vector<32x64xbf16>
    %cst_15 = arith.constant dense<0.000000e+00> : vector<512x64xf32>
    %29 = tpu.matmul %14, %28, %cst_15 {dimension_numbers = #tpu.dot_dimension_numbers<[1], [0], [0], [1], [0, 0, 1, 1], [], []>} : vector<512x32xbf16>, vector<32x64xbf16>, vector<512x64xf32> -> vector<512x64xf32>
    %30 = vector.extract_strided_slice %15 {offsets = [0, 0], sizes = [1, 64], strides = [1, 1]} : vector<1x96xf32> to vector<1x64xf32>
    %31 = vector.broadcast %30 : vector<1x64xf32> to vector<512x64xf32>
    %32 = arith.addf %29, %31 : vector<512x64xf32>
    %33 = vector.shape_cast %32 : vector<512x64xf32> to vector<8x64x64xf32>
    %34 = vector.extract_strided_slice %33 {offsets = [0, 0, 0], sizes = [8, 64, 32], strides = [1, 1, 1]} : vector<8x64x64xf32> to vector<8x64x32xf32>
    %35 = arith.truncf %34 : vector<8x64x32xf32> to vector<8x64x32xbf16>
    %36 = vector.extract_strided_slice %33 {offsets = [0, 0, 32], sizes = [8, 64, 32], strides = [1, 1, 1]} : vector<8x64x64xf32> to vector<8x64x32xf32>
    %37 = arith.truncf %36 : vector<8x64x32xf32> to vector<8x64x32xbf16>
    %c0_16 = arith.constant 0 : index
    %c0_17 = arith.constant 0 : index
    %38 = vector.load %arg8[%c0_16, %c0_17] : memref<32x4xbf16, #tpu.memory_space<vmem>>, vector<32x4xbf16>
    %c0_18 = arith.constant 0 : index
    %c0_19 = arith.constant 0 : index
    %39 = vector.load %arg9[%c0_18, %c0_19] : memref<4x32xbf16, #tpu.memory_space<vmem>>, vector<4x32xbf16>
    %40 = vector.shape_cast %27 : vector<8x32xbf16> to vector<8x1x32xbf16>
    %41 = vector.broadcast %40 : vector<8x1x32xbf16> to vector<8x64x32xbf16>
    %42 = arith.mulf %41, %35 : vector<8x64x32xbf16>
    %43 = vector.shape_cast %42 : vector<8x64x32xbf16> to vector<512x32xbf16>
    %cst_20 = arith.constant dense<0.000000e+00> : vector<512x4xf32>
    %44 = tpu.matmul %43, %38, %cst_20 {dimension_numbers = #tpu.dot_dimension_numbers<[1], [0], [0], [1], [0, 0, 1, 1], [], []>} : vector<512x32xbf16>, vector<32x4xbf16>, vector<512x4xf32> -> vector<512x4xf32>
    %45 = vector.shape_cast %44 : vector<512x4xf32> to vector<8x64x4xf32>
    %c0_21 = arith.constant 0 : index
    %c0_22 = arith.constant 0 : index
    %46 = vector.load %arg10[%c0_21, %c0_22] : memref<64x4xf32, #tpu.memory_space<vmem>>, vector<64x4xf32>
    %47 = vector.shape_cast %46 : vector<64x4xf32> to vector<1x64x4xf32>
    %48 = vector.broadcast %47 : vector<1x64x4xf32> to vector<8x64x4xf32>
    %49 = arith.addf %45, %48 : vector<8x64x4xf32>
    %50 = arith.mulf %27, %21 : vector<8x32xbf16>
    %cst_23 = arith.constant dense<0.000000e+00> : vector<8x4xf32>
    %51 = tpu.matmul %50, %38, %cst_23 {dimension_numbers = #tpu.dot_dimension_numbers<[1], [0], [0], [1], [0, 0, 1, 1], [], []>} : vector<8x32xbf16>, vector<32x4xbf16>, vector<8x4xf32> -> vector<8x4xf32>
    %52 = vector.shape_cast %51 : vector<8x4xf32> to vector<8x1x4xf32>
    %cst_24 = arith.constant dense<0xFF800000> : vector<8x4xf32>
    %53 = vector.multi_reduction <maximumf>, %49, %cst_24 [1] : vector<8x64x4xf32> to vector<8x4xf32>
    %54 = vector.shape_cast %53 : vector<8x4xf32> to vector<8x1x4xf32>
    %55 = arith.maximumf %54, %52 : vector<8x1x4xf32>
    %56 = vector.broadcast %55 : vector<8x1x4xf32> to vector<8x64x4xf32>
    %57 = arith.subf %49, %56 : vector<8x64x4xf32>
    %58 = math.exp %57 : vector<8x64x4xf32>
    %59 = arith.subf %52, %55 : vector<8x1x4xf32>
    %60 = math.exp %59 : vector<8x1x4xf32>
    %cst_25 = arith.constant dense<0.000000e+00> : vector<8x4xf32>
    %61 = vector.multi_reduction <add>, %58, %cst_25 [1] : vector<8x64x4xf32> to vector<8x4xf32>
    %62 = vector.shape_cast %61 : vector<8x4xf32> to vector<8x1x4xf32>
    %63 = arith.addf %62, %60 : vector<8x1x4xf32>
    %64 = tpu.reciprocal %63 {approx = true} : vector<8x1x4xf32> -> vector<8x1x4xf32>
    %65 = vector.broadcast %64 : vector<8x1x4xf32> to vector<8x64x4xf32>
    %66 = arith.mulf %58, %65 : vector<8x64x4xf32>
    %67 = arith.mulf %60, %64 : vector<8x1x4xf32>
    %68 = vector.shape_cast %66 : vector<8x64x4xf32> to vector<512x4xf32>
    %69 = arith.truncf %68 : vector<512x4xf32> to vector<512x4xbf16>
    %cst_26 = arith.constant dense<0.000000e+00> : vector<512x32xf32>
    %70 = tpu.matmul %69, %39, %cst_26 {dimension_numbers = #tpu.dot_dimension_numbers<[1], [0], [0], [1], [0, 0, 1, 1], [], []>} : vector<512x4xbf16>, vector<4x32xbf16>, vector<512x32xf32> -> vector<512x32xf32>
    %71 = vector.shape_cast %70 : vector<512x32xf32> to vector<8x64x32xf32>
    %72 = arith.truncf %71 : vector<8x64x32xf32> to vector<8x64x32xbf16>
    %73 = vector.shape_cast %67 : vector<8x1x4xf32> to vector<8x4xf32>
    %74 = arith.truncf %73 : vector<8x4xf32> to vector<8x4xbf16>
    %cst_27 = arith.constant dense<0.000000e+00> : vector<8x32xf32>
    %75 = tpu.matmul %74, %39, %cst_27 {dimension_numbers = #tpu.dot_dimension_numbers<[1], [0], [0], [1], [0, 0, 1, 1], [], []>} : vector<8x4xbf16>, vector<4x32xbf16>, vector<8x32xf32> -> vector<8x32xf32>
    %76 = arith.truncf %75 : vector<8x32xf32> to vector<8x32xbf16>
    %77 = arith.mulf %72, %37 : vector<8x64x32xbf16>
    %78 = arith.extf %77 : vector<8x64x32xbf16> to vector<8x64x32xf32>
    %cst_28 = arith.constant dense<0.000000e+00> : vector<8x32xf32>
    %79 = vector.multi_reduction <add>, %78, %cst_28 [1] : vector<8x64x32xf32> to vector<8x32xf32>
    %80 = arith.mulf %76, %23 : vector<8x32xbf16>
    %81 = arith.extf %80 : vector<8x32xbf16> to vector<8x32xf32>
    %82 = arith.addf %79, %81 : vector<8x32xf32>
    %83 = arith.truncf %82 : vector<8x32xf32> to vector<8x32xbf16>
    %c0_29 = arith.constant 0 : index
    %c0_30 = arith.constant 0 : index
    %84 = vector.load %arg6[%c0_29, %c0_30] : memref<32x16xbf16, #tpu.memory_space<vmem>>, vector<32x16xbf16>
    %cst_31 = arith.constant dense<0.000000e+00> : vector<8x16xf32>
    %85 = tpu.matmul %83, %84, %cst_31 {dimension_numbers = #tpu.dot_dimension_numbers<[1], [0], [0], [1], [0, 0, 1, 1], [], []>} : vector<8x32xbf16>, vector<32x16xbf16>, vector<8x16xf32> -> vector<8x16xf32>
    %c0_32 = arith.constant 0 : index
    %c0_33 = arith.constant 0 : index
    %86 = vector.load %arg7[%c0_32, %c0_33] : memref<1x16xf32, #tpu.memory_space<vmem>>, vector<1x16xf32>
    %87 = vector.broadcast %86 : vector<1x16xf32> to vector<8x16xf32>
    %88 = arith.addf %85, %87 : vector<8x16xf32>
    %c0_34 = arith.constant 0 : index
    %c0_35 = arith.constant 0 : index
    %89 = vector.load %arg11[%c0_34, %c0_35] : memref<8x16xf32, #tpu.memory_space<vmem>>, vector<8x16xf32>
    tpu.vector_store %arg11[%c0_34, %c0_35], %88 {strides = array<i32>} : memref<8x16xf32, #tpu.memory_space<vmem>>, vector<8x16xf32>,
    return
  }
  func.func @transform_0(%arg0: i32) -> (i32, i32, i32) {
    %c0_i32 = arith.constant 0 : i32
    %c0_i32_0 = arith.constant 0 : i32
    %c0_i32_1 = arith.constant 0 : i32
    return %arg0, %c0_i32, %c0_i32_0 : i32, i32, i32
  }
  func.func @transform_1(%arg0: i32) -> (i32, i32) {
    %c0_i32 = arith.constant 0 : i32
    %c0_i32_0 = arith.constant 0 : i32
    %c0_i32_1 = arith.constant 0 : i32
    return %c0_i32, %c0_i32_0 : i32, i32
  }
  func.func @transform_2(%arg0: i32) -> (i32, i32) {
    %c0_i32 = arith.constant 0 : i32
    %c0_i32_0 = arith.constant 0 : i32
    %c0_i32_1 = arith.constant 0 : i32
    return %c0_i32, %c0_i32_0 : i32, i32
  }
  func.func @transform_3(%arg0: i32) -> (i32, i32) {
    %c0_i32 = arith.constant 0 : i32
    %c0_i32_0 = arith.constant 0 : i32
    %c0_i32_1 = arith.constant 0 : i32
    return %c0_i32, %c0_i32_0 : i32, i32
  }
  func.func @transform_4(%arg0: i32) -> (i32, i32) {
    %c0_i32 = arith.constant 0 : i32
    %c0_i32_0 = arith.constant 0 : i32
    %c0_i32_1 = arith.constant 0 : i32
    return %c0_i32, %c0_i32_0 : i32, i32
  }
  func.func @transform_5(%arg0: i32) -> (i32, i32) {
    %c0_i32 = arith.constant 0 : i32
    %c0_i32_0 = arith.constant 0 : i32
    %c0_i32_1 = arith.constant 0 : i32
    return %c0_i32, %c0_i32_0 : i32, i32
  }
  func.func @transform_6(%arg0: i32) -> (i32, i32) {
    %c0_i32 = arith.constant 0 : i32
    %c0_i32_0 = arith.constant 0 : i32
    %c0_i32_1 = arith.constant 0 : i32
    return %c0_i32, %c0_i32_0 : i32, i32
  }
  func.func @transform_7(%arg0: i32) -> (i32, i32) {
    %c0_i32 = arith.constant 0 : i32
    %c0_i32_0 = arith.constant 0 : i32
    %c0_i32_1 = arith.constant 0 : i32
    return %c0_i32, %c0_i32_0 : i32, i32
  }
  func.func @transform_8(%arg0: i32) -> (i32, i32) {
    %c0_i32 = arith.constant 0 : i32
    %c0_i32_0 = arith.constant 0 : i32
    %c0_i32_1 = arith.constant 0 : i32
    return %c0_i32, %c0_i32_0 : i32, i32
  }
  func.func @transform_9(%arg0: i32) -> (i32, i32) {
    %c0_i32 = arith.constant 0 : i32
    %c0_i32_0 = arith.constant 0 : i32
    %c0_i32_1 = arith.constant 0 : i32
    return %c0_i32, %c0_i32_0 : i32, i32
  }
  func.func @transform_10(%arg0: i32) -> (i32, i32) {
    %c0_i32 = arith.constant 0 : i32
    %c0_i32_0 = arith.constant 0 : i32
    return %arg0, %c0_i32 : i32, i32
  }
}

module attributes {stable_mosaic.version = 11 : i64} {
  func.func @attention_pooling_kernel(%arg0: i32, %arg1: memref<8x64x32xbf16, #tpu.memory_space<vmem>>, %arg2: memref<1x32xbf16, #tpu.memory_space<vmem>>, %arg3: memref<64x32xbf16, #tpu.memory_space<vmem>>, %arg4: memref<32x96xbf16, #tpu.memory_space<vmem>>, %arg5: memref<1x96xf32, #tpu.memory_space<vmem>>, %arg6: memref<32x16xbf16, #tpu.memory_space<vmem>>, %arg7: memref<1x16xf32, #tpu.memory_space<vmem>>, %arg8: memref<32x4xbf16, #tpu.memory_space<vmem>>, %arg9: memref<4x32xbf16, #tpu.memory_space<vmem>>, %arg10: memref<64x4xf32, #tpu.memory_space<vmem>>, %arg11: memref<8x16xf32, #tpu.memory_space<vmem>>) attributes {dimension_semantics = [#tpu.dimension_semantics<parallel>], iteration_bounds = array<i64: 1>, scalar_prefetch = 0 : i64, scratch_operands = 0 : i64, tpu.core_type = #tpu.core_type<tc>, window_params = [{transform_indices = @transform_0, window_bounds = array<i64: 8, 64, 32>}, {pipeline_mode = #tpu.pipeline_mode<synchronous>, transform_indices = @transform_1, window_bounds = array<i64: 1, 32>}, {pipeline_mode = #tpu.pipeline_mode<synchronous>, transform_indices = @transform_2, window_bounds = array<i64: 64, 32>}, {pipeline_mode = #tpu.pipeline_mode<synchronous>, transform_indices = @transform_3, window_bounds = array<i64: 32, 96>}, {pipeline_mode = #tpu.pipeline_mode<synchronous>, transform_indices = @transform_4, window_bounds = array<i64: 1, 96>}, {pipeline_mode = #tpu.pipeline_mode<synchronous>, transform_indices = @transform_5, window_bounds = array<i64: 32, 16>}, {pipeline_mode = #tpu.pipeline_mode<synchronous>, transform_indices = @transform_6, window_bounds = array<i64: 1, 16>}, {pipeline_mode = #tpu.pipeline_mode<synchronous>, transform_indices = @transform_7, window_bounds = array<i64: 32, 4>}, {pipeline_mode = #tpu.pipeline_mode<synchronous>, transform_indices = @transform_8, window_bounds = array<i64: 4, 32>}, {pipeline_mode = #tpu.pipeline_mode<synchronous>, transform_indices = @transform_9, window_bounds = array<i64: 64, 4>}, {transform_indices = @transform_10, window_bounds = array<i64: 8, 16>}]} {
    %c0 = arith.constant 0 : index
    %c0_0 = arith.constant 0 : index
    %c0_1 = arith.constant 0 : index
    %0 = vector.load %arg1[%c0, %c0_0, %c0_1] : memref<8x64x32xbf16, #tpu.memory_space<vmem>>, vector<8x64x32xbf16>
    %1 = arith.extf %0 : vector<8x64x32xbf16> to vector<8x64x32xf32>
    %cst = arith.constant dense<0.000000e+00> : vector<8x32xf32>
    %2 = vector.multi_reduction <add>, %1, %cst [1] : vector<8x64x32xf32> to vector<8x32xf32>
    %cst_2 = arith.constant 0.0204081628 : f32
    %3 = vector.broadcast %cst_2 : f32 to vector<8x32xf32>
    %4 = arith.mulf %2, %3 : vector<8x32xf32>
    %c0_3 = arith.constant 0 : index
    %c0_4 = arith.constant 0 : index
    %5 = vector.load %arg2[%c0_3, %c0_4] : memref<1x32xbf16, #tpu.memory_space<vmem>>, vector<1x32xbf16>
    %6 = arith.extf %5 : vector<1x32xbf16> to vector<1x32xf32>
    %7 = vector.broadcast %6 : vector<1x32xf32> to vector<8x32xf32>
    %8 = arith.addf %4, %7 : vector<8x32xf32>
    %9 = arith.truncf %8 : vector<8x32xf32> to vector<8x32xbf16>
    %c0_5 = arith.constant 0 : index
    %c0_6 = arith.constant 0 : index
    %10 = vector.load %arg3[%c0_5, %c0_6] : memref<64x32xbf16, #tpu.memory_space<vmem>>, vector<64x32xbf16>
    %11 = vector.shape_cast %10 : vector<64x32xbf16> to vector<1x64x32xbf16>
    %12 = vector.broadcast %11 : vector<1x64x32xbf16> to vector<8x64x32xbf16>
    %13 = arith.addf %0, %12 : vector<8x64x32xbf16>
    %14 = vector.shape_cast %13 : vector<8x64x32xbf16> to vector<512x32xbf16>
    %c0_7 = arith.constant 0 : index
    %c0_8 = arith.constant 0 : index
    %15 = vector.load %arg5[%c0_7, %c0_8] : memref<1x96xf32, #tpu.memory_space<vmem>>, vector<1x96xf32>
    %c0_9 = arith.constant 0 : index
    %c0_10 = arith.constant 0 : index
    %16 = vector.load %arg4[%c0_9, %c0_10] : memref<32x96xbf16, #tpu.memory_space<vmem>>, vector<32x96xbf16>
    %cst_11 = arith.constant dense<0.000000e+00> : vector<8x96xf32>
    %17 = tpu.matmul %9, %16, %cst_11 {dimension_numbers = #tpu.dot_dimension_numbers<[1], [0], [0], [1], [0, 0, 1, 1], [], []>} : vector<8x32xbf16>, vector<32x96xbf16>, vector<8x96xf32> -> vector<8x96xf32>
    %18 = vector.broadcast %15 : vector<1x96xf32> to vector<8x96xf32>
    %19 = arith.addf %17, %18 : vector<8x96xf32>
    %20 = vector.extract_strided_slice %19 {offsets = [0, 0], sizes = [8, 32], strides = [1, 1]} : vector<8x96xf32> to vector<8x32xf32>
    %21 = arith.truncf %20 : vector<8x32xf32> to vector<8x32xbf16>
    %22 = vector.extract_strided_slice %19 {offsets = [0, 32], sizes = [8, 32], strides = [1, 1]} : vector<8x96xf32> to vector<8x32xf32>
    %23 = arith.truncf %22 : vector<8x32xf32> to vector<8x32xbf16>
    %24 = vector.extract_strided_slice %19 {offsets = [0, 64], sizes = [8, 32], strides = [1, 1]} : vector<8x96xf32> to vector<8x32xf32>
    %cst_12 = arith.constant 0.353553385 : f32
    %25 = vector.broadcast %cst_12 : f32 to vector<8x32xf32>
    %26 = arith.mulf %24, %25 : vector<8x32xf32>
    %27 = arith.truncf %26 : vector<8x32xf32> to vector<8x32xbf16>
    %c0_13 = arith.constant 0 : index
    %c0_14 = arith.constant 0 : index
    %28 = vector.load %arg4[%c0_13, %c0_14] : memref<32x96xbf16, #tpu.memory_space<vmem>>, vector<32x64xbf16>
    %cst_15 = arith.constant dense<0.000000e+00> : vector<512x64xf32>
    %29 = tpu.matmul %14, %28, %cst_15 {dimension_numbers = #tpu.dot_dimension_numbers<[1], [0], [0], [1], [0, 0, 1, 1], [], []>} : vector<512x32xbf16>, vector<32x64xbf16>, vector<512x64xf32> -> vector<512x64xf32>
    %30 = vector.extract_strided_slice %15 {offsets = [0, 0], sizes = [1, 64], strides = [1, 1]} : vector<1x96xf32> to vector<1x64xf32>
    %31 = vector.broadcast %30 : vector<1x64xf32> to vector<512x64xf32>
    %32 = arith.addf %29, %31 : vector<512x64xf32>
    %33 = vector.shape_cast %32 : vector<512x64xf32> to vector<8x64x64xf32>
    %34 = vector.extract_strided_slice %33 {offsets = [0, 0, 0], sizes = [8, 64, 32], strides = [1, 1, 1]} : vector<8x64x64xf32> to vector<8x64x32xf32>
    %35 = arith.truncf %34 : vector<8x64x32xf32> to vector<8x64x32xbf16>
    %36 = vector.extract_strided_slice %33 {offsets = [0, 0, 32], sizes = [8, 64, 32], strides = [1, 1, 1]} : vector<8x64x64xf32> to vector<8x64x32xf32>
    %37 = arith.truncf %36 : vector<8x64x32xf32> to vector<8x64x32xbf16>
    %c0_16 = arith.constant 0 : index
    %c0_17 = arith.constant 0 : index
    %38 = vector.load %arg8[%c0_16, %c0_17] : memref<32x4xbf16, #tpu.memory_space<vmem>>, vector<32x4xbf16>
    %c0_18 = arith.constant 0 : index
    %c0_19 = arith.constant 0 : index
    %39 = vector.load %arg9[%c0_18, %c0_19] : memref<4x32xbf16, #tpu.memory_space<vmem>>, vector<4x32xbf16>
    %40 = vector.shape_cast %27 : vector<8x32xbf16> to vector<8x1x32xbf16>
    %41 = vector.broadcast %40 : vector<8x1x32xbf16> to vector<8x64x32xbf16>
    %42 = arith.mulf %41, %35 : vector<8x64x32xbf16>
    %43 = vector.shape_cast %42 : vector<8x64x32xbf16> to vector<512x32xbf16>
    %cst_20 = arith.constant dense<0.000000e+00> : vector<512x4xf32>
    %44 = tpu.matmul %43, %38, %cst_20 {dimension_numbers = #tpu.dot_dimension_numbers<[1], [0], [0], [1], [0, 0, 1, 1], [], []>} : vector<512x32xbf16>, vector<32x4xbf16>, vector<512x4xf32> -> vector<512x4xf32>
    %45 = vector.shape_cast %44 : vector<512x4xf32> to vector<8x64x4xf32>
    %c0_21 = arith.constant 0 : index
    %c0_22 = arith.constant 0 : index
    %46 = vector.load %arg10[%c0_21, %c0_22] : memref<64x4xf32, #tpu.memory_space<vmem>>, vector<64x4xf32>
    %47 = vector.shape_cast %46 : vector<64x4xf32> to vector<1x64x4xf32>
    %48 = vector.broadcast %47 : vector<1x64x4xf32> to vector<8x64x4xf32>
    %49 = arith.addf %45, %48 : vector<8x64x4xf32>
    %50 = arith.mulf %27, %21 : vector<8x32xbf16>
    %cst_23 = arith.constant dense<0.000000e+00> : vector<8x4xf32>
    %51 = tpu.matmul %50, %38, %cst_23 {dimension_numbers = #tpu.dot_dimension_numbers<[1], [0], [0], [1], [0, 0, 1, 1], [], []>} : vector<8x32xbf16>, vector<32x4xbf16>, vector<8x4xf32> -> vector<8x4xf32>
    %52 = vector.shape_cast %51 : vector<8x4xf32> to vector<8x1x4xf32>
    %cst_24 = arith.constant dense<0xFF800000> : vector<8x4xf32>
    %53 = vector.multi_reduction <maximumf>, %49, %cst_24 [1] : vector<8x64x4xf32> to vector<8x4xf32>
    %54 = vector.shape_cast %53 : vector<8x4xf32> to vector<8x1x4xf32>
    %55 = arith.maximumf %54, %52 : vector<8x1x4xf32>
    %56 = vector.broadcast %55 : vector<8x1x4xf32> to vector<8x64x4xf32>
    %57 = arith.subf %49, %56 : vector<8x64x4xf32>
    %58 = math.exp %57 : vector<8x64x4xf32>
    %59 = arith.subf %52, %55 : vector<8x1x4xf32>
    %60 = math.exp %59 : vector<8x1x4xf32>
    %cst_25 = arith.constant dense<0.000000e+00> : vector<8x4xf32>
    %61 = vector.multi_reduction <add>, %58, %cst_25 [1] : vector<8x64x4xf32> to vector<8x4xf32>
    %62 = vector.shape_cast %61 : vector<8x4xf32> to vector<8x1x4xf32>
    %63 = arith.addf %62, %60 : vector<8x1x4xf32>
    %64 = tpu.reciprocal %63 {approx = true} : vector<8x1x4xf32> -> vector<8x1x4xf32>
    %65 = vector.broadcast %64 : vector<8x1x4xf32> to vector<8x64x4xf32>
    %66 = arith.mulf %58, %65 : vector<8x64x4xf32>
    %67 = arith.mulf %60, %64 : vector<8x1x4xf32>
    %68 = vector.shape_cast %66 : vector<8x64x4xf32> to vector<512x4xf32>
    %69 = arith.truncf %68 : vector<512x4xf32> to vector<512x4xbf16>
    %cst_26 = arith.constant dense<0.000000e+00> : vector<512x32xf32>
    %70 = tpu.matmul %69, %39, %cst_26 {dimension_numbers = #tpu.dot_dimension_numbers<[1], [0], [0], [1], [0, 0, 1, 1], [], []>} : vector<512x4xbf16>, vector<4x32xbf16>, vector<512x32xf32> -> vector<512x32xf32>
    %71 = vector.shape_cast %70 : vector<512x32xf32> to vector<8x64x32xf32>
    %72 = arith.truncf %71 : vector<8x64x32xf32> to vector<8x64x32xbf16>
    %73 = vector.shape_cast %67 : vector<8x1x4xf32> to vector<8x4xf32>
    %74 = arith.truncf %73 : vector<8x4xf32> to vector<8x4xbf16>
    %cst_27 = arith.constant dense<0.000000e+00> : vector<8x32xf32>
    %75 = tpu.matmul %74, %39, %cst_27 {dimension_numbers = #tpu.dot_dimension_numbers<[1], [0], [0], [1], [0, 0, 1, 1], [], []>} : vector<8x4xbf16>, vector<4x32xbf16>, vector<8x32xf32> -> vector<8x32xf32>
    %76 = arith.truncf %75 : vector<8x32xf32> to vector<8x32xbf16>
    %77 = arith.mulf %72, %37 : vector<8x64x32xbf16>
    %78 = arith.extf %77 : vector<8x64x32xbf16> to vector<8x64x32xf32>
    %cst_28 = arith.constant dense<0.000000e+00> : vector<8x32xf32>
    %79 = vector.multi_reduction <add>, %78, %cst_28 [1] : vector<8x64x32xf32> to vector<8x32xf32>
    %80 = arith.mulf %76, %23 : vector<8x32xbf16>
    %81 = arith.extf %80 : vector<8x32xbf16> to vector<8x32xf32>
    %82 = arith.addf %79, %81 : vector<8x32xf32>
    %83 = arith.truncf %82 : vector<8x32xf32> to vector<8x32xbf16>
    %c0_29 = arith.constant 0 : index
    %c0_30 = arith.constant 0 : index
    %84 = vector.load %arg6[%c0_29, %c0_30] : memref<32x16xbf16, #tpu.memory_space<vmem>>, vector<32x16xbf16>
    %cst_31 = arith.constant dense<0.000000e+00> : vector<8x16xf32>
    %85 = tpu.matmul %83, %84, %cst_31 {dimension_numbers = #tpu.dot_dimension_numbers<[1], [0], [0], [1], [0, 0, 1, 1], [], []>} : vector<8x32xbf16>, vector<32x16xbf16>, vector<8x16xf32> -> vector<8x16xf32>
    %c0_32 = arith.constant 0 : index
    %c0_33 = arith.constant 0 : index
    %86 = vector.load %arg7[%c0_32, %c0_33] : memref<1x16xf32, #tpu.memory_space<vmem>>, vector<1x16xf32>
    %87 = vector.broadcast %86 : vector<1x16xf32> to vector<8x16xf32>
    %88 = arith.addf %85, %87 : vector<8x16xf32>
    %c0_34 = arith.constant 0 : index
    %c0_35 = arith.constant 0 : index
    %89 = vector.load %arg11[%c0_34, %c0_35] : memref<8x16xf32, #tpu.memory_space<vmem>>, vector<8x16xf32>
    tpu.vector_store %arg11[%c0_34, %c0_35], %88 {strides = array<i32>} : memref<8x16xf32, #tpu.memory_space<vmem>>, vector<8x16xf32>,
    return
  }
  func.func @transform_0(%arg0: i32) -> (i32, i32, i32) {
    %c0_i32 = arith.constant 0 : i32
    %c0_i32_0 = arith.constant 0 : i32
    %c0_i32_1 = arith.constant 0 : i32
    return %arg0, %c0_i32, %c0_i32_0 : i32, i32, i32
  }
  func.func @transform_1(%arg0: i32) -> (i32, i32) {
    %c0_i32 = arith.constant 0 : i32
    %c0_i32_0 = arith.constant 0 : i32
    %c0_i32_1 = arith.constant 0 : i32
    return %c0_i32, %c0_i32_0 : i32, i32
  }
  func.func @transform_2(%arg0: i32) -> (i32, i32) {
    %c0_i32 = arith.constant 0 : i32
    %c0_i32_0 = arith.constant 0 : i32
    %c0_i32_1 = arith.constant 0 : i32
    return %c0_i32, %c0_i32_0 : i32, i32
  }
  func.func @transform_3(%arg0: i32) -> (i32, i32) {
    %c0_i32 = arith.constant 0 : i32
    %c0_i32_0 = arith.constant 0 : i32
    %c0_i32_1 = arith.constant 0 : i32
    return %c0_i32, %c0_i32_0 : i32, i32
  }
  func.func @transform_4(%arg0: i32) -> (i32, i32) {
    %c0_i32 = arith.constant 0 : i32
    %c0_i32_0 = arith.constant 0 : i32
    %c0_i32_1 = arith.constant 0 : i32
    return %c0_i32, %c0_i32_0 : i32, i32
  }
  func.func @transform_5(%arg0: i32) -> (i32, i32) {
    %c0_i32 = arith.constant 0 : i32
    %c0_i32_0 = arith.constant 0 : i32
    %c0_i32_1 = arith.constant 0 : i32
    return %c0_i32, %c0_i32_0 : i32, i32
  }
  func.func @transform_6(%arg0: i32) -> (i32, i32) {
    %c0_i32 = arith.constant 0 : i32
    %c0_i32_0 = arith.constant 0 : i32
    %c0_i32_1 = arith.constant 0 : i32
    return %c0_i32, %c0_i32_0 : i32, i32
  }
  func.func @transform_7(%arg0: i32) -> (i32, i32) {
    %c0_i32 = arith.constant 0 : i32
    %c0_i32_0 = arith.constant 0 : i32
    %c0_i32_1 = arith.constant 0 : i32
    return %c0_i32, %c0_i32_0 : i32, i32
  }
  func.func @transform_8(%arg0: i32) -> (i32, i32) {
    %c0_i32 = arith.constant 0 : i32
    %c0_i32_0 = arith.constant 0 : i32
    %c0_i32_1 = arith.constant 0 : i32
    return %c0_i32, %c0_i32_0 : i32, i32
  }
  func.func @transform_9(%arg0: i32) -> (i32, i32) {
    %c0_i32 = arith.constant 0 : i32
    %c0_i32_0 = arith.constant 0 : i32
    %c0_i32_1 = arith.constant 0 : i32
    return %c0_i32, %c0_i32_0 : i32, i32
  }
  func.func @transform_10(%arg0: i32) -> (i32, i32) {
    %c0_i32 = arith.constant 0 : i32
    %c0_i32_0 = arith.constant 0 : i32
    return %arg0, %c0_i32 : i32, i32
  }
}

</mosaic_0001>

<llo_original>
// kernel: tpu_custom_call.1
$region0: #{tpu_custom_call.1}
  #allocation0 [shape = 'u32[]', space=smem, size = 0x4, offset = 0x4, fixed_abs, tag = 'smem constant byte address 0x4 - core index']
  #allocation1 [shape = 'u32[72,128]{1,0:T(1,128)}', space=vmem, size = 0x9000, scoped, tag = 'internal scratch']
  %s0 = inlined_call_operand.vmem [shape: bf16[8,64,32], index: 0, kind: input, shape index: {}]
  %s1 = inlined_call_operand.vmem [shape: bf16[1,32], index: 1, kind: input, shape index: {}]
  %s2 = inlined_call_operand.vmem [shape: bf16[64,32], index: 2, kind: input, shape index: {}]
  %s3 = inlined_call_operand.vmem [shape: bf16[32,96], index: 3, kind: input, shape index: {}]
  %s4 = inlined_call_operand.vmem [shape: f32[1,96], index: 4, kind: input, shape index: {}]
  %s5 = inlined_call_operand.vmem [shape: bf16[32,16], index: 5, kind: input, shape index: {}]
  %s6 = inlined_call_operand.vmem [shape: f32[1,16], index: 6, kind: input, shape index: {}]
  %s7 = inlined_call_operand.vmem [shape: bf16[32,4], index: 7, kind: input, shape index: {}]
  %s8 = inlined_call_operand.vmem [shape: bf16[4,32], index: 8, kind: input, shape index: {}]
  %s9 = inlined_call_operand.vmem [shape: f32[64,4], index: 9, kind: input, shape index: {}]
  %s10 = inlined_call_operand.hbm [shape: f32[8,16], index: 10, kind: output, shape index: {}]
  %s11 = sld [smem:[#allocation0]]
  $region50: #{tpu_custom_call.1} parent=0
    _
  %s13 = ssub.s32 1, %s11
  %s14 = scalar_select 0, %s13, %s11
  $region1: #{tpu_custom_call.1} parent=0
    #allocation2 [shape = 'u8[4096]{0}', space=vmem, size = 0x1000, scoped, tag = 'output window, operand 0, single buffered']
    #allocation3 [shape = 's32[1]{0}', space=sflag, size = 0x4, scoped, tag = 'scoped memory for tpu_custom_call.1']
    %15 = vsyncpa [#allocation3], 0
    // Predicated region
    $region2: #{tpu_custom_call.1} parent=1 // pred_check
      _
    $region3: #{tpu_custom_call.1} parent=1 // pred_check_branch
      %17 = sbr.rel (0) target = $region5
    $region4: #{tpu_custom_call.1} parent=1 // pred_region
      _
    $region5: #{tpu_custom_call.1} parent=1 // pred_fallthru
      _
    // Predicated region
    $region6: #{tpu_custom_call.1} parent=1 // pred_check
      _
    $region7: #{tpu_custom_call.1} parent=1 // pred_check_branch
      %19 = sbr.rel (0) target = $region9
    $region8: #{tpu_custom_call.1} parent=1 // pred_region
      _
    $region9: #{tpu_custom_call.1} parent=1 // pred_fallthru
      _
    // Predicated region
    $region10: #{tpu_custom_call.1} parent=1 // pred_check
      _
    $region11: #{tpu_custom_call.1} parent=1 // pred_check_branch
      %21 = sbr.rel (0) target = $region13
    $region12: #{tpu_custom_call.1} parent=1 // pred_region
      _
    $region13: #{tpu_custom_call.1} parent=1 // pred_fallthru
      _
    // Predicated region
    $region14: #{tpu_custom_call.1} parent=1 // pred_check
      _
    $region15: #{tpu_custom_call.1} parent=1 // pred_check_branch
      %23 = sbr.rel (0) target = $region17
    $region16: #{tpu_custom_call.1} parent=1 // pred_region
      _
    $region17: #{tpu_custom_call.1} parent=1 // pred_fallthru
      _
    // Predicated region
    $region18: #{tpu_custom_call.1} parent=1 // pred_check
      _
    $region19: #{tpu_custom_call.1} parent=1 // pred_check_branch
      %25 = sbr.rel (0) target = $region21
    $region20: #{tpu_custom_call.1} parent=1 // pred_region
      _
    $region21: #{tpu_custom_call.1} parent=1 // pred_fallthru
      _
    // Predicated region
    $region22: #{tpu_custom_call.1} parent=1 // pred_check
      _
    $region23: #{tpu_custom_call.1} parent=1 // pred_check_branch
      %27 = sbr.rel (0) target = $region25
    $region24: #{tpu_custom_call.1} parent=1 // pred_region
      _
    $region25: #{tpu_custom_call.1} parent=1 // pred_fallthru
      _
    // Predicated region
    $region26: #{tpu_custom_call.1} parent=1 // pred_check
      _
    $region27: #{tpu_custom_call.1} parent=1 // pred_check_branch
      %29 = sbr.rel (0) target = $region29
    $region28: #{tpu_custom_call.1} parent=1 // pred_region
      _
    $region29: #{tpu_custom_call.1} parent=1 // pred_fallthru
      _
    // Predicated region
    $region30: #{tpu_custom_call.1} parent=1 // pred_check
      _
    $region31: #{tpu_custom_call.1} parent=1 // pred_check_branch
      %31 = sbr.rel (0) target = $region33
    $region32: #{tpu_custom_call.1} parent=1 // pred_region
      _
    $region33: #{tpu_custom_call.1} parent=1 // pred_fallthru
      _
    // Predicated region
    $region34: #{tpu_custom_call.1} parent=1 // pred_check
      _
    $region35: #{tpu_custom_call.1} parent=1 // pred_check_branch
      %33 = sbr.rel (0) target = $region37
    $region36: #{tpu_custom_call.1} parent=1 // pred_region
      _
    $region37: #{tpu_custom_call.1} parent=1 // pred_fallthru
      _
    // Predicated region
    $region38: #{tpu_custom_call.1} parent=1 // pred_check
      _
    $region39: #{tpu_custom_call.1} parent=1 // pred_check_branch
      %35 = sbr.rel (0) target = $region41
    $region40: #{tpu_custom_call.1} parent=1 // pred_region
      _
    $region41: #{tpu_custom_call.1} parent=1 // pred_fallthru
      _
    %v37 = vld [vmem:[%s0] sm:$0xf]
    %v38 = vld [vmem:[%s0 + $0x4] sm:$0xf]
    %v39 = vld [vmem:[%s0 + $0x8] sm:$0xf]
    %v40 = vld [vmem:[%s0 + $0xc] sm:$0xf]
    %v41 = vld [vmem:[%s0 + $0x10] sm:$0xf]
    %v42 = vld [vmem:[%s0 + $0x14] sm:$0xf]
    %v43 = vld [vmem:[%s0 + $0x18] sm:$0xf]
    %v44 = vld [vmem:[%s0 + $0x1c] sm:$0xf]
    %v45 = vld [vmem:[%s0 + $0x20] sm:$0xf]
    %v46 = vld [vmem:[%s0 + $0x24] sm:$0xf]
    %v47 = vld [vmem:[%s0 + $0x28] sm:$0xf]
    %v48 = vld [vmem:[%s0 + $0x2c] sm:$0xf]
    %v49 = vld [vmem:[%s0 + $0x30] sm:$0xf]
    %v50 = vld [vmem:[%s0 + $0x34] sm:$0xf]
    %v51 = vld [vmem:[%s0 + $0x38] sm:$0xf]
    %v52 = vld [vmem:[%s0 + $0x3c] sm:$0xf]
    %v53 = vld [vmem:[%s0 + $0x40] sm:$0xf]
    %v54 = vld [vmem:[%s0 + $0x44] sm:$0xf]
    %v55 = vld [vmem:[%s0 + $0x48] sm:$0xf]
    %v56 = vld [vmem:[%s0 + $0x4c] sm:$0xf]
    %v57 = vld [vmem:[%s0 + $0x50] sm:$0xf]
    %v58 = vld [vmem:[%s0 + $0x54] sm:$0xf]
    %v59 = vld [vmem:[%s0 + $0x58] sm:$0xf]
    %v60 = vld [vmem:[%s0 + $0x5c] sm:$0xf]
    %v61 = vld [vmem:[%s0 + $0x60] sm:$0xf]
    %v62 = vld [vmem:[%s0 + $0x64] sm:$0xf]
    %v63 = vld [vmem:[%s0 + $0x68] sm:$0xf]
    %v64 = vld [vmem:[%s0 + $0x6c] sm:$0xf]
    %v65 = vld [vmem:[%s0 + $0x70] sm:$0xf]
    %v66 = vld [vmem:[%s0 + $0x74] sm:$0xf]
    %v67 = vld [vmem:[%s0 + $0x78] sm:$0xf]
    %v68 = vld [vmem:[%s0 + $0x7c] sm:$0xf]
    %v69 = vld [vmem:[%s0 + $0x80] sm:$0xf]
    %v70 = vld [vmem:[%s0 + $0x84] sm:$0xf]
    %v71 = vld [vmem:[%s0 + $0x88] sm:$0xf]
    %v72 = vld [vmem:[%s0 + $0x8c] sm:$0xf]
    %v73 = vld [vmem:[%s0 + $0x90] sm:$0xf]
    %v74 = vld [vmem:[%s0 + $0x94] sm:$0xf]
    %v75 = vld [vmem:[%s0 + $0x98] sm:$0xf]
    %v76 = vld [vmem:[%s0 + $0x9c] sm:$0xf]
    %v77 = vld [vmem:[%s0 + $0xa0] sm:$0xf]
    %v78 = vld [vmem:[%s0 + $0xa4] sm:$0xf]
    %v79 = vld [vmem:[%s0 + $0xa8] sm:$0xf]
    %v80 = vld [vmem:[%s0 + $0xac] sm:$0xf]
    %v81 = vld [vmem:[%s0 + $0xb0] sm:$0xf]
    %v82 = vld [vmem:[%s0 + $0xb4] sm:$0xf]
    %v83 = vld [vmem:[%s0 + $0xb8] sm:$0xf]
    %v84 = vld [vmem:[%s0 + $0xbc] sm:$0xf]
    %v85 = vld [vmem:[%s0 + $0xc0] sm:$0xf]
    %v86 = vld [vmem:[%s0 + $0xc4] sm:$0xf]
    %v87 = vld [vmem:[%s0 + $0xc8] sm:$0xf]
    %v88 = vld [vmem:[%s0 + $0xcc] sm:$0xf]
    %v89 = vld [vmem:[%s0 + $0xd0] sm:$0xf]
    %v90 = vld [vmem:[%s0 + $0xd4] sm:$0xf]
    %v91 = vld [vmem:[%s0 + $0xd8] sm:$0xf]
    %v92 = vld [vmem:[%s0 + $0xdc] sm:$0xf]
    %v93 = vld [vmem:[%s0 + $0xe0] sm:$0xf]
    %v94 = vld [vmem:[%s0 + $0xe4] sm:$0xf]
    %v95 = vld [vmem:[%s0 + $0xe8] sm:$0xf]
    %v96 = vld [vmem:[%s0 + $0xec] sm:$0xf]
    %v97 = vld [vmem:[%s0 + $0xf0] sm:$0xf]
    %v98 = vld [vmem:[%s0 + $0xf4] sm:$0xf]
    %v99 = vld [vmem:[%s0 + $0xf8] sm:$0xf]
    %v100 = vld [vmem:[%s0 + $0xfc] sm:$0xf]
    %v101 = vunpack.c.l.bf16 %v37
    %v102 = vunpack.c.l.bf16 %v38
    %v103 = vunpack.c.l.bf16 %v39
    %v104 = vunpack.c.l.bf16 %v40
    %v105 = vunpack.c.l.bf16 %v41
    %v106 = vunpack.c.l.bf16 %v42
    %v107 = vunpack.c.l.bf16 %v43
    %v108 = vunpack.c.l.bf16 %v44
    %v109 = vunpack.c.l.bf16 %v45
    %v110 = vunpack.c.l.bf16 %v46
    %v111 = vunpack.c.l.bf16 %v47
    %v112 = vunpack.c.l.bf16 %v48
    %v113 = vunpack.c.l.bf16 %v49
    %v114 = vunpack.c.l.bf16 %v50
    %v115 = vunpack.c.l.bf16 %v51
    %v116 = vunpack.c.l.bf16 %v52
    %v117 = vunpack.c.l.bf16 %v53
    %v118 = vunpack.c.l.bf16 %v54
    %v119 = vunpack.c.l.bf16 %v55
    %v120 = vunpack.c.l.bf16 %v56
    %v121 = vunpack.c.l.bf16 %v57
    %v122 = vunpack.c.l.bf16 %v58
    %v123 = vunpack.c.l.bf16 %v59
    %v124 = vunpack.c.l.bf16 %v60
    %v125 = vunpack.c.l.bf16 %v61
    %v126 = vunpack.c.l.bf16 %v62
    %v127 = vunpack.c.l.bf16 %v63
    %v128 = vunpack.c.l.bf16 %v64
    %v129 = vunpack.c.l.bf16 %v65
    %v130 = vunpack.c.l.bf16 %v66
    %v131 = vunpack.c.l.bf16 %v67
    %v132 = vunpack.c.l.bf16 %v68
    %v133 = vunpack.c.l.bf16 %v69
    %v134 = vunpack.c.l.bf16 %v70
    %v135 = vunpack.c.l.bf16 %v71
    %v136 = vunpack.c.l.bf16 %v72
    %v137 = vunpack.c.l.bf16 %v73
    %v138 = vunpack.c.l.bf16 %v74
    %v139 = vunpack.c.l.bf16 %v75
    %v140 = vunpack.c.l.bf16 %v76
    %v141 = vunpack.c.l.bf16 %v77
    %v142 = vunpack.c.l.bf16 %v78
    %v143 = vunpack.c.l.bf16 %v79
    %v144 = vunpack.c.l.bf16 %v80
    %v145 = vunpack.c.l.bf16 %v81
    %v146 = vunpack.c.l.bf16 %v82
    %v147 = vunpack.c.l.bf16 %v83
    %v148 = vunpack.c.l.bf16 %v84
    %v149 = vunpack.c.l.bf16 %v85
    %v150 = vunpack.c.l.bf16 %v86
    %v151 = vunpack.c.l.bf16 %v87
    %v152 = vunpack.c.l.bf16 %v88
    %v153 = vunpack.c.l.bf16 %v89
    %v154 = vunpack.c.l.bf16 %v90
    %v155 = vunpack.c.l.bf16 %v91
    %v156 = vunpack.c.l.bf16 %v92
    %v157 = vunpack.c.l.bf16 %v93
    %v158 = vunpack.c.l.bf16 %v94
    %v159 = vunpack.c.l.bf16 %v95
    %v160 = vunpack.c.l.bf16 %v96
    %v161 = vunpack.c.l.bf16 %v97
    %v162 = vunpack.c.l.bf16 %v98
    %v163 = vunpack.c.l.bf16 %v99
    %v164 = vunpack.c.l.bf16 %v100
    %vm165 = vcmask 261120
    %v166 = vsel %vm165, %v101, 0.0
    %v167 = vsel %vm165, %v102, 0.0
    %v168 = vadd.f32 %v166, %v167
    %v169 = vsel %vm165, %v103, 0.0
    %v170 = vadd.f32 %v168, %v169
    %v171 = vsel %vm165, %v104, 0.0
    %v172 = vadd.f32 %v170, %v171
    %v173 = vsel %vm165, %v105, 0.0
    %v174 = vadd.f32 %v172, %v173
    %v175 = vsel %vm165, %v106, 0.0
    %v176 = vadd.f32 %v174, %v175
    %v177 = vsel %vm165, %v107, 0.0
    %v178 = vadd.f32 %v176, %v177
    %v179 = vsel %vm165, %v108, 0.0
    %v180 = vadd.f32 %v178, %v179
    %v181 = vrot.slane %v180, 4
    %v182 = vadd.f32 %v180, %v181
    %v183 = vrot.slane %v182, 2
    %v184 = vadd.f32 %v182, %v183
    %v185 = vrot.slane %v184, 1
    %v186 = vadd.f32 %v184, %v185
    %v187 = vsel %vm165, %v109, 0.0
    %v188 = vsel %vm165, %v110, 0.0
    %v189 = vadd.f32 %v187, %v188
    %v190 = vsel %vm165, %v111, 0.0
    %v191 = vadd.f32 %v189, %v190
    %v192 = vsel %vm165, %v112, 0.0
    %v193 = vadd.f32 %v191, %v192
    %v194 = vsel %vm165, %v113, 0.0
    %v195 = vadd.f32 %v193, %v194
    %v196 = vsel %vm165, %v114, 0.0
    %v197 = vadd.f32 %v195, %v196
    %v198 = vsel %vm165, %v115, 0.0
    %v199 = vadd.f32 %v197, %v198
    %v200 = vsel %vm165, %v116, 0.0
    %v201 = vadd.f32 %v199, %v200
    %v202 = vrot.slane %v201, 4
    %v203 = vadd.f32 %v201, %v202
    %v204 = vrot.slane %v203, 2
    %v205 = vadd.f32 %v203, %v204
    %v206 = vrot.slane %v205, 1
    %v207 = vadd.f32 %v205, %v206
    %v208 = vsel %vm165, %v117, 0.0
    %v209 = vsel %vm165, %v118, 0.0
    %v210 = vadd.f32 %v208, %v209
    %v211 = vsel %vm165, %v119, 0.0
    %v212 = vadd.f32 %v210, %v211
    %v213 = vsel %vm165, %v120, 0.0
    %v214 = vadd.f32 %v212, %v213
    %v215 = vsel %vm165, %v121, 0.0
    %v216 = vadd.f32 %v214, %v215
    %v217 = vsel %vm165, %v122, 0.0
    %v218 = vadd.f32 %v216, %v217
    %v219 = vsel %vm165, %v123, 0.0
    %v220 = vadd.f32 %v218, %v219
    %v221 = vsel %vm165, %v124, 0.0
    %v222 = vadd.f32 %v220, %v221
    %v223 = vrot.slane %v222, 4
    %v224 = vadd.f32 %v222, %v223
    %v225 = vrot.slane %v224, 2
    %v226 = vadd.f32 %v224, %v225
    %v227 = vrot.slane %v226, 1
    %v228 = vadd.f32 %v226, %v227
    %v229 = vsel %vm165, %v125, 0.0
    %v230 = vsel %vm165, %v126, 0.0
    %v231 = vadd.f32 %v229, %v230
    %v232 = vsel %vm165, %v127, 0.0
    %v233 = vadd.f32 %v231, %v232
    %v234 = vsel %vm165, %v128, 0.0
    %v235 = vadd.f32 %v233, %v234
    %v236 = vsel %vm165, %v129, 0.0
    %v237 = vadd.f32 %v235, %v236
    %v238 = vsel %vm165, %v130, 0.0
    %v239 = vadd.f32 %v237, %v238
    %v240 = vsel %vm165, %v131, 0.0
    %v241 = vadd.f32 %v239, %v240
    %v242 = vsel %vm165, %v132, 0.0
    %v243 = vadd.f32 %v241, %v242
    %v244 = vrot.slane %v243, 4
    %v245 = vadd.f32 %v243, %v244
    %v246 = vrot.slane %v245, 2
    %v247 = vadd.f32 %v245, %v246
    %v248 = vrot.slane %v247, 1
    %v249 = vadd.f32 %v247, %v248
    %v250 = vsel %vm165, %v133, 0.0
    %v251 = vsel %vm165, %v134, 0.0
    %v252 = vadd.f32 %v250, %v251
    %v253 = vsel %vm165, %v135, 0.0
    %v254 = vadd.f32 %v252, %v253
    %v255 = vsel %vm165, %v136, 0.0
    %v256 = vadd.f32 %v254, %v255
    %v257 = vsel %vm165, %v137, 0.0
    %v258 = vadd.f32 %v256, %v257
    %v259 = vsel %vm165, %v138, 0.0
    %v260 = vadd.f32 %v258, %v259
    %v261 = vsel %vm165, %v139, 0.0
    %v262 = vadd.f32 %v260, %v261
    %v263 = vsel %vm165, %v140, 0.0
    %v264 = vadd.f32 %v262, %v263
    %v265 = vrot.slane %v264, 4
    %v266 = vadd.f32 %v264, %v265
    %v267 = vrot.slane %v266, 2
    %v268 = vadd.f32 %v266, %v267
    %v269 = vrot.slane %v268, 1
    %v270 = vadd.f32 %v268, %v269
    %v271 = vsel %vm165, %v141, 0.0
    %v272 = vsel %vm165, %v142, 0.0
    %v273 = vadd.f32 %v271, %v272
    %v274 = vsel %vm165, %v143, 0.0
    %v275 = vadd.f32 %v273, %v274
    %v276 = vsel %vm165, %v144, 0.0
    %v277 = vadd.f32 %v275, %v276
    %v278 = vsel %vm165, %v145, 0.0
    %v279 = vadd.f32 %v277, %v278
    %v280 = vsel %vm165, %v146, 0.0
    %v281 = vadd.f32 %v279, %v280
    %v282 = vsel %vm165, %v147, 0.0
    %v283 = vadd.f32 %v281, %v282
    %v284 = vsel %vm165, %v148, 0.0
    %v285 = vadd.f32 %v283, %v284
    %v286 = vrot.slane %v285, 4
    %v287 = vadd.f32 %v285, %v286
    %v288 = vrot.slane %v287, 2
    %v289 = vadd.f32 %v287, %v288
    %v290 = vrot.slane %v289, 1
    %v291 = vadd.f32 %v289, %v290
    %v292 = vsel %vm165, %v149, 0.0
    %v293 = vsel %vm165, %v150, 0.0
    %v294 = vadd.f32 %v292, %v293
    %v295 = vsel %vm165, %v151, 0.0
    %v296 = vadd.f32 %v294, %v295
    %v297 = vsel %vm165, %v152, 0.0
    %v298 = vadd.f32 %v296, %v297
    %v299 = vsel %vm165, %v153, 0.0
    %v300 = vadd.f32 %v298, %v299
    %v301 = vsel %vm165, %v154, 0.0
    %v302 = vadd.f32 %v300, %v301
    %v303 = vsel %vm165, %v155, 0.0
    %v304 = vadd.f32 %v302, %v303
    %v305 = vsel %vm165, %v156, 0.0
    %v306 = vadd.f32 %v304, %v305
    %v307 = vrot.slane %v306, 4
    %v308 = vadd.f32 %v306, %v307
    %v309 = vrot.slane %v308, 2
    %v310 = vadd.f32 %v308, %v309
    %v311 = vrot.slane %v310, 1
    %v312 = vadd.f32 %v310, %v311
    %v313 = vsel %vm165, %v157, 0.0
    %v314 = vsel %vm165, %v158, 0.0
    %v315 = vadd.f32 %v313, %v314
    %v316 = vsel %vm165, %v159, 0.0
    %v317 = vadd.f32 %v315, %v316
    %v318 = vsel %vm165, %v160, 0.0
    %v319 = vadd.f32 %v317, %v318
    %v320 = vsel %vm165, %v161, 0.0
    %v321 = vadd.f32 %v319, %v320
    %v322 = vsel %vm165, %v162, 0.0
    %v323 = vadd.f32 %v321, %v322
    %v324 = vsel %vm165, %v163, 0.0
    %v325 = vadd.f32 %v323, %v324
    %v326 = vsel %vm165, %v164, 0.0
    %v327 = vadd.f32 %v325, %v326
    %v328 = vrot.slane %v327, 4
    %v329 = vadd.f32 %v327, %v328
    %v330 = vrot.slane %v329, 2
    %v331 = vadd.f32 %v329, %v330
    %v332 = vrot.slane %v331, 1
    %v333 = vadd.f32 %v331, %v332
    %v334 = vmul.f32 %v186, 0.020408163
    %v335 = vmul.f32 %v207, 0.020408163
    %v336 = vmul.f32 %v228, 0.020408163
    %v337 = vmul.f32 %v249, 0.020408163
    %v338 = vmul.f32 %v270, 0.020408163
    %v339 = vmul.f32 %v291, 0.020408163
    %v340 = vmul.f32 %v312, 0.020408163
    %v341 = vmul.f32 %v333, 0.020408163
    %v342 = vld [vmem:[%s1] sm:$0x1]
    %v343 = vunpack.c.l.bf16 %v342
    %v344 = vperm.slane %v343, 0
    %v345 = vadd.f32 %v334, %v344
    %v346 = vadd.f32 %v335, %v344
    %v347 = vadd.f32 %v336, %v344
    %v348 = vadd.f32 %v337, %v344
    %v349 = vadd.f32 %v338, %v344
    %v350 = vadd.f32 %v339, %v344
    %v351 = vadd.f32 %v340, %v344
    %v352 = vadd.f32 %v341, %v344
    %v353 = vpack.c.bf16 %v345, %v345
    %v354 = vpack.c.bf16 %v346, %v346
    %v355 = vpack.c.bf16 %v347, %v347
    %v356 = vpack.c.bf16 %v348, %v348
    %v357 = vpack.c.bf16 %v349, %v349
    %v358 = vpack.c.bf16 %v350, %v350
    %v359 = vpack.c.bf16 %v351, %v351
    %v360 = vpack.c.bf16 %v352, %v352
    %v361 = vld [vmem:[%s2] sm:$0xf]
    %v362 = vld [vmem:[%s2 + $0x4] sm:$0xf]
    %v363 = vld [vmem:[%s2 + $0x8] sm:$0xf]
    %v364 = vld [vmem:[%s2 + $0xc] sm:$0xf]
    %v365 = vld [vmem:[%s2 + $0x10] sm:$0xf]
    %v366 = vld [vmem:[%s2 + $0x14] sm:$0xf]
    %v367 = vld [vmem:[%s2 + $0x18] sm:$0xf]
    %v368 = vld [vmem:[%s2 + $0x1c] sm:$0xf]
    %v369 = vunpack.c.l.bf16 %v361
    %v370 = vunpack.c.l.bf16 %v362
    %v371 = vunpack.c.l.bf16 %v363
    %v372 = vunpack.c.l.bf16 %v364
    %v373 = vunpack.c.l.bf16 %v365
    %v374 = vunpack.c.l.bf16 %v366
    %v375 = vunpack.c.l.bf16 %v367
    %v376 = vunpack.c.l.bf16 %v368
    %v377 = vadd.f32 %v101, %v369
    %v378 = vadd.f32 %v102, %v370
    %v379 = vadd.f32 %v103, %v371
    %v380 = vadd.f32 %v104, %v372
    %v381 = vadd.f32 %v105, %v373
    %v382 = vadd.f32 %v106, %v374
    %v383 = vadd.f32 %v107, %v375
    %v384 = vadd.f32 %v108, %v376
    %v385 = vadd.f32 %v109, %v369
    %v386 = vadd.f32 %v110, %v370
    %v387 = vadd.f32 %v111, %v371
    %v388 = vadd.f32 %v112, %v372
    %v389 = vadd.f32 %v113, %v373
    %v390 = vadd.f32 %v114, %v374
    %v391 = vadd.f32 %v115, %v375
    %v392 = vadd.f32 %v116, %v376
    %v393 = vadd.f32 %v117, %v369
    %v394 = vadd.f32 %v118, %v370
    %v395 = vadd.f32 %v119, %v371
    %v396 = vadd.f32 %v120, %v372
    %v397 = vadd.f32 %v121, %v373
    %v398 = vadd.f32 %v122, %v374
    %v399 = vadd.f32 %v123, %v375
    %v400 = vadd.f32 %v124, %v376
    %v401 = vadd.f32 %v125, %v369
    %v402 = vadd.f32 %v126, %v370
    %v403 = vadd.f32 %v127, %v371
    %v404 = vadd.f32 %v128, %v372
    %v405 = vadd.f32 %v129, %v373
    %v406 = vadd.f32 %v130, %v374
    %v407 = vadd.f32 %v131, %v375
    %v408 = vadd.f32 %v132, %v376
    %v409 = vadd.f32 %v133, %v369
    %v410 = vadd.f32 %v134, %v370
    %v411 = vadd.f32 %v135, %v371
    %v412 = vadd.f32 %v136, %v372
    %v413 = vadd.f32 %v137, %v373
    %v414 = vadd.f32 %v138, %v374
    %v415 = vadd.f32 %v139, %v375
    %v416 = vadd.f32 %v140, %v376
    %v417 = vadd.f32 %v141, %v369
    %v418 = vadd.f32 %v142, %v370
    %v419 = vadd.f32 %v143, %v371
    %v420 = vadd.f32 %v144, %v372
    %v421 = vadd.f32 %v145, %v373
    %v422 = vadd.f32 %v146, %v374
    %v423 = vadd.f32 %v147, %v375
    %v424 = vadd.f32 %v148, %v376
    %v425 = vadd.f32 %v149, %v369
    %v426 = vadd.f32 %v150, %v370
    %v427 = vadd.f32 %v151, %v371
    %v428 = vadd.f32 %v152, %v372
    %v429 = vadd.f32 %v153, %v373
    %v430 = vadd.f32 %v154, %v374
    %v431 = vadd.f32 %v155, %v375
    %v432 = vadd.f32 %v156, %v376
    %v433 = vadd.f32 %v157, %v369
    %v434 = vadd.f32 %v158, %v370
    %v435 = vadd.f32 %v159, %v371
    %v436 = vadd.f32 %v160, %v372
    %v437 = vadd.f32 %v161, %v373
    %v438 = vadd.f32 %v162, %v374
    %v439 = vadd.f32 %v163, %v375
    %v440 = vadd.f32 %v164, %v376
    %v441 = vpack.c.bf16 %v377, %v377
    %v442 = vpack.c.bf16 %v378, %v378
    %v443 = vpack.c.bf16 %v379, %v379
    %v444 = vpack.c.bf16 %v380, %v380
    %v445 = vpack.c.bf16 %v381, %v381
    %v446 = vpack.c.bf16 %v382, %v382
    %v447 = vpack.c.bf16 %v383, %v383
    %v448 = vpack.c.bf16 %v384, %v384
    %v449 = vpack.c.bf16 %v385, %v385
    %v450 = vpack.c.bf16 %v386, %v386
    %v451 = vpack.c.bf16 %v387, %v387
    %v452 = vpack.c.bf16 %v388, %v388
    %v453 = vpack.c.bf16 %v389, %v389
    %v454 = vpack.c.bf16 %v390, %v390
    %v455 = vpack.c.bf16 %v391, %v391
    %v456 = vpack.c.bf16 %v392, %v392
    %v457 = vpack.c.bf16 %v393, %v393
    %v458 = vpack.c.bf16 %v394, %v394
    %v459 = vpack.c.bf16 %v395, %v395
    %v460 = vpack.c.bf16 %v396, %v396
    %v461 = vpack.c.bf16 %v397, %v397
    %v462 = vpack.c.bf16 %v398, %v398
    %v463 = vpack.c.bf16 %v399, %v399
    %v464 = vpack.c.bf16 %v400, %v400
    %v465 = vpack.c.bf16 %v401, %v401
    %v466 = vpack.c.bf16 %v402, %v402
    %v467 = vpack.c.bf16 %v403, %v403
    %v468 = vpack.c.bf16 %v404, %v404
    %v469 = vpack.c.bf16 %v405, %v405
    %v470 = vpack.c.bf16 %v406, %v406
    %v471 = vpack.c.bf16 %v407, %v407
    %v472 = vpack.c.bf16 %v408, %v408
    %v473 = vpack.c.bf16 %v409, %v409
    %v474 = vpack.c.bf16 %v410, %v410
    %v475 = vpack.c.bf16 %v411, %v411
    %v476 = vpack.c.bf16 %v412, %v412
    %v477 = vpack.c.bf16 %v413, %v413
    %v478 = vpack.c.bf16 %v414, %v414
    %v479 = vpack.c.bf16 %v415, %v415
    %v480 = vpack.c.bf16 %v416, %v416
    %v481 = vpack.c.bf16 %v417, %v417
    %v482 = vpack.c.bf16 %v418, %v418
    %v483 = vpack.c.bf16 %v419, %v419
    %v484 = vpack.c.bf16 %v420, %v420
    %v485 = vpack.c.bf16 %v421, %v421
    %v486 = vpack.c.bf16 %v422, %v422
    %v487 = vpack.c.bf16 %v423, %v423
    %v488 = vpack.c.bf16 %v424, %v424
    %v489 = vpack.c.bf16 %v425, %v425
    %v490 = vpack.c.bf16 %v426, %v426
    %v491 = vpack.c.bf16 %v427, %v427
    %v492 = vpack.c.bf16 %v428, %v428
    %v493 = vpack.c.bf16 %v429, %v429
    %v494 = vpack.c.bf16 %v430, %v430
    %v495 = vpack.c.bf16 %v431, %v431
    %v496 = vpack.c.bf16 %v432, %v432
    %v497 = vpack.c.bf16 %v433, %v433
    %v498 = vpack.c.bf16 %v434, %v434
    %v499 = vpack.c.bf16 %v435, %v435
    %v500 = vpack.c.bf16 %v436, %v436
    %v501 = vpack.c.bf16 %v437, %v437
    %v502 = vpack.c.bf16 %v438, %v438
    %v503 = vpack.c.bf16 %v439, %v439
    %v504 = vpack.c.bf16 %v440, %v440
    %v505 = vld [vmem:[%s4] sm:$0x1]
    %v506 = vld [vmem:[%s3] sm:$0xf]
    %v507 = vld [vmem:[%s3 + $0x4] sm:$0xf]
    %v508 = vld [vmem:[%s3 + $0x8] sm:$0xf]
    %v509 = vld [vmem:[%s3 + $0xc] sm:$0xf]
    %v511 = vperm.slane %v505, 0
    %v521 = vunpack.c.l.b16 %v353
    %v522 = vunpack.c.l.b16 %v354
    %v523 = vunpack.c.l.b16 %v355
    %v524 = vunpack.c.l.b16 %v356
    %v525 = vunpack.c.l.b16 %v357
    %v526 = vunpack.c.l.b16 %v358
    %v527 = vunpack.c.l.b16 %v359
    %v528 = vunpack.c.l.b16 %v360
    %v529 = vrot.slane %v522, 7
    %vm530 = vcmask 1041409
    %v531 = vsel %vm530, %v529, %v521
    %v532 = vrot.slane %v523, 6
    %vm533 = vcmask 1042434
    %v534 = vsel %vm533, %v532, %v531
    %v535 = vrot.slane %v524, 5
    %vm536 = vcmask 1043459
    %v537 = vsel %vm536, %v535, %v534
    %v538 = vrot.slane %v525, 4
    %vm539 = vcmask 1044484
    %v540 = vsel %vm539, %v538, %v537
    %v541 = vrot.slane %v526, 3
    %vm542 = vcmask 1045509
    %v543 = vsel %vm542, %v541, %v540
    %v544 = vrot.slane %v527, 2
    %vm545 = vcmask 1046534
    %v546 = vsel %vm545, %v544, %v543
    %v547 = vrot.slane %v528, 1
    %vm548 = vcmask 1047559
    %v549 = vsel %vm548, %v547, %v546
    %v550 = vpack.c.b16 %v549, %v549
    %v555 = vunpack.c.l.b16 %v506
    %v556 = vunpack.c.l.b16 %v507
    %v557 = vunpack.c.l.b16 %v508
    %v558 = vunpack.c.l.b16 %v509
    %v559 = vpack.c.b16 %v556, %v555
    %v560 = vpack.c.b16 %v558, %v557
    %v564 = vsel %vm165, %v550, 0
    %566 = vmatpush.bf16.msra.mxu0 0
    %567 = vmatpush.bf16.msra.mxu0 0
    %568 = vmatpush.bf16.msra.mxu0 0
    %569 = vmatpush.bf16.msra.mxu0 0
    %570 = vmatpush.bf16.msra.mxu0 0
    %571 = vmatpush.bf16.msra.mxu0 0
    %572 = vmatpush.bf16.msra.mxu0 %v560
    %573 = vmatpush.bf16.msra.mxu0 %v559
    %574 = vmatmul.bf16.gmra.mxu0 %v564
    %v575 = vpop.f32.mrf.mxu0
    %v576 = vadd.f32 %v511, %v575
    %v577 = vpop.f32.mrf.mxu0
    %578 = vdwg.mxu0
    %v579 = vpack.c.bf16 %v576, %v576
    %v580 = vmul.f32 %v576, 0.35355338
    %v581 = vpack.c.bf16 %v580, %v580
    %v646 = vunpack.c.l.b16 %v441
    %v647 = vunpack.c.l.b16 %v442
    %v648 = vunpack.c.l.b16 %v443
    %v649 = vunpack.c.l.b16 %v444
    %v650 = vunpack.c.l.b16 %v445
    %v651 = vunpack.c.l.b16 %v446
    %v652 = vunpack.c.l.b16 %v447
    %v653 = vunpack.c.l.b16 %v448
    %v654 = vunpack.c.l.b16 %v449
    %v655 = vunpack.c.l.b16 %v450
    %v656 = vunpack.c.l.b16 %v451
    %v657 = vunpack.c.l.b16 %v452
    %v658 = vunpack.c.l.b16 %v453
    %v659 = vunpack.c.l.b16 %v454
    %v660 = vunpack.c.l.b16 %v455
    %v661 = vunpack.c.l.b16 %v456
    %v662 = vunpack.c.l.b16 %v457
    %v663 = vunpack.c.l.b16 %v458
    %v664 = vunpack.c.l.b16 %v459
    %v665 = vunpack.c.l.b16 %v460
    %v666 = vunpack.c.l.b16 %v461
    %v667 = vunpack.c.l.b16 %v462
    %v668 = vunpack.c.l.b16 %v463
    %v669 = vunpack.c.l.b16 %v464
    %v670 = vunpack.c.l.b16 %v465
    %v671 = vunpack.c.l.b16 %v466
    %v672 = vunpack.c.l.b16 %v467
    %v673 = vunpack.c.l.b16 %v468
    %v674 = vunpack.c.l.b16 %v469
    %v675 = vunpack.c.l.b16 %v470
    %v676 = vunpack.c.l.b16 %v471
    %v677 = vunpack.c.l.b16 %v472
    %v678 = vunpack.c.l.b16 %v473
    %v679 = vunpack.c.l.b16 %v474
    %v680 = vunpack.c.l.b16 %v475
    %v681 = vunpack.c.l.b16 %v476
    %v682 = vunpack.c.l.b16 %v477
    %v683 = vunpack.c.l.b16 %v478
    %v684 = vunpack.c.l.b16 %v479
    %v685 = vunpack.c.l.b16 %v480
    %v686 = vunpack.c.l.b16 %v481
    %v687 = vunpack.c.l.b16 %v482
    %v688 = vunpack.c.l.b16 %v483
    %v689 = vunpack.c.l.b16 %v484
    %v690 = vunpack.c.l.b16 %v485
    %v691 = vunpack.c.l.b16 %v486
    %v692 = vunpack.c.l.b16 %v487
    %v693 = vunpack.c.l.b16 %v488
    %v694 = vunpack.c.l.b16 %v489
    %v695 = vunpack.c.l.b16 %v490
    %v696 = vunpack.c.l.b16 %v491
    %v697 = vunpack.c.l.b16 %v492
    %v698 = vunpack.c.l.b16 %v493
    %v699 = vunpack.c.l.b16 %v494
    %v700 = vunpack.c.l.b16 %v495
    %v701 = vunpack.c.l.b16 %v496
    %v702 = vunpack.c.l.b16 %v497
    %v703 = vunpack.c.l.b16 %v498
    %v704 = vunpack.c.l.b16 %v499
    %v705 = vunpack.c.l.b16 %v500
    %v706 = vunpack.c.l.b16 %v501
    %v707 = vunpack.c.l.b16 %v502
    %v708 = vunpack.c.l.b16 %v503
    %v709 = vunpack.c.l.b16 %v504
    %v710 = vpack.c.b16 %v647, %v646
    %v711 = vpack.c.b16 %v649, %v648
    %v712 = vpack.c.b16 %v651, %v650
    %v713 = vpack.c.b16 %v653, %v652
    %v714 = vpack.c.b16 %v655, %v654
    %v715 = vpack.c.b16 %v657, %v656
    %v716 = vpack.c.b16 %v659, %v658
    %v717 = vpack.c.b16 %v661, %v660
    %v718 = vpack.c.b16 %v663, %v662
    %v719 = vpack.c.b16 %v665, %v664
    %v720 = vpack.c.b16 %v667, %v666
    %v721 = vpack.c.b16 %v669, %v668
    %v722 = vpack.c.b16 %v671, %v670
    %v723 = vpack.c.b16 %v673, %v672
    %v724 = vpack.c.b16 %v675, %v674
    %v725 = vpack.c.b16 %v677, %v676
    %v726 = vpack.c.b16 %v679, %v678
    %v727 = vpack.c.b16 %v681, %v680
    %v728 = vpack.c.b16 %v683, %v682
    %v729 = vpack.c.b16 %v685, %v684
    %v730 = vpack.c.b16 %v687, %v686
    %v731 = vpack.c.b16 %v689, %v688
    %v732 = vpack.c.b16 %v691, %v690
    %v733 = vpack.c.b16 %v693, %v692
    %v734 = vpack.c.b16 %v695, %v694
    %v735 = vpack.c.b16 %v697, %v696
    %v736 = vpack.c.b16 %v699, %v698
    %v737 = vpack.c.b16 %v701, %v700
    %v738 = vpack.c.b16 %v703, %v702
    %v739 = vpack.c.b16 %v705, %v704
    %v740 = vpack.c.b16 %v707, %v706
    %v741 = vpack.c.b16 %v709, %v708
    %v743 = vsel %vm165, %v710, 0
    %v746 = vsel %vm165, %v711, 0
    %v749 = vsel %vm165, %v712, 0
    %v752 = vsel %vm165, %v713, 0
    %v755 = vsel %vm165, %v714, 0
    %v758 = vsel %vm165, %v715, 0
    %v761 = vsel %vm165, %v716, 0
    %v764 = vsel %vm165, %v717, 0
    %v767 = vsel %vm165, %v718, 0
    %v770 = vsel %vm165, %v719, 0
    %v773 = vsel %vm165, %v720, 0
    %v776 = vsel %vm165, %v721, 0
    %v779 = vsel %vm165, %v722, 0
    %v782 = vsel %vm165, %v723, 0
    %v785 = vsel %vm165, %v724, 0
    %v788 = vsel %vm165, %v725, 0
    %v791 = vsel %vm165, %v726, 0
    %v794 = vsel %vm165, %v727, 0
    %v797 = vsel %vm165, %v728, 0
    %v800 = vsel %vm165, %v729, 0
    %v803 = vsel %vm165, %v730, 0
    %v806 = vsel %vm165, %v731, 0
    %v809 = vsel %vm165, %v732, 0
    %v812 = vsel %vm165, %v733, 0
    %v815 = vsel %vm165, %v734, 0
    %v818 = vsel %vm165, %v735, 0
    %v821 = vsel %vm165, %v736, 0
    %v824 = vsel %vm165, %v737, 0
    %v827 = vsel %vm165, %v738, 0
    %v830 = vsel %vm165, %v739, 0
    %v833 = vsel %vm165, %v740, 0
    %v836 = vsel %vm165, %v741, 0
    %838 = vmatpush.bf16.msra.mxu0 0
    %839 = vmatpush.bf16.msra.mxu0 0
    %840 = vmatpush.bf16.msra.mxu0 0
    %841 = vmatpush.bf16.msra.mxu0 0
    %842 = vmatpush.bf16.msra.mxu0 0
    %843 = vmatpush.bf16.msra.mxu0 0
    %844 = vmatpush.bf16.msra.mxu0 %v560
    %845 = vmatpush.bf16.msra.mxu0 %v559
    %846 = vmatmul.bf16.gmra.mxu0 %v743
    %v847 = vpop.f32.mrf.mxu0
    %v848 = vadd.f32 %v511, %v847
    %v849 = vpop.f32.mrf.mxu0
    %v850 = vadd.f32 %v511, %v849
    %851 = vmatmul.bf16.gmra.mxu0 %v746
    %v852 = vpop.f32.mrf.mxu0
    %v853 = vadd.f32 %v511, %v852
    %v854 = vpop.f32.mrf.mxu0
    %v855 = vadd.f32 %v511, %v854
    %856 = vmatmul.bf16.gmra.mxu0 %v749
    %v857 = vpop.f32.mrf.mxu0
    %v858 = vadd.f32 %v511, %v857
    %v859 = vpop.f32.mrf.mxu0
    %v860 = vadd.f32 %v511, %v859
    %861 = vmatmul.bf16.gmra.mxu0 %v752
    %v862 = vpop.f32.mrf.mxu0
    %v863 = vadd.f32 %v511, %v862
    %v864 = vpop.f32.mrf.mxu0
    %v865 = vadd.f32 %v511, %v864
    %866 = vmatmul.bf16.gmra.mxu0 %v755
    %v867 = vpop.f32.mrf.mxu0
    %v868 = vadd.f32 %v511, %v867
    %v869 = vpop.f32.mrf.mxu0
    %v870 = vadd.f32 %v511, %v869
    %871 = vmatmul.bf16.gmra.mxu0 %v758
    %v872 = vpop.f32.mrf.mxu0
    %v873 = vadd.f32 %v511, %v872
    %v874 = vpop.f32.mrf.mxu0
    %v875 = vadd.f32 %v511, %v874
    %876 = vmatmul.bf16.gmra.mxu0 %v761
    %v877 = vpop.f32.mrf.mxu0
    %v878 = vadd.f32 %v511, %v877
    %v879 = vpop.f32.mrf.mxu0
    %v880 = vadd.f32 %v511, %v879
    %881 = vmatmul.bf16.gmra.mxu0 %v764
    %v882 = vpop.f32.mrf.mxu0
    %v883 = vadd.f32 %v511, %v882
    %v884 = vpop.f32.mrf.mxu0
    %v885 = vadd.f32 %v511, %v884
    %886 = vmatmul.bf16.gmra.mxu0 %v767
    %v887 = vpop.f32.mrf.mxu0
    %v888 = vadd.f32 %v511, %v887
    %v889 = vpop.f32.mrf.mxu0
    %v890 = vadd.f32 %v511, %v889
    %891 = vmatmul.bf16.gmra.mxu0 %v770
    %v892 = vpop.f32.mrf.mxu0
    %v893 = vadd.f32 %v511, %v892
    %v894 = vpop.f32.mrf.mxu0
    %v895 = vadd.f32 %v511, %v894
    %896 = vmatmul.bf16.gmra.mxu0 %v773
    %v897 = vpop.f32.mrf.mxu0
    %v898 = vadd.f32 %v511, %v897
    %v899 = vpop.f32.mrf.mxu0
    %v900 = vadd.f32 %v511, %v899
    %901 = vmatmul.bf16.gmra.mxu0 %v776
    %v902 = vpop.f32.mrf.mxu0
    %v903 = vadd.f32 %v511, %v902
    %v904 = vpop.f32.mrf.mxu0
    %v905 = vadd.f32 %v511, %v904
    %906 = vmatmul.bf16.gmra.mxu0 %v779
    %v907 = vpop.f32.mrf.mxu0
    %v908 = vadd.f32 %v511, %v907
    %v909 = vpop.f32.mrf.mxu0
    %v910 = vadd.f32 %v511, %v909
    %911 = vmatmul.bf16.gmra.mxu0 %v782
    %v912 = vpop.f32.mrf.mxu0
    %v913 = vadd.f32 %v511, %v912
    %v914 = vpop.f32.mrf.mxu0
    %v915 = vadd.f32 %v511, %v914
    %916 = vmatmul.bf16.gmra.mxu0 %v785
    %v917 = vpop.f32.mrf.mxu0
    %v918 = vadd.f32 %v511, %v917
    %v919 = vpop.f32.mrf.mxu0
    %v920 = vadd.f32 %v511, %v919
    %921 = vmatmul.bf16.gmra.mxu0 %v788
    %v922 = vpop.f32.mrf.mxu0
    %v923 = vadd.f32 %v511, %v922
    %v924 = vpop.f32.mrf.mxu0
    %v925 = vadd.f32 %v511, %v924
    %926 = vmatmul.bf16.gmra.mxu0 %v791
    %v927 = vpop.f32.mrf.mxu0
    %v928 = vadd.f32 %v511, %v927
    %v929 = vpop.f32.mrf.mxu0
    %v930 = vadd.f32 %v511, %v929
    %931 = vmatmul.bf16.gmra.mxu0 %v794
    %v932 = vpop.f32.mrf.mxu0
    %v933 = vadd.f32 %v511, %v932
    %v934 = vpop.f32.mrf.mxu0
    %v935 = vadd.f32 %v511, %v934
    %936 = vmatmul.bf16.gmra.mxu0 %v797
    %v937 = vpop.f32.mrf.mxu0
    %v938 = vadd.f32 %v511, %v937
    %v939 = vpop.f32.mrf.mxu0
    %v940 = vadd.f32 %v511, %v939
    %941 = vmatmul.bf16.gmra.mxu0 %v800
    %v942 = vpop.f32.mrf.mxu0
    %v943 = vadd.f32 %v511, %v942
    %v944 = vpop.f32.mrf.mxu0
    %v945 = vadd.f32 %v511, %v944
    %946 = vmatmul.bf16.gmra.mxu0 %v803
    %v947 = vpop.f32.mrf.mxu0
    %v948 = vadd.f32 %v511, %v947
    %v949 = vpop.f32.mrf.mxu0
    %v950 = vadd.f32 %v511, %v949
    %951 = vmatmul.bf16.gmra.mxu0 %v806
    %v952 = vpop.f32.mrf.mxu0
    %v953 = vadd.f32 %v511, %v952
    %v954 = vpop.f32.mrf.mxu0
    %v955 = vadd.f32 %v511, %v954
    %956 = vmatmul.bf16.gmra.mxu0 %v809
    %v957 = vpop.f32.mrf.mxu0
    %v958 = vadd.f32 %v511, %v957
    %v959 = vpop.f32.mrf.mxu0
    %v960 = vadd.f32 %v511, %v959
    %961 = vmatmul.bf16.gmra.mxu0 %v812
    %v962 = vpop.f32.mrf.mxu0
    %v963 = vadd.f32 %v511, %v962
    %v964 = vpop.f32.mrf.mxu0
    %v965 = vadd.f32 %v511, %v964
    %966 = vmatmul.bf16.gmra.mxu0 %v815
    %v967 = vpop.f32.mrf.mxu0
    %v968 = vadd.f32 %v511, %v967
    %v969 = vpop.f32.mrf.mxu0
    %v970 = vadd.f32 %v511, %v969
    %971 = vmatmul.bf16.gmra.mxu0 %v818
    %v972 = vpop.f32.mrf.mxu0
    %v973 = vadd.f32 %v511, %v972
    %v974 = vpop.f32.mrf.mxu0
    %v975 = vadd.f32 %v511, %v974
    %976 = vmatmul.bf16.gmra.mxu0 %v821
    %v977 = vpop.f32.mrf.mxu0
    %v978 = vadd.f32 %v511, %v977
    %v979 = vpop.f32.mrf.mxu0
    %v980 = vadd.f32 %v511, %v979
    %981 = vmatmul.bf16.gmra.mxu0 %v824
    %v982 = vpop.f32.mrf.mxu0
    %v983 = vadd.f32 %v511, %v982
    %v984 = vpop.f32.mrf.mxu0
    %v985 = vadd.f32 %v511, %v984
    %986 = vmatmul.bf16.gmra.mxu0 %v827
    %v987 = vpop.f32.mrf.mxu0
    %v988 = vadd.f32 %v511, %v987
    %v989 = vpop.f32.mrf.mxu0
    %v990 = vadd.f32 %v511, %v989
    %991 = vmatmul.bf16.gmra.mxu0 %v830
    %v992 = vpop.f32.mrf.mxu0
    %v993 = vadd.f32 %v511, %v992
    %v994 = vpop.f32.mrf.mxu0
    %v995 = vadd.f32 %v511, %v994
    %996 = vmatmul.bf16.gmra.mxu0 %v833
    %v997 = vpop.f32.mrf.mxu0
    %v998 = vadd.f32 %v511, %v997
    %v999 = vpop.f32.mrf.mxu0
    %v1000 = vadd.f32 %v511, %v999
    %1001 = vmatmul.bf16.gmra.mxu0 %v836
    %v1002 = vpop.f32.mrf.mxu0
    %v1003 = vadd.f32 %v511, %v1002
    %v1004 = vpop.f32.mrf.mxu0
    %v1005 = vadd.f32 %v511, %v1004
    %1006 = vdwg.mxu0
    %v1007 = vpack.c.bf16 %v848, %v848
    %v1008 = vpack.c.bf16 %v850, %v850
    %v1009 = vpack.c.bf16 %v853, %v853
    %v1010 = vpack.c.bf16 %v855, %v855
    %v1011 = vpack.c.bf16 %v858, %v858
    %v1012 = vpack.c.bf16 %v860, %v860
    %v1013 = vpack.c.bf16 %v863, %v863
    %v1014 = vpack.c.bf16 %v865, %v865
    %v1015 = vpack.c.bf16 %v868, %v868
    %v1016 = vpack.c.bf16 %v870, %v870
    %v1017 = vpack.c.bf16 %v873, %v873
    %v1018 = vpack.c.bf16 %v875, %v875
    %v1019 = vpack.c.bf16 %v878, %v878
    %v1020 = vpack.c.bf16 %v880, %v880
    %v1021 = vpack.c.bf16 %v883, %v883
    %v1022 = vpack.c.bf16 %v885, %v885
    %v1023 = vpack.c.bf16 %v888, %v888
    %v1024 = vpack.c.bf16 %v890, %v890
    %v1025 = vpack.c.bf16 %v893, %v893
    %v1026 = vpack.c.bf16 %v895, %v895
    %v1027 = vpack.c.bf16 %v898, %v898
    %v1028 = vpack.c.bf16 %v900, %v900
    %v1029 = vpack.c.bf16 %v903, %v903
    %v1030 = vpack.c.bf16 %v905, %v905
    %v1031 = vpack.c.bf16 %v908, %v908
    %v1032 = vpack.c.bf16 %v910, %v910
    %v1033 = vpack.c.bf16 %v913, %v913
    %v1034 = vpack.c.bf16 %v915, %v915
    %v1035 = vpack.c.bf16 %v918, %v918
    %v1036 = vpack.c.bf16 %v920, %v920
    %v1037 = vpack.c.bf16 %v923, %v923
    %v1038 = vpack.c.bf16 %v925, %v925
    %v1039 = vpack.c.bf16 %v928, %v928
    %v1040 = vpack.c.bf16 %v930, %v930
    %v1041 = vpack.c.bf16 %v933, %v933
    %v1042 = vpack.c.bf16 %v935, %v935
    %v1043 = vpack.c.bf16 %v938, %v938
    %v1044 = vpack.c.bf16 %v940, %v940
    %v1045 = vpack.c.bf16 %v943, %v943
    %v1046 = vpack.c.bf16 %v945, %v945
    %v1047 = vpack.c.bf16 %v948, %v948
    %v1048 = vpack.c.bf16 %v950, %v950
    %v1049 = vpack.c.bf16 %v953, %v953
    %v1050 = vpack.c.bf16 %v955, %v955
    %v1051 = vpack.c.bf16 %v958, %v958
    %v1052 = vpack.c.bf16 %v960, %v960
    %v1053 = vpack.c.bf16 %v963, %v963
    %v1054 = vpack.c.bf16 %v965, %v965
    %v1055 = vpack.c.bf16 %v968, %v968
    %v1056 = vpack.c.bf16 %v970, %v970
    %v1057 = vpack.c.bf16 %v973, %v973
    %v1058 = vpack.c.bf16 %v975, %v975
    %v1059 = vpack.c.bf16 %v978, %v978
    %v1060 = vpack.c.bf16 %v980, %v980
    %v1061 = vpack.c.bf16 %v983, %v983
    %v1062 = vpack.c.bf16 %v985, %v985
    %v1063 = vpack.c.bf16 %v988, %v988
    %v1064 = vpack.c.bf16 %v990, %v990
    %v1065 = vpack.c.bf16 %v993, %v993
    %v1066 = vpack.c.bf16 %v995, %v995
    %v1067 = vpack.c.bf16 %v998, %v998
    %v1068 = vpack.c.bf16 %v1000, %v1000
    %v1069 = vpack.c.bf16 %v1003, %v1003
    %v1070 = vpack.c.bf16 %v1005, %v1005
    %v1071 = vld [vmem:[%s7] sm:$0xf]
    %v1072 = vld [vmem:[%s7 + $0x4] sm:$0xf]
    %v1073 = vld [vmem:[%s7 + $0x8] sm:$0xf]
    %v1074 = vld [vmem:[%s7 + $0xc] sm:$0xf]
    %v1075 = vld [vmem:[%s8] sm:$0x3]
    %v1077 = vrot.slane %v581, 3
    %vm1078 = vcmask 1040384
    %v1081 = vsel %vm1078, %v581, %v1077
    %v1083 = vsel %vm530, %v581, %v1077
    %v1085 = vrot.slane %v1083, 1
    %v1086 = vsel %vm533, %v581, %v1077
    %v1088 = vrot.slane %v1086, 2
    %v1089 = vsel %vm536, %v581, %v1077
    %v1091 = vrot.slane %v1089, 3
    %v1092 = vunpack.i.l.s16 %v1081
    %v1093 = vunpack.i.h.s16 %v1081
    %v1094 = vunpack.i.l.s16 %v1085
    %v1095 = vunpack.i.h.s16 %v1085
    %v1096 = vunpack.i.l.s16 %v1088
    %v1097 = vunpack.i.h.s16 %v1088
    %v1098 = vunpack.i.l.s16 %v1091
    %v1099 = vunpack.i.h.s16 %v1091
    %v1100 = vpack.i.b16 %v1092, %v1092
    %v1101 = vpack.i.b16 %v1093, %v1093
    %v1102 = vpack.i.b16 %v1094, %v1094
    %v1103 = vpack.i.b16 %v1095, %v1095
    %v1104 = vpack.i.b16 %v1096, %v1096
    %v1105 = vpack.i.b16 %v1097, %v1097
    %v1106 = vpack.i.b16 %v1098, %v1098
    %v1107 = vpack.i.b16 %v1099, %v1099
    %v1108 = vperm.slane %v1100, 0
    %v1109 = vperm.slane %v1101, 0
    %v1110 = vperm.slane %v1102, 0
    %v1111 = vperm.slane %v1103, 0
    %v1112 = vperm.slane %v1104, 0
    %v1113 = vperm.slane %v1105, 0
    %v1114 = vperm.slane %v1106, 0
    %v1115 = vperm.slane %v1107, 0
    %v1117 = vpack.i.b16 %v1108, %v1108
    %v1119 = vperm.slane %v1117, 0
    %v1121 = vpack.i.b16 %v1109, %v1109
    %v1123 = vperm.slane %v1121, 0
    %v1125 = vpack.i.b16 %v1110, %v1110
    %v1127 = vperm.slane %v1125, 0
    %v1129 = vpack.i.b16 %v1111, %v1111
    %v1131 = vperm.slane %v1129, 0
    %v1133 = vpack.i.b16 %v1112, %v1112
    %v1135 = vperm.slane %v1133, 0
    %v1137 = vpack.i.b16 %v1113, %v1113
    %v1139 = vperm.slane %v1137, 0
    %v1141 = vpack.i.b16 %v1114, %v1114
    %v1143 = vperm.slane %v1141, 0
    %v1145 = vpack.i.b16 %v1115, %v1115
    %v1147 = vperm.slane %v1145, 0
    %v1148 = vunpack.c.l.bf16 %v1119
    %v1149 = vunpack.c.l.bf16 %v1123
    %v1150 = vunpack.c.l.bf16 %v1127
    %v1151 = vunpack.c.l.bf16 %v1131
    %v1152 = vunpack.c.l.bf16 %v1135
    %v1153 = vunpack.c.l.bf16 %v1139
    %v1154 = vunpack.c.l.bf16 %v1143
    %v1155 = vunpack.c.l.bf16 %v1147
    %v1156 = vunpack.c.l.bf16 %v1007
    %v1157 = vunpack.c.l.bf16 %v1008
    %v1158 = vunpack.c.l.bf16 %v1009
    %v1159 = vunpack.c.l.bf16 %v1010
    %v1160 = vunpack.c.l.bf16 %v1011
    %v1161 = vunpack.c.l.bf16 %v1012
    %v1162 = vunpack.c.l.bf16 %v1013
    %v1163 = vunpack.c.l.bf16 %v1014
    %v1164 = vunpack.c.l.bf16 %v1015
    %v1165 = vunpack.c.l.bf16 %v1016
    %v1166 = vunpack.c.l.bf16 %v1017
    %v1167 = vunpack.c.l.bf16 %v1018
    %v1168 = vunpack.c.l.bf16 %v1019
    %v1169 = vunpack.c.l.bf16 %v1020
    %v1170 = vunpack.c.l.bf16 %v1021
    %v1171 = vunpack.c.l.bf16 %v1022
    %v1172 = vunpack.c.l.bf16 %v1023
    %v1173 = vunpack.c.l.bf16 %v1024
    %v1174 = vunpack.c.l.bf16 %v1025
    %v1175 = vunpack.c.l.bf16 %v1026
    %v1176 = vunpack.c.l.bf16 %v1027
    %v1177 = vunpack.c.l.bf16 %v1028
    %v1178 = vunpack.c.l.bf16 %v1029
    %v1179 = vunpack.c.l.bf16 %v1030
    %v1180 = vunpack.c.l.bf16 %v1031
    %v1181 = vunpack.c.l.bf16 %v1032
    %v1182 = vunpack.c.l.bf16 %v1033
    %v1183 = vunpack.c.l.bf16 %v1034
    %v1184 = vunpack.c.l.bf16 %v1035
    %v1185 = vunpack.c.l.bf16 %v1036
    %v1186 = vunpack.c.l.bf16 %v1037
    %v1187 = vunpack.c.l.bf16 %v1038
    %v1188 = vunpack.c.l.bf16 %v1039
    %v1189 = vunpack.c.l.bf16 %v1040
    %v1190 = vunpack.c.l.bf16 %v1041
    %v1191 = vunpack.c.l.bf16 %v1042
    %v1192 = vunpack.c.l.bf16 %v1043
    %v1193 = vunpack.c.l.bf16 %v1044
    %v1194 = vunpack.c.l.bf16 %v1045
    %v1195 = vunpack.c.l.bf16 %v1046
    %v1196 = vunpack.c.l.bf16 %v1047
    %v1197 = vunpack.c.l.bf16 %v1048
    %v1198 = vunpack.c.l.bf16 %v1049
    %v1199 = vunpack.c.l.bf16 %v1050
    %v1200 = vunpack.c.l.bf16 %v1051
    %v1201 = vunpack.c.l.bf16 %v1052
    %v1202 = vunpack.c.l.bf16 %v1053
    %v1203 = vunpack.c.l.bf16 %v1054
    %v1204 = vunpack.c.l.bf16 %v1055
    %v1205 = vunpack.c.l.bf16 %v1056
    %v1206 = vunpack.c.l.bf16 %v1057
    %v1207 = vunpack.c.l.bf16 %v1058
    %v1208 = vunpack.c.l.bf16 %v1059
    %v1209 = vunpack.c.l.bf16 %v1060
    %v1210 = vunpack.c.l.bf16 %v1061
    %v1211 = vunpack.c.l.bf16 %v1062
    %v1212 = vunpack.c.l.bf16 %v1063
    %v1213 = vunpack.c.l.bf16 %v1064
    %v1214 = vunpack.c.l.bf16 %v1065
    %v1215 = vunpack.c.l.bf16 %v1066
    %v1216 = vunpack.c.l.bf16 %v1067
    %v1217 = vunpack.c.l.bf16 %v1068
    %v1218 = vunpack.c.l.bf16 %v1069
    %v1219 = vunpack.c.l.bf16 %v1070
    %1284 = vrot.lane.b32.xlu0 %v1156, 64
    %v1285 = vpop.permute.xlu0 %1284
    %1286 = vrot.lane.b32.xlu0 %v1157, 64
    %v1287 = vpop.permute.xlu0 %1286
    %1288 = vrot.lane.b32.xlu0 %v1158, 64
    %v1289 = vpop.permute.xlu0 %1288
    %1290 = vrot.lane.b32.xlu0 %v1159, 64
    %v1291 = vpop.permute.xlu0 %1290
    %1292 = vrot.lane.b32.xlu0 %v1160, 64
    %v1293 = vpop.permute.xlu0 %1292
    %1294 = vrot.lane.b32.xlu0 %v1161, 64
    %v1295 = vpop.permute.xlu0 %1294
    %1296 = vrot.lane.b32.xlu0 %v1162, 64
    %v1297 = vpop.permute.xlu0 %1296
    %1298 = vrot.lane.b32.xlu0 %v1163, 64
    %v1299 = vpop.permute.xlu0 %1298
    %1300 = vrot.lane.b32.xlu0 %v1164, 64
    %v1301 = vpop.permute.xlu0 %1300
    %1302 = vrot.lane.b32.xlu0 %v1165, 64
    %v1303 = vpop.permute.xlu0 %1302
    %1304 = vrot.lane.b32.xlu0 %v1166, 64
    %v1305 = vpop.permute.xlu0 %1304
    %1306 = vrot.lane.b32.xlu0 %v1167, 64
    %v1307 = vpop.permute.xlu0 %1306
    %1308 = vrot.lane.b32.xlu0 %v1168, 64
    %v1309 = vpop.permute.xlu0 %1308
    %1310 = vrot.lane.b32.xlu0 %v1169, 64
    %v1311 = vpop.permute.xlu0 %1310
    %1312 = vrot.lane.b32.xlu0 %v1170, 64
    %v1313 = vpop.permute.xlu0 %1312
    %1314 = vrot.lane.b32.xlu0 %v1171, 64
    %v1315 = vpop.permute.xlu0 %1314
    %1316 = vrot.lane.b32.xlu0 %v1172, 64
    %v1317 = vpop.permute.xlu0 %1316
    %1318 = vrot.lane.b32.xlu0 %v1173, 64
    %v1319 = vpop.permute.xlu0 %1318
    %1320 = vrot.lane.b32.xlu0 %v1174, 64
    %v1321 = vpop.permute.xlu0 %1320
    %1322 = vrot.lane.b32.xlu0 %v1175, 64
    %v1323 = vpop.permute.xlu0 %1322
    %1324 = vrot.lane.b32.xlu0 %v1176, 64
    %v1325 = vpop.permute.xlu0 %1324
    %1326 = vrot.lane.b32.xlu0 %v1177, 64
    %v1327 = vpop.permute.xlu0 %1326
    %1328 = vrot.lane.b32.xlu0 %v1178, 64
    %v1329 = vpop.permute.xlu0 %1328
    %1330 = vrot.lane.b32.xlu0 %v1179, 64
    %v1331 = vpop.permute.xlu0 %1330
    %1332 = vrot.lane.b32.xlu0 %v1180, 64
    %v1333 = vpop.permute.xlu0 %1332
    %1334 = vrot.lane.b32.xlu0 %v1181, 64
    %v1335 = vpop.permute.xlu0 %1334
    %1336 = vrot.lane.b32.xlu0 %v1182, 64
    %v1337 = vpop.permute.xlu0 %1336
    %1338 = vrot.lane.b32.xlu0 %v1183, 64
    %v1339 = vpop.permute.xlu0 %1338
    %1340 = vrot.lane.b32.xlu0 %v1184, 64
    %v1341 = vpop.permute.xlu0 %1340
    %1342 = vrot.lane.b32.xlu0 %v1185, 64
    %v1343 = vpop.permute.xlu0 %1342
    %1344 = vrot.lane.b32.xlu0 %v1186, 64
    %v1345 = vpop.permute.xlu0 %1344
    %1346 = vrot.lane.b32.xlu0 %v1187, 64
    %v1347 = vpop.permute.xlu0 %1346
    %1348 = vrot.lane.b32.xlu0 %v1188, 64
    %v1349 = vpop.permute.xlu0 %1348
    %1350 = vrot.lane.b32.xlu0 %v1189, 64
    %v1351 = vpop.permute.xlu0 %1350
    %1352 = vrot.lane.b32.xlu0 %v1190, 64
    %v1353 = vpop.permute.xlu0 %1352
    %1354 = vrot.lane.b32.xlu0 %v1191, 64
    %v1355 = vpop.permute.xlu0 %1354
    %1356 = vrot.lane.b32.xlu0 %v1192, 64
    %v1357 = vpop.permute.xlu0 %1356
    %1358 = vrot.lane.b32.xlu0 %v1193, 64
    %v1359 = vpop.permute.xlu0 %1358
    %1360 = vrot.lane.b32.xlu0 %v1194, 64
    %v1361 = vpop.permute.xlu0 %1360
    %1362 = vrot.lane.b32.xlu0 %v1195, 64
    %v1363 = vpop.permute.xlu0 %1362
    %1364 = vrot.lane.b32.xlu0 %v1196, 64
    %v1365 = vpop.permute.xlu0 %1364
    %1366 = vrot.lane.b32.xlu0 %v1197, 64
    %v1367 = vpop.permute.xlu0 %1366
    %1368 = vrot.lane.b32.xlu0 %v1198, 64
    %v1369 = vpop.permute.xlu0 %1368
    %1370 = vrot.lane.b32.xlu0 %v1199, 64
    %v1371 = vpop.permute.xlu0 %1370
    %1372 = vrot.lane.b32.xlu0 %v1200, 64
    %v1373 = vpop.permute.xlu0 %1372
    %1374 = vrot.lane.b32.xlu0 %v1201, 64
    %v1375 = vpop.permute.xlu0 %1374
    %1376 = vrot.lane.b32.xlu0 %v1202, 64
    %v1377 = vpop.permute.xlu0 %1376
    %1378 = vrot.lane.b32.xlu0 %v1203, 64
    %v1379 = vpop.permute.xlu0 %1378
    %1380 = vrot.lane.b32.xlu0 %v1204, 64
    %v1381 = vpop.permute.xlu0 %1380
    %1382 = vrot.lane.b32.xlu0 %v1205, 64
    %v1383 = vpop.permute.xlu0 %1382
    %1384 = vrot.lane.b32.xlu0 %v1206, 64
    %v1385 = vpop.permute.xlu0 %1384
    %1386 = vrot.lane.b32.xlu0 %v1207, 64
    %v1387 = vpop.permute.xlu0 %1386
    %1388 = vrot.lane.b32.xlu0 %v1208, 64
    %v1389 = vpop.permute.xlu0 %1388
    %1390 = vrot.lane.b32.xlu0 %v1209, 64
    %v1391 = vpop.permute.xlu0 %1390
    %1392 = vrot.lane.b32.xlu0 %v1210, 64
    %v1393 = vpop.permute.xlu0 %1392
    %1394 = vrot.lane.b32.xlu0 %v1211, 64
    %v1395 = vpop.permute.xlu0 %1394
    %1396 = vrot.lane.b32.xlu0 %v1212, 64
    %v1397 = vpop.permute.xlu0 %1396
    %1398 = vrot.lane.b32.xlu0 %v1213, 64
    %v1399 = vpop.permute.xlu0 %1398
    %1400 = vrot.lane.b32.xlu0 %v1214, 64
    %v1401 = vpop.permute.xlu0 %1400
    %1402 = vrot.lane.b32.xlu0 %v1215, 64
    %v1403 = vpop.permute.xlu0 %1402
    %1404 = vrot.lane.b32.xlu0 %v1216, 64
    %v1405 = vpop.permute.xlu0 %1404
    %1406 = vrot.lane.b32.xlu0 %v1217, 64
    %v1407 = vpop.permute.xlu0 %1406
    %1408 = vrot.lane.b32.xlu0 %v1218, 64
    %v1409 = vpop.permute.xlu0 %1408
    %1410 = vrot.lane.b32.xlu0 %v1219, 64
    %v1411 = vpop.permute.xlu0 %1410
    %v1476 = vmul.f32 %v1148, %v1285
    %v1477 = vmul.f32 %v1148, %v1287
    %v1478 = vmul.f32 %v1148, %v1289
    %v1479 = vmul.f32 %v1148, %v1291
    %v1480 = vmul.f32 %v1148, %v1293
    %v1481 = vmul.f32 %v1148, %v1295
    %v1482 = vmul.f32 %v1148, %v1297
    %v1483 = vmul.f32 %v1148, %v1299
    %v1484 = vmul.f32 %v1149, %v1301
    %v1485 = vmul.f32 %v1149, %v1303
    %v1486 = vmul.f32 %v1149, %v1305
    %v1487 = vmul.f32 %v1149, %v1307
    %v1488 = vmul.f32 %v1149, %v1309
    %v1489 = vmul.f32 %v1149, %v1311
    %v1490 = vmul.f32 %v1149, %v1313
    %v1491 = vmul.f32 %v1149, %v1315
    %v1492 = vmul.f32 %v1150, %v1317
    %v1493 = vmul.f32 %v1150, %v1319
    %v1494 = vmul.f32 %v1150, %v1321
    %v1495 = vmul.f32 %v1150, %v1323
    %v1496 = vmul.f32 %v1150, %v1325
    %v1497 = vmul.f32 %v1150, %v1327
    %v1498 = vmul.f32 %v1150, %v1329
    %v1499 = vmul.f32 %v1150, %v1331
    %v1500 = vmul.f32 %v1151, %v1333
    %v1501 = vmul.f32 %v1151, %v1335
    %v1502 = vmul.f32 %v1151, %v1337
    %v1503 = vmul.f32 %v1151, %v1339
    %v1504 = vmul.f32 %v1151, %v1341
    %v1505 = vmul.f32 %v1151, %v1343
    %v1506 = vmul.f32 %v1151, %v1345
    %v1507 = vmul.f32 %v1151, %v1347
    %v1508 = vmul.f32 %v1152, %v1349
    %v1509 = vmul.f32 %v1152, %v1351
    %v1510 = vmul.f32 %v1152, %v1353
    %v1511 = vmul.f32 %v1152, %v1355
    %v1512 = vmul.f32 %v1152, %v1357
    %v1513 = vmul.f32 %v1152, %v1359
    %v1514 = vmul.f32 %v1152, %v1361
    %v1515 = vmul.f32 %v1152, %v1363
    %v1516 = vmul.f32 %v1153, %v1365
    %v1517 = vmul.f32 %v1153, %v1367
    %v1518 = vmul.f32 %v1153, %v1369
    %v1519 = vmul.f32 %v1153, %v1371
    %v1520 = vmul.f32 %v1153, %v1373
    %v1521 = vmul.f32 %v1153, %v1375
    %v1522 = vmul.f32 %v1153, %v1377
    %v1523 = vmul.f32 %v1153, %v1379
    %v1524 = vmul.f32 %v1154, %v1381
    %v1525 = vmul.f32 %v1154, %v1383
    %v1526 = vmul.f32 %v1154, %v1385
    %v1527 = vmul.f32 %v1154, %v1387
    %v1528 = vmul.f32 %v1154, %v1389
    %v1529 = vmul.f32 %v1154, %v1391
    %v1530 = vmul.f32 %v1154, %v1393
    %v1531 = vmul.f32 %v1154, %v1395
    %v1532 = vmul.f32 %v1155, %v1397
    %v1533 = vmul.f32 %v1155, %v1399
    %v1534 = vmul.f32 %v1155, %v1401
    %v1535 = vmul.f32 %v1155, %v1403
    %v1536 = vmul.f32 %v1155, %v1405
    %v1537 = vmul.f32 %v1155, %v1407
    %v1538 = vmul.f32 %v1155, %v1409
    %v1539 = vmul.f32 %v1155, %v1411
    %v1540 = vpack.c.bf16 %v1476, %v1476
    %v1541 = vpack.c.bf16 %v1477, %v1477
    %v1542 = vpack.c.bf16 %v1478, %v1478
    %v1543 = vpack.c.bf16 %v1479, %v1479
    %v1544 = vpack.c.bf16 %v1480, %v1480
    %v1545 = vpack.c.bf16 %v1481, %v1481
    %v1546 = vpack.c.bf16 %v1482, %v1482
    %v1547 = vpack.c.bf16 %v1483, %v1483
    %v1548 = vpack.c.bf16 %v1484, %v1484
    %v1549 = vpack.c.bf16 %v1485, %v1485
    %v1550 = vpack.c.bf16 %v1486, %v1486
    %v1551 = vpack.c.bf16 %v1487, %v1487
    %v1552 = vpack.c.bf16 %v1488, %v1488
    %v1553 = vpack.c.bf16 %v1489, %v1489
    %v1554 = vpack.c.bf16 %v1490, %v1490
    %v1555 = vpack.c.bf16 %v1491, %v1491
    %v1556 = vpack.c.bf16 %v1492, %v1492
    %v1557 = vpack.c.bf16 %v1493, %v1493
    %v1558 = vpack.c.bf16 %v1494, %v1494
    %v1559 = vpack.c.bf16 %v1495, %v1495
    %v1560 = vpack.c.bf16 %v1496, %v1496
    %v1561 = vpack.c.bf16 %v1497, %v1497
    %v1562 = vpack.c.bf16 %v1498, %v1498
    %v1563 = vpack.c.bf16 %v1499, %v1499
    %v1564 = vpack.c.bf16 %v1500, %v1500
    %v1565 = vpack.c.bf16 %v1501, %v1501
    %v1566 = vpack.c.bf16 %v1502, %v1502
    %v1567 = vpack.c.bf16 %v1503, %v1503
    %v1568 = vpack.c.bf16 %v1504, %v1504
    %v1569 = vpack.c.bf16 %v1505, %v1505
    %v1570 = vpack.c.bf16 %v1506, %v1506
    %v1571 = vpack.c.bf16 %v1507, %v1507
    %v1572 = vpack.c.bf16 %v1508, %v1508
    %v1573 = vpack.c.bf16 %v1509, %v1509
    %v1574 = vpack.c.bf16 %v1510, %v1510
    %v1575 = vpack.c.bf16 %v1511, %v1511
    %v1576 = vpack.c.bf16 %v1512, %v1512
    %v1577 = vpack.c.bf16 %v1513, %v1513
    %v1578 = vpack.c.bf16 %v1514, %v1514
    %v1579 = vpack.c.bf16 %v1515, %v1515
    %v1580 = vpack.c.bf16 %v1516, %v1516
    %v1581 = vpack.c.bf16 %v1517, %v1517
    %v1582 = vpack.c.bf16 %v1518, %v1518
    %v1583 = vpack.c.bf16 %v1519, %v1519
    %v1584 = vpack.c.bf16 %v1520, %v1520
    %v1585 = vpack.c.bf16 %v1521, %v1521
    %v1586 = vpack.c.bf16 %v1522, %v1522
    %v1587 = vpack.c.bf16 %v1523, %v1523
    %v1588 = vpack.c.bf16 %v1524, %v1524
    %v1589 = vpack.c.bf16 %v1525, %v1525
    %v1590 = vpack.c.bf16 %v1526, %v1526
    %v1591 = vpack.c.bf16 %v1527, %v1527
    %v1592 = vpack.c.bf16 %v1528, %v1528
    %v1593 = vpack.c.bf16 %v1529, %v1529
    %v1594 = vpack.c.bf16 %v1530, %v1530
    %v1595 = vpack.c.bf16 %v1531, %v1531
    %v1596 = vpack.c.bf16 %v1532, %v1532
    %v1597 = vpack.c.bf16 %v1533, %v1533
    %v1598 = vpack.c.bf16 %v1534, %v1534
    %v1599 = vpack.c.bf16 %v1535, %v1535
    %v1600 = vpack.c.bf16 %v1536, %v1536
    %v1601 = vpack.c.bf16 %v1537, %v1537
    %v1602 = vpack.c.bf16 %v1538, %v1538
    %v1603 = vpack.c.bf16 %v1539, %v1539
    %v1668 = vunpack.c.l.b16 %v1540
    %v1669 = vunpack.c.l.b16 %v1541
    %v1670 = vunpack.c.l.b16 %v1542
    %v1671 = vunpack.c.l.b16 %v1543
    %v1672 = vunpack.c.l.b16 %v1544
    %v1673 = vunpack.c.l.b16 %v1545
    %v1674 = vunpack.c.l.b16 %v1546
    %v1675 = vunpack.c.l.b16 %v1547
    %v1676 = vunpack.c.l.b16 %v1548
    %v1677 = vunpack.c.l.b16 %v1549
    %v1678 = vunpack.c.l.b16 %v1550
    %v1679 = vunpack.c.l.b16 %v1551
    %v1680 = vunpack.c.l.b16 %v1552
    %v1681 = vunpack.c.l.b16 %v1553
    %v1682 = vunpack.c.l.b16 %v1554
    %v1683 = vunpack.c.l.b16 %v1555
    %v1684 = vunpack.c.l.b16 %v1556
    %v1685 = vunpack.c.l.b16 %v1557
    %v1686 = vunpack.c.l.b16 %v1558
    %v1687 = vunpack.c.l.b16 %v1559
    %v1688 = vunpack.c.l.b16 %v1560
    %v1689 = vunpack.c.l.b16 %v1561
    %v1690 = vunpack.c.l.b16 %v1562
    %v1691 = vunpack.c.l.b16 %v1563
    %v1692 = vunpack.c.l.b16 %v1564
    %v1693 = vunpack.c.l.b16 %v1565
    %v1694 = vunpack.c.l.b16 %v1566
    %v1695 = vunpack.c.l.b16 %v1567
    %v1696 = vunpack.c.l.b16 %v1568
    %v1697 = vunpack.c.l.b16 %v1569
    %v1698 = vunpack.c.l.b16 %v1570
    %v1699 = vunpack.c.l.b16 %v1571
    %v1700 = vunpack.c.l.b16 %v1572
    %v1701 = vunpack.c.l.b16 %v1573
    %v1702 = vunpack.c.l.b16 %v1574
    %v1703 = vunpack.c.l.b16 %v1575
    %v1704 = vunpack.c.l.b16 %v1576
    %v1705 = vunpack.c.l.b16 %v1577
    %v1706 = vunpack.c.l.b16 %v1578
    %v1707 = vunpack.c.l.b16 %v1579
    %v1708 = vunpack.c.l.b16 %v1580
    %v1709 = vunpack.c.l.b16 %v1581
    %v1710 = vunpack.c.l.b16 %v1582
    %v1711 = vunpack.c.l.b16 %v1583
    %v1712 = vunpack.c.l.b16 %v1584
    %v1713 = vunpack.c.l.b16 %v1585
    %v1714 = vunpack.c.l.b16 %v1586
    %v1715 = vunpack.c.l.b16 %v1587
    %v1716 = vunpack.c.l.b16 %v1588
    %v1717 = vunpack.c.l.b16 %v1589
    %v1718 = vunpack.c.l.b16 %v1590
    %v1719 = vunpack.c.l.b16 %v1591
    %v1720 = vunpack.c.l.b16 %v1592
    %v1721 = vunpack.c.l.b16 %v1593
    %v1722 = vunpack.c.l.b16 %v1594
    %v1723 = vunpack.c.l.b16 %v1595
    %v1724 = vunpack.c.l.b16 %v1596
    %v1725 = vunpack.c.l.b16 %v1597
    %v1726 = vunpack.c.l.b16 %v1598
    %v1727 = vunpack.c.l.b16 %v1599
    %v1728 = vunpack.c.l.b16 %v1600
    %v1729 = vunpack.c.l.b16 %v1601
    %v1730 = vunpack.c.l.b16 %v1602
    %v1731 = vunpack.c.l.b16 %v1603
    %v1732 = vpack.c.b16 %v1669, %v1668
    %v1733 = vpack.c.b16 %v1671, %v1670
    %v1734 = vpack.c.b16 %v1673, %v1672
    %v1735 = vpack.c.b16 %v1675, %v1674
    %v1736 = vpack.c.b16 %v1677, %v1676
    %v1737 = vpack.c.b16 %v1679, %v1678
    %v1738 = vpack.c.b16 %v1681, %v1680
    %v1739 = vpack.c.b16 %v1683, %v1682
    %v1740 = vpack.c.b16 %v1685, %v1684
    %v1741 = vpack.c.b16 %v1687, %v1686
    %v1742 = vpack.c.b16 %v1689, %v1688
    %v1743 = vpack.c.b16 %v1691, %v1690
    %v1744 = vpack.c.b16 %v1693, %v1692
    %v1745 = vpack.c.b16 %v1695, %v1694
    %v1746 = vpack.c.b16 %v1697, %v1696
    %v1747 = vpack.c.b16 %v1699, %v1698
    %v1748 = vpack.c.b16 %v1701, %v1700
    %v1749 = vpack.c.b16 %v1703, %v1702
    %v1750 = vpack.c.b16 %v1705, %v1704
    %v1751 = vpack.c.b16 %v1707, %v1706
    %v1752 = vpack.c.b16 %v1709, %v1708
    %v1753 = vpack.c.b16 %v1711, %v1710
    %v1754 = vpack.c.b16 %v1713, %v1712
    %v1755 = vpack.c.b16 %v1715, %v1714
    %v1756 = vpack.c.b16 %v1717, %v1716
    %v1757 = vpack.c.b16 %v1719, %v1718
    %v1758 = vpack.c.b16 %v1721, %v1720
    %v1759 = vpack.c.b16 %v1723, %v1722
    %v1760 = vpack.c.b16 %v1725, %v1724
    %v1761 = vpack.c.b16 %v1727, %v1726
    %v1762 = vpack.c.b16 %v1729, %v1728
    %v1763 = vpack.c.b16 %v1731, %v1730
    %1764 = vrot.lane.b32.xlu0 %v1732, 64
    %v1765 = vpop.permute.xlu0 %1764
    %1766 = vrot.lane.b32.xlu0 %v1733, 64
    %v1767 = vpop.permute.xlu0 %1766
    %1768 = vrot.lane.b32.xlu0 %v1734, 64
    %v1769 = vpop.permute.xlu0 %1768
    %1770 = vrot.lane.b32.xlu0 %v1735, 64
    %v1771 = vpop.permute.xlu0 %1770
    %1772 = vrot.lane.b32.xlu0 %v1736, 64
    %v1773 = vpop.permute.xlu0 %1772
    %1774 = vrot.lane.b32.xlu0 %v1737, 64
    %v1775 = vpop.permute.xlu0 %1774
    %1776 = vrot.lane.b32.xlu0 %v1738, 64
    %v1777 = vpop.permute.xlu0 %1776
    %1778 = vrot.lane.b32.xlu0 %v1739, 64
    %v1779 = vpop.permute.xlu0 %1778
    %1780 = vrot.lane.b32.xlu0 %v1740, 64
    %v1781 = vpop.permute.xlu0 %1780
    %1782 = vrot.lane.b32.xlu0 %v1741, 64
    %v1783 = vpop.permute.xlu0 %1782
    %1784 = vrot.lane.b32.xlu0 %v1742, 64
    %v1785 = vpop.permute.xlu0 %1784
    %1786 = vrot.lane.b32.xlu0 %v1743, 64
    %v1787 = vpop.permute.xlu0 %1786
    %1788 = vrot.lane.b32.xlu0 %v1744, 64
    %v1789 = vpop.permute.xlu0 %1788
    %1790 = vrot.lane.b32.xlu0 %v1745, 64
    %v1791 = vpop.permute.xlu0 %1790
    %1792 = vrot.lane.b32.xlu0 %v1746, 64
    %v1793 = vpop.permute.xlu0 %1792
    %1794 = vrot.lane.b32.xlu0 %v1747, 64
    %v1795 = vpop.permute.xlu0 %1794
    %1796 = vrot.lane.b32.xlu0 %v1748, 64
    %v1797 = vpop.permute.xlu0 %1796
    %1798 = vrot.lane.b32.xlu0 %v1749, 64
    %v1799 = vpop.permute.xlu0 %1798
    %1800 = vrot.lane.b32.xlu0 %v1750, 64
    %v1801 = vpop.permute.xlu0 %1800
    %1802 = vrot.lane.b32.xlu0 %v1751, 64
    %v1803 = vpop.permute.xlu0 %1802
    %1804 = vrot.lane.b32.xlu0 %v1752, 64
    %v1805 = vpop.permute.xlu0 %1804
    %1806 = vrot.lane.b32.xlu0 %v1753, 64
    %v1807 = vpop.permute.xlu0 %1806
    %1808 = vrot.lane.b32.xlu0 %v1754, 64
    %v1809 = vpop.permute.xlu0 %1808
    %1810 = vrot.lane.b32.xlu0 %v1755, 64
    %v1811 = vpop.permute.xlu0 %1810
    %1812 = vrot.lane.b32.xlu0 %v1756, 64
    %v1813 = vpop.permute.xlu0 %1812
    %1814 = vrot.lane.b32.xlu0 %v1757, 64
    %v1815 = vpop.permute.xlu0 %1814
    %1816 = vrot.lane.b32.xlu0 %v1758, 64
    %v1817 = vpop.permute.xlu0 %1816
    %1818 = vrot.lane.b32.xlu0 %v1759, 64
    %v1819 = vpop.permute.xlu0 %1818
    %1820 = vrot.lane.b32.xlu0 %v1760, 64
    %v1821 = vpop.permute.xlu0 %1820
    %1822 = vrot.lane.b32.xlu0 %v1761, 64
    %v1823 = vpop.permute.xlu0 %1822
    %1824 = vrot.lane.b32.xlu0 %v1762, 64
    %v1825 = vpop.permute.xlu0 %1824
    %1826 = vrot.lane.b32.xlu0 %v1763, 64
    %v1827 = vpop.permute.xlu0 %1826
    %v1832 = vunpack.c.l.b16 %v1071
    %v1833 = vunpack.c.l.b16 %v1072
    %v1834 = vunpack.c.l.b16 %v1073
    %v1835 = vunpack.c.l.b16 %v1074
    %v1836 = vpack.c.b16 %v1833, %v1832
    %v1837 = vpack.c.b16 %v1835, %v1834
    %v1841 = vsel %vm165, %v1765, 0
    %v1844 = vsel %vm165, %v1767, 0
    %v1847 = vsel %vm165, %v1769, 0
    %v1850 = vsel %vm165, %v1771, 0
    %v1853 = vsel %vm165, %v1773, 0
    %v1856 = vsel %vm165, %v1775, 0
    %v1859 = vsel %vm165, %v1777, 0
    %v1862 = vsel %vm165, %v1779, 0
    %v1865 = vsel %vm165, %v1781, 0
    %v1868 = vsel %vm165, %v1783, 0
    %v1871 = vsel %vm165, %v1785, 0
    %v1874 = vsel %vm165, %v1787, 0
    %v1877 = vsel %vm165, %v1789, 0
    %v1880 = vsel %vm165, %v1791, 0
    %v1883 = vsel %vm165, %v1793, 0
    %v1886 = vsel %vm165, %v1795, 0
    %v1889 = vsel %vm165, %v1797, 0
    %v1892 = vsel %vm165, %v1799, 0
    %v1895 = vsel %vm165, %v1801, 0
    %v1898 = vsel %vm165, %v1803, 0
    %v1901 = vsel %vm165, %v1805, 0
    %v1904 = vsel %vm165, %v1807, 0
    %v1907 = vsel %vm165, %v1809, 0
    %v1910 = vsel %vm165, %v1811, 0
    %v1913 = vsel %vm165, %v1813, 0
    %v1916 = vsel %vm165, %v1815, 0
    %v1919 = vsel %vm165, %v1817, 0
    %v1922 = vsel %vm165, %v1819, 0
    %v1925 = vsel %vm165, %v1821, 0
    %v1928 = vsel %vm165, %v1823, 0
    %v1931 = vsel %vm165, %v1825, 0
    %v1934 = vsel %vm165, %v1827, 0
    %1936 = vmatpush.bf16.msra.mxu0 0
    %1937 = vmatpush.bf16.msra.mxu0 0
    %1938 = vmatpush.bf16.msra.mxu0 0
    %1939 = vmatpush.bf16.msra.mxu0 0
    %1940 = vmatpush.bf16.msra.mxu0 0
    %1941 = vmatpush.bf16.msra.mxu0 0
    %1942 = vmatpush.bf16.msra.mxu0 %v1837
    %1943 = vmatpush.bf16.msra.mxu0 %v1836
    %1944 = vmatmul.bf16.gmra.mxu0 %v1841
    %v1945 = vpop.f32.mrf.mxu0
    %v1946 = vadd.f32 0.0, %v1945
    %v1947 = vpop.f32.mrf.mxu0
    %v1948 = vadd.f32 0.0, %v1947
    %1949 = vmatmul.bf16.gmra.mxu0 %v1844
    %v1950 = vpop.f32.mrf.mxu0
    %v1951 = vadd.f32 0.0, %v1950
    %v1952 = vpop.f32.mrf.mxu0
    %v1953 = vadd.f32 0.0, %v1952
    %1954 = vmatmul.bf16.gmra.mxu0 %v1847
    %v1955 = vpop.f32.mrf.mxu0
    %v1956 = vadd.f32 0.0, %v1955
    %v1957 = vpop.f32.mrf.mxu0
    %v1958 = vadd.f32 0.0, %v1957
    %1959 = vmatmul.bf16.gmra.mxu0 %v1850
    %v1960 = vpop.f32.mrf.mxu0
    %v1961 = vadd.f32 0.0, %v1960
    %v1962 = vpop.f32.mrf.mxu0
    %v1963 = vadd.f32 0.0, %v1962
    %1964 = vmatmul.bf16.gmra.mxu0 %v1853
    %v1965 = vpop.f32.mrf.mxu0
    %v1966 = vadd.f32 0.0, %v1965
    %v1967 = vpop.f32.mrf.mxu0
    %v1968 = vadd.f32 0.0, %v1967
    %1969 = vmatmul.bf16.gmra.mxu0 %v1856
    %v1970 = vpop.f32.mrf.mxu0
    %v1971 = vadd.f32 0.0, %v1970
    %v1972 = vpop.f32.mrf.mxu0
    %v1973 = vadd.f32 0.0, %v1972
    %1974 = vmatmul.bf16.gmra.mxu0 %v1859
    %v1975 = vpop.f32.mrf.mxu0
    %v1976 = vadd.f32 0.0, %v1975
    %v1977 = vpop.f32.mrf.mxu0
    %v1978 = vadd.f32 0.0, %v1977
    %1979 = vmatmul.bf16.gmra.mxu0 %v1862
    %v1980 = vpop.f32.mrf.mxu0
    %v1981 = vadd.f32 0.0, %v1980
    %v1982 = vpop.f32.mrf.mxu0
    %v1983 = vadd.f32 0.0, %v1982
    %1984 = vmatmul.bf16.gmra.mxu0 %v1865
    %v1985 = vpop.f32.mrf.mxu0
    %v1986 = vadd.f32 0.0, %v1985
    %v1987 = vpop.f32.mrf.mxu0
    %v1988 = vadd.f32 0.0, %v1987
    %1989 = vmatmul.bf16.gmra.mxu0 %v1868
    %v1990 = vpop.f32.mrf.mxu0
    %v1991 = vadd.f32 0.0, %v1990
    %v1992 = vpop.f32.mrf.mxu0
    %v1993 = vadd.f32 0.0, %v1992
    %1994 = vmatmul.bf16.gmra.mxu0 %v1871
    %v1995 = vpop.f32.mrf.mxu0
    %v1996 = vadd.f32 0.0, %v1995
    %v1997 = vpop.f32.mrf.mxu0
    %v1998 = vadd.f32 0.0, %v1997
    %1999 = vmatmul.bf16.gmra.mxu0 %v1874
    %v2000 = vpop.f32.mrf.mxu0
    %v2001 = vadd.f32 0.0, %v2000
    %v2002 = vpop.f32.mrf.mxu0
    %v2003 = vadd.f32 0.0, %v2002
    %2004 = vmatmul.bf16.gmra.mxu0 %v1877
    %v2005 = vpop.f32.mrf.mxu0
    %v2006 = vadd.f32 0.0, %v2005
    %v2007 = vpop.f32.mrf.mxu0
    %v2008 = vadd.f32 0.0, %v2007
    %2009 = vmatmul.bf16.gmra.mxu0 %v1880
    %v2010 = vpop.f32.mrf.mxu0
    %v2011 = vadd.f32 0.0, %v2010
    %v2012 = vpop.f32.mrf.mxu0
    %v2013 = vadd.f32 0.0, %v2012
    %2014 = vmatmul.bf16.gmra.mxu0 %v1883
    %v2015 = vpop.f32.mrf.mxu0
    %v2016 = vadd.f32 0.0, %v2015
    %v2017 = vpop.f32.mrf.mxu0
    %v2018 = vadd.f32 0.0, %v2017
    %2019 = vmatmul.bf16.gmra.mxu0 %v1886
    %v2020 = vpop.f32.mrf.mxu0
    %v2021 = vadd.f32 0.0, %v2020
    %v2022 = vpop.f32.mrf.mxu0
    %v2023 = vadd.f32 0.0, %v2022
    %2024 = vmatmul.bf16.gmra.mxu0 %v1889
    %v2025 = vpop.f32.mrf.mxu0
    %v2026 = vadd.f32 0.0, %v2025
    %v2027 = vpop.f32.mrf.mxu0
    %v2028 = vadd.f32 0.0, %v2027
    %2029 = vmatmul.bf16.gmra.mxu0 %v1892
    %v2030 = vpop.f32.mrf.mxu0
    %v2031 = vadd.f32 0.0, %v2030
    %v2032 = vpop.f32.mrf.mxu0
    %v2033 = vadd.f32 0.0, %v2032
    %2034 = vmatmul.bf16.gmra.mxu0 %v1895
    %v2035 = vpop.f32.mrf.mxu0
    %v2036 = vadd.f32 0.0, %v2035
    %v2037 = vpop.f32.mrf.mxu0
    %v2038 = vadd.f32 0.0, %v2037
    %2039 = vmatmul.bf16.gmra.mxu0 %v1898
    %v2040 = vpop.f32.mrf.mxu0
    %v2041 = vadd.f32 0.0, %v2040
    %v2042 = vpop.f32.mrf.mxu0
    %v2043 = vadd.f32 0.0, %v2042
    %2044 = vmatmul.bf16.gmra.mxu0 %v1901
    %v2045 = vpop.f32.mrf.mxu0
    %v2046 = vadd.f32 0.0, %v2045
    %v2047 = vpop.f32.mrf.mxu0
    %v2048 = vadd.f32 0.0, %v2047
    %2049 = vmatmul.bf16.gmra.mxu0 %v1904
    %v2050 = vpop.f32.mrf.mxu0
    %v2051 = vadd.f32 0.0, %v2050
    %v2052 = vpop.f32.mrf.mxu0
    %v2053 = vadd.f32 0.0, %v2052
    %2054 = vmatmul.bf16.gmra.mxu0 %v1907
    %v2055 = vpop.f32.mrf.mxu0
    %v2056 = vadd.f32 0.0, %v2055
    %v2057 = vpop.f32.mrf.mxu0
    %v2058 = vadd.f32 0.0, %v2057
    %2059 = vmatmul.bf16.gmra.mxu0 %v1910
    %v2060 = vpop.f32.mrf.mxu0
    %v2061 = vadd.f32 0.0, %v2060
    %v2062 = vpop.f32.mrf.mxu0
    %v2063 = vadd.f32 0.0, %v2062
    %2064 = vmatmul.bf16.gmra.mxu0 %v1913
    %v2065 = vpop.f32.mrf.mxu0
    %v2066 = vadd.f32 0.0, %v2065
    %v2067 = vpop.f32.mrf.mxu0
    %v2068 = vadd.f32 0.0, %v2067
    %2069 = vmatmul.bf16.gmra.mxu0 %v1916
    %v2070 = vpop.f32.mrf.mxu0
    %v2071 = vadd.f32 0.0, %v2070
    %v2072 = vpop.f32.mrf.mxu0
    %v2073 = vadd.f32 0.0, %v2072
    %2074 = vmatmul.bf16.gmra.mxu0 %v1919
    %v2075 = vpop.f32.mrf.mxu0
    %v2076 = vadd.f32 0.0, %v2075
    %v2077 = vpop.f32.mrf.mxu0
    %v2078 = vadd.f32 0.0, %v2077
    %2079 = vmatmul.bf16.gmra.mxu0 %v1922
    %v2080 = vpop.f32.mrf.mxu0
    %v2081 = vadd.f32 0.0, %v2080
    %v2082 = vpop.f32.mrf.mxu0
    %v2083 = vadd.f32 0.0, %v2082
    %2084 = vmatmul.bf16.gmra.mxu0 %v1925
    %v2085 = vpop.f32.mrf.mxu0
    %v2086 = vadd.f32 0.0, %v2085
    %v2087 = vpop.f32.mrf.mxu0
    %v2088 = vadd.f32 0.0, %v2087
    %2089 = vmatmul.bf16.gmra.mxu0 %v1928
    %v2090 = vpop.f32.mrf.mxu0
    %v2091 = vadd.f32 0.0, %v2090
    %v2092 = vpop.f32.mrf.mxu0
    %v2093 = vadd.f32 0.0, %v2092
    %2094 = vmatmul.bf16.gmra.mxu0 %v1931
    %v2095 = vpop.f32.mrf.mxu0
    %v2096 = vadd.f32 0.0, %v2095
    %v2097 = vpop.f32.mrf.mxu0
    %v2098 = vadd.f32 0.0, %v2097
    %2099 = vmatmul.bf16.gmra.mxu0 %v1934
    %v2100 = vpop.f32.mrf.mxu0
    %v2101 = vadd.f32 0.0, %v2100
    %v2102 = vpop.f32.mrf.mxu0
    %v2103 = vadd.f32 0.0, %v2102
    %2104 = vdwg.mxu0
    %v2105 = vld [vmem:[%s9] sm:$0xff]
    %v2106 = vld [vmem:[%s9 + $0x8] sm:$0xff]
    %v2107 = vld [vmem:[%s9 + $0x10] sm:$0xff]
    %v2108 = vld [vmem:[%s9 + $0x18] sm:$0xff]
    %v2109 = vld [vmem:[%s9 + $0x20] sm:$0xff]
    %v2110 = vld [vmem:[%s9 + $0x28] sm:$0xff]
    %v2111 = vld [vmem:[%s9 + $0x30] sm:$0xff]
    %v2112 = vld [vmem:[%s9 + $0x38] sm:$0xff]
    %v2113 = vadd.f32 %v1946, %v2105
    %v2114 = vadd.f32 %v1948, %v2106
    %v2115 = vadd.f32 %v1951, %v2107
    %v2116 = vadd.f32 %v1953, %v2108
    %v2117 = vadd.f32 %v1956, %v2109
    %v2118 = vadd.f32 %v1958, %v2110
    %v2119 = vadd.f32 %v1961, %v2111
    %v2120 = vadd.f32 %v1963, %v2112
    %v2121 = vadd.f32 %v1966, %v2105
    %v2122 = vadd.f32 %v1968, %v2106
    %v2123 = vadd.f32 %v1971, %v2107
    %v2124 = vadd.f32 %v1973, %v2108
    %v2125 = vadd.f32 %v1976, %v2109
    %v2126 = vadd.f32 %v1978, %v2110
    %v2127 = vadd.f32 %v1981, %v2111
    %v2128 = vadd.f32 %v1983, %v2112
    %v2129 = vadd.f32 %v1986, %v2105
    %v2130 = vadd.f32 %v1988, %v2106
    %v2131 = vadd.f32 %v1991, %v2107
    %v2132 = vadd.f32 %v1993, %v2108
    %v2133 = vadd.f32 %v1996, %v2109
    %v2134 = vadd.f32 %v1998, %v2110
    %v2135 = vadd.f32 %v2001, %v2111
    %v2136 = vadd.f32 %v2003, %v2112
    %v2137 = vadd.f32 %v2006, %v2105
    %v2138 = vadd.f32 %v2008, %v2106
    %v2139 = vadd.f32 %v2011, %v2107
    %v2140 = vadd.f32 %v2013, %v2108
    %v2141 = vadd.f32 %v2016, %v2109
    %v2142 = vadd.f32 %v2018, %v2110
    %v2143 = vadd.f32 %v2021, %v2111
    %v2144 = vadd.f32 %v2023, %v2112
    %v2145 = vadd.f32 %v2026, %v2105
    %v2146 = vadd.f32 %v2028, %v2106
    %v2147 = vadd.f32 %v2031, %v2107
    %v2148 = vadd.f32 %v2033, %v2108
    %v2149 = vadd.f32 %v2036, %v2109
    %v2150 = vadd.f32 %v2038, %v2110
    %v2151 = vadd.f32 %v2041, %v2111
    %v2152 = vadd.f32 %v2043, %v2112
    %v2153 = vadd.f32 %v2046, %v2105
    %v2154 = vadd.f32 %v2048, %v2106
    %v2155 = vadd.f32 %v2051, %v2107
    %v2156 = vadd.f32 %v2053, %v2108
    %v2157 = vadd.f32 %v2056, %v2109
    %v2158 = vadd.f32 %v2058, %v2110
    %v2159 = vadd.f32 %v2061, %v2111
    %v2160 = vadd.f32 %v2063, %v2112
    %v2161 = vadd.f32 %v2066, %v2105
    %v2162 = vadd.f32 %v2068, %v2106
    %v2163 = vadd.f32 %v2071, %v2107
    %v2164 = vadd.f32 %v2073, %v2108
    %v2165 = vadd.f32 %v2076, %v2109
    %v2166 = vadd.f32 %v2078, %v2110
    %v2167 = vadd.f32 %v2081, %v2111
    %v2168 = vadd.f32 %v2083, %v2112
    %v2169 = vadd.f32 %v2086, %v2105
    %v2170 = vadd.f32 %v2088, %v2106
    %v2171 = vadd.f32 %v2091, %v2107
    %v2172 = vadd.f32 %v2093, %v2108
    %v2173 = vadd.f32 %v2096, %v2109
    %v2174 = vadd.f32 %v2098, %v2110
    %v2175 = vadd.f32 %v2101, %v2111
    %v2176 = vadd.f32 %v2103, %v2112
    %v2177 = vunpack.c.l.bf16 %v581
    %v2178 = vunpack.c.l.bf16 %v579
    %2180 = vrot.lane.b32.xlu0 %v2178, 64
    %v2181 = vpop.permute.xlu0 %2180
    %v2183 = vmul.f32 %v2177, %v2181
    %v2184 = vpack.c.bf16 %v2183, %v2183
    %2186 = vrot.lane.b32.xlu0 %v2184, 64
    %v2187 = vpop.permute.xlu0 %2186
    %v2189 = vsel %vm165, %v2187, 0
    %2191 = vmatpush.bf16.msra.mxu0 0
    %2192 = vmatpush.bf16.msra.mxu0 0
    %2193 = vmatpush.bf16.msra.mxu0 0
    %2194 = vmatpush.bf16.msra.mxu0 0
    %2195 = vmatpush.bf16.msra.mxu0 0
    %2196 = vmatpush.bf16.msra.mxu0 0
    %2197 = vmatpush.bf16.msra.mxu0 %v1837
    %2198 = vmatpush.bf16.msra.mxu0 %v1836
    %2199 = vmatmul.bf16.gmra.mxu0 %v2189
    %v2200 = vpop.f32.mrf.mxu0
    %v2201 = vadd.f32 0.0, %v2200
    %v2202 = vpop.f32.mrf.mxu0
    %2203 = vdwg.mxu0
    %v2205 = vrot.slane %v2201, 1
    %v2206 = vrot.slane %v2201, 2
    %v2207 = vrot.slane %v2201, 3
    %v2208 = vrot.slane %v2201, 4
    %v2209 = vrot.slane %v2201, 5
    %v2210 = vrot.slane %v2201, 6
    %v2211 = vrot.slane %v2201, 7
    %vm2219 = vcmask 31744
    %v2220 = vsel %vm2219, %v2113, -inf
    %v2221 = vsel %vm2219, %v2114, -inf
    %v2222 = vmax.f32 %v2220, %v2221
    %v2223 = vsel %vm2219, %v2115, -inf
    %v2224 = vmax.f32 %v2222, %v2223
    %v2225 = vsel %vm2219, %v2116, -inf
    %v2226 = vmax.f32 %v2224, %v2225
    %v2227 = vsel %vm2219, %v2117, -inf
    %v2228 = vmax.f32 %v2226, %v2227
    %v2229 = vsel %vm2219, %v2118, -inf
    %v2230 = vmax.f32 %v2228, %v2229
    %v2231 = vsel %vm2219, %v2119, -inf
    %v2232 = vmax.f32 %v2230, %v2231
    %v2233 = vsel %vm2219, %v2120, -inf
    %v2234 = vmax.f32 %v2232, %v2233
    %v2235 = vrot.slane %v2234, 4
    %v2236 = vmax.f32 %v2234, %v2235
    %v2237 = vrot.slane %v2236, 2
    %v2238 = vmax.f32 %v2236, %v2237
    %v2239 = vrot.slane %v2238, 1
    %v2240 = vmax.f32 %v2238, %v2239
    %v2241 = vsel %vm2219, %v2121, -inf
    %v2242 = vsel %vm2219, %v2122, -inf
    %v2243 = vmax.f32 %v2241, %v2242
    %v2244 = vsel %vm2219, %v2123, -inf
    %v2245 = vmax.f32 %v2243, %v2244
    %v2246 = vsel %vm2219, %v2124, -inf
    %v2247 = vmax.f32 %v2245, %v2246
    %v2248 = vsel %vm2219, %v2125, -inf
    %v2249 = vmax.f32 %v2247, %v2248
    %v2250 = vsel %vm2219, %v2126, -inf
    %v2251 = vmax.f32 %v2249, %v2250
    %v2252 = vsel %vm2219, %v2127, -inf
    %v2253 = vmax.f32 %v2251, %v2252
    %v2254 = vsel %vm2219, %v2128, -inf
    %v2255 = vmax.f32 %v2253, %v2254
    %v2256 = vrot.slane %v2255, 4
    %v2257 = vmax.f32 %v2255, %v2256
    %v2258 = vrot.slane %v2257, 2
    %v2259 = vmax.f32 %v2257, %v2258
    %v2260 = vrot.slane %v2259, 1
    %v2261 = vmax.f32 %v2259, %v2260
    %v2262 = vsel %vm2219, %v2129, -inf
    %v2263 = vsel %vm2219, %v2130, -inf
    %v2264 = vmax.f32 %v2262, %v2263
    %v2265 = vsel %vm2219, %v2131, -inf
    %v2266 = vmax.f32 %v2264, %v2265
    %v2267 = vsel %vm2219, %v2132, -inf
    %v2268 = vmax.f32 %v2266, %v2267
    %v2269 = vsel %vm2219, %v2133, -inf
    %v2270 = vmax.f32 %v2268, %v2269
    %v2271 = vsel %vm2219, %v2134, -inf
    %v2272 = vmax.f32 %v2270, %v2271
    %v2273 = vsel %vm2219, %v2135, -inf
    %v2274 = vmax.f32 %v2272, %v2273
    %v2275 = vsel %vm2219, %v2136, -inf
    %v2276 = vmax.f32 %v2274, %v2275
    %v2277 = vrot.slane %v2276, 4
    %v2278 = vmax.f32 %v2276, %v2277
    %v2279 = vrot.slane %v2278, 2
    %v2280 = vmax.f32 %v2278, %v2279
    %v2281 = vrot.slane %v2280, 1
    %v2282 = vmax.f32 %v2280, %v2281
    %v2283 = vsel %vm2219, %v2137, -inf
    %v2284 = vsel %vm2219, %v2138, -inf
    %v2285 = vmax.f32 %v2283, %v2284
    %v2286 = vsel %vm2219, %v2139, -inf
    %v2287 = vmax.f32 %v2285, %v2286
    %v2288 = vsel %vm2219, %v2140, -inf
    %v2289 = vmax.f32 %v2287, %v2288
    %v2290 = vsel %vm2219, %v2141, -inf
    %v2291 = vmax.f32 %v2289, %v2290
    %v2292 = vsel %vm2219, %v2142, -inf
    %v2293 = vmax.f32 %v2291, %v2292
    %v2294 = vsel %vm2219, %v2143, -inf
    %v2295 = vmax.f32 %v2293, %v2294
    %v2296 = vsel %vm2219, %v2144, -inf
    %v2297 = vmax.f32 %v2295, %v2296
    %v2298 = vrot.slane %v2297, 4
    %v2299 = vmax.f32 %v2297, %v2298
    %v2300 = vrot.slane %v2299, 2
    %v2301 = vmax.f32 %v2299, %v2300
    %v2302 = vrot.slane %v2301, 1
    %v2303 = vmax.f32 %v2301, %v2302
    %v2304 = vsel %vm2219, %v2145, -inf
    %v2305 = vsel %vm2219, %v2146, -inf
    %v2306 = vmax.f32 %v2304, %v2305
    %v2307 = vsel %vm2219, %v2147, -inf
    %v2308 = vmax.f32 %v2306, %v2307
    %v2309 = vsel %vm2219, %v2148, -inf
    %v2310 = vmax.f32 %v2308, %v2309
    %v2311 = vsel %vm2219, %v2149, -inf
    %v2312 = vmax.f32 %v2310, %v2311
    %v2313 = vsel %vm2219, %v2150, -inf
    %v2314 = vmax.f32 %v2312, %v2313
    %v2315 = vsel %vm2219, %v2151, -inf
    %v2316 = vmax.f32 %v2314, %v2315
    %v2317 = vsel %vm2219, %v2152, -inf
    %v2318 = vmax.f32 %v2316, %v2317
    %v2319 = vrot.slane %v2318, 4
    %v2320 = vmax.f32 %v2318, %v2319
    %v2321 = vrot.slane %v2320, 2
    %v2322 = vmax.f32 %v2320, %v2321
    %v2323 = vrot.slane %v2322, 1
    %v2324 = vmax.f32 %v2322, %v2323
    %v2325 = vsel %vm2219, %v2153, -inf
    %v2326 = vsel %vm2219, %v2154, -inf
    %v2327 = vmax.f32 %v2325, %v2326
    %v2328 = vsel %vm2219, %v2155, -inf
    %v2329 = vmax.f32 %v2327, %v2328
    %v2330 = vsel %vm2219, %v2156, -inf
    %v2331 = vmax.f32 %v2329, %v2330
    %v2332 = vsel %vm2219, %v2157, -inf
    %v2333 = vmax.f32 %v2331, %v2332
    %v2334 = vsel %vm2219, %v2158, -inf
    %v2335 = vmax.f32 %v2333, %v2334
    %v2336 = vsel %vm2219, %v2159, -inf
    %v2337 = vmax.f32 %v2335, %v2336
    %v2338 = vsel %vm2219, %v2160, -inf
    %v2339 = vmax.f32 %v2337, %v2338
    %v2340 = vrot.slane %v2339, 4
    %v2341 = vmax.f32 %v2339, %v2340
    %v2342 = vrot.slane %v2341, 2
    %v2343 = vmax.f32 %v2341, %v2342
    %v2344 = vrot.slane %v2343, 1
    %v2345 = vmax.f32 %v2343, %v2344
    %v2346 = vsel %vm2219, %v2161, -inf
    %v2347 = vsel %vm2219, %v2162, -inf
    %v2348 = vmax.f32 %v2346, %v2347
    %v2349 = vsel %vm2219, %v2163, -inf
    %v2350 = vmax.f32 %v2348, %v2349
    %v2351 = vsel %vm2219, %v2164, -inf
    %v2352 = vmax.f32 %v2350, %v2351
    %v2353 = vsel %vm2219, %v2165, -inf
    %v2354 = vmax.f32 %v2352, %v2353
    %v2355 = vsel %vm2219, %v2166, -inf
    %v2356 = vmax.f32 %v2354, %v2355
    %v2357 = vsel %vm2219, %v2167, -inf
    %v2358 = vmax.f32 %v2356, %v2357
    %v2359 = vsel %vm2219, %v2168, -inf
    %v2360 = vmax.f32 %v2358, %v2359
    %v2361 = vrot.slane %v2360, 4
    %v2362 = vmax.f32 %v2360, %v2361
    %v2363 = vrot.slane %v2362, 2
    %v2364 = vmax.f32 %v2362, %v2363
    %v2365 = vrot.slane %v2364, 1
    %v2366 = vmax.f32 %v2364, %v2365
    %v2367 = vsel %vm2219, %v2169, -inf
    %v2368 = vsel %vm2219, %v2170, -inf
    %v2369 = vmax.f32 %v2367, %v2368
    %v2370 = vsel %vm2219, %v2171, -inf
    %v2371 = vmax.f32 %v2369, %v2370
    %v2372 = vsel %vm2219, %v2172, -inf
    %v2373 = vmax.f32 %v2371, %v2372
    %v2374 = vsel %vm2219, %v2173, -inf
    %v2375 = vmax.f32 %v2373, %v2374
    %v2376 = vsel %vm2219, %v2174, -inf
    %v2377 = vmax.f32 %v2375, %v2376
    %v2378 = vsel %vm2219, %v2175, -inf
    %v2379 = vmax.f32 %v2377, %v2378
    %v2380 = vsel %vm2219, %v2176, -inf
    %v2381 = vmax.f32 %v2379, %v2380
    %v2382 = vrot.slane %v2381, 4
    %v2383 = vmax.f32 %v2381, %v2382
    %v2384 = vrot.slane %v2383, 2
    %v2385 = vmax.f32 %v2383, %v2384
    %v2386 = vrot.slane %v2385, 1
    %v2387 = vmax.f32 %v2385, %v2386
    %v2388 = vmax.f32 %v2240, %v2201
    %v2389 = vmax.f32 %v2261, %v2205
    %v2390 = vmax.f32 %v2282, %v2206
    %v2391 = vmax.f32 %v2303, %v2207
    %v2392 = vmax.f32 %v2324, %v2208
    %v2393 = vmax.f32 %v2345, %v2209
    %v2394 = vmax.f32 %v2366, %v2210
    %v2395 = vmax.f32 %v2387, %v2211
    %v2396 = vperm.slane %v2388, 0
    %v2397 = vperm.slane %v2389, 0
    %v2398 = vperm.slane %v2390, 0
    %v2399 = vperm.slane %v2391, 0
    %v2400 = vperm.slane %v2392, 0
    %v2401 = vperm.slane %v2393, 0
    %v2402 = vperm.slane %v2394, 0
    %v2403 = vperm.slane %v2395, 0
    %v2404 = vsub.f32 %v2113, %v2396
    %v2405 = vsub.f32 %v2114, %v2396
    %v2406 = vsub.f32 %v2115, %v2396
    %v2407 = vsub.f32 %v2116, %v2396
    %v2408 = vsub.f32 %v2117, %v2396
    %v2409 = vsub.f32 %v2118, %v2396
    %v2410 = vsub.f32 %v2119, %v2396
    %v2411 = vsub.f32 %v2120, %v2396
    %v2412 = vsub.f32 %v2121, %v2397
    %v2413 = vsub.f32 %v2122, %v2397
    %v2414 = vsub.f32 %v2123, %v2397
    %v2415 = vsub.f32 %v2124, %v2397
    %v2416 = vsub.f32 %v2125, %v2397
    %v2417 = vsub.f32 %v2126, %v2397
    %v2418 = vsub.f32 %v2127, %v2397
    %v2419 = vsub.f32 %v2128, %v2397
    %v2420 = vsub.f32 %v2129, %v2398
    %v2421 = vsub.f32 %v2130, %v2398
    %v2422 = vsub.f32 %v2131, %v2398
    %v2423 = vsub.f32 %v2132, %v2398
    %v2424 = vsub.f32 %v2133, %v2398
    %v2425 = vsub.f32 %v2134, %v2398
    %v2426 = vsub.f32 %v2135, %v2398
    %v2427 = vsub.f32 %v2136, %v2398
    %v2428 = vsub.f32 %v2137, %v2399
    %v2429 = vsub.f32 %v2138, %v2399
    %v2430 = vsub.f32 %v2139, %v2399
    %v2431 = vsub.f32 %v2140, %v2399
    %v2432 = vsub.f32 %v2141, %v2399
    %v2433 = vsub.f32 %v2142, %v2399
    %v2434 = vsub.f32 %v2143, %v2399
    %v2435 = vsub.f32 %v2144, %v2399
    %v2436 = vsub.f32 %v2145, %v2400
    %v2437 = vsub.f32 %v2146, %v2400
    %v2438 = vsub.f32 %v2147, %v2400
    %v2439 = vsub.f32 %v2148, %v2400
    %v2440 = vsub.f32 %v2149, %v2400
    %v2441 = vsub.f32 %v2150, %v2400
    %v2442 = vsub.f32 %v2151, %v2400
    %v2443 = vsub.f32 %v2152, %v2400
    %v2444 = vsub.f32 %v2153, %v2401
    %v2445 = vsub.f32 %v2154, %v2401
    %v2446 = vsub.f32 %v2155, %v2401
    %v2447 = vsub.f32 %v2156, %v2401
    %v2448 = vsub.f32 %v2157, %v2401
    %v2449 = vsub.f32 %v2158, %v2401
    %v2450 = vsub.f32 %v2159, %v2401
    %v2451 = vsub.f32 %v2160, %v2401
    %v2452 = vsub.f32 %v2161, %v2402
    %v2453 = vsub.f32 %v2162, %v2402
    %v2454 = vsub.f32 %v2163, %v2402
    %v2455 = vsub.f32 %v2164, %v2402
    %v2456 = vsub.f32 %v2165, %v2402
    %v2457 = vsub.f32 %v2166, %v2402
    %v2458 = vsub.f32 %v2167, %v2402
    %v2459 = vsub.f32 %v2168, %v2402
    %v2460 = vsub.f32 %v2169, %v2403
    %v2461 = vsub.f32 %v2170, %v2403
    %v2462 = vsub.f32 %v2171, %v2403
    %v2463 = vsub.f32 %v2172, %v2403
    %v2464 = vsub.f32 %v2173, %v2403
    %v2465 = vsub.f32 %v2174, %v2403
    %v2466 = vsub.f32 %v2175, %v2403
    %v2467 = vsub.f32 %v2176, %v2403
    %v2468 = vmul.f32 %v2404, 1.442695
    %v2469 = vpow.pop %v2468
    %v2470 = vmul.f32 %v2405, 1.442695
    %v2471 = vpow.pop %v2470
    %v2472 = vmul.f32 %v2406, 1.442695
    %v2473 = vpow.pop %v2472
    %v2474 = vmul.f32 %v2407, 1.442695
    %v2475 = vpow.pop %v2474
    %v2476 = vmul.f32 %v2408, 1.442695
    %v2477 = vpow.pop %v2476
    %v2478 = vmul.f32 %v2409, 1.442695
    %v2479 = vpow.pop %v2478
    %v2480 = vmul.f32 %v2410, 1.442695
    %v2481 = vpow.pop %v2480
    %v2482 = vmul.f32 %v2411, 1.442695
    %v2483 = vpow.pop %v2482
    %v2484 = vmul.f32 %v2412, 1.442695
    %v2485 = vpow.pop %v2484
    %v2486 = vmul.f32 %v2413, 1.442695
    %v2487 = vpow.pop %v2486
    %v2488 = vmul.f32 %v2414, 1.442695
    %v2489 = vpow.pop %v2488
    %v2490 = vmul.f32 %v2415, 1.442695
    %v2491 = vpow.pop %v2490
    %v2492 = vmul.f32 %v2416, 1.442695
    %v2493 = vpow.pop %v2492
    %v2494 = vmul.f32 %v2417, 1.442695
    %v2495 = vpow.pop %v2494
    %v2496 = vmul.f32 %v2418, 1.442695
    %v2497 = vpow.pop %v2496
    %v2498 = vmul.f32 %v2419, 1.442695
    %v2499 = vpow.pop %v2498
    %v2500 = vmul.f32 %v2420, 1.442695
    %v2501 = vpow.pop %v2500
    %v2502 = vmul.f32 %v2421, 1.442695
    %v2503 = vpow.pop %v2502
    %v2504 = vmul.f32 %v2422, 1.442695
    %v2505 = vpow.pop %v2504
    %v2506 = vmul.f32 %v2423, 1.442695
    %v2507 = vpow.pop %v2506
    %v2508 = vmul.f32 %v2424, 1.442695
    %v2509 = vpow.pop %v2508
    %v2510 = vmul.f32 %v2425, 1.442695
    %v2511 = vpow.pop %v2510
    %v2512 = vmul.f32 %v2426, 1.442695
    %v2513 = vpow.pop %v2512
    %v2514 = vmul.f32 %v2427, 1.442695
    %v2515 = vpow.pop %v2514
    %v2516 = vmul.f32 %v2428, 1.442695
    %v2517 = vpow.pop %v2516
    %v2518 = vmul.f32 %v2429, 1.442695
    %v2519 = vpow.pop %v2518
    %v2520 = vmul.f32 %v2430, 1.442695
    %v2521 = vpow.pop %v2520
    %v2522 = vmul.f32 %v2431, 1.442695
    %v2523 = vpow.pop %v2522
    %v2524 = vmul.f32 %v2432, 1.442695
    %v2525 = vpow.pop %v2524
    %v2526 = vmul.f32 %v2433, 1.442695
    %v2527 = vpow.pop %v2526
    %v2528 = vmul.f32 %v2434, 1.442695
    %v2529 = vpow.pop %v2528
    %v2530 = vmul.f32 %v2435, 1.442695
    %v2531 = vpow.pop %v2530
    %v2532 = vmul.f32 %v2436, 1.442695
    %v2533 = vpow.pop %v2532
    %v2534 = vmul.f32 %v2437, 1.442695
    %v2535 = vpow.pop %v2534
    %v2536 = vmul.f32 %v2438, 1.442695
    %v2537 = vpow.pop %v2536
    %v2538 = vmul.f32 %v2439, 1.442695
    %v2539 = vpow.pop %v2538
    %v2540 = vmul.f32 %v2440, 1.442695
    %v2541 = vpow.pop %v2540
    %v2542 = vmul.f32 %v2441, 1.442695
    %v2543 = vpow.pop %v2542
    %v2544 = vmul.f32 %v2442, 1.442695
    %v2545 = vpow.pop %v2544
    %v2546 = vmul.f32 %v2443, 1.442695
    %v2547 = vpow.pop %v2546
    %v2548 = vmul.f32 %v2444, 1.442695
    %v2549 = vpow.pop %v2548
    %v2550 = vmul.f32 %v2445, 1.442695
    %v2551 = vpow.pop %v2550
    %v2552 = vmul.f32 %v2446, 1.442695
    %v2553 = vpow.pop %v2552
    %v2554 = vmul.f32 %v2447, 1.442695
    %v2555 = vpow.pop %v2554
    %v2556 = vmul.f32 %v2448, 1.442695
    %v2557 = vpow.pop %v2556
    %v2558 = vmul.f32 %v2449, 1.442695
    %v2559 = vpow.pop %v2558
    %v2560 = vmul.f32 %v2450, 1.442695
    %v2561 = vpow.pop %v2560
    %v2562 = vmul.f32 %v2451, 1.442695
    %v2563 = vpow.pop %v2562
    %v2564 = vmul.f32 %v2452, 1.442695
    %v2565 = vpow.pop %v2564
    %v2566 = vmul.f32 %v2453, 1.442695
    %v2567 = vpow.pop %v2566
    %v2568 = vmul.f32 %v2454, 1.442695
    %v2569 = vpow.pop %v2568
    %v2570 = vmul.f32 %v2455, 1.442695
    %v2571 = vpow.pop %v2570
    %v2572 = vmul.f32 %v2456, 1.442695
    %v2573 = vpow.pop %v2572
    %v2574 = vmul.f32 %v2457, 1.442695
    %v2575 = vpow.pop %v2574
    %v2576 = vmul.f32 %v2458, 1.442695
    %v2577 = vpow.pop %v2576
    %v2578 = vmul.f32 %v2459, 1.442695
    %v2579 = vpow.pop %v2578
    %v2580 = vmul.f32 %v2460, 1.442695
    %v2581 = vpow.pop %v2580
    %v2582 = vmul.f32 %v2461, 1.442695
    %v2583 = vpow.pop %v2582
    %v2584 = vmul.f32 %v2462, 1.442695
    %v2585 = vpow.pop %v2584
    %v2586 = vmul.f32 %v2463, 1.442695
    %v2587 = vpow.pop %v2586
    %v2588 = vmul.f32 %v2464, 1.442695
    %v2589 = vpow.pop %v2588
    %v2590 = vmul.f32 %v2465, 1.442695
    %v2591 = vpow.pop %v2590
    %v2592 = vmul.f32 %v2466, 1.442695
    %v2593 = vpow.pop %v2592
    %v2594 = vmul.f32 %v2467, 1.442695
    %v2595 = vpow.pop %v2594
    %v2596 = vsub.f32 %v2201, %v2388
    %v2597 = vsub.f32 %v2205, %v2389
    %v2598 = vsub.f32 %v2206, %v2390
    %v2599 = vsub.f32 %v2207, %v2391
    %v2600 = vsub.f32 %v2208, %v2392
    %v2601 = vsub.f32 %v2209, %v2393
    %v2602 = vsub.f32 %v2210, %v2394
    %v2603 = vsub.f32 %v2211, %v2395
    %v2604 = vmul.f32 %v2596, 1.442695
    %v2605 = vpow.pop %v2604
    %v2606 = vmul.f32 %v2597, 1.442695
    %v2607 = vpow.pop %v2606
    %v2608 = vmul.f32 %v2598, 1.442695
    %v2609 = vpow.pop %v2608
    %v2610 = vmul.f32 %v2599, 1.442695
    %v2611 = vpow.pop %v2610
    %v2612 = vmul.f32 %v2600, 1.442695
    %v2613 = vpow.pop %v2612
    %v2614 = vmul.f32 %v2601, 1.442695
    %v2615 = vpow.pop %v2614
    %v2616 = vmul.f32 %v2602, 1.442695
    %v2617 = vpow.pop %v2616
    %v2618 = vmul.f32 %v2603, 1.442695
    %v2619 = vpow.pop %v2618
    %v2620 = vsel %vm2219, %v2469, 0.0
    %v2621 = vsel %vm2219, %v2471, 0.0
    %v2622 = vadd.f32 %v2620, %v2621
    %v2623 = vsel %vm2219, %v2473, 0.0
    %v2624 = vadd.f32 %v2622, %v2623
    %v2625 = vsel %vm2219, %v2475, 0.0
    %v2626 = vadd.f32 %v2624, %v2625
    %v2627 = vsel %vm2219, %v2477, 0.0
    %v2628 = vadd.f32 %v2626, %v2627
    %v2629 = vsel %vm2219, %v2479, 0.0
    %v2630 = vadd.f32 %v2628, %v2629
    %v2631 = vsel %vm2219, %v2481, 0.0
    %v2632 = vadd.f32 %v2630, %v2631
    %v2633 = vsel %vm2219, %v2483, 0.0
    %v2634 = vadd.f32 %v2632, %v2633
    %v2635 = vrot.slane %v2634, 4
    %v2636 = vadd.f32 %v2634, %v2635
    %v2637 = vrot.slane %v2636, 2
    %v2638 = vadd.f32 %v2636, %v2637
    %v2639 = vrot.slane %v2638, 1
    %v2640 = vadd.f32 %v2638, %v2639
    %v2641 = vsel %vm2219, %v2485, 0.0
    %v2642 = vsel %vm2219, %v2487, 0.0
    %v2643 = vadd.f32 %v2641, %v2642
    %v2644 = vsel %vm2219, %v2489, 0.0
    %v2645 = vadd.f32 %v2643, %v2644
    %v2646 = vsel %vm2219, %v2491, 0.0
    %v2647 = vadd.f32 %v2645, %v2646
    %v2648 = vsel %vm2219, %v2493, 0.0
    %v2649 = vadd.f32 %v2647, %v2648
    %v2650 = vsel %vm2219, %v2495, 0.0
    %v2651 = vadd.f32 %v2649, %v2650
    %v2652 = vsel %vm2219, %v2497, 0.0
    %v2653 = vadd.f32 %v2651, %v2652
    %v2654 = vsel %vm2219, %v2499, 0.0
    %v2655 = vadd.f32 %v2653, %v2654
    %v2656 = vrot.slane %v2655, 4
    %v2657 = vadd.f32 %v2655, %v2656
    %v2658 = vrot.slane %v2657, 2
    %v2659 = vadd.f32 %v2657, %v2658
    %v2660 = vrot.slane %v2659, 1
    %v2661 = vadd.f32 %v2659, %v2660
    %v2662 = vsel %vm2219, %v2501, 0.0
    %v2663 = vsel %vm2219, %v2503, 0.0
    %v2664 = vadd.f32 %v2662, %v2663
    %v2665 = vsel %vm2219, %v2505, 0.0
    %v2666 = vadd.f32 %v2664, %v2665
    %v2667 = vsel %vm2219, %v2507, 0.0
    %v2668 = vadd.f32 %v2666, %v2667
    %v2669 = vsel %vm2219, %v2509, 0.0
    %v2670 = vadd.f32 %v2668, %v2669
    %v2671 = vsel %vm2219, %v2511, 0.0
    %v2672 = vadd.f32 %v2670, %v2671
    %v2673 = vsel %vm2219, %v2513, 0.0
    %v2674 = vadd.f32 %v2672, %v2673
    %v2675 = vsel %vm2219, %v2515, 0.0
    %v2676 = vadd.f32 %v2674, %v2675
    %v2677 = vrot.slane %v2676, 4
    %v2678 = vadd.f32 %v2676, %v2677
    %v2679 = vrot.slane %v2678, 2
    %v2680 = vadd.f32 %v2678, %v2679
    %v2681 = vrot.slane %v2680, 1
    %v2682 = vadd.f32 %v2680, %v2681
    %v2683 = vsel %vm2219, %v2517, 0.0
    %v2684 = vsel %vm2219, %v2519, 0.0
    %v2685 = vadd.f32 %v2683, %v2684
    %v2686 = vsel %vm2219, %v2521, 0.0
    %v2687 = vadd.f32 %v2685, %v2686
    %v2688 = vsel %vm2219, %v2523, 0.0
    %v2689 = vadd.f32 %v2687, %v2688
    %v2690 = vsel %vm2219, %v2525, 0.0
    %v2691 = vadd.f32 %v2689, %v2690
    %v2692 = vsel %vm2219, %v2527, 0.0
    %v2693 = vadd.f32 %v2691, %v2692
    %v2694 = vsel %vm2219, %v2529, 0.0
    %v2695 = vadd.f32 %v2693, %v2694
    %v2696 = vsel %vm2219, %v2531, 0.0
    %v2697 = vadd.f32 %v2695, %v2696
    %v2698 = vrot.slane %v2697, 4
    %v2699 = vadd.f32 %v2697, %v2698
    %v2700 = vrot.slane %v2699, 2
    %v2701 = vadd.f32 %v2699, %v2700
    %v2702 = vrot.slane %v2701, 1
    %v2703 = vadd.f32 %v2701, %v2702
    %v2704 = vsel %vm2219, %v2533, 0.0
    %v2705 = vsel %vm2219, %v2535, 0.0
    %v2706 = vadd.f32 %v2704, %v2705
    %v2707 = vsel %vm2219, %v2537, 0.0
    %v2708 = vadd.f32 %v2706, %v2707
    %v2709 = vsel %vm2219, %v2539, 0.0
    %v2710 = vadd.f32 %v2708, %v2709
    %v2711 = vsel %vm2219, %v2541, 0.0
    %v2712 = vadd.f32 %v2710, %v2711
    %v2713 = vsel %vm2219, %v2543, 0.0
    %v2714 = vadd.f32 %v2712, %v2713
    %v2715 = vsel %vm2219, %v2545, 0.0
    %v2716 = vadd.f32 %v2714, %v2715
    %v2717 = vsel %vm2219, %v2547, 0.0
    %v2718 = vadd.f32 %v2716, %v2717
    %v2719 = vrot.slane %v2718, 4
    %v2720 = vadd.f32 %v2718, %v2719
    %v2721 = vrot.slane %v2720, 2
    %v2722 = vadd.f32 %v2720, %v2721
    %v2723 = vrot.slane %v2722, 1
    %v2724 = vadd.f32 %v2722, %v2723
    %v2725 = vsel %vm2219, %v2549, 0.0
    %v2726 = vsel %vm2219, %v2551, 0.0
    %v2727 = vadd.f32 %v2725, %v2726
    %v2728 = vsel %vm2219, %v2553, 0.0
    %v2729 = vadd.f32 %v2727, %v2728
    %v2730 = vsel %vm2219, %v2555, 0.0
    %v2731 = vadd.f32 %v2729, %v2730
    %v2732 = vsel %vm2219, %v2557, 0.0
    %v2733 = vadd.f32 %v2731, %v2732
    %v2734 = vsel %vm2219, %v2559, 0.0
    %v2735 = vadd.f32 %v2733, %v2734
    %v2736 = vsel %vm2219, %v2561, 0.0
    %v2737 = vadd.f32 %v2735, %v2736
    %v2738 = vsel %vm2219, %v2563, 0.0
    %v2739 = vadd.f32 %v2737, %v2738
    %v2740 = vrot.slane %v2739, 4
    %v2741 = vadd.f32 %v2739, %v2740
    %v2742 = vrot.slane %v2741, 2
    %v2743 = vadd.f32 %v2741, %v2742
    %v2744 = vrot.slane %v2743, 1
    %v2745 = vadd.f32 %v2743, %v2744
    %v2746 = vsel %vm2219, %v2565, 0.0
    %v2747 = vsel %vm2219, %v2567, 0.0
    %v2748 = vadd.f32 %v2746, %v2747
    %v2749 = vsel %vm2219, %v2569, 0.0
    %v2750 = vadd.f32 %v2748, %v2749
    %v2751 = vsel %vm2219, %v2571, 0.0
    %v2752 = vadd.f32 %v2750, %v2751
    %v2753 = vsel %vm2219, %v2573, 0.0
    %v2754 = vadd.f32 %v2752, %v2753
    %v2755 = vsel %vm2219, %v2575, 0.0
    %v2756 = vadd.f32 %v2754, %v2755
    %v2757 = vsel %vm2219, %v2577, 0.0
    %v2758 = vadd.f32 %v2756, %v2757
    %v2759 = vsel %vm2219, %v2579, 0.0
    %v2760 = vadd.f32 %v2758, %v2759
    %v2761 = vrot.slane %v2760, 4
    %v2762 = vadd.f32 %v2760, %v2761
    %v2763 = vrot.slane %v2762, 2
    %v2764 = vadd.f32 %v2762, %v2763
    %v2765 = vrot.slane %v2764, 1
    %v2766 = vadd.f32 %v2764, %v2765
    %v2767 = vsel %vm2219, %v2581, 0.0
    %v2768 = vsel %vm2219, %v2583, 0.0
    %v2769 = vadd.f32 %v2767, %v2768
    %v2770 = vsel %vm2219, %v2585, 0.0
    %v2771 = vadd.f32 %v2769, %v2770
    %v2772 = vsel %vm2219, %v2587, 0.0
    %v2773 = vadd.f32 %v2771, %v2772
    %v2774 = vsel %vm2219, %v2589, 0.0
    %v2775 = vadd.f32 %v2773, %v2774
    %v2776 = vsel %vm2219, %v2591, 0.0
    %v2777 = vadd.f32 %v2775, %v2776
    %v2778 = vsel %vm2219, %v2593, 0.0
    %v2779 = vadd.f32 %v2777, %v2778
    %v2780 = vsel %vm2219, %v2595, 0.0
    %v2781 = vadd.f32 %v2779, %v2780
    %v2782 = vrot.slane %v2781, 4
    %v2783 = vadd.f32 %v2781, %v2782
    %v2784 = vrot.slane %v2783, 2
    %v2785 = vadd.f32 %v2783, %v2784
    %v2786 = vrot.slane %v2785, 1
    %v2787 = vadd.f32 %v2785, %v2786
    %v2788 = vadd.f32 %v2640, %v2605
    %v2789 = vadd.f32 %v2661, %v2607
    %v2790 = vadd.f32 %v2682, %v2609
    %v2791 = vadd.f32 %v2703, %v2611
    %v2792 = vadd.f32 %v2724, %v2613
    %v2793 = vadd.f32 %v2745, %v2615
    %v2794 = vadd.f32 %v2766, %v2617
    %v2795 = vadd.f32 %v2787, %v2619
    %v2796 = vrcp.pop %v2788
    %v2797 = vrcp.pop %v2789
    %v2798 = vrcp.pop %v2790
    %v2799 = vrcp.pop %v2791
    %v2800 = vrcp.pop %v2792
    %v2801 = vrcp.pop %v2793
    %v2802 = vrcp.pop %v2794
    %v2803 = vrcp.pop %v2795
    %v2804 = vperm.slane %v2796, 0
    %v2805 = vperm.slane %v2797, 0
    %v2806 = vperm.slane %v2798, 0
    %v2807 = vperm.slane %v2799, 0
    %v2808 = vperm.slane %v2800, 0
    %v2809 = vperm.slane %v2801, 0
    %v2810 = vperm.slane %v2802, 0
    %v2811 = vperm.slane %v2803, 0
    %v2812 = vmul.f32 %v2469, %v2804
    %v2813 = vmul.f32 %v2471, %v2804
    %v2814 = vmul.f32 %v2473, %v2804
    %v2815 = vmul.f32 %v2475, %v2804
    %v2816 = vmul.f32 %v2477, %v2804
    %v2817 = vmul.f32 %v2479, %v2804
    %v2818 = vmul.f32 %v2481, %v2804
    %v2819 = vmul.f32 %v2483, %v2804
    %v2820 = vmul.f32 %v2485, %v2805
    %v2821 = vmul.f32 %v2487, %v2805
    %v2822 = vmul.f32 %v2489, %v2805
    %v2823 = vmul.f32 %v2491, %v2805
    %v2824 = vmul.f32 %v2493, %v2805
    %v2825 = vmul.f32 %v2495, %v2805
    %v2826 = vmul.f32 %v2497, %v2805
    %v2827 = vmul.f32 %v2499, %v2805
    %v2828 = vmul.f32 %v2501, %v2806
    %v2829 = vmul.f32 %v2503, %v2806
    %v2830 = vmul.f32 %v2505, %v2806
    %v2831 = vmul.f32 %v2507, %v2806
    %v2832 = vmul.f32 %v2509, %v2806
    %v2833 = vmul.f32 %v2511, %v2806
    %v2834 = vmul.f32 %v2513, %v2806
    %v2835 = vmul.f32 %v2515, %v2806
    %v2836 = vmul.f32 %v2517, %v2807
    %v2837 = vmul.f32 %v2519, %v2807
    %v2838 = vmul.f32 %v2521, %v2807
    %v2839 = vmul.f32 %v2523, %v2807
    %v2840 = vmul.f32 %v2525, %v2807
    %v2841 = vmul.f32 %v2527, %v2807
    %v2842 = vmul.f32 %v2529, %v2807
    %v2843 = vmul.f32 %v2531, %v2807
    %v2844 = vmul.f32 %v2533, %v2808
    %v2845 = vmul.f32 %v2535, %v2808
    %v2846 = vmul.f32 %v2537, %v2808
    %v2847 = vmul.f32 %v2539, %v2808
    %v2848 = vmul.f32 %v2541, %v2808
    %v2849 = vmul.f32 %v2543, %v2808
    %v2850 = vmul.f32 %v2545, %v2808
    %v2851 = vmul.f32 %v2547, %v2808
    %v2852 = vmul.f32 %v2549, %v2809
    %v2853 = vmul.f32 %v2551, %v2809
    %v2854 = vmul.f32 %v2553, %v2809
    %v2855 = vmul.f32 %v2555, %v2809
    %v2856 = vmul.f32 %v2557, %v2809
    %v2857 = vmul.f32 %v2559, %v2809
    %v2858 = vmul.f32 %v2561, %v2809
    %v2859 = vmul.f32 %v2563, %v2809
    %v2860 = vmul.f32 %v2565, %v2810
    %v2861 = vmul.f32 %v2567, %v2810
    %v2862 = vmul.f32 %v2569, %v2810
    %v2863 = vmul.f32 %v2571, %v2810
    %v2864 = vmul.f32 %v2573, %v2810
    %v2865 = vmul.f32 %v2575, %v2810
    %v2866 = vmul.f32 %v2577, %v2810
    %v2867 = vmul.f32 %v2579, %v2810
    %v2868 = vmul.f32 %v2581, %v2811
    %v2869 = vmul.f32 %v2583, %v2811
    %v2870 = vmul.f32 %v2585, %v2811
    %v2871 = vmul.f32 %v2587, %v2811
    %v2872 = vmul.f32 %v2589, %v2811
    %v2873 = vmul.f32 %v2591, %v2811
    %v2874 = vmul.f32 %v2593, %v2811
    %v2875 = vmul.f32 %v2595, %v2811
    %v2876 = vmul.f32 %v2605, %v2796
    %v2877 = vmul.f32 %v2607, %v2797
    %v2878 = vmul.f32 %v2609, %v2798
    %v2879 = vmul.f32 %v2611, %v2799
    %v2880 = vmul.f32 %v2613, %v2800
    %v2881 = vmul.f32 %v2615, %v2801
    %v2882 = vmul.f32 %v2617, %v2802
    %v2883 = vmul.f32 %v2619, %v2803
    %v2884 = vpack.c.bf16 %v2813, %v2812
    %v2885 = vpack.c.bf16 %v2815, %v2814
    %v2886 = vpack.c.bf16 %v2817, %v2816
    %v2887 = vpack.c.bf16 %v2819, %v2818
    %v2888 = vpack.c.bf16 %v2821, %v2820
    %v2889 = vpack.c.bf16 %v2823, %v2822
    %v2890 = vpack.c.bf16 %v2825, %v2824
    %v2891 = vpack.c.bf16 %v2827, %v2826
    %v2892 = vpack.c.bf16 %v2829, %v2828
    %v2893 = vpack.c.bf16 %v2831, %v2830
    %v2894 = vpack.c.bf16 %v2833, %v2832
    %v2895 = vpack.c.bf16 %v2835, %v2834
    %v2896 = vpack.c.bf16 %v2837, %v2836
    %v2897 = vpack.c.bf16 %v2839, %v2838
    %v2898 = vpack.c.bf16 %v2841, %v2840
    %v2899 = vpack.c.bf16 %v2843, %v2842
    %v2900 = vpack.c.bf16 %v2845, %v2844
    %v2901 = vpack.c.bf16 %v2847, %v2846
    %v2902 = vpack.c.bf16 %v2849, %v2848
    %v2903 = vpack.c.bf16 %v2851, %v2850
    %v2904 = vpack.c.bf16 %v2853, %v2852
    %v2905 = vpack.c.bf16 %v2855, %v2854
    %v2906 = vpack.c.bf16 %v2857, %v2856
    %v2907 = vpack.c.bf16 %v2859, %v2858
    %v2908 = vpack.c.bf16 %v2861, %v2860
    %v2909 = vpack.c.bf16 %v2863, %v2862
    %v2910 = vpack.c.bf16 %v2865, %v2864
    %v2911 = vpack.c.bf16 %v2867, %v2866
    %v2912 = vpack.c.bf16 %v2869, %v2868
    %v2913 = vpack.c.bf16 %v2871, %v2870
    %v2914 = vpack.c.bf16 %v2873, %v2872
    %v2915 = vpack.c.bf16 %v2875, %v2874
    %v2917 = vsel %vm2219, %v2884, 0
    %v2920 = vsel %vm2219, %v2885, 0
    %v2923 = vsel %vm2219, %v2886, 0
    %v2926 = vsel %vm2219, %v2887, 0
    %v2929 = vsel %vm2219, %v2888, 0
    %v2932 = vsel %vm2219, %v2889, 0
    %v2935 = vsel %vm2219, %v2890, 0
    %v2938 = vsel %vm2219, %v2891, 0
    %v2941 = vsel %vm2219, %v2892, 0
    %v2944 = vsel %vm2219, %v2893, 0
    %v2947 = vsel %vm2219, %v2894, 0
    %v2950 = vsel %vm2219, %v2895, 0
    %v2953 = vsel %vm2219, %v2896, 0
    %v2956 = vsel %vm2219, %v2897, 0
    %v2959 = vsel %vm2219, %v2898, 0
    %v2962 = vsel %vm2219, %v2899, 0
    %v2965 = vsel %vm2219, %v2900, 0
    %v2968 = vsel %vm2219, %v2901, 0
    %v2971 = vsel %vm2219, %v2902, 0
    %v2974 = vsel %vm2219, %v2903, 0
    %v2977 = vsel %vm2219, %v2904, 0
    %v2980 = vsel %vm2219, %v2905, 0
    %v2983 = vsel %vm2219, %v2906, 0
    %v2986 = vsel %vm2219, %v2907, 0
    %v2989 = vsel %vm2219, %v2908, 0
    %v2992 = vsel %vm2219, %v2909, 0
    %v2995 = vsel %vm2219, %v2910, 0
    %v2998 = vsel %vm2219, %v2911, 0
    %v3001 = vsel %vm2219, %v2912, 0
    %v3004 = vsel %vm2219, %v2913, 0
    %v3007 = vsel %vm2219, %v2914, 0
    %v3010 = vsel %vm2219, %v2915, 0
    %vm3012 = vcmask 1041408
    %v3014 = vsel %vm3012, %v1075, 0
    %3016 = vmatpush.bf16.msra.mxu0 0
    %3017 = vmatpush.bf16.msra.mxu0 0
    %3018 = vmatpush.bf16.msra.mxu0 0
    %3019 = vmatpush.bf16.msra.mxu0 0
    %3020 = vmatpush.bf16.msra.mxu0 0
    %3021 = vmatpush.bf16.msra.mxu0 0
    %3022 = vmatpush.bf16.msra.mxu0 0
    %3023 = vmatpush.bf16.msra.mxu0 %v3014
    %3024 = vmatmul.bf16.gmra.mxu0 %v2917
    %v3025 = vpop.f32.mrf.mxu0
    %v3026 = vadd.f32 0.0, %v3025
    %v3027 = vpop.f32.mrf.mxu0
    %v3028 = vadd.f32 0.0, %v3027
    %3029 = vmatmul.bf16.gmra.mxu0 %v2920
    %v3030 = vpop.f32.mrf.mxu0
    %v3031 = vadd.f32 0.0, %v3030
    %v3032 = vpop.f32.mrf.mxu0
    %v3033 = vadd.f32 0.0, %v3032
    %3034 = vmatmul.bf16.gmra.mxu0 %v2923
    %v3035 = vpop.f32.mrf.mxu0
    %v3036 = vadd.f32 0.0, %v3035
    %v3037 = vpop.f32.mrf.mxu0
    %v3038 = vadd.f32 0.0, %v3037
    %3039 = vmatmul.bf16.gmra.mxu0 %v2926
    %v3040 = vpop.f32.mrf.mxu0
    %v3041 = vadd.f32 0.0, %v3040
    %v3042 = vpop.f32.mrf.mxu0
    %v3043 = vadd.f32 0.0, %v3042
    %3044 = vmatmul.bf16.gmra.mxu0 %v2929
    %v3045 = vpop.f32.mrf.mxu0
    %v3046 = vadd.f32 0.0, %v3045
    %v3047 = vpop.f32.mrf.mxu0
    %v3048 = vadd.f32 0.0, %v3047
    %3049 = vmatmul.bf16.gmra.mxu0 %v2932
    %v3050 = vpop.f32.mrf.mxu0
    %v3051 = vadd.f32 0.0, %v3050
    %v3052 = vpop.f32.mrf.mxu0
    %v3053 = vadd.f32 0.0, %v3052
    %3054 = vmatmul.bf16.gmra.mxu0 %v2935
    %v3055 = vpop.f32.mrf.mxu0
    %v3056 = vadd.f32 0.0, %v3055
    %v3057 = vpop.f32.mrf.mxu0
    %v3058 = vadd.f32 0.0, %v3057
    %3059 = vmatmul.bf16.gmra.mxu0 %v2938
    %v3060 = vpop.f32.mrf.mxu0
    %v3061 = vadd.f32 0.0, %v3060
    %v3062 = vpop.f32.mrf.mxu0
    %v3063 = vadd.f32 0.0, %v3062
    %3064 = vmatmul.bf16.gmra.mxu0 %v2941
    %v3065 = vpop.f32.mrf.mxu0
    %v3066 = vadd.f32 0.0, %v3065
    %v3067 = vpop.f32.mrf.mxu0
    %v3068 = vadd.f32 0.0, %v3067
    %3069 = vmatmul.bf16.gmra.mxu0 %v2944
    %v3070 = vpop.f32.mrf.mxu0
    %v3071 = vadd.f32 0.0, %v3070
    %v3072 = vpop.f32.mrf.mxu0
    %v3073 = vadd.f32 0.0, %v3072
    %3074 = vmatmul.bf16.gmra.mxu0 %v2947
    %v3075 = vpop.f32.mrf.mxu0
    %v3076 = vadd.f32 0.0, %v3075
    %v3077 = vpop.f32.mrf.mxu0
    %v3078 = vadd.f32 0.0, %v3077
    %3079 = vmatmul.bf16.gmra.mxu0 %v2950
    %v3080 = vpop.f32.mrf.mxu0
    %v3081 = vadd.f32 0.0, %v3080
    %v3082 = vpop.f32.mrf.mxu0
    %v3083 = vadd.f32 0.0, %v3082
    %3084 = vmatmul.bf16.gmra.mxu0 %v2953
    %v3085 = vpop.f32.mrf.mxu0
    %v3086 = vadd.f32 0.0, %v3085
    %v3087 = vpop.f32.mrf.mxu0
    %v3088 = vadd.f32 0.0, %v3087
    %3089 = vmatmul.bf16.gmra.mxu0 %v2956
    %v3090 = vpop.f32.mrf.mxu0
    %v3091 = vadd.f32 0.0, %v3090
    %v3092 = vpop.f32.mrf.mxu0
    %v3093 = vadd.f32 0.0, %v3092
    %3094 = vmatmul.bf16.gmra.mxu0 %v2959
    %v3095 = vpop.f32.mrf.mxu0
    %v3096 = vadd.f32 0.0, %v3095
    %v3097 = vpop.f32.mrf.mxu0
    %v3098 = vadd.f32 0.0, %v3097
    %3099 = vmatmul.bf16.gmra.mxu0 %v2962
    %v3100 = vpop.f32.mrf.mxu0
    %v3101 = vadd.f32 0.0, %v3100
    %v3102 = vpop.f32.mrf.mxu0
    %v3103 = vadd.f32 0.0, %v3102
    %3104 = vmatmul.bf16.gmra.mxu0 %v2965
    %v3105 = vpop.f32.mrf.mxu0
    %v3106 = vadd.f32 0.0, %v3105
    %v3107 = vpop.f32.mrf.mxu0
    %v3108 = vadd.f32 0.0, %v3107
    %3109 = vmatmul.bf16.gmra.mxu0 %v2968
    %v3110 = vpop.f32.mrf.mxu0
    %v3111 = vadd.f32 0.0, %v3110
    %v3112 = vpop.f32.mrf.mxu0
    %v3113 = vadd.f32 0.0, %v3112
    %3114 = vmatmul.bf16.gmra.mxu0 %v2971
    %v3115 = vpop.f32.mrf.mxu0
    %v3116 = vadd.f32 0.0, %v3115
    %v3117 = vpop.f32.mrf.mxu0
    %v3118 = vadd.f32 0.0, %v3117
    %3119 = vmatmul.bf16.gmra.mxu0 %v2974
    %v3120 = vpop.f32.mrf.mxu0
    %v3121 = vadd.f32 0.0, %v3120
    %v3122 = vpop.f32.mrf.mxu0
    %v3123 = vadd.f32 0.0, %v3122
    %3124 = vmatmul.bf16.gmra.mxu0 %v2977
    %v3125 = vpop.f32.mrf.mxu0
    %v3126 = vadd.f32 0.0, %v3125
    %v3127 = vpop.f32.mrf.mxu0
    %v3128 = vadd.f32 0.0, %v3127
    %3129 = vmatmul.bf16.gmra.mxu0 %v2980
    %v3130 = vpop.f32.mrf.mxu0
    %v3131 = vadd.f32 0.0, %v3130
    %v3132 = vpop.f32.mrf.mxu0
    %v3133 = vadd.f32 0.0, %v3132
    %3134 = vmatmul.bf16.gmra.mxu0 %v2983
    %v3135 = vpop.f32.mrf.mxu0
    %v3136 = vadd.f32 0.0, %v3135
    %v3137 = vpop.f32.mrf.mxu0
    %v3138 = vadd.f32 0.0, %v3137
    %3139 = vmatmul.bf16.gmra.mxu0 %v2986
    %v3140 = vpop.f32.mrf.mxu0
    %v3141 = vadd.f32 0.0, %v3140
    %v3142 = vpop.f32.mrf.mxu0
    %v3143 = vadd.f32 0.0, %v3142
    %3144 = vmatmul.bf16.gmra.mxu0 %v2989
    %v3145 = vpop.f32.mrf.mxu0
    %v3146 = vadd.f32 0.0, %v3145
    %v3147 = vpop.f32.mrf.mxu0
    %v3148 = vadd.f32 0.0, %v3147
    %3149 = vmatmul.bf16.gmra.mxu0 %v2992
    %v3150 = vpop.f32.mrf.mxu0
    %v3151 = vadd.f32 0.0, %v3150
    %v3152 = vpop.f32.mrf.mxu0
    %v3153 = vadd.f32 0.0, %v3152
    %3154 = vmatmul.bf16.gmra.mxu0 %v2995
    %v3155 = vpop.f32.mrf.mxu0
    %v3156 = vadd.f32 0.0, %v3155
    %v3157 = vpop.f32.mrf.mxu0
    %v3158 = vadd.f32 0.0, %v3157
    %3159 = vmatmul.bf16.gmra.mxu0 %v2998
    %v3160 = vpop.f32.mrf.mxu0
    %v3161 = vadd.f32 0.0, %v3160
    %v3162 = vpop.f32.mrf.mxu0
    %v3163 = vadd.f32 0.0, %v3162
    %3164 = vmatmul.bf16.gmra.mxu0 %v3001
    %v3165 = vpop.f32.mrf.mxu0
    %v3166 = vadd.f32 0.0, %v3165
    %v3167 = vpop.f32.mrf.mxu0
    %v3168 = vadd.f32 0.0, %v3167
    %3169 = vmatmul.bf16.gmra.mxu0 %v3004
    %v3170 = vpop.f32.mrf.mxu0
    %v3171 = vadd.f32 0.0, %v3170
    %v3172 = vpop.f32.mrf.mxu0
    %v3173 = vadd.f32 0.0, %v3172
    %3174 = vmatmul.bf16.gmra.mxu0 %v3007
    %v3175 = vpop.f32.mrf.mxu0
    %v3176 = vadd.f32 0.0, %v3175
    %v3177 = vpop.f32.mrf.mxu0
    %v3178 = vadd.f32 0.0, %v3177
    %3179 = vmatmul.bf16.gmra.mxu0 %v3010
    %v3180 = vpop.f32.mrf.mxu0
    %v3181 = vadd.f32 0.0, %v3180
    %v3182 = vpop.f32.mrf.mxu0
    %v3183 = vadd.f32 0.0, %v3182
    %3184 = vdwg.mxu0
    %v3185 = vpack.c.bf16 %v3026, %v3026
    %v3186 = vpack.c.bf16 %v3028, %v3028
    %v3187 = vpack.c.bf16 %v3031, %v3031
    %v3188 = vpack.c.bf16 %v3033, %v3033
    %v3189 = vpack.c.bf16 %v3036, %v3036
    %v3190 = vpack.c.bf16 %v3038, %v3038
    %v3191 = vpack.c.bf16 %v3041, %v3041
    %v3192 = vpack.c.bf16 %v3043, %v3043
    %v3193 = vpack.c.bf16 %v3046, %v3046
    %v3194 = vpack.c.bf16 %v3048, %v3048
    %v3195 = vpack.c.bf16 %v3051, %v3051
    %v3196 = vpack.c.bf16 %v3053, %v3053
    %v3197 = vpack.c.bf16 %v3056, %v3056
    %v3198 = vpack.c.bf16 %v3058, %v3058
    %v3199 = vpack.c.bf16 %v3061, %v3061
    %v3200 = vpack.c.bf16 %v3063, %v3063
    %v3201 = vpack.c.bf16 %v3066, %v3066
    %v3202 = vpack.c.bf16 %v3068, %v3068
    %v3203 = vpack.c.bf16 %v3071, %v3071
    %v3204 = vpack.c.bf16 %v3073, %v3073
    %v3205 = vpack.c.bf16 %v3076, %v3076
    %v3206 = vpack.c.bf16 %v3078, %v3078
    %v3207 = vpack.c.bf16 %v3081, %v3081
    %v3208 = vpack.c.bf16 %v3083, %v3083
    %v3209 = vpack.c.bf16 %v3086, %v3086
    %v3210 = vpack.c.bf16 %v3088, %v3088
    %v3211 = vpack.c.bf16 %v3091, %v3091
    %v3212 = vpack.c.bf16 %v3093, %v3093
    %v3213 = vpack.c.bf16 %v3096, %v3096
    %v3214 = vpack.c.bf16 %v3098, %v3098
    %v3215 = vpack.c.bf16 %v3101, %v3101
    %v3216 = vpack.c.bf16 %v3103, %v3103
    %v3217 = vpack.c.bf16 %v3106, %v3106
    %v3218 = vpack.c.bf16 %v3108, %v3108
    %v3219 = vpack.c.bf16 %v3111, %v3111
    %v3220 = vpack.c.bf16 %v3113, %v3113
    %v3221 = vpack.c.bf16 %v3116, %v3116
    %v3222 = vpack.c.bf16 %v3118, %v3118
    %v3223 = vpack.c.bf16 %v3121, %v3121
    %v3224 = vpack.c.bf16 %v3123, %v3123
    %v3225 = vpack.c.bf16 %v3126, %v3126
    %v3226 = vpack.c.bf16 %v3128, %v3128
    %v3227 = vpack.c.bf16 %v3131, %v3131
    %v3228 = vpack.c.bf16 %v3133, %v3133
    %v3229 = vpack.c.bf16 %v3136, %v3136
    %v3230 = vpack.c.bf16 %v3138, %v3138
    %v3231 = vpack.c.bf16 %v3141, %v3141
    %v3232 = vpack.c.bf16 %v3143, %v3143
    %v3233 = vpack.c.bf16 %v3146, %v3146
    %v3234 = vpack.c.bf16 %v3148, %v3148
    %v3235 = vpack.c.bf16 %v3151, %v3151
    %v3236 = vpack.c.bf16 %v3153, %v3153
    %v3237 = vpack.c.bf16 %v3156, %v3156
    %v3238 = vpack.c.bf16 %v3158, %v3158
    %v3239 = vpack.c.bf16 %v3161, %v3161
    %v3240 = vpack.c.bf16 %v3163, %v3163
    %v3241 = vpack.c.bf16 %v3166, %v3166
    %v3242 = vpack.c.bf16 %v3168, %v3168
    %v3243 = vpack.c.bf16 %v3171, %v3171
    %v3244 = vpack.c.bf16 %v3173, %v3173
    %v3245 = vpack.c.bf16 %v3176, %v3176
    %v3246 = vpack.c.bf16 %v3178, %v3178
    %v3247 = vpack.c.bf16 %v3181, %v3181
    %v3248 = vpack.c.bf16 %v3183, %v3183
    %v3249 = vpack.c.bf16 %v2876, %v2876
    %v3250 = vpack.c.bf16 %v2877, %v2877
    %v3251 = vpack.c.bf16 %v2878, %v2878
    %v3252 = vpack.c.bf16 %v2879, %v2879
    %v3253 = vpack.c.bf16 %v2880, %v2880
    %v3254 = vpack.c.bf16 %v2881, %v2881
    %v3255 = vpack.c.bf16 %v2882, %v2882
    %v3256 = vpack.c.bf16 %v2883, %v2883
    %v3265 = vunpack.c.l.b16 %v3249
    %v3266 = vunpack.c.l.b16 %v3250
    %v3267 = vunpack.c.l.b16 %v3251
    %v3268 = vunpack.c.l.b16 %v3252
    %v3269 = vunpack.c.l.b16 %v3253
    %v3270 = vunpack.c.l.b16 %v3254
    %v3271 = vunpack.c.l.b16 %v3255
    %v3272 = vunpack.c.l.b16 %v3256
    %v3273 = vrot.slane %v3266, 7
    %v3274 = vsel %vm530, %v3273, %v3265
    %v3275 = vrot.slane %v3267, 6
    %v3276 = vsel %vm533, %v3275, %v3274
    %v3277 = vrot.slane %v3268, 5
    %v3278 = vsel %vm536, %v3277, %v3276
    %v3279 = vrot.slane %v3269, 4
    %v3280 = vsel %vm539, %v3279, %v3278
    %v3281 = vrot.slane %v3270, 3
    %v3282 = vsel %vm542, %v3281, %v3280
    %v3283 = vrot.slane %v3271, 2
    %v3284 = vsel %vm545, %v3283, %v3282
    %v3285 = vrot.slane %v3272, 1
    %v3286 = vsel %vm548, %v3285, %v3284
    %v3287 = vpack.c.b16 %v3286, %v3286
    %v3289 = vsel %vm2219, %v3287, 0
    %3291 = vmatpush.bf16.msra.mxu0 0
    %3292 = vmatpush.bf16.msra.mxu0 0
    %3293 = vmatpush.bf16.msra.mxu0 0
    %3294 = vmatpush.bf16.msra.mxu0 0
    %3295 = vmatpush.bf16.msra.mxu0 0
    %3296 = vmatpush.bf16.msra.mxu0 0
    %3297 = vmatpush.bf16.msra.mxu0 0
    %3298 = vmatpush.bf16.msra.mxu0 %v3014
    %3299 = vmatmul.bf16.gmra.mxu0 %v3289
    %v3300 = vpop.f32.mrf.mxu0
    %v3301 = vadd.f32 0.0, %v3300
    %v3302 = vpop.f32.mrf.mxu0
    %3303 = vdwg.mxu0
    %v3304 = vpack.c.bf16 %v3301, %v3301
    %v3305 = vunpack.c.l.bf16 %v3185
    %v3306 = vunpack.c.l.bf16 %v3186
    %v3307 = vunpack.c.l.bf16 %v3187
    %v3308 = vunpack.c.l.bf16 %v3188
    %v3309 = vunpack.c.l.bf16 %v3189
    %v3310 = vunpack.c.l.bf16 %v3190
    %v3311 = vunpack.c.l.bf16 %v3191
    %v3312 = vunpack.c.l.bf16 %v3192
    %v3313 = vunpack.c.l.bf16 %v3193
    %v3314 = vunpack.c.l.bf16 %v3194
    %v3315 = vunpack.c.l.bf16 %v3195
    %v3316 = vunpack.c.l.bf16 %v3196
    %v3317 = vunpack.c.l.bf16 %v3197
    %v3318 = vunpack.c.l.bf16 %v3198
    %v3319 = vunpack.c.l.bf16 %v3199
    %v3320 = vunpack.c.l.bf16 %v3200
    %v3321 = vunpack.c.l.bf16 %v3201
    %v3322 = vunpack.c.l.bf16 %v3202
    %v3323 = vunpack.c.l.bf16 %v3203
    %v3324 = vunpack.c.l.bf16 %v3204
    %v3325 = vunpack.c.l.bf16 %v3205
    %v3326 = vunpack.c.l.bf16 %v3206
    %v3327 = vunpack.c.l.bf16 %v3207
    %v3328 = vunpack.c.l.bf16 %v3208
    %v3329 = vunpack.c.l.bf16 %v3209
    %v3330 = vunpack.c.l.bf16 %v3210
    %v3331 = vunpack.c.l.bf16 %v3211
    %v3332 = vunpack.c.l.bf16 %v3212
    %v3333 = vunpack.c.l.bf16 %v3213
    %v3334 = vunpack.c.l.bf16 %v3214
    %v3335 = vunpack.c.l.bf16 %v3215
    %v3336 = vunpack.c.l.bf16 %v3216
    %v3337 = vunpack.c.l.bf16 %v3217
    %v3338 = vunpack.c.l.bf16 %v3218
    %v3339 = vunpack.c.l.bf16 %v3219
    %v3340 = vunpack.c.l.bf16 %v3220
    %v3341 = vunpack.c.l.bf16 %v3221
    %v3342 = vunpack.c.l.bf16 %v3222
    %v3343 = vunpack.c.l.bf16 %v3223
    %v3344 = vunpack.c.l.bf16 %v3224
    %v3345 = vunpack.c.l.bf16 %v3225
    %v3346 = vunpack.c.l.bf16 %v3226
    %v3347 = vunpack.c.l.bf16 %v3227
    %v3348 = vunpack.c.l.bf16 %v3228
    %v3349 = vunpack.c.l.bf16 %v3229
    %v3350 = vunpack.c.l.bf16 %v3230
    %v3351 = vunpack.c.l.bf16 %v3231
    %v3352 = vunpack.c.l.bf16 %v3232
    %v3353 = vunpack.c.l.bf16 %v3233
    %v3354 = vunpack.c.l.bf16 %v3234
    %v3355 = vunpack.c.l.bf16 %v3235
    %v3356 = vunpack.c.l.bf16 %v3236
    %v3357 = vunpack.c.l.bf16 %v3237
    %v3358 = vunpack.c.l.bf16 %v3238
    %v3359 = vunpack.c.l.bf16 %v3239
    %v3360 = vunpack.c.l.bf16 %v3240
    %v3361 = vunpack.c.l.bf16 %v3241
    %v3362 = vunpack.c.l.bf16 %v3242
    %v3363 = vunpack.c.l.bf16 %v3243
    %v3364 = vunpack.c.l.bf16 %v3244
    %v3365 = vunpack.c.l.bf16 %v3245
    %v3366 = vunpack.c.l.bf16 %v3246
    %v3367 = vunpack.c.l.bf16 %v3247
    %v3368 = vunpack.c.l.bf16 %v3248
    %3369 = vrot.lane.b32.xlu0 %v1156, 96
    %v3370 = vpop.permute.xlu0 %3369
    %3371 = vrot.lane.b32.xlu0 %v1157, 96
    %v3372 = vpop.permute.xlu0 %3371
    %3373 = vrot.lane.b32.xlu0 %v1158, 96
    %v3374 = vpop.permute.xlu0 %3373
    %3375 = vrot.lane.b32.xlu0 %v1159, 96
    %v3376 = vpop.permute.xlu0 %3375
    %3377 = vrot.lane.b32.xlu0 %v1160, 96
    %v3378 = vpop.permute.xlu0 %3377
    %3379 = vrot.lane.b32.xlu0 %v1161, 96
    %v3380 = vpop.permute.xlu0 %3379
    %3381 = vrot.lane.b32.xlu0 %v1162, 96
    %v3382 = vpop.permute.xlu0 %3381
    %3383 = vrot.lane.b32.xlu0 %v1163, 96
    %v3384 = vpop.permute.xlu0 %3383
    %3385 = vrot.lane.b32.xlu0 %v1164, 96
    %v3386 = vpop.permute.xlu0 %3385
    %3387 = vrot.lane.b32.xlu0 %v1165, 96
    %v3388 = vpop.permute.xlu0 %3387
    %3389 = vrot.lane.b32.xlu0 %v1166, 96
    %v3390 = vpop.permute.xlu0 %3389
    %3391 = vrot.lane.b32.xlu0 %v1167, 96
    %v3392 = vpop.permute.xlu0 %3391
    %3393 = vrot.lane.b32.xlu0 %v1168, 96
    %v3394 = vpop.permute.xlu0 %3393
    %3395 = vrot.lane.b32.xlu0 %v1169, 96
    %v3396 = vpop.permute.xlu0 %3395
    %3397 = vrot.lane.b32.xlu0 %v1170, 96
    %v3398 = vpop.permute.xlu0 %3397
    %3399 = vrot.lane.b32.xlu0 %v1171, 96
    %v3400 = vpop.permute.xlu0 %3399
    %3401 = vrot.lane.b32.xlu0 %v1172, 96
    %v3402 = vpop.permute.xlu0 %3401
    %3403 = vrot.lane.b32.xlu0 %v1173, 96
    %v3404 = vpop.permute.xlu0 %3403
    %3405 = vrot.lane.b32.xlu0 %v1174, 96
    %v3406 = vpop.permute.xlu0 %3405
    %3407 = vrot.lane.b32.xlu0 %v1175, 96
    %v3408 = vpop.permute.xlu0 %3407
    %3409 = vrot.lane.b32.xlu0 %v1176, 96
    %v3410 = vpop.permute.xlu0 %3409
    %3411 = vrot.lane.b32.xlu0 %v1177, 96
    %v3412 = vpop.permute.xlu0 %3411
    %3413 = vrot.lane.b32.xlu0 %v1178, 96
    %v3414 = vpop.permute.xlu0 %3413
    %3415 = vrot.lane.b32.xlu0 %v1179, 96
    %v3416 = vpop.permute.xlu0 %3415
    %3417 = vrot.lane.b32.xlu0 %v1180, 96
    %v3418 = vpop.permute.xlu0 %3417
    %3419 = vrot.lane.b32.xlu0 %v1181, 96
    %v3420 = vpop.permute.xlu0 %3419
    %3421 = vrot.lane.b32.xlu0 %v1182, 96
    %v3422 = vpop.permute.xlu0 %3421
    %3423 = vrot.lane.b32.xlu0 %v1183, 96
    %v3424 = vpop.permute.xlu0 %3423
    %3425 = vrot.lane.b32.xlu0 %v1184, 96
    %v3426 = vpop.permute.xlu0 %3425
    %3427 = vrot.lane.b32.xlu0 %v1185, 96
    %v3428 = vpop.permute.xlu0 %3427
    %3429 = vrot.lane.b32.xlu0 %v1186, 96
    %v3430 = vpop.permute.xlu0 %3429
    %3431 = vrot.lane.b32.xlu0 %v1187, 96
    %v3432 = vpop.permute.xlu0 %3431
    %3433 = vrot.lane.b32.xlu0 %v1188, 96
    %v3434 = vpop.permute.xlu0 %3433
    %3435 = vrot.lane.b32.xlu0 %v1189, 96
    %v3436 = vpop.permute.xlu0 %3435
    %3437 = vrot.lane.b32.xlu0 %v1190, 96
    %v3438 = vpop.permute.xlu0 %3437
    %3439 = vrot.lane.b32.xlu0 %v1191, 96
    %v3440 = vpop.permute.xlu0 %3439
    %3441 = vrot.lane.b32.xlu0 %v1192, 96
    %v3442 = vpop.permute.xlu0 %3441
    %3443 = vrot.lane.b32.xlu0 %v1193, 96
    %v3444 = vpop.permute.xlu0 %3443
    %3445 = vrot.lane.b32.xlu0 %v1194, 96
    %v3446 = vpop.permute.xlu0 %3445
    %3447 = vrot.lane.b32.xlu0 %v1195, 96
    %v3448 = vpop.permute.xlu0 %3447
    %3449 = vrot.lane.b32.xlu0 %v1196, 96
    %v3450 = vpop.permute.xlu0 %3449
    %3451 = vrot.lane.b32.xlu0 %v1197, 96
    %v3452 = vpop.permute.xlu0 %3451
    %3453 = vrot.lane.b32.xlu0 %v1198, 96
    %v3454 = vpop.permute.xlu0 %3453
    %3455 = vrot.lane.b32.xlu0 %v1199, 96
    %v3456 = vpop.permute.xlu0 %3455
    %3457 = vrot.lane.b32.xlu0 %v1200, 96
    %v3458 = vpop.permute.xlu0 %3457
    %3459 = vrot.lane.b32.xlu0 %v1201, 96
    %v3460 = vpop.permute.xlu0 %3459
    %3461 = vrot.lane.b32.xlu0 %v1202, 96
    %v3462 = vpop.permute.xlu0 %3461
    %3463 = vrot.lane.b32.xlu0 %v1203, 96
    %v3464 = vpop.permute.xlu0 %3463
    %3465 = vrot.lane.b32.xlu0 %v1204, 96
    %v3466 = vpop.permute.xlu0 %3465
    %3467 = vrot.lane.b32.xlu0 %v1205, 96
    %v3468 = vpop.permute.xlu0 %3467
    %3469 = vrot.lane.b32.xlu0 %v1206, 96
    %v3470 = vpop.permute.xlu0 %3469
    %3471 = vrot.lane.b32.xlu0 %v1207, 96
    %v3472 = vpop.permute.xlu0 %3471
    %3473 = vrot.lane.b32.xlu0 %v1208, 96
    %v3474 = vpop.permute.xlu0 %3473
    %3475 = vrot.lane.b32.xlu0 %v1209, 96
    %v3476 = vpop.permute.xlu0 %3475
    %3477 = vrot.lane.b32.xlu0 %v1210, 96
    %v3478 = vpop.permute.xlu0 %3477
    %3479 = vrot.lane.b32.xlu0 %v1211, 96
    %v3480 = vpop.permute.xlu0 %3479
    %3481 = vrot.lane.b32.xlu0 %v1212, 96
    %v3482 = vpop.permute.xlu0 %3481
    %3483 = vrot.lane.b32.xlu0 %v1213, 96
    %v3484 = vpop.permute.xlu0 %3483
    %3485 = vrot.lane.b32.xlu0 %v1214, 96
    %v3486 = vpop.permute.xlu0 %3485
    %3487 = vrot.lane.b32.xlu0 %v1215, 96
    %v3488 = vpop.permute.xlu0 %3487
    %3489 = vrot.lane.b32.xlu0 %v1216, 96
    %v3490 = vpop.permute.xlu0 %3489
    %3491 = vrot.lane.b32.xlu0 %v1217, 96
    %v3492 = vpop.permute.xlu0 %3491
    %3493 = vrot.lane.b32.xlu0 %v1218, 96
    %v3494 = vpop.permute.xlu0 %3493
    %3495 = vrot.lane.b32.xlu0 %v1219, 96
    %v3496 = vpop.permute.xlu0 %3495
    %v3561 = vmul.f32 %v3305, %v3370
    %v3562 = vmul.f32 %v3306, %v3372
    %v3563 = vmul.f32 %v3307, %v3374
    %v3564 = vmul.f32 %v3308, %v3376
    %v3565 = vmul.f32 %v3309, %v3378
    %v3566 = vmul.f32 %v3310, %v3380
    %v3567 = vmul.f32 %v3311, %v3382
    %v3568 = vmul.f32 %v3312, %v3384
    %v3569 = vmul.f32 %v3313, %v3386
    %v3570 = vmul.f32 %v3314, %v3388
    %v3571 = vmul.f32 %v3315, %v3390
    %v3572 = vmul.f32 %v3316, %v3392
    %v3573 = vmul.f32 %v3317, %v3394
    %v3574 = vmul.f32 %v3318, %v3396
    %v3575 = vmul.f32 %v3319, %v3398
    %v3576 = vmul.f32 %v3320, %v3400
    %v3577 = vmul.f32 %v3321, %v3402
    %v3578 = vmul.f32 %v3322, %v3404
    %v3579 = vmul.f32 %v3323, %v3406
    %v3580 = vmul.f32 %v3324, %v3408
    %v3581 = vmul.f32 %v3325, %v3410
    %v3582 = vmul.f32 %v3326, %v3412
    %v3583 = vmul.f32 %v3327, %v3414
    %v3584 = vmul.f32 %v3328, %v3416
    %v3585 = vmul.f32 %v3329, %v3418
    %v3586 = vmul.f32 %v3330, %v3420
    %v3587 = vmul.f32 %v3331, %v3422
    %v3588 = vmul.f32 %v3332, %v3424
    %v3589 = vmul.f32 %v3333, %v3426
    %v3590 = vmul.f32 %v3334, %v3428
    %v3591 = vmul.f32 %v3335, %v3430
    %v3592 = vmul.f32 %v3336, %v3432
    %v3593 = vmul.f32 %v3337, %v3434
    %v3594 = vmul.f32 %v3338, %v3436
    %v3595 = vmul.f32 %v3339, %v3438
    %v3596 = vmul.f32 %v3340, %v3440
    %v3597 = vmul.f32 %v3341, %v3442
    %v3598 = vmul.f32 %v3342, %v3444
    %v3599 = vmul.f32 %v3343, %v3446
    %v3600 = vmul.f32 %v3344, %v3448
    %v3601 = vmul.f32 %v3345, %v3450
    %v3602 = vmul.f32 %v3346, %v3452
    %v3603 = vmul.f32 %v3347, %v3454
    %v3604 = vmul.f32 %v3348, %v3456
    %v3605 = vmul.f32 %v3349, %v3458
    %v3606 = vmul.f32 %v3350, %v3460
    %v3607 = vmul.f32 %v3351, %v3462
    %v3608 = vmul.f32 %v3352, %v3464
    %v3609 = vmul.f32 %v3353, %v3466
    %v3610 = vmul.f32 %v3354, %v3468
    %v3611 = vmul.f32 %v3355, %v3470
    %v3612 = vmul.f32 %v3356, %v3472
    %v3613 = vmul.f32 %v3357, %v3474
    %v3614 = vmul.f32 %v3358, %v3476
    %v3615 = vmul.f32 %v3359, %v3478
    %v3616 = vmul.f32 %v3360, %v3480
    %v3617 = vmul.f32 %v3361, %v3482
    %v3618 = vmul.f32 %v3362, %v3484
    %v3619 = vmul.f32 %v3363, %v3486
    %v3620 = vmul.f32 %v3364, %v3488
    %v3621 = vmul.f32 %v3365, %v3490
    %v3622 = vmul.f32 %v3366, %v3492
    %v3623 = vmul.f32 %v3367, %v3494
    %v3624 = vmul.f32 %v3368, %v3496
    %v3625 = vpack.c.bf16 %v3562, %v3561
    %v3626 = vpack.c.bf16 %v3564, %v3563
    %v3627 = vpack.c.bf16 %v3566, %v3565
    %v3628 = vpack.c.bf16 %v3568, %v3567
    %v3629 = vpack.c.bf16 %v3570, %v3569
    %v3630 = vpack.c.bf16 %v3572, %v3571
    %v3631 = vpack.c.bf16 %v3574, %v3573
    %v3632 = vpack.c.bf16 %v3576, %v3575
    %v3633 = vpack.c.bf16 %v3578, %v3577
    %v3634 = vpack.c.bf16 %v3580, %v3579
    %v3635 = vpack.c.bf16 %v3582, %v3581
    %v3636 = vpack.c.bf16 %v3584, %v3583
    %v3637 = vpack.c.bf16 %v3586, %v3585
    %v3638 = vpack.c.bf16 %v3588, %v3587
    %v3639 = vpack.c.bf16 %v3590, %v3589
    %v3640 = vpack.c.bf16 %v3592, %v3591
    %v3641 = vpack.c.bf16 %v3594, %v3593
    %v3642 = vpack.c.bf16 %v3596, %v3595
    %v3643 = vpack.c.bf16 %v3598, %v3597
    %v3644 = vpack.c.bf16 %v3600, %v3599
    %v3645 = vpack.c.bf16 %v3602, %v3601
    %v3646 = vpack.c.bf16 %v3604, %v3603
    %v3647 = vpack.c.bf16 %v3606, %v3605
    %v3648 = vpack.c.bf16 %v3608, %v3607
    %v3649 = vpack.c.bf16 %v3610, %v3609
    %v3650 = vpack.c.bf16 %v3612, %v3611
    %v3651 = vpack.c.bf16 %v3614, %v3613
    %v3652 = vpack.c.bf16 %v3616, %v3615
    %v3653 = vpack.c.bf16 %v3618, %v3617
    %v3654 = vpack.c.bf16 %v3620, %v3619
    %v3655 = vpack.c.bf16 %v3622, %v3621
    %v3656 = vpack.c.bf16 %v3624, %v3623
    %v3657 = vunpack.c.l.bf16 %v3625
    %v3658 = vunpack.c.h.bf16 %v3625
    %v3659 = vunpack.c.l.bf16 %v3626
    %v3660 = vunpack.c.h.bf16 %v3626
    %v3661 = vunpack.c.l.bf16 %v3627
    %v3662 = vunpack.c.h.bf16 %v3627
    %v3663 = vunpack.c.l.bf16 %v3628
    %v3664 = vunpack.c.h.bf16 %v3628
    %v3665 = vunpack.c.l.bf16 %v3629
    %v3666 = vunpack.c.h.bf16 %v3629
    %v3667 = vunpack.c.l.bf16 %v3630
    %v3668 = vunpack.c.h.bf16 %v3630
    %v3669 = vunpack.c.l.bf16 %v3631
    %v3670 = vunpack.c.h.bf16 %v3631
    %v3671 = vunpack.c.l.bf16 %v3632
    %v3672 = vunpack.c.h.bf16 %v3632
    %v3673 = vunpack.c.l.bf16 %v3633
    %v3674 = vunpack.c.h.bf16 %v3633
    %v3675 = vunpack.c.l.bf16 %v3634
    %v3676 = vunpack.c.h.bf16 %v3634
    %v3677 = vunpack.c.l.bf16 %v3635
    %v3678 = vunpack.c.h.bf16 %v3635
    %v3679 = vunpack.c.l.bf16 %v3636
    %v3680 = vunpack.c.h.bf16 %v3636
    %v3681 = vunpack.c.l.bf16 %v3637
    %v3682 = vunpack.c.h.bf16 %v3637
    %v3683 = vunpack.c.l.bf16 %v3638
    %v3684 = vunpack.c.h.bf16 %v3638
    %v3685 = vunpack.c.l.bf16 %v3639
    %v3686 = vunpack.c.h.bf16 %v3639
    %v3687 = vunpack.c.l.bf16 %v3640
    %v3688 = vunpack.c.h.bf16 %v3640
    %v3689 = vunpack.c.l.bf16 %v3641
    %v3690 = vunpack.c.h.bf16 %v3641
    %v3691 = vunpack.c.l.bf16 %v3642
    %v3692 = vunpack.c.h.bf16 %v3642
    %v3693 = vunpack.c.l.bf16 %v3643
    %v3694 = vunpack.c.h.bf16 %v3643
    %v3695 = vunpack.c.l.bf16 %v3644
    %v3696 = vunpack.c.h.bf16 %v3644
    %v3697 = vunpack.c.l.bf16 %v3645
    %v3698 = vunpack.c.h.bf16 %v3645
    %v3699 = vunpack.c.l.bf16 %v3646
    %v3700 = vunpack.c.h.bf16 %v3646
    %v3701 = vunpack.c.l.bf16 %v3647
    %v3702 = vunpack.c.h.bf16 %v3647
    %v3703 = vunpack.c.l.bf16 %v3648
    %v3704 = vunpack.c.h.bf16 %v3648
    %v3705 = vunpack.c.l.bf16 %v3649
    %v3706 = vunpack.c.h.bf16 %v3649
    %v3707 = vunpack.c.l.bf16 %v3650
    %v3708 = vunpack.c.h.bf16 %v3650
    %v3709 = vunpack.c.l.bf16 %v3651
    %v3710 = vunpack.c.h.bf16 %v3651
    %v3711 = vunpack.c.l.bf16 %v3652
    %v3712 = vunpack.c.h.bf16 %v3652
    %v3713 = vunpack.c.l.bf16 %v3653
    %v3714 = vunpack.c.h.bf16 %v3653
    %v3715 = vunpack.c.l.bf16 %v3654
    %v3716 = vunpack.c.h.bf16 %v3654
    %v3717 = vunpack.c.l.bf16 %v3655
    %v3718 = vunpack.c.h.bf16 %v3655
    %v3719 = vunpack.c.l.bf16 %v3656
    %v3720 = vunpack.c.h.bf16 %v3656
    %v3721 = vsel %vm165, %v3657, 0.0
    %v3722 = vsel %vm165, %v3658, 0.0
    %v3723 = vadd.f32 %v3721, %v3722
    %v3724 = vsel %vm165, %v3659, 0.0
    %v3725 = vadd.f32 %v3723, %v3724
    %v3726 = vsel %vm165, %v3660, 0.0
    %v3727 = vadd.f32 %v3725, %v3726
    %v3728 = vsel %vm165, %v3661, 0.0
    %v3729 = vadd.f32 %v3727, %v3728
    %v3730 = vsel %vm165, %v3662, 0.0
    %v3731 = vadd.f32 %v3729, %v3730
    %v3732 = vsel %vm165, %v3663, 0.0
    %v3733 = vadd.f32 %v3731, %v3732
    %v3734 = vsel %vm165, %v3664, 0.0
    %v3735 = vadd.f32 %v3733, %v3734
    %v3736 = vrot.slane %v3735, 4
    %v3737 = vadd.f32 %v3735, %v3736
    %v3738 = vrot.slane %v3737, 2
    %v3739 = vadd.f32 %v3737, %v3738
    %v3740 = vrot.slane %v3739, 1
    %v3741 = vadd.f32 %v3739, %v3740
    %v3742 = vsel %vm165, %v3665, 0.0
    %v3743 = vsel %vm165, %v3666, 0.0
    %v3744 = vadd.f32 %v3742, %v3743
    %v3745 = vsel %vm165, %v3667, 0.0
    %v3746 = vadd.f32 %v3744, %v3745
    %v3747 = vsel %vm165, %v3668, 0.0
    %v3748 = vadd.f32 %v3746, %v3747
    %v3749 = vsel %vm165, %v3669, 0.0
    %v3750 = vadd.f32 %v3748, %v3749
    %v3751 = vsel %vm165, %v3670, 0.0
    %v3752 = vadd.f32 %v3750, %v3751
    %v3753 = vsel %vm165, %v3671, 0.0
    %v3754 = vadd.f32 %v3752, %v3753
    %v3755 = vsel %vm165, %v3672, 0.0
    %v3756 = vadd.f32 %v3754, %v3755
    %v3757 = vrot.slane %v3756, 4
    %v3758 = vadd.f32 %v3756, %v3757
    %v3759 = vrot.slane %v3758, 2
    %v3760 = vadd.f32 %v3758, %v3759
    %v3761 = vrot.slane %v3760, 1
    %v3762 = vadd.f32 %v3760, %v3761
    %v3763 = vsel %vm165, %v3673, 0.0
    %v3764 = vsel %vm165, %v3674, 0.0
    %v3765 = vadd.f32 %v3763, %v3764
    %v3766 = vsel %vm165, %v3675, 0.0
    %v3767 = vadd.f32 %v3765, %v3766
    %v3768 = vsel %vm165, %v3676, 0.0
    %v3769 = vadd.f32 %v3767, %v3768
    %v3770 = vsel %vm165, %v3677, 0.0
    %v3771 = vadd.f32 %v3769, %v3770
    %v3772 = vsel %vm165, %v3678, 0.0
    %v3773 = vadd.f32 %v3771, %v3772
    %v3774 = vsel %vm165, %v3679, 0.0
    %v3775 = vadd.f32 %v3773, %v3774
    %v3776 = vsel %vm165, %v3680, 0.0
    %v3777 = vadd.f32 %v3775, %v3776
    %v3778 = vrot.slane %v3777, 4
    %v3779 = vadd.f32 %v3777, %v3778
    %v3780 = vrot.slane %v3779, 2
    %v3781 = vadd.f32 %v3779, %v3780
    %v3782 = vrot.slane %v3781, 1
    %v3783 = vadd.f32 %v3781, %v3782
    %v3784 = vsel %vm165, %v3681, 0.0
    %v3785 = vsel %vm165, %v3682, 0.0
    %v3786 = vadd.f32 %v3784, %v3785
    %v3787 = vsel %vm165, %v3683, 0.0
    %v3788 = vadd.f32 %v3786, %v3787
    %v3789 = vsel %vm165, %v3684, 0.0
    %v3790 = vadd.f32 %v3788, %v3789
    %v3791 = vsel %vm165, %v3685, 0.0
    %v3792 = vadd.f32 %v3790, %v3791
    %v3793 = vsel %vm165, %v3686, 0.0
    %v3794 = vadd.f32 %v3792, %v3793
    %v3795 = vsel %vm165, %v3687, 0.0
    %v3796 = vadd.f32 %v3794, %v3795
    %v3797 = vsel %vm165, %v3688, 0.0
    %v3798 = vadd.f32 %v3796, %v3797
    %v3799 = vrot.slane %v3798, 4
    %v3800 = vadd.f32 %v3798, %v3799
    %v3801 = vrot.slane %v3800, 2
    %v3802 = vadd.f32 %v3800, %v3801
    %v3803 = vrot.slane %v3802, 1
    %v3804 = vadd.f32 %v3802, %v3803
    %v3805 = vsel %vm165, %v3689, 0.0
    %v3806 = vsel %vm165, %v3690, 0.0
    %v3807 = vadd.f32 %v3805, %v3806
    %v3808 = vsel %vm165, %v3691, 0.0
    %v3809 = vadd.f32 %v3807, %v3808
    %v3810 = vsel %vm165, %v3692, 0.0
    %v3811 = vadd.f32 %v3809, %v3810
    %v3812 = vsel %vm165, %v3693, 0.0
    %v3813 = vadd.f32 %v3811, %v3812
    %v3814 = vsel %vm165, %v3694, 0.0
    %v3815 = vadd.f32 %v3813, %v3814
    %v3816 = vsel %vm165, %v3695, 0.0
    %v3817 = vadd.f32 %v3815, %v3816
    %v3818 = vsel %vm165, %v3696, 0.0
    %v3819 = vadd.f32 %v3817, %v3818
    %v3820 = vrot.slane %v3819, 4
    %v3821 = vadd.f32 %v3819, %v3820
    %v3822 = vrot.slane %v3821, 2
    %v3823 = vadd.f32 %v3821, %v3822
    %v3824 = vrot.slane %v3823, 1
    %v3825 = vadd.f32 %v3823, %v3824
    %v3826 = vsel %vm165, %v3697, 0.0
    %v3827 = vsel %vm165, %v3698, 0.0
    %v3828 = vadd.f32 %v3826, %v3827
    %v3829 = vsel %vm165, %v3699, 0.0
    %v3830 = vadd.f32 %v3828, %v3829
    %v3831 = vsel %vm165, %v3700, 0.0
    %v3832 = vadd.f32 %v3830, %v3831
    %v3833 = vsel %vm165, %v3701, 0.0
    %v3834 = vadd.f32 %v3832, %v3833
    %v3835 = vsel %vm165, %v3702, 0.0
    %v3836 = vadd.f32 %v3834, %v3835
    %v3837 = vsel %vm165, %v3703, 0.0
    %v3838 = vadd.f32 %v3836, %v3837
    %v3839 = vsel %vm165, %v3704, 0.0
    %v3840 = vadd.f32 %v3838, %v3839
    %v3841 = vrot.slane %v3840, 4
    %v3842 = vadd.f32 %v3840, %v3841
    %v3843 = vrot.slane %v3842, 2
    %v3844 = vadd.f32 %v3842, %v3843
    %v3845 = vrot.slane %v3844, 1
    %v3846 = vadd.f32 %v3844, %v3845
    %v3847 = vsel %vm165, %v3705, 0.0
    %v3848 = vsel %vm165, %v3706, 0.0
    %v3849 = vadd.f32 %v3847, %v3848
    %v3850 = vsel %vm165, %v3707, 0.0
    %v3851 = vadd.f32 %v3849, %v3850
    %v3852 = vsel %vm165, %v3708, 0.0
    %v3853 = vadd.f32 %v3851, %v3852
    %v3854 = vsel %vm165, %v3709, 0.0
    %v3855 = vadd.f32 %v3853, %v3854
    %v3856 = vsel %vm165, %v3710, 0.0
    %v3857 = vadd.f32 %v3855, %v3856
    %v3858 = vsel %vm165, %v3711, 0.0
    %v3859 = vadd.f32 %v3857, %v3858
    %v3860 = vsel %vm165, %v3712, 0.0
    %v3861 = vadd.f32 %v3859, %v3860
    %v3862 = vrot.slane %v3861, 4
    %v3863 = vadd.f32 %v3861, %v3862
    %v3864 = vrot.slane %v3863, 2
    %v3865 = vadd.f32 %v3863, %v3864
    %v3866 = vrot.slane %v3865, 1
    %v3867 = vadd.f32 %v3865, %v3866
    %v3868 = vsel %vm165, %v3713, 0.0
    %v3869 = vsel %vm165, %v3714, 0.0
    %v3870 = vadd.f32 %v3868, %v3869
    %v3871 = vsel %vm165, %v3715, 0.0
    %v3872 = vadd.f32 %v3870, %v3871
    %v3873 = vsel %vm165, %v3716, 0.0
    %v3874 = vadd.f32 %v3872, %v3873
    %v3875 = vsel %vm165, %v3717, 0.0
    %v3876 = vadd.f32 %v3874, %v3875
    %v3877 = vsel %vm165, %v3718, 0.0
    %v3878 = vadd.f32 %v3876, %v3877
    %v3879 = vsel %vm165, %v3719, 0.0
    %v3880 = vadd.f32 %v3878, %v3879
    %v3881 = vsel %vm165, %v3720, 0.0
    %v3882 = vadd.f32 %v3880, %v3881
    %v3883 = vrot.slane %v3882, 4
    %v3884 = vadd.f32 %v3882, %v3883
    %v3885 = vrot.slane %v3884, 2
    %v3886 = vadd.f32 %v3884, %v3885
    %v3887 = vrot.slane %v3886, 1
    %v3888 = vadd.f32 %v3886, %v3887
    %v3889 = vunpack.c.l.bf16 %v3304
    %3890 = vrot.lane.b32.xlu0 %v2178, 96
    %v3891 = vpop.permute.xlu0 %3890
    %v3893 = vmul.f32 %v3889, %v3891
    %v3894 = vpack.c.bf16 %v3893, %v3893
    %v3895 = vunpack.c.l.bf16 %v3894
    %v3897 = vrot.slane %v3895, 1
    %v3898 = vrot.slane %v3895, 2
    %v3899 = vrot.slane %v3895, 3
    %v3900 = vrot.slane %v3895, 4
    %v3901 = vrot.slane %v3895, 5
    %v3902 = vrot.slane %v3895, 6
    %v3903 = vrot.slane %v3895, 7
    %v3912 = vadd.f32 %v3741, %v3895
    %v3913 = vadd.f32 %v3762, %v3897
    %v3914 = vadd.f32 %v3783, %v3898
    %v3915 = vadd.f32 %v3804, %v3899
    %v3916 = vadd.f32 %v3825, %v3900
    %v3917 = vadd.f32 %v3846, %v3901
    %v3918 = vadd.f32 %v3867, %v3902
    %v3919 = vadd.f32 %v3888, %v3903
    %v3920 = vpack.c.bf16 %v3912, %v3912
    %v3921 = vpack.c.bf16 %v3913, %v3913
    %v3922 = vpack.c.bf16 %v3914, %v3914
    %v3923 = vpack.c.bf16 %v3915, %v3915
    %v3924 = vpack.c.bf16 %v3916, %v3916
    %v3925 = vpack.c.bf16 %v3917, %v3917
    %v3926 = vpack.c.bf16 %v3918, %v3918
    %v3927 = vpack.c.bf16 %v3919, %v3919
    %v3928 = vld [vmem:[%s5] sm:$0xf]
    %v3929 = vld [vmem:[%s5 + $0x4] sm:$0xf]
    %v3930 = vld [vmem:[%s5 + $0x8] sm:$0xf]
    %v3931 = vld [vmem:[%s5 + $0xc] sm:$0xf]
    %v3932 = vld [vmem:[%s6] sm:$0x1]
    %v3934 = vperm.slane %v3932, 0
    %v3944 = vunpack.c.l.b16 %v3920
    %v3945 = vunpack.c.l.b16 %v3921
    %v3946 = vunpack.c.l.b16 %v3922
    %v3947 = vunpack.c.l.b16 %v3923
    %v3948 = vunpack.c.l.b16 %v3924
    %v3949 = vunpack.c.l.b16 %v3925
    %v3950 = vunpack.c.l.b16 %v3926
    %v3951 = vunpack.c.l.b16 %v3927
    %v3952 = vrot.slane %v3945, 7
    %v3953 = vsel %vm530, %v3952, %v3944
    %v3954 = vrot.slane %v3946, 6
    %v3955 = vsel %vm533, %v3954, %v3953
    %v3956 = vrot.slane %v3947, 5
    %v3957 = vsel %vm536, %v3956, %v3955
    %v3958 = vrot.slane %v3948, 4
    %v3959 = vsel %vm539, %v3958, %v3957
    %v3960 = vrot.slane %v3949, 3
    %v3961 = vsel %vm542, %v3960, %v3959
    %v3962 = vrot.slane %v3950, 2
    %v3963 = vsel %vm545, %v3962, %v3961
    %v3964 = vrot.slane %v3951, 1
    %v3965 = vsel %vm548, %v3964, %v3963
    %v3966 = vpack.c.b16 %v3965, %v3965
    %v3971 = vunpack.c.l.b16 %v3928
    %v3972 = vunpack.c.l.b16 %v3929
    %v3973 = vunpack.c.l.b16 %v3930
    %v3974 = vunpack.c.l.b16 %v3931
    %v3975 = vpack.c.b16 %v3972, %v3971
    %v3976 = vpack.c.b16 %v3974, %v3973
    %v3980 = vsel %vm165, %v3966, 0
    %3982 = vmatpush.bf16.msra.mxu0 0
    %3983 = vmatpush.bf16.msra.mxu0 0
    %3984 = vmatpush.bf16.msra.mxu0 0
    %3985 = vmatpush.bf16.msra.mxu0 0
    %3986 = vmatpush.bf16.msra.mxu0 0
    %3987 = vmatpush.bf16.msra.mxu0 0
    %3988 = vmatpush.bf16.msra.mxu0 %v3976
    %3989 = vmatpush.bf16.msra.mxu0 %v3975
    %3990 = vmatmul.bf16.gmra.mxu0 %v3980
    %v3991 = vpop.f32.mrf.mxu0
    %v3992 = vadd.f32 %v3934, %v3991
    %v3993 = vpop.f32.mrf.mxu0
    %3994 = vdwg.mxu0
    %vm3995 = vcmask 130048
    %3996 = vst.msk [vmem:[#allocation2] sm:$0xff] %vm3995, %v3992
    // Predicated region
    $region42: #{tpu_custom_call.1} parent=1 // pred_check
      _
    $region43: #{tpu_custom_call.1} parent=1 // pred_check_branch
      %3998 = sbr.rel (0) target = $region45
    $region44: #{tpu_custom_call.1} parent=1 // pred_region
      %4000 = vsyncadd [#allocation3], 0
      %s4002 = sshll.u32 [#allocation2], 4
      %s4003 = int_to_ptr.vmem [resolvable:$true] %s4002
      %s4004 = sshll.u32 %s10, 4
      %s4005 = int_to_ptr.hbm [resolvable:$true] %s4004
      %4007 = dma.vmem_to_hbm [thread:$0]  %s4003, 128, %s4005, [#allocation3]
    $region45: #{tpu_custom_call.1} parent=1 // pred_fallthru
      _
    // Predicated region
    $region46: #{tpu_custom_call.1} parent=1 // pred_check
      _
    $region47: #{tpu_custom_call.1} parent=1 // pred_check_branch
      %4009 = sbr.rel (0) target = $region49
    $region48: #{tpu_custom_call.1} parent=1 // pred_region
      %4011 = dma.done [#allocation3], 128
    $region49: #{tpu_custom_call.1} parent=1 // pred_fallthru
      _
    %4012 = vsyncpa [#allocation3], 1

// kernel: tpu_custom_call.1
$region0: #{tpu_custom_call.1}
  #allocation0 [shape = 'u32[]', space=smem, size = 0x4, offset = 0x4, fixed_abs, tag = 'smem constant byte address 0x4 - core index']
  #allocation1 [shape = 'u32[72,128]{1,0:T(1,128)}', space=vmem, size = 0x9000, scoped, tag = 'internal scratch']
  %s0 = inlined_call_operand.vmem [shape: bf16[8,64,32], index: 0, kind: input, shape index: {}]
  %s1 = inlined_call_operand.vmem [shape: bf16[1,32], index: 1, kind: input, shape index: {}]
  %s2 = inlined_call_operand.vmem [shape: bf16[64,32], index: 2, kind: input, shape index: {}]
  %s3 = inlined_call_operand.vmem [shape: bf16[32,96], index: 3, kind: input, shape index: {}]
  %s4 = inlined_call_operand.vmem [shape: f32[1,96], index: 4, kind: input, shape index: {}]
  %s5 = inlined_call_operand.vmem [shape: bf16[32,16], index: 5, kind: input, shape index: {}]
  %s6 = inlined_call_operand.vmem [shape: f32[1,16], index: 6, kind: input, shape index: {}]
  %s7 = inlined_call_operand.vmem [shape: bf16[32,4], index: 7, kind: input, shape index: {}]
  %s8 = inlined_call_operand.vmem [shape: bf16[4,32], index: 8, kind: input, shape index: {}]
  %s9 = inlined_call_operand.vmem [shape: f32[64,4], index: 9, kind: input, shape index: {}]
  %s10 = inlined_call_operand.hbm [shape: f32[8,16], index: 10, kind: output, shape index: {}]
  %s11 = sld [smem:[#allocation0]]
  $region50: #{tpu_custom_call.1} parent=0
    _
  %s13 = ssub.s32 1, %s11
  %s14 = scalar_select 0, %s13, %s11
  $region1: #{tpu_custom_call.1} parent=0
    #allocation2 [shape = 'u8[4096]{0}', space=vmem, size = 0x1000, scoped, tag = 'output window, operand 0, single buffered']
    #allocation3 [shape = 's32[1]{0}', space=sflag, size = 0x4, scoped, tag = 'scoped memory for tpu_custom_call.1']
    %15 = vsyncpa [#allocation3], 0
    // Predicated region
    $region2: #{tpu_custom_call.1} parent=1 // pred_check
      _
    $region3: #{tpu_custom_call.1} parent=1 // pred_check_branch
      %17 = sbr.rel (0) target = $region5
    $region4: #{tpu_custom_call.1} parent=1 // pred_region
      _
    $region5: #{tpu_custom_call.1} parent=1 // pred_fallthru
      _
    // Predicated region
    $region6: #{tpu_custom_call.1} parent=1 // pred_check
      _
    $region7: #{tpu_custom_call.1} parent=1 // pred_check_branch
      %19 = sbr.rel (0) target = $region9
    $region8: #{tpu_custom_call.1} parent=1 // pred_region
      _
    $region9: #{tpu_custom_call.1} parent=1 // pred_fallthru
      _
    // Predicated region
    $region10: #{tpu_custom_call.1} parent=1 // pred_check
      _
    $region11: #{tpu_custom_call.1} parent=1 // pred_check_branch
      %21 = sbr.rel (0) target = $region13
    $region12: #{tpu_custom_call.1} parent=1 // pred_region
      _
    $region13: #{tpu_custom_call.1} parent=1 // pred_fallthru
      _
    // Predicated region
    $region14: #{tpu_custom_call.1} parent=1 // pred_check
      _
    $region15: #{tpu_custom_call.1} parent=1 // pred_check_branch
      %23 = sbr.rel (0) target = $region17
    $region16: #{tpu_custom_call.1} parent=1 // pred_region
      _
    $region17: #{tpu_custom_call.1} parent=1 // pred_fallthru
      _
    // Predicated region
    $region18: #{tpu_custom_call.1} parent=1 // pred_check
      _
    $region19: #{tpu_custom_call.1} parent=1 // pred_check_branch
      %25 = sbr.rel (0) target = $region21
    $region20: #{tpu_custom_call.1} parent=1 // pred_region
      _
    $region21: #{tpu_custom_call.1} parent=1 // pred_fallthru
      _
    // Predicated region
    $region22: #{tpu_custom_call.1} parent=1 // pred_check
      _
    $region23: #{tpu_custom_call.1} parent=1 // pred_check_branch
      %27 = sbr.rel (0) target = $region25
    $region24: #{tpu_custom_call.1} parent=1 // pred_region
      _
    $region25: #{tpu_custom_call.1} parent=1 // pred_fallthru
      _
    // Predicated region
    $region26: #{tpu_custom_call.1} parent=1 // pred_check
      _
    $region27: #{tpu_custom_call.1} parent=1 // pred_check_branch
      %29 = sbr.rel (0) target = $region29
    $region28: #{tpu_custom_call.1} parent=1 // pred_region
      _
    $region29: #{tpu_custom_call.1} parent=1 // pred_fallthru
      _
    // Predicated region
    $region30: #{tpu_custom_call.1} parent=1 // pred_check
      _
    $region31: #{tpu_custom_call.1} parent=1 // pred_check_branch
      %31 = sbr.rel (0) target = $region33
    $region32: #{tpu_custom_call.1} parent=1 // pred_region
      _
    $region33: #{tpu_custom_call.1} parent=1 // pred_fallthru
      _
    // Predicated region
    $region34: #{tpu_custom_call.1} parent=1 // pred_check
      _
    $region35: #{tpu_custom_call.1} parent=1 // pred_check_branch
      %33 = sbr.rel (0) target = $region37
    $region36: #{tpu_custom_call.1} parent=1 // pred_region
      _
    $region37: #{tpu_custom_call.1} parent=1 // pred_fallthru
      _
    // Predicated region
    $region38: #{tpu_custom_call.1} parent=1 // pred_check
      _
    $region39: #{tpu_custom_call.1} parent=1 // pred_check_branch
      %35 = sbr.rel (0) target = $region41
    $region40: #{tpu_custom_call.1} parent=1 // pred_region
      _
    $region41: #{tpu_custom_call.1} parent=1 // pred_fallthru
      _
    %v37 = vld [vmem:[%s0] sm:$0xf]
    %v38 = vld [vmem:[%s0 + $0x4] sm:$0xf]
    %v39 = vld [vmem:[%s0 + $0x8] sm:$0xf]
    %v40 = vld [vmem:[%s0 + $0xc] sm:$0xf]
    %v41 = vld [vmem:[%s0 + $0x10] sm:$0xf]
    %v42 = vld [vmem:[%s0 + $0x14] sm:$0xf]
    %v43 = vld [vmem:[%s0 + $0x18] sm:$0xf]
    %v44 = vld [vmem:[%s0 + $0x1c] sm:$0xf]
    %v45 = vld [vmem:[%s0 + $0x20] sm:$0xf]
    %v46 = vld [vmem:[%s0 + $0x24] sm:$0xf]
    %v47 = vld [vmem:[%s0 + $0x28] sm:$0xf]
    %v48 = vld [vmem:[%s0 + $0x2c] sm:$0xf]
    %v49 = vld [vmem:[%s0 + $0x30] sm:$0xf]
    %v50 = vld [vmem:[%s0 + $0x34] sm:$0xf]
    %v51 = vld [vmem:[%s0 + $0x38] sm:$0xf]
    %v52 = vld [vmem:[%s0 + $0x3c] sm:$0xf]
    %v53 = vld [vmem:[%s0 + $0x40] sm:$0xf]
    %v54 = vld [vmem:[%s0 + $0x44] sm:$0xf]
    %v55 = vld [vmem:[%s0 + $0x48] sm:$0xf]
    %v56 = vld [vmem:[%s0 + $0x4c] sm:$0xf]
    %v57 = vld [vmem:[%s0 + $0x50] sm:$0xf]
    %v58 = vld [vmem:[%s0 + $0x54] sm:$0xf]
    %v59 = vld [vmem:[%s0 + $0x58] sm:$0xf]
    %v60 = vld [vmem:[%s0 + $0x5c] sm:$0xf]
    %v61 = vld [vmem:[%s0 + $0x60] sm:$0xf]
    %v62 = vld [vmem:[%s0 + $0x64] sm:$0xf]
    %v63 = vld [vmem:[%s0 + $0x68] sm:$0xf]
    %v64 = vld [vmem:[%s0 + $0x6c] sm:$0xf]
    %v65 = vld [vmem:[%s0 + $0x70] sm:$0xf]
    %v66 = vld [vmem:[%s0 + $0x74] sm:$0xf]
    %v67 = vld [vmem:[%s0 + $0x78] sm:$0xf]
    %v68 = vld [vmem:[%s0 + $0x7c] sm:$0xf]
    %v69 = vld [vmem:[%s0 + $0x80] sm:$0xf]
    %v70 = vld [vmem:[%s0 + $0x84] sm:$0xf]
    %v71 = vld [vmem:[%s0 + $0x88] sm:$0xf]
    %v72 = vld [vmem:[%s0 + $0x8c] sm:$0xf]
    %v73 = vld [vmem:[%s0 + $0x90] sm:$0xf]
    %v74 = vld [vmem:[%s0 + $0x94] sm:$0xf]
    %v75 = vld [vmem:[%s0 + $0x98] sm:$0xf]
    %v76 = vld [vmem:[%s0 + $0x9c] sm:$0xf]
    %v77 = vld [vmem:[%s0 + $0xa0] sm:$0xf]
    %v78 = vld [vmem:[%s0 + $0xa4] sm:$0xf]
    %v79 = vld [vmem:[%s0 + $0xa8] sm:$0xf]
    %v80 = vld [vmem:[%s0 + $0xac] sm:$0xf]
    %v81 = vld [vmem:[%s0 + $0xb0] sm:$0xf]
    %v82 = vld [vmem:[%s0 + $0xb4] sm:$0xf]
    %v83 = vld [vmem:[%s0 + $0xb8] sm:$0xf]
    %v84 = vld [vmem:[%s0 + $0xbc] sm:$0xf]
    %v85 = vld [vmem:[%s0 + $0xc0] sm:$0xf]
    %v86 = vld [vmem:[%s0 + $0xc4] sm:$0xf]
    %v87 = vld [vmem:[%s0 + $0xc8] sm:$0xf]
    %v88 = vld [vmem:[%s0 + $0xcc] sm:$0xf]
    %v89 = vld [vmem:[%s0 + $0xd0] sm:$0xf]
    %v90 = vld [vmem:[%s0 + $0xd4] sm:$0xf]
    %v91 = vld [vmem:[%s0 + $0xd8] sm:$0xf]
    %v92 = vld [vmem:[%s0 + $0xdc] sm:$0xf]
    %v93 = vld [vmem:[%s0 + $0xe0] sm:$0xf]
    %v94 = vld [vmem:[%s0 + $0xe4] sm:$0xf]
    %v95 = vld [vmem:[%s0 + $0xe8] sm:$0xf]
    %v96 = vld [vmem:[%s0 + $0xec] sm:$0xf]
    %v97 = vld [vmem:[%s0 + $0xf0] sm:$0xf]
    %v98 = vld [vmem:[%s0 + $0xf4] sm:$0xf]
    %v99 = vld [vmem:[%s0 + $0xf8] sm:$0xf]
    %v100 = vld [vmem:[%s0 + $0xfc] sm:$0xf]
    %v101 = vunpack.c.l.bf16 %v37
    %v102 = vunpack.c.l.bf16 %v38
    %v103 = vunpack.c.l.bf16 %v39
    %v104 = vunpack.c.l.bf16 %v40
    %v105 = vunpack.c.l.bf16 %v41
    %v106 = vunpack.c.l.bf16 %v42
    %v107 = vunpack.c.l.bf16 %v43
    %v108 = vunpack.c.l.bf16 %v44
    %v109 = vunpack.c.l.bf16 %v45
    %v110 = vunpack.c.l.bf16 %v46
    %v111 = vunpack.c.l.bf16 %v47
    %v112 = vunpack.c.l.bf16 %v48
    %v113 = vunpack.c.l.bf16 %v49
    %v114 = vunpack.c.l.bf16 %v50
    %v115 = vunpack.c.l.bf16 %v51
    %v116 = vunpack.c.l.bf16 %v52
    %v117 = vunpack.c.l.bf16 %v53
    %v118 = vunpack.c.l.bf16 %v54
    %v119 = vunpack.c.l.bf16 %v55
    %v120 = vunpack.c.l.bf16 %v56
    %v121 = vunpack.c.l.bf16 %v57
    %v122 = vunpack.c.l.bf16 %v58
    %v123 = vunpack.c.l.bf16 %v59
    %v124 = vunpack.c.l.bf16 %v60
    %v125 = vunpack.c.l.bf16 %v61
    %v126 = vunpack.c.l.bf16 %v62
    %v127 = vunpack.c.l.bf16 %v63
    %v128 = vunpack.c.l.bf16 %v64
    %v129 = vunpack.c.l.bf16 %v65
    %v130 = vunpack.c.l.bf16 %v66
    %v131 = vunpack.c.l.bf16 %v67
    %v132 = vunpack.c.l.bf16 %v68
    %v133 = vunpack.c.l.bf16 %v69
    %v134 = vunpack.c.l.bf16 %v70
    %v135 = vunpack.c.l.bf16 %v71
    %v136 = vunpack.c.l.bf16 %v72
    %v137 = vunpack.c.l.bf16 %v73
    %v138 = vunpack.c.l.bf16 %v74
    %v139 = vunpack.c.l.bf16 %v75
    %v140 = vunpack.c.l.bf16 %v76
    %v141 = vunpack.c.l.bf16 %v77
    %v142 = vunpack.c.l.bf16 %v78
    %v143 = vunpack.c.l.bf16 %v79
    %v144 = vunpack.c.l.bf16 %v80
    %v145 = vunpack.c.l.bf16 %v81
    %v146 = vunpack.c.l.bf16 %v82
    %v147 = vunpack.c.l.bf16 %v83
    %v148 = vunpack.c.l.bf16 %v84
    %v149 = vunpack.c.l.bf16 %v85
    %v150 = vunpack.c.l.bf16 %v86
    %v151 = vunpack.c.l.bf16 %v87
    %v152 = vunpack.c.l.bf16 %v88
    %v153 = vunpack.c.l.bf16 %v89
    %v154 = vunpack.c.l.bf16 %v90
    %v155 = vunpack.c.l.bf16 %v91
    %v156 = vunpack.c.l.bf16 %v92
    %v157 = vunpack.c.l.bf16 %v93
    %v158 = vunpack.c.l.bf16 %v94
    %v159 = vunpack.c.l.bf16 %v95
    %v160 = vunpack.c.l.bf16 %v96
    %v161 = vunpack.c.l.bf16 %v97
    %v162 = vunpack.c.l.bf16 %v98
    %v163 = vunpack.c.l.bf16 %v99
    %v164 = vunpack.c.l.bf16 %v100
    %vm165 = vcmask 261120
    %v166 = vsel %vm165, %v101, 0.0
    %v167 = vsel %vm165, %v102, 0.0
    %v168 = vadd.f32 %v166, %v167
    %v169 = vsel %vm165, %v103, 0.0
    %v170 = vadd.f32 %v168, %v169
    %v171 = vsel %vm165, %v104, 0.0
    %v172 = vadd.f32 %v170, %v171
    %v173 = vsel %vm165, %v105, 0.0
    %v174 = vadd.f32 %v172, %v173
    %v175 = vsel %vm165, %v106, 0.0
    %v176 = vadd.f32 %v174, %v175
    %v177 = vsel %vm165, %v107, 0.0
    %v178 = vadd.f32 %v176, %v177
    %v179 = vsel %vm165, %v108, 0.0
    %v180 = vadd.f32 %v178, %v179
    %v181 = vrot.slane %v180, 4
    %v182 = vadd.f32 %v180, %v181
    %v183 = vrot.slane %v182, 2
    %v184 = vadd.f32 %v182, %v183
    %v185 = vrot.slane %v184, 1
    %v186 = vadd.f32 %v184, %v185
    %v187 = vsel %vm165, %v109, 0.0
    %v188 = vsel %vm165, %v110, 0.0
    %v189 = vadd.f32 %v187, %v188
    %v190 = vsel %vm165, %v111, 0.0
    %v191 = vadd.f32 %v189, %v190
    %v192 = vsel %vm165, %v112, 0.0
    %v193 = vadd.f32 %v191, %v192
    %v194 = vsel %vm165, %v113, 0.0
    %v195 = vadd.f32 %v193, %v194
    %v196 = vsel %vm165, %v114, 0.0
    %v197 = vadd.f32 %v195, %v196
    %v198 = vsel %vm165, %v115, 0.0
    %v199 = vadd.f32 %v197, %v198
    %v200 = vsel %vm165, %v116, 0.0
    %v201 = vadd.f32 %v199, %v200
    %v202 = vrot.slane %v201, 4
    %v203 = vadd.f32 %v201, %v202
    %v204 = vrot.slane %v203, 2
    %v205 = vadd.f32 %v203, %v204
    %v206 = vrot.slane %v205, 1
    %v207 = vadd.f32 %v205, %v206
    %v208 = vsel %vm165, %v117, 0.0
    %v209 = vsel %vm165, %v118, 0.0
    %v210 = vadd.f32 %v208, %v209
    %v211 = vsel %vm165, %v119, 0.0
    %v212 = vadd.f32 %v210, %v211
    %v213 = vsel %vm165, %v120, 0.0
    %v214 = vadd.f32 %v212, %v213
    %v215 = vsel %vm165, %v121, 0.0
    %v216 = vadd.f32 %v214, %v215
    %v217 = vsel %vm165, %v122, 0.0
    %v218 = vadd.f32 %v216, %v217
    %v219 = vsel %vm165, %v123, 0.0
    %v220 = vadd.f32 %v218, %v219
    %v221 = vsel %vm165, %v124, 0.0
    %v222 = vadd.f32 %v220, %v221
    %v223 = vrot.slane %v222, 4
    %v224 = vadd.f32 %v222, %v223
    %v225 = vrot.slane %v224, 2
    %v226 = vadd.f32 %v224, %v225
    %v227 = vrot.slane %v226, 1
    %v228 = vadd.f32 %v226, %v227
    %v229 = vsel %vm165, %v125, 0.0
    %v230 = vsel %vm165, %v126, 0.0
    %v231 = vadd.f32 %v229, %v230
    %v232 = vsel %vm165, %v127, 0.0
    %v233 = vadd.f32 %v231, %v232
    %v234 = vsel %vm165, %v128, 0.0
    %v235 = vadd.f32 %v233, %v234
    %v236 = vsel %vm165, %v129, 0.0
    %v237 = vadd.f32 %v235, %v236
    %v238 = vsel %vm165, %v130, 0.0
    %v239 = vadd.f32 %v237, %v238
    %v240 = vsel %vm165, %v131, 0.0
    %v241 = vadd.f32 %v239, %v240
    %v242 = vsel %vm165, %v132, 0.0
    %v243 = vadd.f32 %v241, %v242
    %v244 = vrot.slane %v243, 4
    %v245 = vadd.f32 %v243, %v244
    %v246 = vrot.slane %v245, 2
    %v247 = vadd.f32 %v245, %v246
    %v248 = vrot.slane %v247, 1
    %v249 = vadd.f32 %v247, %v248
    %v250 = vsel %vm165, %v133, 0.0
    %v251 = vsel %vm165, %v134, 0.0
    %v252 = vadd.f32 %v250, %v251
    %v253 = vsel %vm165, %v135, 0.0
    %v254 = vadd.f32 %v252, %v253
    %v255 = vsel %vm165, %v136, 0.0
    %v256 = vadd.f32 %v254, %v255
    %v257 = vsel %vm165, %v137, 0.0
    %v258 = vadd.f32 %v256, %v257
    %v259 = vsel %vm165, %v138, 0.0
    %v260 = vadd.f32 %v258, %v259
    %v261 = vsel %vm165, %v139, 0.0
    %v262 = vadd.f32 %v260, %v261
    %v263 = vsel %vm165, %v140, 0.0
    %v264 = vadd.f32 %v262, %v263
    %v265 = vrot.slane %v264, 4
    %v266 = vadd.f32 %v264, %v265
    %v267 = vrot.slane %v266, 2
    %v268 = vadd.f32 %v266, %v267
    %v269 = vrot.slane %v268, 1
    %v270 = vadd.f32 %v268, %v269
    %v271 = vsel %vm165, %v141, 0.0
    %v272 = vsel %vm165, %v142, 0.0
    %v273 = vadd.f32 %v271, %v272
    %v274 = vsel %vm165, %v143, 0.0
    %v275 = vadd.f32 %v273, %v274
    %v276 = vsel %vm165, %v144, 0.0
    %v277 = vadd.f32 %v275, %v276
    %v278 = vsel %vm165, %v145, 0.0
    %v279 = vadd.f32 %v277, %v278
    %v280 = vsel %vm165, %v146, 0.0
    %v281 = vadd.f32 %v279, %v280
    %v282 = vsel %vm165, %v147, 0.0
    %v283 = vadd.f32 %v281, %v282
    %v284 = vsel %vm165, %v148, 0.0
    %v285 = vadd.f32 %v283, %v284
    %v286 = vrot.slane %v285, 4
    %v287 = vadd.f32 %v285, %v286
    %v288 = vrot.slane %v287, 2
    %v289 = vadd.f32 %v287, %v288
    %v290 = vrot.slane %v289, 1
    %v291 = vadd.f32 %v289, %v290
    %v292 = vsel %vm165, %v149, 0.0
    %v293 = vsel %vm165, %v150, 0.0
    %v294 = vadd.f32 %v292, %v293
    %v295 = vsel %vm165, %v151, 0.0
    %v296 = vadd.f32 %v294, %v295
    %v297 = vsel %vm165, %v152, 0.0
    %v298 = vadd.f32 %v296, %v297
    %v299 = vsel %vm165, %v153, 0.0
    %v300 = vadd.f32 %v298, %v299
    %v301 = vsel %vm165, %v154, 0.0
    %v302 = vadd.f32 %v300, %v301
    %v303 = vsel %vm165, %v155, 0.0
    %v304 = vadd.f32 %v302, %v303
    %v305 = vsel %vm165, %v156, 0.0
    %v306 = vadd.f32 %v304, %v305
    %v307 = vrot.slane %v306, 4
    %v308 = vadd.f32 %v306, %v307
    %v309 = vrot.slane %v308, 2
    %v310 = vadd.f32 %v308, %v309
    %v311 = vrot.slane %v310, 1
    %v312 = vadd.f32 %v310, %v311
    %v313 = vsel %vm165, %v157, 0.0
    %v314 = vsel %vm165, %v158, 0.0
    %v315 = vadd.f32 %v313, %v314
    %v316 = vsel %vm165, %v159, 0.0
    %v317 = vadd.f32 %v315, %v316
    %v318 = vsel %vm165, %v160, 0.0
    %v319 = vadd.f32 %v317, %v318
    %v320 = vsel %vm165, %v161, 0.0
    %v321 = vadd.f32 %v319, %v320
    %v322 = vsel %vm165, %v162, 0.0
    %v323 = vadd.f32 %v321, %v322
    %v324 = vsel %vm165, %v163, 0.0
    %v325 = vadd.f32 %v323, %v324
    %v326 = vsel %vm165, %v164, 0.0
    %v327 = vadd.f32 %v325, %v326
    %v328 = vrot.slane %v327, 4
    %v329 = vadd.f32 %v327, %v328
    %v330 = vrot.slane %v329, 2
    %v331 = vadd.f32 %v329, %v330
    %v332 = vrot.slane %v331, 1
    %v333 = vadd.f32 %v331, %v332
    %v334 = vmul.f32 %v186, 0.020408163
    %v335 = vmul.f32 %v207, 0.020408163
    %v336 = vmul.f32 %v228, 0.020408163
    %v337 = vmul.f32 %v249, 0.020408163
    %v338 = vmul.f32 %v270, 0.020408163
    %v339 = vmul.f32 %v291, 0.020408163
    %v340 = vmul.f32 %v312, 0.020408163
    %v341 = vmul.f32 %v333, 0.020408163
    %v342 = vld [vmem:[%s1] sm:$0x1]
    %v343 = vunpack.c.l.bf16 %v342
    %v344 = vperm.slane %v343, 0
    %v345 = vadd.f32 %v334, %v344
    %v346 = vadd.f32 %v335, %v344
    %v347 = vadd.f32 %v336, %v344
    %v348 = vadd.f32 %v337, %v344
    %v349 = vadd.f32 %v338, %v344
    %v350 = vadd.f32 %v339, %v344
    %v351 = vadd.f32 %v340, %v344
    %v352 = vadd.f32 %v341, %v344
    %v353 = vpack.c.bf16 %v345, %v345
    %v354 = vpack.c.bf16 %v346, %v346
    %v355 = vpack.c.bf16 %v347, %v347
    %v356 = vpack.c.bf16 %v348, %v348
    %v357 = vpack.c.bf16 %v349, %v349
    %v358 = vpack.c.bf16 %v350, %v350
    %v359 = vpack.c.bf16 %v351, %v351
    %v360 = vpack.c.bf16 %v352, %v352
    %v361 = vld [vmem:[%s2] sm:$0xf]
    %v362 = vld [vmem:[%s2 + $0x4] sm:$0xf]
    %v363 = vld [vmem:[%s2 + $0x8] sm:$0xf]
    %v364 = vld [vmem:[%s2 + $0xc] sm:$0xf]
    %v365 = vld [vmem:[%s2 + $0x10] sm:$0xf]
    %v366 = vld [vmem:[%s2 + $0x14] sm:$0xf]
    %v367 = vld [vmem:[%s2 + $0x18] sm:$0xf]
    %v368 = vld [vmem:[%s2 + $0x1c] sm:$0xf]
    %v369 = vunpack.c.l.bf16 %v361
    %v370 = vunpack.c.l.bf16 %v362
    %v371 = vunpack.c.l.bf16 %v363
    %v372 = vunpack.c.l.bf16 %v364
    %v373 = vunpack.c.l.bf16 %v365
    %v374 = vunpack.c.l.bf16 %v366
    %v375 = vunpack.c.l.bf16 %v367
    %v376 = vunpack.c.l.bf16 %v368
    %v377 = vadd.f32 %v101, %v369
    %v378 = vadd.f32 %v102, %v370
    %v379 = vadd.f32 %v103, %v371
    %v380 = vadd.f32 %v104, %v372
    %v381 = vadd.f32 %v105, %v373
    %v382 = vadd.f32 %v106, %v374
    %v383 = vadd.f32 %v107, %v375
    %v384 = vadd.f32 %v108, %v376
    %v385 = vadd.f32 %v109, %v369
    %v386 = vadd.f32 %v110, %v370
    %v387 = vadd.f32 %v111, %v371
    %v388 = vadd.f32 %v112, %v372
    %v389 = vadd.f32 %v113, %v373
    %v390 = vadd.f32 %v114, %v374
    %v391 = vadd.f32 %v115, %v375
    %v392 = vadd.f32 %v116, %v376
    %v393 = vadd.f32 %v117, %v369
    %v394 = vadd.f32 %v118, %v370
    %v395 = vadd.f32 %v119, %v371
    %v396 = vadd.f32 %v120, %v372
    %v397 = vadd.f32 %v121, %v373
    %v398 = vadd.f32 %v122, %v374
    %v399 = vadd.f32 %v123, %v375
    %v400 = vadd.f32 %v124, %v376
    %v401 = vadd.f32 %v125, %v369
    %v402 = vadd.f32 %v126, %v370
    %v403 = vadd.f32 %v127, %v371
    %v404 = vadd.f32 %v128, %v372
    %v405 = vadd.f32 %v129, %v373
    %v406 = vadd.f32 %v130, %v374
    %v407 = vadd.f32 %v131, %v375
    %v408 = vadd.f32 %v132, %v376
    %v409 = vadd.f32 %v133, %v369
    %v410 = vadd.f32 %v134, %v370
    %v411 = vadd.f32 %v135, %v371
    %v412 = vadd.f32 %v136, %v372
    %v413 = vadd.f32 %v137, %v373
    %v414 = vadd.f32 %v138, %v374
    %v415 = vadd.f32 %v139, %v375
    %v416 = vadd.f32 %v140, %v376
    %v417 = vadd.f32 %v141, %v369
    %v418 = vadd.f32 %v142, %v370
    %v419 = vadd.f32 %v143, %v371
    %v420 = vadd.f32 %v144, %v372
    %v421 = vadd.f32 %v145, %v373
    %v422 = vadd.f32 %v146, %v374
    %v423 = vadd.f32 %v147, %v375
    %v424 = vadd.f32 %v148, %v376
    %v425 = vadd.f32 %v149, %v369
    %v426 = vadd.f32 %v150, %v370
    %v427 = vadd.f32 %v151, %v371
    %v428 = vadd.f32 %v152, %v372
    %v429 = vadd.f32 %v153, %v373
    %v430 = vadd.f32 %v154, %v374
    %v431 = vadd.f32 %v155, %v375
    %v432 = vadd.f32 %v156, %v376
    %v433 = vadd.f32 %v157, %v369
    %v434 = vadd.f32 %v158, %v370
    %v435 = vadd.f32 %v159, %v371
    %v436 = vadd.f32 %v160, %v372
    %v437 = vadd.f32 %v161, %v373
    %v438 = vadd.f32 %v162, %v374
    %v439 = vadd.f32 %v163, %v375
    %v440 = vadd.f32 %v164, %v376
    %v441 = vpack.c.bf16 %v377, %v377
    %v442 = vpack.c.bf16 %v378, %v378
    %v443 = vpack.c.bf16 %v379, %v379
    %v444 = vpack.c.bf16 %v380, %v380
    %v445 = vpack.c.bf16 %v381, %v381
    %v446 = vpack.c.bf16 %v382, %v382
    %v447 = vpack.c.bf16 %v383, %v383
    %v448 = vpack.c.bf16 %v384, %v384
    %v449 = vpack.c.bf16 %v385, %v385
    %v450 = vpack.c.bf16 %v386, %v386
    %v451 = vpack.c.bf16 %v387, %v387
    %v452 = vpack.c.bf16 %v388, %v388
    %v453 = vpack.c.bf16 %v389, %v389
    %v454 = vpack.c.bf16 %v390, %v390
    %v455 = vpack.c.bf16 %v391, %v391
    %v456 = vpack.c.bf16 %v392, %v392
    %v457 = vpack.c.bf16 %v393, %v393
    %v458 = vpack.c.bf16 %v394, %v394
    %v459 = vpack.c.bf16 %v395, %v395
    %v460 = vpack.c.bf16 %v396, %v396
    %v461 = vpack.c.bf16 %v397, %v397
    %v462 = vpack.c.bf16 %v398, %v398
    %v463 = vpack.c.bf16 %v399, %v399
    %v464 = vpack.c.bf16 %v400, %v400
    %v465 = vpack.c.bf16 %v401, %v401
    %v466 = vpack.c.bf16 %v402, %v402
    %v467 = vpack.c.bf16 %v403, %v403
    %v468 = vpack.c.bf16 %v404, %v404
    %v469 = vpack.c.bf16 %v405, %v405
    %v470 = vpack.c.bf16 %v406, %v406
    %v471 = vpack.c.bf16 %v407, %v407
    %v472 = vpack.c.bf16 %v408, %v408
    %v473 = vpack.c.bf16 %v409, %v409
    %v474 = vpack.c.bf16 %v410, %v410
    %v475 = vpack.c.bf16 %v411, %v411
    %v476 = vpack.c.bf16 %v412, %v412
    %v477 = vpack.c.bf16 %v413, %v413
    %v478 = vpack.c.bf16 %v414, %v414
    %v479 = vpack.c.bf16 %v415, %v415
    %v480 = vpack.c.bf16 %v416, %v416
    %v481 = vpack.c.bf16 %v417, %v417
    %v482 = vpack.c.bf16 %v418, %v418
    %v483 = vpack.c.bf16 %v419, %v419
    %v484 = vpack.c.bf16 %v420, %v420
    %v485 = vpack.c.bf16 %v421, %v421
    %v486 = vpack.c.bf16 %v422, %v422
    %v487 = vpack.c.bf16 %v423, %v423
    %v488 = vpack.c.bf16 %v424, %v424
    %v489 = vpack.c.bf16 %v425, %v425
    %v490 = vpack.c.bf16 %v426, %v426
    %v491 = vpack.c.bf16 %v427, %v427
    %v492 = vpack.c.bf16 %v428, %v428
    %v493 = vpack.c.bf16 %v429, %v429
    %v494 = vpack.c.bf16 %v430, %v430
    %v495 = vpack.c.bf16 %v431, %v431
    %v496 = vpack.c.bf16 %v432, %v432
    %v497 = vpack.c.bf16 %v433, %v433
    %v498 = vpack.c.bf16 %v434, %v434
    %v499 = vpack.c.bf16 %v435, %v435
    %v500 = vpack.c.bf16 %v436, %v436
    %v501 = vpack.c.bf16 %v437, %v437
    %v502 = vpack.c.bf16 %v438, %v438
    %v503 = vpack.c.bf16 %v439, %v439
    %v504 = vpack.c.bf16 %v440, %v440
    %v505 = vld [vmem:[%s4] sm:$0x1]
    %v506 = vld [vmem:[%s3] sm:$0xf]
    %v507 = vld [vmem:[%s3 + $0x4] sm:$0xf]
    %v508 = vld [vmem:[%s3 + $0x8] sm:$0xf]
    %v509 = vld [vmem:[%s3 + $0xc] sm:$0xf]
    %v511 = vperm.slane %v505, 0
    %v521 = vunpack.c.l.b16 %v353
    %v522 = vunpack.c.l.b16 %v354
    %v523 = vunpack.c.l.b16 %v355
    %v524 = vunpack.c.l.b16 %v356
    %v525 = vunpack.c.l.b16 %v357
    %v526 = vunpack.c.l.b16 %v358
    %v527 = vunpack.c.l.b16 %v359
    %v528 = vunpack.c.l.b16 %v360
    %v529 = vrot.slane %v522, 7
    %vm530 = vcmask 1041409
    %v531 = vsel %vm530, %v529, %v521
    %v532 = vrot.slane %v523, 6
    %vm533 = vcmask 1042434
    %v534 = vsel %vm533, %v532, %v531
    %v535 = vrot.slane %v524, 5
    %vm536 = vcmask 1043459
    %v537 = vsel %vm536, %v535, %v534
    %v538 = vrot.slane %v525, 4
    %vm539 = vcmask 1044484
    %v540 = vsel %vm539, %v538, %v537
    %v541 = vrot.slane %v526, 3
    %vm542 = vcmask 1045509
    %v543 = vsel %vm542, %v541, %v540
    %v544 = vrot.slane %v527, 2
    %vm545 = vcmask 1046534
    %v546 = vsel %vm545, %v544, %v543
    %v547 = vrot.slane %v528, 1
    %vm548 = vcmask 1047559
    %v549 = vsel %vm548, %v547, %v546
    %v550 = vpack.c.b16 %v549, %v549
    %v555 = vunpack.c.l.b16 %v506
    %v556 = vunpack.c.l.b16 %v507
    %v557 = vunpack.c.l.b16 %v508
    %v558 = vunpack.c.l.b16 %v509
    %v559 = vpack.c.b16 %v556, %v555
    %v560 = vpack.c.b16 %v558, %v557
    %v564 = vsel %vm165, %v550, 0
    %566 = vmatpush.bf16.msra.mxu0 0
    %567 = vmatpush.bf16.msra.mxu0 0
    %568 = vmatpush.bf16.msra.mxu0 0
    %569 = vmatpush.bf16.msra.mxu0 0
    %570 = vmatpush.bf16.msra.mxu0 0
    %571 = vmatpush.bf16.msra.mxu0 0
    %572 = vmatpush.bf16.msra.mxu0 %v560
    %573 = vmatpush.bf16.msra.mxu0 %v559
    %574 = vmatmul.bf16.gmra.mxu0 %v564
    %v575 = vpop.f32.mrf.mxu0
    %v576 = vadd.f32 %v511, %v575
    %v577 = vpop.f32.mrf.mxu0
    %578 = vdwg.mxu0
    %v579 = vpack.c.bf16 %v576, %v576
    %v580 = vmul.f32 %v576, 0.35355338
    %v581 = vpack.c.bf16 %v580, %v580
    %v646 = vunpack.c.l.b16 %v441
    %v647 = vunpack.c.l.b16 %v442
    %v648 = vunpack.c.l.b16 %v443
    %v649 = vunpack.c.l.b16 %v444
    %v650 = vunpack.c.l.b16 %v445
    %v651 = vunpack.c.l.b16 %v446
    %v652 = vunpack.c.l.b16 %v447
    %v653 = vunpack.c.l.b16 %v448
    %v654 = vunpack.c.l.b16 %v449
    %v655 = vunpack.c.l.b16 %v450
    %v656 = vunpack.c.l.b16 %v451
    %v657 = vunpack.c.l.b16 %v452
    %v658 = vunpack.c.l.b16 %v453
    %v659 = vunpack.c.l.b16 %v454
    %v660 = vunpack.c.l.b16 %v455
    %v661 = vunpack.c.l.b16 %v456
    %v662 = vunpack.c.l.b16 %v457
    %v663 = vunpack.c.l.b16 %v458
    %v664 = vunpack.c.l.b16 %v459
    %v665 = vunpack.c.l.b16 %v460
    %v666 = vunpack.c.l.b16 %v461
    %v667 = vunpack.c.l.b16 %v462
    %v668 = vunpack.c.l.b16 %v463
    %v669 = vunpack.c.l.b16 %v464
    %v670 = vunpack.c.l.b16 %v465
    %v671 = vunpack.c.l.b16 %v466
    %v672 = vunpack.c.l.b16 %v467
    %v673 = vunpack.c.l.b16 %v468
    %v674 = vunpack.c.l.b16 %v469
    %v675 = vunpack.c.l.b16 %v470
    %v676 = vunpack.c.l.b16 %v471
    %v677 = vunpack.c.l.b16 %v472
    %v678 = vunpack.c.l.b16 %v473
    %v679 = vunpack.c.l.b16 %v474
    %v680 = vunpack.c.l.b16 %v475
    %v681 = vunpack.c.l.b16 %v476
    %v682 = vunpack.c.l.b16 %v477
    %v683 = vunpack.c.l.b16 %v478
    %v684 = vunpack.c.l.b16 %v479
    %v685 = vunpack.c.l.b16 %v480
    %v686 = vunpack.c.l.b16 %v481
    %v687 = vunpack.c.l.b16 %v482
    %v688 = vunpack.c.l.b16 %v483
    %v689 = vunpack.c.l.b16 %v484
    %v690 = vunpack.c.l.b16 %v485
    %v691 = vunpack.c.l.b16 %v486
    %v692 = vunpack.c.l.b16 %v487
    %v693 = vunpack.c.l.b16 %v488
    %v694 = vunpack.c.l.b16 %v489
    %v695 = vunpack.c.l.b16 %v490
    %v696 = vunpack.c.l.b16 %v491
    %v697 = vunpack.c.l.b16 %v492
    %v698 = vunpack.c.l.b16 %v493
    %v699 = vunpack.c.l.b16 %v494
    %v700 = vunpack.c.l.b16 %v495
    %v701 = vunpack.c.l.b16 %v496
    %v702 = vunpack.c.l.b16 %v497
    %v703 = vunpack.c.l.b16 %v498
    %v704 = vunpack.c.l.b16 %v499
    %v705 = vunpack.c.l.b16 %v500
    %v706 = vunpack.c.l.b16 %v501
    %v707 = vunpack.c.l.b16 %v502
    %v708 = vunpack.c.l.b16 %v503
    %v709 = vunpack.c.l.b16 %v504
    %v710 = vpack.c.b16 %v647, %v646
    %v711 = vpack.c.b16 %v649, %v648
    %v712 = vpack.c.b16 %v651, %v650
    %v713 = vpack.c.b16 %v653, %v652
    %v714 = vpack.c.b16 %v655, %v654
    %v715 = vpack.c.b16 %v657, %v656
    %v716 = vpack.c.b16 %v659, %v658
    %v717 = vpack.c.b16 %v661, %v660
    %v718 = vpack.c.b16 %v663, %v662
    %v719 = vpack.c.b16 %v665, %v664
    %v720 = vpack.c.b16 %v667, %v666
    %v721 = vpack.c.b16 %v669, %v668
    %v722 = vpack.c.b16 %v671, %v670
    %v723 = vpack.c.b16 %v673, %v672
    %v724 = vpack.c.b16 %v675, %v674
    %v725 = vpack.c.b16 %v677, %v676
    %v726 = vpack.c.b16 %v679, %v678
    %v727 = vpack.c.b16 %v681, %v680
    %v728 = vpack.c.b16 %v683, %v682
    %v729 = vpack.c.b16 %v685, %v684
    %v730 = vpack.c.b16 %v687, %v686
    %v731 = vpack.c.b16 %v689, %v688
    %v732 = vpack.c.b16 %v691, %v690
    %v733 = vpack.c.b16 %v693, %v692
    %v734 = vpack.c.b16 %v695, %v694
    %v735 = vpack.c.b16 %v697, %v696
    %v736 = vpack.c.b16 %v699, %v698
    %v737 = vpack.c.b16 %v701, %v700
    %v738 = vpack.c.b16 %v703, %v702
    %v739 = vpack.c.b16 %v705, %v704
    %v740 = vpack.c.b16 %v707, %v706
    %v741 = vpack.c.b16 %v709, %v708
    %v743 = vsel %vm165, %v710, 0
    %v746 = vsel %vm165, %v711, 0
    %v749 = vsel %vm165, %v712, 0
    %v752 = vsel %vm165, %v713, 0
    %v755 = vsel %vm165, %v714, 0
    %v758 = vsel %vm165, %v715, 0
    %v761 = vsel %vm165, %v716, 0
    %v764 = vsel %vm165, %v717, 0
    %v767 = vsel %vm165, %v718, 0
    %v770 = vsel %vm165, %v719, 0
    %v773 = vsel %vm165, %v720, 0
    %v776 = vsel %vm165, %v721, 0
    %v779 = vsel %vm165, %v722, 0
    %v782 = vsel %vm165, %v723, 0
    %v785 = vsel %vm165, %v724, 0
    %v788 = vsel %vm165, %v725, 0
    %v791 = vsel %vm165, %v726, 0
    %v794 = vsel %vm165, %v727, 0
    %v797 = vsel %vm165, %v728, 0
    %v800 = vsel %vm165, %v729, 0
    %v803 = vsel %vm165, %v730, 0
    %v806 = vsel %vm165, %v731, 0
    %v809 = vsel %vm165, %v732, 0
    %v812 = vsel %vm165, %v733, 0
    %v815 = vsel %vm165, %v734, 0
    %v818 = vsel %vm165, %v735, 0
    %v821 = vsel %vm165, %v736, 0
    %v824 = vsel %vm165, %v737, 0
    %v827 = vsel %vm165, %v738, 0
    %v830 = vsel %vm165, %v739, 0
    %v833 = vsel %vm165, %v740, 0
    %v836 = vsel %vm165, %v741, 0
    %838 = vmatpush.bf16.msra.mxu0 0
    %839 = vmatpush.bf16.msra.mxu0 0
    %840 = vmatpush.bf16.msra.mxu0 0
    %841 = vmatpush.bf16.msra.mxu0 0
    %842 = vmatpush.bf16.msra.mxu0 0
    %843 = vmatpush.bf16.msra.mxu0 0
    %844 = vmatpush.bf16.msra.mxu0 %v560
    %845 = vmatpush.bf16.msra.mxu0 %v559
    %846 = vmatmul.bf16.gmra.mxu0 %v743
    %v847 = vpop.f32.mrf.mxu0
    %v848 = vadd.f32 %v511, %v847
    %v849 = vpop.f32.mrf.mxu0
    %v850 = vadd.f32 %v511, %v849
    %851 = vmatmul.bf16.gmra.mxu0 %v746
    %v852 = vpop.f32.mrf.mxu0
    %v853 = vadd.f32 %v511, %v852
    %v854 = vpop.f32.mrf.mxu0
    %v855 = vadd.f32 %v511, %v854
    %856 = vmatmul.bf16.gmra.mxu0 %v749
    %v857 = vpop.f32.mrf.mxu0
    %v858 = vadd.f32 %v511, %v857
    %v859 = vpop.f32.mrf.mxu0
    %v860 = vadd.f32 %v511, %v859
    %861 = vmatmul.bf16.gmra.mxu0 %v752
    %v862 = vpop.f32.mrf.mxu0
    %v863 = vadd.f32 %v511, %v862
    %v864 = vpop.f32.mrf.mxu0
    %v865 = vadd.f32 %v511, %v864
    %866 = vmatmul.bf16.gmra.mxu0 %v755
    %v867 = vpop.f32.mrf.mxu0
    %v868 = vadd.f32 %v511, %v867
    %v869 = vpop.f32.mrf.mxu0
    %v870 = vadd.f32 %v511, %v869
    %871 = vmatmul.bf16.gmra.mxu0 %v758
    %v872 = vpop.f32.mrf.mxu0
    %v873 = vadd.f32 %v511, %v872
    %v874 = vpop.f32.mrf.mxu0
    %v875 = vadd.f32 %v511, %v874
    %876 = vmatmul.bf16.gmra.mxu0 %v761
    %v877 = vpop.f32.mrf.mxu0
    %v878 = vadd.f32 %v511, %v877
    %v879 = vpop.f32.mrf.mxu0
    %v880 = vadd.f32 %v511, %v879
    %881 = vmatmul.bf16.gmra.mxu0 %v764
    %v882 = vpop.f32.mrf.mxu0
    %v883 = vadd.f32 %v511, %v882
    %v884 = vpop.f32.mrf.mxu0
    %v885 = vadd.f32 %v511, %v884
    %886 = vmatmul.bf16.gmra.mxu0 %v767
    %v887 = vpop.f32.mrf.mxu0
    %v888 = vadd.f32 %v511, %v887
    %v889 = vpop.f32.mrf.mxu0
    %v890 = vadd.f32 %v511, %v889
    %891 = vmatmul.bf16.gmra.mxu0 %v770
    %v892 = vpop.f32.mrf.mxu0
    %v893 = vadd.f32 %v511, %v892
    %v894 = vpop.f32.mrf.mxu0
    %v895 = vadd.f32 %v511, %v894
    %896 = vmatmul.bf16.gmra.mxu0 %v773
    %v897 = vpop.f32.mrf.mxu0
    %v898 = vadd.f32 %v511, %v897
    %v899 = vpop.f32.mrf.mxu0
    %v900 = vadd.f32 %v511, %v899
    %901 = vmatmul.bf16.gmra.mxu0 %v776
    %v902 = vpop.f32.mrf.mxu0
    %v903 = vadd.f32 %v511, %v902
    %v904 = vpop.f32.mrf.mxu0
    %v905 = vadd.f32 %v511, %v904
    %906 = vmatmul.bf16.gmra.mxu0 %v779
    %v907 = vpop.f32.mrf.mxu0
    %v908 = vadd.f32 %v511, %v907
    %v909 = vpop.f32.mrf.mxu0
    %v910 = vadd.f32 %v511, %v909
    %911 = vmatmul.bf16.gmra.mxu0 %v782
    %v912 = vpop.f32.mrf.mxu0
    %v913 = vadd.f32 %v511, %v912
    %v914 = vpop.f32.mrf.mxu0
    %v915 = vadd.f32 %v511, %v914
    %916 = vmatmul.bf16.gmra.mxu0 %v785
    %v917 = vpop.f32.mrf.mxu0
    %v918 = vadd.f32 %v511, %v917
    %v919 = vpop.f32.mrf.mxu0
    %v920 = vadd.f32 %v511, %v919
    %921 = vmatmul.bf16.gmra.mxu0 %v788
    %v922 = vpop.f32.mrf.mxu0
    %v923 = vadd.f32 %v511, %v922
    %v924 = vpop.f32.mrf.mxu0
    %v925 = vadd.f32 %v511, %v924
    %926 = vmatmul.bf16.gmra.mxu0 %v791
    %v927 = vpop.f32.mrf.mxu0
    %v928 = vadd.f32 %v511, %v927
    %v929 = vpop.f32.mrf.mxu0
    %v930 = vadd.f32 %v511, %v929
    %931 = vmatmul.bf16.gmra.mxu0 %v794
    %v932 = vpop.f32.mrf.mxu0
    %v933 = vadd.f32 %v511, %v932
    %v934 = vpop.f32.mrf.mxu0
    %v935 = vadd.f32 %v511, %v934
    %936 = vmatmul.bf16.gmra.mxu0 %v797
    %v937 = vpop.f32.mrf.mxu0
    %v938 = vadd.f32 %v511, %v937
    %v939 = vpop.f32.mrf.mxu0
    %v940 = vadd.f32 %v511, %v939
    %941 = vmatmul.bf16.gmra.mxu0 %v800
    %v942 = vpop.f32.mrf.mxu0
    %v943 = vadd.f32 %v511, %v942
    %v944 = vpop.f32.mrf.mxu0
    %v945 = vadd.f32 %v511, %v944
    %946 = vmatmul.bf16.gmra.mxu0 %v803
    %v947 = vpop.f32.mrf.mxu0
    %v948 = vadd.f32 %v511, %v947
    %v949 = vpop.f32.mrf.mxu0
    %v950 = vadd.f32 %v511, %v949
    %951 = vmatmul.bf16.gmra.mxu0 %v806
    %v952 = vpop.f32.mrf.mxu0
    %v953 = vadd.f32 %v511, %v952
    %v954 = vpop.f32.mrf.mxu0
    %v955 = vadd.f32 %v511, %v954
    %956 = vmatmul.bf16.gmra.mxu0 %v809
    %v957 = vpop.f32.mrf.mxu0
    %v958 = vadd.f32 %v511, %v957
    %v959 = vpop.f32.mrf.mxu0
    %v960 = vadd.f32 %v511, %v959
    %961 = vmatmul.bf16.gmra.mxu0 %v812
    %v962 = vpop.f32.mrf.mxu0
    %v963 = vadd.f32 %v511, %v962
    %v964 = vpop.f32.mrf.mxu0
    %v965 = vadd.f32 %v511, %v964
    %966 = vmatmul.bf16.gmra.mxu0 %v815
    %v967 = vpop.f32.mrf.mxu0
    %v968 = vadd.f32 %v511, %v967
    %v969 = vpop.f32.mrf.mxu0
    %v970 = vadd.f32 %v511, %v969
    %971 = vmatmul.bf16.gmra.mxu0 %v818
    %v972 = vpop.f32.mrf.mxu0
    %v973 = vadd.f32 %v511, %v972
    %v974 = vpop.f32.mrf.mxu0
    %v975 = vadd.f32 %v511, %v974
    %976 = vmatmul.bf16.gmra.mxu0 %v821
    %v977 = vpop.f32.mrf.mxu0
    %v978 = vadd.f32 %v511, %v977
    %v979 = vpop.f32.mrf.mxu0
    %v980 = vadd.f32 %v511, %v979
    %981 = vmatmul.bf16.gmra.mxu0 %v824
    %v982 = vpop.f32.mrf.mxu0
    %v983 = vadd.f32 %v511, %v982
    %v984 = vpop.f32.mrf.mxu0
    %v985 = vadd.f32 %v511, %v984
    %986 = vmatmul.bf16.gmra.mxu0 %v827
    %v987 = vpop.f32.mrf.mxu0
    %v988 = vadd.f32 %v511, %v987
    %v989 = vpop.f32.mrf.mxu0
    %v990 = vadd.f32 %v511, %v989
    %991 = vmatmul.bf16.gmra.mxu0 %v830
    %v992 = vpop.f32.mrf.mxu0
    %v993 = vadd.f32 %v511, %v992
    %v994 = vpop.f32.mrf.mxu0
    %v995 = vadd.f32 %v511, %v994
    %996 = vmatmul.bf16.gmra.mxu0 %v833
    %v997 = vpop.f32.mrf.mxu0
    %v998 = vadd.f32 %v511, %v997
    %v999 = vpop.f32.mrf.mxu0
    %v1000 = vadd.f32 %v511, %v999
    %1001 = vmatmul.bf16.gmra.mxu0 %v836
    %v1002 = vpop.f32.mrf.mxu0
    %v1003 = vadd.f32 %v511, %v1002
    %v1004 = vpop.f32.mrf.mxu0
    %v1005 = vadd.f32 %v511, %v1004
    %1006 = vdwg.mxu0
    %v1007 = vpack.c.bf16 %v848, %v848
    %v1008 = vpack.c.bf16 %v850, %v850
    %v1009 = vpack.c.bf16 %v853, %v853
    %v1010 = vpack.c.bf16 %v855, %v855
    %v1011 = vpack.c.bf16 %v858, %v858
    %v1012 = vpack.c.bf16 %v860, %v860
    %v1013 = vpack.c.bf16 %v863, %v863
    %v1014 = vpack.c.bf16 %v865, %v865
    %v1015 = vpack.c.bf16 %v868, %v868
    %v1016 = vpack.c.bf16 %v870, %v870
    %v1017 = vpack.c.bf16 %v873, %v873
    %v1018 = vpack.c.bf16 %v875, %v875
    %v1019 = vpack.c.bf16 %v878, %v878
    %v1020 = vpack.c.bf16 %v880, %v880
    %v1021 = vpack.c.bf16 %v883, %v883
    %v1022 = vpack.c.bf16 %v885, %v885
    %v1023 = vpack.c.bf16 %v888, %v888
    %v1024 = vpack.c.bf16 %v890, %v890
    %v1025 = vpack.c.bf16 %v893, %v893
    %v1026 = vpack.c.bf16 %v895, %v895
    %v1027 = vpack.c.bf16 %v898, %v898
    %v1028 = vpack.c.bf16 %v900, %v900
    %v1029 = vpack.c.bf16 %v903, %v903
    %v1030 = vpack.c.bf16 %v905, %v905
    %v1031 = vpack.c.bf16 %v908, %v908
    %v1032 = vpack.c.bf16 %v910, %v910
    %v1033 = vpack.c.bf16 %v913, %v913
    %v1034 = vpack.c.bf16 %v915, %v915
    %v1035 = vpack.c.bf16 %v918, %v918
    %v1036 = vpack.c.bf16 %v920, %v920
    %v1037 = vpack.c.bf16 %v923, %v923
    %v1038 = vpack.c.bf16 %v925, %v925
    %v1039 = vpack.c.bf16 %v928, %v928
    %v1040 = vpack.c.bf16 %v930, %v930
    %v1041 = vpack.c.bf16 %v933, %v933
    %v1042 = vpack.c.bf16 %v935, %v935
    %v1043 = vpack.c.bf16 %v938, %v938
    %v1044 = vpack.c.bf16 %v940, %v940
    %v1045 = vpack.c.bf16 %v943, %v943
    %v1046 = vpack.c.bf16 %v945, %v945
    %v1047 = vpack.c.bf16 %v948, %v948
    %v1048 = vpack.c.bf16 %v950, %v950
    %v1049 = vpack.c.bf16 %v953, %v953
    %v1050 = vpack.c.bf16 %v955, %v955
    %v1051 = vpack.c.bf16 %v958, %v958
    %v1052 = vpack.c.bf16 %v960, %v960
    %v1053 = vpack.c.bf16 %v963, %v963
    %v1054 = vpack.c.bf16 %v965, %v965
    %v1055 = vpack.c.bf16 %v968, %v968
    %v1056 = vpack.c.bf16 %v970, %v970
    %v1057 = vpack.c.bf16 %v973, %v973
    %v1058 = vpack.c.bf16 %v975, %v975
    %v1059 = vpack.c.bf16 %v978, %v978
    %v1060 = vpack.c.bf16 %v980, %v980
    %v1061 = vpack.c.bf16 %v983, %v983
    %v1062 = vpack.c.bf16 %v985, %v985
    %v1063 = vpack.c.bf16 %v988, %v988
    %v1064 = vpack.c.bf16 %v990, %v990
    %v1065 = vpack.c.bf16 %v993, %v993
    %v1066 = vpack.c.bf16 %v995, %v995
    %v1067 = vpack.c.bf16 %v998, %v998
    %v1068 = vpack.c.bf16 %v1000, %v1000
    %v1069 = vpack.c.bf16 %v1003, %v1003
    %v1070 = vpack.c.bf16 %v1005, %v1005
    %v1071 = vld [vmem:[%s7] sm:$0xf]
    %v1072 = vld [vmem:[%s7 + $0x4] sm:$0xf]
    %v1073 = vld [vmem:[%s7 + $0x8] sm:$0xf]
    %v1074 = vld [vmem:[%s7 + $0xc] sm:$0xf]
    %v1075 = vld [vmem:[%s8] sm:$0x3]
    %v1077 = vrot.slane %v581, 3
    %vm1078 = vcmask 1040384
    %v1081 = vsel %vm1078, %v581, %v1077
    %v1083 = vsel %vm530, %v581, %v1077
    %v1085 = vrot.slane %v1083, 1
    %v1086 = vsel %vm533, %v581, %v1077
    %v1088 = vrot.slane %v1086, 2
    %v1089 = vsel %vm536, %v581, %v1077
    %v1091 = vrot.slane %v1089, 3
    %v1092 = vunpack.i.l.s16 %v1081
    %v1093 = vunpack.i.h.s16 %v1081
    %v1094 = vunpack.i.l.s16 %v1085
    %v1095 = vunpack.i.h.s16 %v1085
    %v1096 = vunpack.i.l.s16 %v1088
    %v1097 = vunpack.i.h.s16 %v1088
    %v1098 = vunpack.i.l.s16 %v1091
    %v1099 = vunpack.i.h.s16 %v1091
    %v1100 = vpack.i.b16 %v1092, %v1092
    %v1101 = vpack.i.b16 %v1093, %v1093
    %v1102 = vpack.i.b16 %v1094, %v1094
    %v1103 = vpack.i.b16 %v1095, %v1095
    %v1104 = vpack.i.b16 %v1096, %v1096
    %v1105 = vpack.i.b16 %v1097, %v1097
    %v1106 = vpack.i.b16 %v1098, %v1098
    %v1107 = vpack.i.b16 %v1099, %v1099
    %v1108 = vperm.slane %v1100, 0
    %v1109 = vperm.slane %v1101, 0
    %v1110 = vperm.slane %v1102, 0
    %v1111 = vperm.slane %v1103, 0
    %v1112 = vperm.slane %v1104, 0
    %v1113 = vperm.slane %v1105, 0
    %v1114 = vperm.slane %v1106, 0
    %v1115 = vperm.slane %v1107, 0
    %v1117 = vpack.i.b16 %v1108, %v1108
    %v1119 = vperm.slane %v1117, 0
    %v1121 = vpack.i.b16 %v1109, %v1109
    %v1123 = vperm.slane %v1121, 0
    %v1125 = vpack.i.b16 %v1110, %v1110
    %v1127 = vperm.slane %v1125, 0
    %v1129 = vpack.i.b16 %v1111, %v1111
    %v1131 = vperm.slane %v1129, 0
    %v1133 = vpack.i.b16 %v1112, %v1112
    %v1135 = vperm.slane %v1133, 0
    %v1137 = vpack.i.b16 %v1113, %v1113
    %v1139 = vperm.slane %v1137, 0
    %v1141 = vpack.i.b16 %v1114, %v1114
    %v1143 = vperm.slane %v1141, 0
    %v1145 = vpack.i.b16 %v1115, %v1115
    %v1147 = vperm.slane %v1145, 0
    %v1148 = vunpack.c.l.bf16 %v1119
    %v1149 = vunpack.c.l.bf16 %v1123
    %v1150 = vunpack.c.l.bf16 %v1127
    %v1151 = vunpack.c.l.bf16 %v1131
    %v1152 = vunpack.c.l.bf16 %v1135
    %v1153 = vunpack.c.l.bf16 %v1139
    %v1154 = vunpack.c.l.bf16 %v1143
    %v1155 = vunpack.c.l.bf16 %v1147
    %v1156 = vunpack.c.l.bf16 %v1007
    %v1157 = vunpack.c.l.bf16 %v1008
    %v1158 = vunpack.c.l.bf16 %v1009
    %v1159 = vunpack.c.l.bf16 %v1010
    %v1160 = vunpack.c.l.bf16 %v1011
    %v1161 = vunpack.c.l.bf16 %v1012
    %v1162 = vunpack.c.l.bf16 %v1013
    %v1163 = vunpack.c.l.bf16 %v1014
    %v1164 = vunpack.c.l.bf16 %v1015
    %v1165 = vunpack.c.l.bf16 %v1016
    %v1166 = vunpack.c.l.bf16 %v1017
    %v1167 = vunpack.c.l.bf16 %v1018
    %v1168 = vunpack.c.l.bf16 %v1019
    %v1169 = vunpack.c.l.bf16 %v1020
    %v1170 = vunpack.c.l.bf16 %v1021
    %v1171 = vunpack.c.l.bf16 %v1022
    %v1172 = vunpack.c.l.bf16 %v1023
    %v1173 = vunpack.c.l.bf16 %v1024
    %v1174 = vunpack.c.l.bf16 %v1025
    %v1175 = vunpack.c.l.bf16 %v1026
    %v1176 = vunpack.c.l.bf16 %v1027
    %v1177 = vunpack.c.l.bf16 %v1028
    %v1178 = vunpack.c.l.bf16 %v1029
    %v1179 = vunpack.c.l.bf16 %v1030
    %v1180 = vunpack.c.l.bf16 %v1031
    %v1181 = vunpack.c.l.bf16 %v1032
    %v1182 = vunpack.c.l.bf16 %v1033
    %v1183 = vunpack.c.l.bf16 %v1034
    %v1184 = vunpack.c.l.bf16 %v1035
    %v1185 = vunpack.c.l.bf16 %v1036
    %v1186 = vunpack.c.l.bf16 %v1037
    %v1187 = vunpack.c.l.bf16 %v1038
    %v1188 = vunpack.c.l.bf16 %v1039
    %v1189 = vunpack.c.l.bf16 %v1040
    %v1190 = vunpack.c.l.bf16 %v1041
    %v1191 = vunpack.c.l.bf16 %v1042
    %v1192 = vunpack.c.l.bf16 %v1043
    %v1193 = vunpack.c.l.bf16 %v1044
    %v1194 = vunpack.c.l.bf16 %v1045
    %v1195 = vunpack.c.l.bf16 %v1046
    %v1196 = vunpack.c.l.bf16 %v1047
    %v1197 = vunpack.c.l.bf16 %v1048
    %v1198 = vunpack.c.l.bf16 %v1049
    %v1199 = vunpack.c.l.bf16 %v1050
    %v1200 = vunpack.c.l.bf16 %v1051
    %v1201 = vunpack.c.l.bf16 %v1052
    %v1202 = vunpack.c.l.bf16 %v1053
    %v1203 = vunpack.c.l.bf16 %v1054
    %v1204 = vunpack.c.l.bf16 %v1055
    %v1205 = vunpack.c.l.bf16 %v1056
    %v1206 = vunpack.c.l.bf16 %v1057
    %v1207 = vunpack.c.l.bf16 %v1058
    %v1208 = vunpack.c.l.bf16 %v1059
    %v1209 = vunpack.c.l.bf16 %v1060
    %v1210 = vunpack.c.l.bf16 %v1061
    %v1211 = vunpack.c.l.bf16 %v1062
    %v1212 = vunpack.c.l.bf16 %v1063
    %v1213 = vunpack.c.l.bf16 %v1064
    %v1214 = vunpack.c.l.bf16 %v1065
    %v1215 = vunpack.c.l.bf16 %v1066
    %v1216 = vunpack.c.l.bf16 %v1067
    %v1217 = vunpack.c.l.bf16 %v1068
    %v1218 = vunpack.c.l.bf16 %v1069
    %v1219 = vunpack.c.l.bf16 %v1070
    %1284 = vrot.lane.b32.xlu0 %v1156, 64
    %v1285 = vpop.permute.xlu0 %1284
    %1286 = vrot.lane.b32.xlu0 %v1157, 64
    %v1287 = vpop.permute.xlu0 %1286
    %1288 = vrot.lane.b32.xlu0 %v1158, 64
    %v1289 = vpop.permute.xlu0 %1288
    %1290 = vrot.lane.b32.xlu0 %v1159, 64
    %v1291 = vpop.permute.xlu0 %1290
    %1292 = vrot.lane.b32.xlu0 %v1160, 64
    %v1293 = vpop.permute.xlu0 %1292
    %1294 = vrot.lane.b32.xlu0 %v1161, 64
    %v1295 = vpop.permute.xlu0 %1294
    %1296 = vrot.lane.b32.xlu0 %v1162, 64
    %v1297 = vpop.permute.xlu0 %1296
    %1298 = vrot.lane.b32.xlu0 %v1163, 64
    %v1299 = vpop.permute.xlu0 %1298
    %1300 = vrot.lane.b32.xlu0 %v1164, 64
    %v1301 = vpop.permute.xlu0 %1300
    %1302 = vrot.lane.b32.xlu0 %v1165, 64
    %v1303 = vpop.permute.xlu0 %1302
    %1304 = vrot.lane.b32.xlu0 %v1166, 64
    %v1305 = vpop.permute.xlu0 %1304
    %1306 = vrot.lane.b32.xlu0 %v1167, 64
    %v1307 = vpop.permute.xlu0 %1306
    %1308 = vrot.lane.b32.xlu0 %v1168, 64
    %v1309 = vpop.permute.xlu0 %1308
    %1310 = vrot.lane.b32.xlu0 %v1169, 64
    %v1311 = vpop.permute.xlu0 %1310
    %1312 = vrot.lane.b32.xlu0 %v1170, 64
    %v1313 = vpop.permute.xlu0 %1312
    %1314 = vrot.lane.b32.xlu0 %v1171, 64
    %v1315 = vpop.permute.xlu0 %1314
    %1316 = vrot.lane.b32.xlu0 %v1172, 64
    %v1317 = vpop.permute.xlu0 %1316
    %1318 = vrot.lane.b32.xlu0 %v1173, 64
    %v1319 = vpop.permute.xlu0 %1318
    %1320 = vrot.lane.b32.xlu0 %v1174, 64
    %v1321 = vpop.permute.xlu0 %1320
    %1322 = vrot.lane.b32.xlu0 %v1175, 64
    %v1323 = vpop.permute.xlu0 %1322
    %1324 = vrot.lane.b32.xlu0 %v1176, 64
    %v1325 = vpop.permute.xlu0 %1324
    %1326 = vrot.lane.b32.xlu0 %v1177, 64
    %v1327 = vpop.permute.xlu0 %1326
    %1328 = vrot.lane.b32.xlu0 %v1178, 64
    %v1329 = vpop.permute.xlu0 %1328
    %1330 = vrot.lane.b32.xlu0 %v1179, 64
    %v1331 = vpop.permute.xlu0 %1330
    %1332 = vrot.lane.b32.xlu0 %v1180, 64
    %v1333 = vpop.permute.xlu0 %1332
    %1334 = vrot.lane.b32.xlu0 %v1181, 64
    %v1335 = vpop.permute.xlu0 %1334
    %1336 = vrot.lane.b32.xlu0 %v1182, 64
    %v1337 = vpop.permute.xlu0 %1336
    %1338 = vrot.lane.b32.xlu0 %v1183, 64
    %v1339 = vpop.permute.xlu0 %1338
    %1340 = vrot.lane.b32.xlu0 %v1184, 64
    %v1341 = vpop.permute.xlu0 %1340
    %1342 = vrot.lane.b32.xlu0 %v1185, 64
    %v1343 = vpop.permute.xlu0 %1342
    %1344 = vrot.lane.b32.xlu0 %v1186, 64
    %v1345 = vpop.permute.xlu0 %1344
    %1346 = vrot.lane.b32.xlu0 %v1187, 64
    %v1347 = vpop.permute.xlu0 %1346
    %1348 = vrot.lane.b32.xlu0 %v1188, 64
    %v1349 = vpop.permute.xlu0 %1348
    %1350 = vrot.lane.b32.xlu0 %v1189, 64
    %v1351 = vpop.permute.xlu0 %1350
    %1352 = vrot.lane.b32.xlu0 %v1190, 64
    %v1353 = vpop.permute.xlu0 %1352
    %1354 = vrot.lane.b32.xlu0 %v1191, 64
    %v1355 = vpop.permute.xlu0 %1354
    %1356 = vrot.lane.b32.xlu0 %v1192, 64
    %v1357 = vpop.permute.xlu0 %1356
    %1358 = vrot.lane.b32.xlu0 %v1193, 64
    %v1359 = vpop.permute.xlu0 %1358
    %1360 = vrot.lane.b32.xlu0 %v1194, 64
    %v1361 = vpop.permute.xlu0 %1360
    %1362 = vrot.lane.b32.xlu0 %v1195, 64
    %v1363 = vpop.permute.xlu0 %1362
    %1364 = vrot.lane.b32.xlu0 %v1196, 64
    %v1365 = vpop.permute.xlu0 %1364
    %1366 = vrot.lane.b32.xlu0 %v1197, 64
    %v1367 = vpop.permute.xlu0 %1366
    %1368 = vrot.lane.b32.xlu0 %v1198, 64
    %v1369 = vpop.permute.xlu0 %1368
    %1370 = vrot.lane.b32.xlu0 %v1199, 64
    %v1371 = vpop.permute.xlu0 %1370
    %1372 = vrot.lane.b32.xlu0 %v1200, 64
    %v1373 = vpop.permute.xlu0 %1372
    %1374 = vrot.lane.b32.xlu0 %v1201, 64
    %v1375 = vpop.permute.xlu0 %1374
    %1376 = vrot.lane.b32.xlu0 %v1202, 64
    %v1377 = vpop.permute.xlu0 %1376
    %1378 = vrot.lane.b32.xlu0 %v1203, 64
    %v1379 = vpop.permute.xlu0 %1378
    %1380 = vrot.lane.b32.xlu0 %v1204, 64
    %v1381 = vpop.permute.xlu0 %1380
    %1382 = vrot.lane.b32.xlu0 %v1205, 64
    %v1383 = vpop.permute.xlu0 %1382
    %1384 = vrot.lane.b32.xlu0 %v1206, 64
    %v1385 = vpop.permute.xlu0 %1384
    %1386 = vrot.lane.b32.xlu0 %v1207, 64
    %v1387 = vpop.permute.xlu0 %1386
    %1388 = vrot.lane.b32.xlu0 %v1208, 64
    %v1389 = vpop.permute.xlu0 %1388
    %1390 = vrot.lane.b32.xlu0 %v1209, 64
    %v1391 = vpop.permute.xlu0 %1390
    %1392 = vrot.lane.b32.xlu0 %v1210, 64
    %v1393 = vpop.permute.xlu0 %1392
    %1394 = vrot.lane.b32.xlu0 %v1211, 64
    %v1395 = vpop.permute.xlu0 %1394
    %1396 = vrot.lane.b32.xlu0 %v1212, 64
    %v1397 = vpop.permute.xlu0 %1396
    %1398 = vrot.lane.b32.xlu0 %v1213, 64
    %v1399 = vpop.permute.xlu0 %1398
    %1400 = vrot.lane.b32.xlu0 %v1214, 64
    %v1401 = vpop.permute.xlu0 %1400
    %1402 = vrot.lane.b32.xlu0 %v1215, 64
    %v1403 = vpop.permute.xlu0 %1402
    %1404 = vrot.lane.b32.xlu0 %v1216, 64
    %v1405 = vpop.permute.xlu0 %1404
    %1406 = vrot.lane.b32.xlu0 %v1217, 64
    %v1407 = vpop.permute.xlu0 %1406
    %1408 = vrot.lane.b32.xlu0 %v1218, 64
    %v1409 = vpop.permute.xlu0 %1408
    %1410 = vrot.lane.b32.xlu0 %v1219, 64
    %v1411 = vpop.permute.xlu0 %1410
    %v1476 = vmul.f32 %v1148, %v1285
    %v1477 = vmul.f32 %v1148, %v1287
    %v1478 = vmul.f32 %v1148, %v1289
    %v1479 = vmul.f32 %v1148, %v1291
    %v1480 = vmul.f32 %v1148, %v1293
    %v1481 = vmul.f32 %v1148, %v1295
    %v1482 = vmul.f32 %v1148, %v1297
    %v1483 = vmul.f32 %v1148, %v1299
    %v1484 = vmul.f32 %v1149, %v1301
    %v1485 = vmul.f32 %v1149, %v1303
    %v1486 = vmul.f32 %v1149, %v1305
    %v1487 = vmul.f32 %v1149, %v1307
    %v1488 = vmul.f32 %v1149, %v1309
    %v1489 = vmul.f32 %v1149, %v1311
    %v1490 = vmul.f32 %v1149, %v1313
    %v1491 = vmul.f32 %v1149, %v1315
    %v1492 = vmul.f32 %v1150, %v1317
    %v1493 = vmul.f32 %v1150, %v1319
    %v1494 = vmul.f32 %v1150, %v1321
    %v1495 = vmul.f32 %v1150, %v1323
    %v1496 = vmul.f32 %v1150, %v1325
    %v1497 = vmul.f32 %v1150, %v1327
    %v1498 = vmul.f32 %v1150, %v1329
    %v1499 = vmul.f32 %v1150, %v1331
    %v1500 = vmul.f32 %v1151, %v1333
    %v1501 = vmul.f32 %v1151, %v1335
    %v1502 = vmul.f32 %v1151, %v1337
    %v1503 = vmul.f32 %v1151, %v1339
    %v1504 = vmul.f32 %v1151, %v1341
    %v1505 = vmul.f32 %v1151, %v1343
    %v1506 = vmul.f32 %v1151, %v1345
    %v1507 = vmul.f32 %v1151, %v1347
    %v1508 = vmul.f32 %v1152, %v1349
    %v1509 = vmul.f32 %v1152, %v1351
    %v1510 = vmul.f32 %v1152, %v1353
    %v1511 = vmul.f32 %v1152, %v1355
    %v1512 = vmul.f32 %v1152, %v1357
    %v1513 = vmul.f32 %v1152, %v1359
    %v1514 = vmul.f32 %v1152, %v1361
    %v1515 = vmul.f32 %v1152, %v1363
    %v1516 = vmul.f32 %v1153, %v1365
    %v1517 = vmul.f32 %v1153, %v1367
    %v1518 = vmul.f32 %v1153, %v1369
    %v1519 = vmul.f32 %v1153, %v1371
    %v1520 = vmul.f32 %v1153, %v1373
    %v1521 = vmul.f32 %v1153, %v1375
    %v1522 = vmul.f32 %v1153, %v1377
    %v1523 = vmul.f32 %v1153, %v1379
    %v1524 = vmul.f32 %v1154, %v1381
    %v1525 = vmul.f32 %v1154, %v1383
    %v1526 = vmul.f32 %v1154, %v1385
    %v1527 = vmul.f32 %v1154, %v1387
    %v1528 = vmul.f32 %v1154, %v1389
    %v1529 = vmul.f32 %v1154, %v1391
    %v1530 = vmul.f32 %v1154, %v1393
    %v1531 = vmul.f32 %v1154, %v1395
    %v1532 = vmul.f32 %v1155, %v1397
    %v1533 = vmul.f32 %v1155, %v1399
    %v1534 = vmul.f32 %v1155, %v1401
    %v1535 = vmul.f32 %v1155, %v1403
    %v1536 = vmul.f32 %v1155, %v1405
    %v1537 = vmul.f32 %v1155, %v1407
    %v1538 = vmul.f32 %v1155, %v1409
    %v1539 = vmul.f32 %v1155, %v1411
    %v1540 = vpack.c.bf16 %v1476, %v1476
    %v1541 = vpack.c.bf16 %v1477, %v1477
    %v1542 = vpack.c.bf16 %v1478, %v1478
    %v1543 = vpack.c.bf16 %v1479, %v1479
    %v1544 = vpack.c.bf16 %v1480, %v1480
    %v1545 = vpack.c.bf16 %v1481, %v1481
    %v1546 = vpack.c.bf16 %v1482, %v1482
    %v1547 = vpack.c.bf16 %v1483, %v1483
    %v1548 = vpack.c.bf16 %v1484, %v1484
    %v1549 = vpack.c.bf16 %v1485, %v1485
    %v1550 = vpack.c.bf16 %v1486, %v1486
    %v1551 = vpack.c.bf16 %v1487, %v1487
    %v1552 = vpack.c.bf16 %v1488, %v1488
    %v1553 = vpack.c.bf16 %v1489, %v1489
    %v1554 = vpack.c.bf16 %v1490, %v1490
    %v1555 = vpack.c.bf16 %v1491, %v1491
    %v1556 = vpack.c.bf16 %v1492, %v1492
    %v1557 = vpack.c.bf16 %v1493, %v1493
    %v1558 = vpack.c.bf16 %v1494, %v1494
    %v1559 = vpack.c.bf16 %v1495, %v1495
    %v1560 = vpack.c.bf16 %v1496, %v1496
    %v1561 = vpack.c.bf16 %v1497, %v1497
    %v1562 = vpack.c.bf16 %v1498, %v1498
    %v1563 = vpack.c.bf16 %v1499, %v1499
    %v1564 = vpack.c.bf16 %v1500, %v1500
    %v1565 = vpack.c.bf16 %v1501, %v1501
    %v1566 = vpack.c.bf16 %v1502, %v1502
    %v1567 = vpack.c.bf16 %v1503, %v1503
    %v1568 = vpack.c.bf16 %v1504, %v1504
    %v1569 = vpack.c.bf16 %v1505, %v1505
    %v1570 = vpack.c.bf16 %v1506, %v1506
    %v1571 = vpack.c.bf16 %v1507, %v1507
    %v1572 = vpack.c.bf16 %v1508, %v1508
    %v1573 = vpack.c.bf16 %v1509, %v1509
    %v1574 = vpack.c.bf16 %v1510, %v1510
    %v1575 = vpack.c.bf16 %v1511, %v1511
    %v1576 = vpack.c.bf16 %v1512, %v1512
    %v1577 = vpack.c.bf16 %v1513, %v1513
    %v1578 = vpack.c.bf16 %v1514, %v1514
    %v1579 = vpack.c.bf16 %v1515, %v1515
    %v1580 = vpack.c.bf16 %v1516, %v1516
    %v1581 = vpack.c.bf16 %v1517, %v1517
    %v1582 = vpack.c.bf16 %v1518, %v1518
    %v1583 = vpack.c.bf16 %v1519, %v1519
    %v1584 = vpack.c.bf16 %v1520, %v1520
    %v1585 = vpack.c.bf16 %v1521, %v1521
    %v1586 = vpack.c.bf16 %v1522, %v1522
    %v1587 = vpack.c.bf16 %v1523, %v1523
    %v1588 = vpack.c.bf16 %v1524, %v1524
    %v1589 = vpack.c.bf16 %v1525, %v1525
    %v1590 = vpack.c.bf16 %v1526, %v1526
    %v1591 = vpack.c.bf16 %v1527, %v1527
    %v1592 = vpack.c.bf16 %v1528, %v1528
    %v1593 = vpack.c.bf16 %v1529, %v1529
    %v1594 = vpack.c.bf16 %v1530, %v1530
    %v1595 = vpack.c.bf16 %v1531, %v1531
    %v1596 = vpack.c.bf16 %v1532, %v1532
    %v1597 = vpack.c.bf16 %v1533, %v1533
    %v1598 = vpack.c.bf16 %v1534, %v1534
    %v1599 = vpack.c.bf16 %v1535, %v1535
    %v1600 = vpack.c.bf16 %v1536, %v1536
    %v1601 = vpack.c.bf16 %v1537, %v1537
    %v1602 = vpack.c.bf16 %v1538, %v1538
    %v1603 = vpack.c.bf16 %v1539, %v1539
    %v1668 = vunpack.c.l.b16 %v1540
    %v1669 = vunpack.c.l.b16 %v1541
    %v1670 = vunpack.c.l.b16 %v1542
    %v1671 = vunpack.c.l.b16 %v1543
    %v1672 = vunpack.c.l.b16 %v1544
    %v1673 = vunpack.c.l.b16 %v1545
    %v1674 = vunpack.c.l.b16 %v1546
    %v1675 = vunpack.c.l.b16 %v1547
    %v1676 = vunpack.c.l.b16 %v1548
    %v1677 = vunpack.c.l.b16 %v1549
    %v1678 = vunpack.c.l.b16 %v1550
    %v1679 = vunpack.c.l.b16 %v1551
    %v1680 = vunpack.c.l.b16 %v1552
    %v1681 = vunpack.c.l.b16 %v1553
    %v1682 = vunpack.c.l.b16 %v1554
    %v1683 = vunpack.c.l.b16 %v1555
    %v1684 = vunpack.c.l.b16 %v1556
    %v1685 = vunpack.c.l.b16 %v1557
    %v1686 = vunpack.c.l.b16 %v1558
    %v1687 = vunpack.c.l.b16 %v1559
    %v1688 = vunpack.c.l.b16 %v1560
    %v1689 = vunpack.c.l.b16 %v1561
    %v1690 = vunpack.c.l.b16 %v1562
    %v1691 = vunpack.c.l.b16 %v1563
    %v1692 = vunpack.c.l.b16 %v1564
    %v1693 = vunpack.c.l.b16 %v1565
    %v1694 = vunpack.c.l.b16 %v1566
    %v1695 = vunpack.c.l.b16 %v1567
    %v1696 = vunpack.c.l.b16 %v1568
    %v1697 = vunpack.c.l.b16 %v1569
    %v1698 = vunpack.c.l.b16 %v1570
    %v1699 = vunpack.c.l.b16 %v1571
    %v1700 = vunpack.c.l.b16 %v1572
    %v1701 = vunpack.c.l.b16 %v1573
    %v1702 = vunpack.c.l.b16 %v1574
    %v1703 = vunpack.c.l.b16 %v1575
    %v1704 = vunpack.c.l.b16 %v1576
    %v1705 = vunpack.c.l.b16 %v1577
    %v1706 = vunpack.c.l.b16 %v1578
    %v1707 = vunpack.c.l.b16 %v1579
    %v1708 = vunpack.c.l.b16 %v1580
    %v1709 = vunpack.c.l.b16 %v1581
    %v1710 = vunpack.c.l.b16 %v1582
    %v1711 = vunpack.c.l.b16 %v1583
    %v1712 = vunpack.c.l.b16 %v1584
    %v1713 = vunpack.c.l.b16 %v1585
    %v1714 = vunpack.c.l.b16 %v1586
    %v1715 = vunpack.c.l.b16 %v1587
    %v1716 = vunpack.c.l.b16 %v1588
    %v1717 = vunpack.c.l.b16 %v1589
    %v1718 = vunpack.c.l.b16 %v1590
    %v1719 = vunpack.c.l.b16 %v1591
    %v1720 = vunpack.c.l.b16 %v1592
    %v1721 = vunpack.c.l.b16 %v1593
    %v1722 = vunpack.c.l.b16 %v1594
    %v1723 = vunpack.c.l.b16 %v1595
    %v1724 = vunpack.c.l.b16 %v1596
    %v1725 = vunpack.c.l.b16 %v1597
    %v1726 = vunpack.c.l.b16 %v1598
    %v1727 = vunpack.c.l.b16 %v1599
    %v1728 = vunpack.c.l.b16 %v1600
    %v1729 = vunpack.c.l.b16 %v1601
    %v1730 = vunpack.c.l.b16 %v1602
    %v1731 = vunpack.c.l.b16 %v1603
    %v1732 = vpack.c.b16 %v1669, %v1668
    %v1733 = vpack.c.b16 %v1671, %v1670
    %v1734 = vpack.c.b16 %v1673, %v1672
    %v1735 = vpack.c.b16 %v1675, %v1674
    %v1736 = vpack.c.b16 %v1677, %v1676
    %v1737 = vpack.c.b16 %v1679, %v1678
    %v1738 = vpack.c.b16 %v1681, %v1680
    %v1739 = vpack.c.b16 %v1683, %v1682
    %v1740 = vpack.c.b16 %v1685, %v1684
    %v1741 = vpack.c.b16 %v1687, %v1686
    %v1742 = vpack.c.b16 %v1689, %v1688
    %v1743 = vpack.c.b16 %v1691, %v1690
    %v1744 = vpack.c.b16 %v1693, %v1692
    %v1745 = vpack.c.b16 %v1695, %v1694
    %v1746 = vpack.c.b16 %v1697, %v1696
    %v1747 = vpack.c.b16 %v1699, %v1698
    %v1748 = vpack.c.b16 %v1701, %v1700
    %v1749 = vpack.c.b16 %v1703, %v1702
    %v1750 = vpack.c.b16 %v1705, %v1704
    %v1751 = vpack.c.b16 %v1707, %v1706
    %v1752 = vpack.c.b16 %v1709, %v1708
    %v1753 = vpack.c.b16 %v1711, %v1710
    %v1754 = vpack.c.b16 %v1713, %v1712
    %v1755 = vpack.c.b16 %v1715, %v1714
    %v1756 = vpack.c.b16 %v1717, %v1716
    %v1757 = vpack.c.b16 %v1719, %v1718
    %v1758 = vpack.c.b16 %v1721, %v1720
    %v1759 = vpack.c.b16 %v1723, %v1722
    %v1760 = vpack.c.b16 %v1725, %v1724
    %v1761 = vpack.c.b16 %v1727, %v1726
    %v1762 = vpack.c.b16 %v1729, %v1728
    %v1763 = vpack.c.b16 %v1731, %v1730
    %1764 = vrot.lane.b32.xlu0 %v1732, 64
    %v1765 = vpop.permute.xlu0 %1764
    %1766 = vrot.lane.b32.xlu0 %v1733, 64
    %v1767 = vpop.permute.xlu0 %1766
    %1768 = vrot.lane.b32.xlu0 %v1734, 64
    %v1769 = vpop.permute.xlu0 %1768
    %1770 = vrot.lane.b32.xlu0 %v1735, 64
    %v1771 = vpop.permute.xlu0 %1770
    %1772 = vrot.lane.b32.xlu0 %v1736, 64
    %v1773 = vpop.permute.xlu0 %1772
    %1774 = vrot.lane.b32.xlu0 %v1737, 64
    %v1775 = vpop.permute.xlu0 %1774
    %1776 = vrot.lane.b32.xlu0 %v1738, 64
    %v1777 = vpop.permute.xlu0 %1776
    %1778 = vrot.lane.b32.xlu0 %v1739, 64
    %v1779 = vpop.permute.xlu0 %1778
    %1780 = vrot.lane.b32.xlu0 %v1740, 64
    %v1781 = vpop.permute.xlu0 %1780
    %1782 = vrot.lane.b32.xlu0 %v1741, 64
    %v1783 = vpop.permute.xlu0 %1782
    %1784 = vrot.lane.b32.xlu0 %v1742, 64
    %v1785 = vpop.permute.xlu0 %1784
    %1786 = vrot.lane.b32.xlu0 %v1743, 64
    %v1787 = vpop.permute.xlu0 %1786
    %1788 = vrot.lane.b32.xlu0 %v1744, 64
    %v1789 = vpop.permute.xlu0 %1788
    %1790 = vrot.lane.b32.xlu0 %v1745, 64
    %v1791 = vpop.permute.xlu0 %1790
    %1792 = vrot.lane.b32.xlu0 %v1746, 64
    %v1793 = vpop.permute.xlu0 %1792
    %1794 = vrot.lane.b32.xlu0 %v1747, 64
    %v1795 = vpop.permute.xlu0 %1794
    %1796 = vrot.lane.b32.xlu0 %v1748, 64
    %v1797 = vpop.permute.xlu0 %1796
    %1798 = vrot.lane.b32.xlu0 %v1749, 64
    %v1799 = vpop.permute.xlu0 %1798
    %1800 = vrot.lane.b32.xlu0 %v1750, 64
    %v1801 = vpop.permute.xlu0 %1800
    %1802 = vrot.lane.b32.xlu0 %v1751, 64
    %v1803 = vpop.permute.xlu0 %1802
    %1804 = vrot.lane.b32.xlu0 %v1752, 64
    %v1805 = vpop.permute.xlu0 %1804
    %1806 = vrot.lane.b32.xlu0 %v1753, 64
    %v1807 = vpop.permute.xlu0 %1806
    %1808 = vrot.lane.b32.xlu0 %v1754, 64
    %v1809 = vpop.permute.xlu0 %1808
    %1810 = vrot.lane.b32.xlu0 %v1755, 64
    %v1811 = vpop.permute.xlu0 %1810
    %1812 = vrot.lane.b32.xlu0 %v1756, 64
    %v1813 = vpop.permute.xlu0 %1812
    %1814 = vrot.lane.b32.xlu0 %v1757, 64
    %v1815 = vpop.permute.xlu0 %1814
    %1816 = vrot.lane.b32.xlu0 %v1758, 64
    %v1817 = vpop.permute.xlu0 %1816
    %1818 = vrot.lane.b32.xlu0 %v1759, 64
    %v1819 = vpop.permute.xlu0 %1818
    %1820 = vrot.lane.b32.xlu0 %v1760, 64
    %v1821 = vpop.permute.xlu0 %1820
    %1822 = vrot.lane.b32.xlu0 %v1761, 64
    %v1823 = vpop.permute.xlu0 %1822
    %1824 = vrot.lane.b32.xlu0 %v1762, 64
    %v1825 = vpop.permute.xlu0 %1824
    %1826 = vrot.lane.b32.xlu0 %v1763, 64
    %v1827 = vpop.permute.xlu0 %1826
    %v1832 = vunpack.c.l.b16 %v1071
    %v1833 = vunpack.c.l.b16 %v1072
    %v1834 = vunpack.c.l.b16 %v1073
    %v1835 = vunpack.c.l.b16 %v1074
    %v1836 = vpack.c.b16 %v1833, %v1832
    %v1837 = vpack.c.b16 %v1835, %v1834
    %v1841 = vsel %vm165, %v1765, 0
    %v1844 = vsel %vm165, %v1767, 0
    %v1847 = vsel %vm165, %v1769, 0
    %v1850 = vsel %vm165, %v1771, 0
    %v1853 = vsel %vm165, %v1773, 0
    %v1856 = vsel %vm165, %v1775, 0
    %v1859 = vsel %vm165, %v1777, 0
    %v1862 = vsel %vm165, %v1779, 0
    %v1865 = vsel %vm165, %v1781, 0
    %v1868 = vsel %vm165, %v1783, 0
    %v1871 = vsel %vm165, %v1785, 0
    %v1874 = vsel %vm165, %v1787, 0
    %v1877 = vsel %vm165, %v1789, 0
    %v1880 = vsel %vm165, %v1791, 0
    %v1883 = vsel %vm165, %v1793, 0
    %v1886 = vsel %vm165, %v1795, 0
    %v1889 = vsel %vm165, %v1797, 0
    %v1892 = vsel %vm165, %v1799, 0
    %v1895 = vsel %vm165, %v1801, 0
    %v1898 = vsel %vm165, %v1803, 0
    %v1901 = vsel %vm165, %v1805, 0
    %v1904 = vsel %vm165, %v1807, 0
    %v1907 = vsel %vm165, %v1809, 0
    %v1910 = vsel %vm165, %v1811, 0
    %v1913 = vsel %vm165, %v1813, 0
    %v1916 = vsel %vm165, %v1815, 0
    %v1919 = vsel %vm165, %v1817, 0
    %v1922 = vsel %vm165, %v1819, 0
    %v1925 = vsel %vm165, %v1821, 0
    %v1928 = vsel %vm165, %v1823, 0
    %v1931 = vsel %vm165, %v1825, 0
    %v1934 = vsel %vm165, %v1827, 0
    %1936 = vmatpush.bf16.msra.mxu0 0
    %1937 = vmatpush.bf16.msra.mxu0 0
    %1938 = vmatpush.bf16.msra.mxu0 0
    %1939 = vmatpush.bf16.msra.mxu0 0
    %1940 = vmatpush.bf16.msra.mxu0 0
    %1941 = vmatpush.bf16.msra.mxu0 0
    %1942 = vmatpush.bf16.msra.mxu0 %v1837
    %1943 = vmatpush.bf16.msra.mxu0 %v1836
    %1944 = vmatmul.bf16.gmra.mxu0 %v1841
    %v1945 = vpop.f32.mrf.mxu0
    %v1946 = vadd.f32 0.0, %v1945
    %v1947 = vpop.f32.mrf.mxu0
    %v1948 = vadd.f32 0.0, %v1947
    %1949 = vmatmul.bf16.gmra.mxu0 %v1844
    %v1950 = vpop.f32.mrf.mxu0
    %v1951 = vadd.f32 0.0, %v1950
    %v1952 = vpop.f32.mrf.mxu0
    %v1953 = vadd.f32 0.0, %v1952
    %1954 = vmatmul.bf16.gmra.mxu0 %v1847
    %v1955 = vpop.f32.mrf.mxu0
    %v1956 = vadd.f32 0.0, %v1955
    %v1957 = vpop.f32.mrf.mxu0
    %v1958 = vadd.f32 0.0, %v1957
    %1959 = vmatmul.bf16.gmra.mxu0 %v1850
    %v1960 = vpop.f32.mrf.mxu0
    %v1961 = vadd.f32 0.0, %v1960
    %v1962 = vpop.f32.mrf.mxu0
    %v1963 = vadd.f32 0.0, %v1962
    %1964 = vmatmul.bf16.gmra.mxu0 %v1853
    %v1965 = vpop.f32.mrf.mxu0
    %v1966 = vadd.f32 0.0, %v1965
    %v1967 = vpop.f32.mrf.mxu0
    %v1968 = vadd.f32 0.0, %v1967
    %1969 = vmatmul.bf16.gmra.mxu0 %v1856
    %v1970 = vpop.f32.mrf.mxu0
    %v1971 = vadd.f32 0.0, %v1970
    %v1972 = vpop.f32.mrf.mxu0
    %v1973 = vadd.f32 0.0, %v1972
    %1974 = vmatmul.bf16.gmra.mxu0 %v1859
    %v1975 = vpop.f32.mrf.mxu0
    %v1976 = vadd.f32 0.0, %v1975
    %v1977 = vpop.f32.mrf.mxu0
    %v1978 = vadd.f32 0.0, %v1977
    %1979 = vmatmul.bf16.gmra.mxu0 %v1862
    %v1980 = vpop.f32.mrf.mxu0
    %v1981 = vadd.f32 0.0, %v1980
    %v1982 = vpop.f32.mrf.mxu0
    %v1983 = vadd.f32 0.0, %v1982
    %1984 = vmatmul.bf16.gmra.mxu0 %v1865
    %v1985 = vpop.f32.mrf.mxu0
    %v1986 = vadd.f32 0.0, %v1985
    %v1987 = vpop.f32.mrf.mxu0
    %v1988 = vadd.f32 0.0, %v1987
    %1989 = vmatmul.bf16.gmra.mxu0 %v1868
    %v1990 = vpop.f32.mrf.mxu0
    %v1991 = vadd.f32 0.0, %v1990
    %v1992 = vpop.f32.mrf.mxu0
    %v1993 = vadd.f32 0.0, %v1992
    %1994 = vmatmul.bf16.gmra.mxu0 %v1871
    %v1995 = vpop.f32.mrf.mxu0
    %v1996 = vadd.f32 0.0, %v1995
    %v1997 = vpop.f32.mrf.mxu0
    %v1998 = vadd.f32 0.0, %v1997
    %1999 = vmatmul.bf16.gmra.mxu0 %v1874
    %v2000 = vpop.f32.mrf.mxu0
    %v2001 = vadd.f32 0.0, %v2000
    %v2002 = vpop.f32.mrf.mxu0
    %v2003 = vadd.f32 0.0, %v2002
    %2004 = vmatmul.bf16.gmra.mxu0 %v1877
    %v2005 = vpop.f32.mrf.mxu0
    %v2006 = vadd.f32 0.0, %v2005
    %v2007 = vpop.f32.mrf.mxu0
    %v2008 = vadd.f32 0.0, %v2007
    %2009 = vmatmul.bf16.gmra.mxu0 %v1880
    %v2010 = vpop.f32.mrf.mxu0
    %v2011 = vadd.f32 0.0, %v2010
    %v2012 = vpop.f32.mrf.mxu0
    %v2013 = vadd.f32 0.0, %v2012
    %2014 = vmatmul.bf16.gmra.mxu0 %v1883
    %v2015 = vpop.f32.mrf.mxu0
    %v2016 = vadd.f32 0.0, %v2015
    %v2017 = vpop.f32.mrf.mxu0
    %v2018 = vadd.f32 0.0, %v2017
    %2019 = vmatmul.bf16.gmra.mxu0 %v1886
    %v2020 = vpop.f32.mrf.mxu0
    %v2021 = vadd.f32 0.0, %v2020
    %v2022 = vpop.f32.mrf.mxu0
    %v2023 = vadd.f32 0.0, %v2022
    %2024 = vmatmul.bf16.gmra.mxu0 %v1889
    %v2025 = vpop.f32.mrf.mxu0
    %v2026 = vadd.f32 0.0, %v2025
    %v2027 = vpop.f32.mrf.mxu0
    %v2028 = vadd.f32 0.0, %v2027
    %2029 = vmatmul.bf16.gmra.mxu0 %v1892
    %v2030 = vpop.f32.mrf.mxu0
    %v2031 = vadd.f32 0.0, %v2030
    %v2032 = vpop.f32.mrf.mxu0
    %v2033 = vadd.f32 0.0, %v2032
    %2034 = vmatmul.bf16.gmra.mxu0 %v1895
    %v2035 = vpop.f32.mrf.mxu0
    %v2036 = vadd.f32 0.0, %v2035
    %v2037 = vpop.f32.mrf.mxu0
    %v2038 = vadd.f32 0.0, %v2037
    %2039 = vmatmul.bf16.gmra.mxu0 %v1898
    %v2040 = vpop.f32.mrf.mxu0
    %v2041 = vadd.f32 0.0, %v2040
    %v2042 = vpop.f32.mrf.mxu0
    %v2043 = vadd.f32 0.0, %v2042
    %2044 = vmatmul.bf16.gmra.mxu0 %v1901
    %v2045 = vpop.f32.mrf.mxu0
    %v2046 = vadd.f32 0.0, %v2045
    %v2047 = vpop.f32.mrf.mxu0
    %v2048 = vadd.f32 0.0, %v2047
    %2049 = vmatmul.bf16.gmra.mxu0 %v1904
    %v2050 = vpop.f32.mrf.mxu0
    %v2051 = vadd.f32 0.0, %v2050
    %v2052 = vpop.f32.mrf.mxu0
    %v2053 = vadd.f32 0.0, %v2052
    %2054 = vmatmul.bf16.gmra.mxu0 %v1907
    %v2055 = vpop.f32.mrf.mxu0
    %v2056 = vadd.f32 0.0, %v2055
    %v2057 = vpop.f32.mrf.mxu0
    %v2058 = vadd.f32 0.0, %v2057
    %2059 = vmatmul.bf16.gmra.mxu0 %v1910
    %v2060 = vpop.f32.mrf.mxu0
    %v2061 = vadd.f32 0.0, %v2060
    %v2062 = vpop.f32.mrf.mxu0
    %v2063 = vadd.f32 0.0, %v2062
    %2064 = vmatmul.bf16.gmra.mxu0 %v1913
    %v2065 = vpop.f32.mrf.mxu0
    %v2066 = vadd.f32 0.0, %v2065
    %v2067 = vpop.f32.mrf.mxu0
    %v2068 = vadd.f32 0.0, %v2067
    %2069 = vmatmul.bf16.gmra.mxu0 %v1916
    %v2070 = vpop.f32.mrf.mxu0
    %v2071 = vadd.f32 0.0, %v2070
    %v2072 = vpop.f32.mrf.mxu0
    %v2073 = vadd.f32 0.0, %v2072
    %2074 = vmatmul.bf16.gmra.mxu0 %v1919
    %v2075 = vpop.f32.mrf.mxu0
    %v2076 = vadd.f32 0.0, %v2075
    %v2077 = vpop.f32.mrf.mxu0
    %v2078 = vadd.f32 0.0, %v2077
    %2079 = vmatmul.bf16.gmra.mxu0 %v1922
    %v2080 = vpop.f32.mrf.mxu0
    %v2081 = vadd.f32 0.0, %v2080
    %v2082 = vpop.f32.mrf.mxu0
    %v2083 = vadd.f32 0.0, %v2082
    %2084 = vmatmul.bf16.gmra.mxu0 %v1925
    %v2085 = vpop.f32.mrf.mxu0
    %v2086 = vadd.f32 0.0, %v2085
    %v2087 = vpop.f32.mrf.mxu0
    %v2088 = vadd.f32 0.0, %v2087
    %2089 = vmatmul.bf16.gmra.mxu0 %v1928
    %v2090 = vpop.f32.mrf.mxu0
    %v2091 = vadd.f32 0.0, %v2090
    %v2092 = vpop.f32.mrf.mxu0
    %v2093 = vadd.f32 0.0, %v2092
    %2094 = vmatmul.bf16.gmra.mxu0 %v1931
    %v2095 = vpop.f32.mrf.mxu0
    %v2096 = vadd.f32 0.0, %v2095
    %v2097 = vpop.f32.mrf.mxu0
    %v2098 = vadd.f32 0.0, %v2097
    %2099 = vmatmul.bf16.gmra.mxu0 %v1934
    %v2100 = vpop.f32.mrf.mxu0
    %v2101 = vadd.f32 0.0, %v2100
    %v2102 = vpop.f32.mrf.mxu0
    %v2103 = vadd.f32 0.0, %v2102
    %2104 = vdwg.mxu0
    %v2105 = vld [vmem:[%s9] sm:$0xff]
    %v2106 = vld [vmem:[%s9 + $0x8] sm:$0xff]
    %v2107 = vld [vmem:[%s9 + $0x10] sm:$0xff]
    %v2108 = vld [vmem:[%s9 + $0x18] sm:$0xff]
    %v2109 = vld [vmem:[%s9 + $0x20] sm:$0xff]
    %v2110 = vld [vmem:[%s9 + $0x28] sm:$0xff]
    %v2111 = vld [vmem:[%s9 + $0x30] sm:$0xff]
    %v2112 = vld [vmem:[%s9 + $0x38] sm:$0xff]
    %v2113 = vadd.f32 %v1946, %v2105
    %v2114 = vadd.f32 %v1948, %v2106
    %v2115 = vadd.f32 %v1951, %v2107
    %v2116 = vadd.f32 %v1953, %v2108
    %v2117 = vadd.f32 %v1956, %v2109
    %v2118 = vadd.f32 %v1958, %v2110
    %v2119 = vadd.f32 %v1961, %v2111
    %v2120 = vadd.f32 %v1963, %v2112
    %v2121 = vadd.f32 %v1966, %v2105
    %v2122 = vadd.f32 %v1968, %v2106
    %v2123 = vadd.f32 %v1971, %v2107
    %v2124 = vadd.f32 %v1973, %v2108
    %v2125 = vadd.f32 %v1976, %v2109
    %v2126 = vadd.f32 %v1978, %v2110
    %v2127 = vadd.f32 %v1981, %v2111
    %v2128 = vadd.f32 %v1983, %v2112
    %v2129 = vadd.f32 %v1986, %v2105
    %v2130 = vadd.f32 %v1988, %v2106
    %v2131 = vadd.f32 %v1991, %v2107
    %v2132 = vadd.f32 %v1993, %v2108
    %v2133 = vadd.f32 %v1996, %v2109
    %v2134 = vadd.f32 %v1998, %v2110
    %v2135 = vadd.f32 %v2001, %v2111
    %v2136 = vadd.f32 %v2003, %v2112
    %v2137 = vadd.f32 %v2006, %v2105
    %v2138 = vadd.f32 %v2008, %v2106
    %v2139 = vadd.f32 %v2011, %v2107
    %v2140 = vadd.f32 %v2013, %v2108
    %v2141 = vadd.f32 %v2016, %v2109
    %v2142 = vadd.f32 %v2018, %v2110
    %v2143 = vadd.f32 %v2021, %v2111
    %v2144 = vadd.f32 %v2023, %v2112
    %v2145 = vadd.f32 %v2026, %v2105
    %v2146 = vadd.f32 %v2028, %v2106
    %v2147 = vadd.f32 %v2031, %v2107
    %v2148 = vadd.f32 %v2033, %v2108
    %v2149 = vadd.f32 %v2036, %v2109
    %v2150 = vadd.f32 %v2038, %v2110
    %v2151 = vadd.f32 %v2041, %v2111
    %v2152 = vadd.f32 %v2043, %v2112
    %v2153 = vadd.f32 %v2046, %v2105
    %v2154 = vadd.f32 %v2048, %v2106
    %v2155 = vadd.f32 %v2051, %v2107
    %v2156 = vadd.f32 %v2053, %v2108
    %v2157 = vadd.f32 %v2056, %v2109
    %v2158 = vadd.f32 %v2058, %v2110
    %v2159 = vadd.f32 %v2061, %v2111
    %v2160 = vadd.f32 %v2063, %v2112
    %v2161 = vadd.f32 %v2066, %v2105
    %v2162 = vadd.f32 %v2068, %v2106
    %v2163 = vadd.f32 %v2071, %v2107
    %v2164 = vadd.f32 %v2073, %v2108
    %v2165 = vadd.f32 %v2076, %v2109
    %v2166 = vadd.f32 %v2078, %v2110
    %v2167 = vadd.f32 %v2081, %v2111
    %v2168 = vadd.f32 %v2083, %v2112
    %v2169 = vadd.f32 %v2086, %v2105
    %v2170 = vadd.f32 %v2088, %v2106
    %v2171 = vadd.f32 %v2091, %v2107
    %v2172 = vadd.f32 %v2093, %v2108
    %v2173 = vadd.f32 %v2096, %v2109
    %v2174 = vadd.f32 %v2098, %v2110
    %v2175 = vadd.f32 %v2101, %v2111
    %v2176 = vadd.f32 %v2103, %v2112
    %v2177 = vunpack.c.l.bf16 %v581
    %v2178 = vunpack.c.l.bf16 %v579
    %2180 = vrot.lane.b32.xlu0 %v2178, 64
    %v2181 = vpop.permute.xlu0 %2180
    %v2183 = vmul.f32 %v2177, %v2181
    %v2184 = vpack.c.bf16 %v2183, %v2183
    %2186 = vrot.lane.b32.xlu0 %v2184, 64
    %v2187 = vpop.permute.xlu0 %2186
    %v2189 = vsel %vm165, %v2187, 0
    %2191 = vmatpush.bf16.msra.mxu0 0
    %2192 = vmatpush.bf16.msra.mxu0 0
    %2193 = vmatpush.bf16.msra.mxu0 0
    %2194 = vmatpush.bf16.msra.mxu0 0
    %2195 = vmatpush.bf16.msra.mxu0 0
    %2196 = vmatpush.bf16.msra.mxu0 0
    %2197 = vmatpush.bf16.msra.mxu0 %v1837
    %2198 = vmatpush.bf16.msra.mxu0 %v1836
    %2199 = vmatmul.bf16.gmra.mxu0 %v2189
    %v2200 = vpop.f32.mrf.mxu0
    %v2201 = vadd.f32 0.0, %v2200
    %v2202 = vpop.f32.mrf.mxu0
    %2203 = vdwg.mxu0
    %v2205 = vrot.slane %v2201, 1
    %v2206 = vrot.slane %v2201, 2
    %v2207 = vrot.slane %v2201, 3
    %v2208 = vrot.slane %v2201, 4
    %v2209 = vrot.slane %v2201, 5
    %v2210 = vrot.slane %v2201, 6
    %v2211 = vrot.slane %v2201, 7
    %vm2219 = vcmask 31744
    %v2220 = vsel %vm2219, %v2113, -inf
    %v2221 = vsel %vm2219, %v2114, -inf
    %v2222 = vmax.f32 %v2220, %v2221
    %v2223 = vsel %vm2219, %v2115, -inf
    %v2224 = vmax.f32 %v2222, %v2223
    %v2225 = vsel %vm2219, %v2116, -inf
    %v2226 = vmax.f32 %v2224, %v2225
    %v2227 = vsel %vm2219, %v2117, -inf
    %v2228 = vmax.f32 %v2226, %v2227
    %v2229 = vsel %vm2219, %v2118, -inf
    %v2230 = vmax.f32 %v2228, %v2229
    %v2231 = vsel %vm2219, %v2119, -inf
    %v2232 = vmax.f32 %v2230, %v2231
    %v2233 = vsel %vm2219, %v2120, -inf
    %v2234 = vmax.f32 %v2232, %v2233
    %v2235 = vrot.slane %v2234, 4
    %v2236 = vmax.f32 %v2234, %v2235
    %v2237 = vrot.slane %v2236, 2
    %v2238 = vmax.f32 %v2236, %v2237
    %v2239 = vrot.slane %v2238, 1
    %v2240 = vmax.f32 %v2238, %v2239
    %v2241 = vsel %vm2219, %v2121, -inf
    %v2242 = vsel %vm2219, %v2122, -inf
    %v2243 = vmax.f32 %v2241, %v2242
    %v2244 = vsel %vm2219, %v2123, -inf
    %v2245 = vmax.f32 %v2243, %v2244
    %v2246 = vsel %vm2219, %v2124, -inf
    %v2247 = vmax.f32 %v2245, %v2246
    %v2248 = vsel %vm2219, %v2125, -inf
    %v2249 = vmax.f32 %v2247, %v2248
    %v2250 = vsel %vm2219, %v2126, -inf
    %v2251 = vmax.f32 %v2249, %v2250
    %v2252 = vsel %vm2219, %v2127, -inf
    %v2253 = vmax.f32 %v2251, %v2252
    %v2254 = vsel %vm2219, %v2128, -inf
    %v2255 = vmax.f32 %v2253, %v2254
    %v2256 = vrot.slane %v2255, 4
    %v2257 = vmax.f32 %v2255, %v2256
    %v2258 = vrot.slane %v2257, 2
    %v2259 = vmax.f32 %v2257, %v2258
    %v2260 = vrot.slane %v2259, 1
    %v2261 = vmax.f32 %v2259, %v2260
    %v2262 = vsel %vm2219, %v2129, -inf
    %v2263 = vsel %vm2219, %v2130, -inf
    %v2264 = vmax.f32 %v2262, %v2263
    %v2265 = vsel %vm2219, %v2131, -inf
    %v2266 = vmax.f32 %v2264, %v2265
    %v2267 = vsel %vm2219, %v2132, -inf
    %v2268 = vmax.f32 %v2266, %v2267
    %v2269 = vsel %vm2219, %v2133, -inf
    %v2270 = vmax.f32 %v2268, %v2269
    %v2271 = vsel %vm2219, %v2134, -inf
    %v2272 = vmax.f32 %v2270, %v2271
    %v2273 = vsel %vm2219, %v2135, -inf
    %v2274 = vmax.f32 %v2272, %v2273
    %v2275 = vsel %vm2219, %v2136, -inf
    %v2276 = vmax.f32 %v2274, %v2275
    %v2277 = vrot.slane %v2276, 4
    %v2278 = vmax.f32 %v2276, %v2277
    %v2279 = vrot.slane %v2278, 2
    %v2280 = vmax.f32 %v2278, %v2279
    %v2281 = vrot.slane %v2280, 1
    %v2282 = vmax.f32 %v2280, %v2281
    %v2283 = vsel %vm2219, %v2137, -inf
    %v2284 = vsel %vm2219, %v2138, -inf
    %v2285 = vmax.f32 %v2283, %v2284
    %v2286 = vsel %vm2219, %v2139, -inf
    %v2287 = vmax.f32 %v2285, %v2286
    %v2288 = vsel %vm2219, %v2140, -inf
    %v2289 = vmax.f32 %v2287, %v2288
    %v2290 = vsel %vm2219, %v2141, -inf
    %v2291 = vmax.f32 %v2289, %v2290
    %v2292 = vsel %vm2219, %v2142, -inf
    %v2293 = vmax.f32 %v2291, %v2292
    %v2294 = vsel %vm2219, %v2143, -inf
    %v2295 = vmax.f32 %v2293, %v2294
    %v2296 = vsel %vm2219, %v2144, -inf
    %v2297 = vmax.f32 %v2295, %v2296
    %v2298 = vrot.slane %v2297, 4
    %v2299 = vmax.f32 %v2297, %v2298
    %v2300 = vrot.slane %v2299, 2
    %v2301 = vmax.f32 %v2299, %v2300
    %v2302 = vrot.slane %v2301, 1
    %v2303 = vmax.f32 %v2301, %v2302
    %v2304 = vsel %vm2219, %v2145, -inf
    %v2305 = vsel %vm2219, %v2146, -inf
    %v2306 = vmax.f32 %v2304, %v2305
    %v2307 = vsel %vm2219, %v2147, -inf
    %v2308 = vmax.f32 %v2306, %v2307
    %v2309 = vsel %vm2219, %v2148, -inf
    %v2310 = vmax.f32 %v2308, %v2309
    %v2311 = vsel %vm2219, %v2149, -inf
    %v2312 = vmax.f32 %v2310, %v2311
    %v2313 = vsel %vm2219, %v2150, -inf
    %v2314 = vmax.f32 %v2312, %v2313
    %v2315 = vsel %vm2219, %v2151, -inf
    %v2316 = vmax.f32 %v2314, %v2315
    %v2317 = vsel %vm2219, %v2152, -inf
    %v2318 = vmax.f32 %v2316, %v2317
    %v2319 = vrot.slane %v2318, 4
    %v2320 = vmax.f32 %v2318, %v2319
    %v2321 = vrot.slane %v2320, 2
    %v2322 = vmax.f32 %v2320, %v2321
    %v2323 = vrot.slane %v2322, 1
    %v2324 = vmax.f32 %v2322, %v2323
    %v2325 = vsel %vm2219, %v2153, -inf
    %v2326 = vsel %vm2219, %v2154, -inf
    %v2327 = vmax.f32 %v2325, %v2326
    %v2328 = vsel %vm2219, %v2155, -inf
    %v2329 = vmax.f32 %v2327, %v2328
    %v2330 = vsel %vm2219, %v2156, -inf
    %v2331 = vmax.f32 %v2329, %v2330
    %v2332 = vsel %vm2219, %v2157, -inf
    %v2333 = vmax.f32 %v2331, %v2332
    %v2334 = vsel %vm2219, %v2158, -inf
    %v2335 = vmax.f32 %v2333, %v2334
    %v2336 = vsel %vm2219, %v2159, -inf
    %v2337 = vmax.f32 %v2335, %v2336
    %v2338 = vsel %vm2219, %v2160, -inf
    %v2339 = vmax.f32 %v2337, %v2338
    %v2340 = vrot.slane %v2339, 4
    %v2341 = vmax.f32 %v2339, %v2340
    %v2342 = vrot.slane %v2341, 2
    %v2343 = vmax.f32 %v2341, %v2342
    %v2344 = vrot.slane %v2343, 1
    %v2345 = vmax.f32 %v2343, %v2344
    %v2346 = vsel %vm2219, %v2161, -inf
    %v2347 = vsel %vm2219, %v2162, -inf
    %v2348 = vmax.f32 %v2346, %v2347
    %v2349 = vsel %vm2219, %v2163, -inf
    %v2350 = vmax.f32 %v2348, %v2349
    %v2351 = vsel %vm2219, %v2164, -inf
    %v2352 = vmax.f32 %v2350, %v2351
    %v2353 = vsel %vm2219, %v2165, -inf
    %v2354 = vmax.f32 %v2352, %v2353
    %v2355 = vsel %vm2219, %v2166, -inf
    %v2356 = vmax.f32 %v2354, %v2355
    %v2357 = vsel %vm2219, %v2167, -inf
    %v2358 = vmax.f32 %v2356, %v2357
    %v2359 = vsel %vm2219, %v2168, -inf
    %v2360 = vmax.f32 %v2358, %v2359
    %v2361 = vrot.slane %v2360, 4
    %v2362 = vmax.f32 %v2360, %v2361
    %v2363 = vrot.slane %v2362, 2
    %v2364 = vmax.f32 %v2362, %v2363
    %v2365 = vrot.slane %v2364, 1
    %v2366 = vmax.f32 %v2364, %v2365
    %v2367 = vsel %vm2219, %v2169, -inf
    %v2368 = vsel %vm2219, %v2170, -inf
    %v2369 = vmax.f32 %v2367, %v2368
    %v2370 = vsel %vm2219, %v2171, -inf
    %v2371 = vmax.f32 %v2369, %v2370
    %v2372 = vsel %vm2219, %v2172, -inf
    %v2373 = vmax.f32 %v2371, %v2372
    %v2374 = vsel %vm2219, %v2173, -inf
    %v2375 = vmax.f32 %v2373, %v2374
    %v2376 = vsel %vm2219, %v2174, -inf
    %v2377 = vmax.f32 %v2375, %v2376
    %v2378 = vsel %vm2219, %v2175, -inf
    %v2379 = vmax.f32 %v2377, %v2378
    %v2380 = vsel %vm2219, %v2176, -inf
    %v2381 = vmax.f32 %v2379, %v2380
    %v2382 = vrot.slane %v2381, 4
    %v2383 = vmax.f32 %v2381, %v2382
    %v2384 = vrot.slane %v2383, 2
    %v2385 = vmax.f32 %v2383, %v2384
    %v2386 = vrot.slane %v2385, 1
    %v2387 = vmax.f32 %v2385, %v2386
    %v2388 = vmax.f32 %v2240, %v2201
    %v2389 = vmax.f32 %v2261, %v2205
    %v2390 = vmax.f32 %v2282, %v2206
    %v2391 = vmax.f32 %v2303, %v2207
    %v2392 = vmax.f32 %v2324, %v2208
    %v2393 = vmax.f32 %v2345, %v2209
    %v2394 = vmax.f32 %v2366, %v2210
    %v2395 = vmax.f32 %v2387, %v2211
    %v2396 = vperm.slane %v2388, 0
    %v2397 = vperm.slane %v2389, 0
    %v2398 = vperm.slane %v2390, 0
    %v2399 = vperm.slane %v2391, 0
    %v2400 = vperm.slane %v2392, 0
    %v2401 = vperm.slane %v2393, 0
    %v2402 = vperm.slane %v2394, 0
    %v2403 = vperm.slane %v2395, 0
    %v2404 = vsub.f32 %v2113, %v2396
    %v2405 = vsub.f32 %v2114, %v2396
    %v2406 = vsub.f32 %v2115, %v2396
    %v2407 = vsub.f32 %v2116, %v2396
    %v2408 = vsub.f32 %v2117, %v2396
    %v2409 = vsub.f32 %v2118, %v2396
    %v2410 = vsub.f32 %v2119, %v2396
    %v2411 = vsub.f32 %v2120, %v2396
    %v2412 = vsub.f32 %v2121, %v2397
    %v2413 = vsub.f32 %v2122, %v2397
    %v2414 = vsub.f32 %v2123, %v2397
    %v2415 = vsub.f32 %v2124, %v2397
    %v2416 = vsub.f32 %v2125, %v2397
    %v2417 = vsub.f32 %v2126, %v2397
    %v2418 = vsub.f32 %v2127, %v2397
    %v2419 = vsub.f32 %v2128, %v2397
    %v2420 = vsub.f32 %v2129, %v2398
    %v2421 = vsub.f32 %v2130, %v2398
    %v2422 = vsub.f32 %v2131, %v2398
    %v2423 = vsub.f32 %v2132, %v2398
    %v2424 = vsub.f32 %v2133, %v2398
    %v2425 = vsub.f32 %v2134, %v2398
    %v2426 = vsub.f32 %v2135, %v2398
    %v2427 = vsub.f32 %v2136, %v2398
    %v2428 = vsub.f32 %v2137, %v2399
    %v2429 = vsub.f32 %v2138, %v2399
    %v2430 = vsub.f32 %v2139, %v2399
    %v2431 = vsub.f32 %v2140, %v2399
    %v2432 = vsub.f32 %v2141, %v2399
    %v2433 = vsub.f32 %v2142, %v2399
    %v2434 = vsub.f32 %v2143, %v2399
    %v2435 = vsub.f32 %v2144, %v2399
    %v2436 = vsub.f32 %v2145, %v2400
    %v2437 = vsub.f32 %v2146, %v2400
    %v2438 = vsub.f32 %v2147, %v2400
    %v2439 = vsub.f32 %v2148, %v2400
    %v2440 = vsub.f32 %v2149, %v2400
    %v2441 = vsub.f32 %v2150, %v2400
    %v2442 = vsub.f32 %v2151, %v2400
    %v2443 = vsub.f32 %v2152, %v2400
    %v2444 = vsub.f32 %v2153, %v2401
    %v2445 = vsub.f32 %v2154, %v2401
    %v2446 = vsub.f32 %v2155, %v2401
    %v2447 = vsub.f32 %v2156, %v2401
    %v2448 = vsub.f32 %v2157, %v2401
    %v2449 = vsub.f32 %v2158, %v2401
    %v2450 = vsub.f32 %v2159, %v2401
    %v2451 = vsub.f32 %v2160, %v2401
    %v2452 = vsub.f32 %v2161, %v2402
    %v2453 = vsub.f32 %v2162, %v2402
    %v2454 = vsub.f32 %v2163, %v2402
    %v2455 = vsub.f32 %v2164, %v2402
    %v2456 = vsub.f32 %v2165, %v2402
    %v2457 = vsub.f32 %v2166, %v2402
    %v2458 = vsub.f32 %v2167, %v2402
    %v2459 = vsub.f32 %v2168, %v2402
    %v2460 = vsub.f32 %v2169, %v2403
    %v2461 = vsub.f32 %v2170, %v2403
    %v2462 = vsub.f32 %v2171, %v2403
    %v2463 = vsub.f32 %v2172, %v2403
    %v2464 = vsub.f32 %v2173, %v2403
    %v2465 = vsub.f32 %v2174, %v2403
    %v2466 = vsub.f32 %v2175, %v2403
    %v2467 = vsub.f32 %v2176, %v2403
    %v2468 = vmul.f32 %v2404, 1.442695
    %v2469 = vpow.pop %v2468
    %v2470 = vmul.f32 %v2405, 1.442695
    %v2471 = vpow.pop %v2470
    %v2472 = vmul.f32 %v2406, 1.442695
    %v2473 = vpow.pop %v2472
    %v2474 = vmul.f32 %v2407, 1.442695
    %v2475 = vpow.pop %v2474
    %v2476 = vmul.f32 %v2408, 1.442695
    %v2477 = vpow.pop %v2476
    %v2478 = vmul.f32 %v2409, 1.442695
    %v2479 = vpow.pop %v2478
    %v2480 = vmul.f32 %v2410, 1.442695
    %v2481 = vpow.pop %v2480
    %v2482 = vmul.f32 %v2411, 1.442695
    %v2483 = vpow.pop %v2482
    %v2484 = vmul.f32 %v2412, 1.442695
    %v2485 = vpow.pop %v2484
    %v2486 = vmul.f32 %v2413, 1.442695
    %v2487 = vpow.pop %v2486
    %v2488 = vmul.f32 %v2414, 1.442695
    %v2489 = vpow.pop %v2488
    %v2490 = vmul.f32 %v2415, 1.442695
    %v2491 = vpow.pop %v2490
    %v2492 = vmul.f32 %v2416, 1.442695
    %v2493 = vpow.pop %v2492
    %v2494 = vmul.f32 %v2417, 1.442695
    %v2495 = vpow.pop %v2494
    %v2496 = vmul.f32 %v2418, 1.442695
    %v2497 = vpow.pop %v2496
    %v2498 = vmul.f32 %v2419, 1.442695
    %v2499 = vpow.pop %v2498
    %v2500 = vmul.f32 %v2420, 1.442695
    %v2501 = vpow.pop %v2500
    %v2502 = vmul.f32 %v2421, 1.442695
    %v2503 = vpow.pop %v2502
    %v2504 = vmul.f32 %v2422, 1.442695
    %v2505 = vpow.pop %v2504
    %v2506 = vmul.f32 %v2423, 1.442695
    %v2507 = vpow.pop %v2506
    %v2508 = vmul.f32 %v2424, 1.442695
    %v2509 = vpow.pop %v2508
    %v2510 = vmul.f32 %v2425, 1.442695
    %v2511 = vpow.pop %v2510
    %v2512 = vmul.f32 %v2426, 1.442695
    %v2513 = vpow.pop %v2512
    %v2514 = vmul.f32 %v2427, 1.442695
    %v2515 = vpow.pop %v2514
    %v2516 = vmul.f32 %v2428, 1.442695
    %v2517 = vpow.pop %v2516
    %v2518 = vmul.f32 %v2429, 1.442695
    %v2519 = vpow.pop %v2518
    %v2520 = vmul.f32 %v2430, 1.442695
    %v2521 = vpow.pop %v2520
    %v2522 = vmul.f32 %v2431, 1.442695
    %v2523 = vpow.pop %v2522
    %v2524 = vmul.f32 %v2432, 1.442695
    %v2525 = vpow.pop %v2524
    %v2526 = vmul.f32 %v2433, 1.442695
    %v2527 = vpow.pop %v2526
    %v2528 = vmul.f32 %v2434, 1.442695
    %v2529 = vpow.pop %v2528
    %v2530 = vmul.f32 %v2435, 1.442695
    %v2531 = vpow.pop %v2530
    %v2532 = vmul.f32 %v2436, 1.442695
    %v2533 = vpow.pop %v2532
    %v2534 = vmul.f32 %v2437, 1.442695
    %v2535 = vpow.pop %v2534
    %v2536 = vmul.f32 %v2438, 1.442695
    %v2537 = vpow.pop %v2536
    %v2538 = vmul.f32 %v2439, 1.442695
    %v2539 = vpow.pop %v2538
    %v2540 = vmul.f32 %v2440, 1.442695
    %v2541 = vpow.pop %v2540
    %v2542 = vmul.f32 %v2441, 1.442695
    %v2543 = vpow.pop %v2542
    %v2544 = vmul.f32 %v2442, 1.442695
    %v2545 = vpow.pop %v2544
    %v2546 = vmul.f32 %v2443, 1.442695
    %v2547 = vpow.pop %v2546
    %v2548 = vmul.f32 %v2444, 1.442695
    %v2549 = vpow.pop %v2548
    %v2550 = vmul.f32 %v2445, 1.442695
    %v2551 = vpow.pop %v2550
    %v2552 = vmul.f32 %v2446, 1.442695
    %v2553 = vpow.pop %v2552
    %v2554 = vmul.f32 %v2447, 1.442695
    %v2555 = vpow.pop %v2554
    %v2556 = vmul.f32 %v2448, 1.442695
    %v2557 = vpow.pop %v2556
    %v2558 = vmul.f32 %v2449, 1.442695
    %v2559 = vpow.pop %v2558
    %v2560 = vmul.f32 %v2450, 1.442695
    %v2561 = vpow.pop %v2560
    %v2562 = vmul.f32 %v2451, 1.442695
    %v2563 = vpow.pop %v2562
    %v2564 = vmul.f32 %v2452, 1.442695
    %v2565 = vpow.pop %v2564
    %v2566 = vmul.f32 %v2453, 1.442695
    %v2567 = vpow.pop %v2566
    %v2568 = vmul.f32 %v2454, 1.442695
    %v2569 = vpow.pop %v2568
    %v2570 = vmul.f32 %v2455, 1.442695
    %v2571 = vpow.pop %v2570
    %v2572 = vmul.f32 %v2456, 1.442695
    %v2573 = vpow.pop %v2572
    %v2574 = vmul.f32 %v2457, 1.442695
    %v2575 = vpow.pop %v2574
    %v2576 = vmul.f32 %v2458, 1.442695
    %v2577 = vpow.pop %v2576
    %v2578 = vmul.f32 %v2459, 1.442695
    %v2579 = vpow.pop %v2578
    %v2580 = vmul.f32 %v2460, 1.442695
    %v2581 = vpow.pop %v2580
    %v2582 = vmul.f32 %v2461, 1.442695
    %v2583 = vpow.pop %v2582
    %v2584 = vmul.f32 %v2462, 1.442695
    %v2585 = vpow.pop %v2584
    %v2586 = vmul.f32 %v2463, 1.442695
    %v2587 = vpow.pop %v2586
    %v2588 = vmul.f32 %v2464, 1.442695
    %v2589 = vpow.pop %v2588
    %v2590 = vmul.f32 %v2465, 1.442695
    %v2591 = vpow.pop %v2590
    %v2592 = vmul.f32 %v2466, 1.442695
    %v2593 = vpow.pop %v2592
    %v2594 = vmul.f32 %v2467, 1.442695
    %v2595 = vpow.pop %v2594
    %v2596 = vsub.f32 %v2201, %v2388
    %v2597 = vsub.f32 %v2205, %v2389
    %v2598 = vsub.f32 %v2206, %v2390
    %v2599 = vsub.f32 %v2207, %v2391
    %v2600 = vsub.f32 %v2208, %v2392
    %v2601 = vsub.f32 %v2209, %v2393
    %v2602 = vsub.f32 %v2210, %v2394
    %v2603 = vsub.f32 %v2211, %v2395
    %v2604 = vmul.f32 %v2596, 1.442695
    %v2605 = vpow.pop %v2604
    %v2606 = vmul.f32 %v2597, 1.442695
    %v2607 = vpow.pop %v2606
    %v2608 = vmul.f32 %v2598, 1.442695
    %v2609 = vpow.pop %v2608
    %v2610 = vmul.f32 %v2599, 1.442695
    %v2611 = vpow.pop %v2610
    %v2612 = vmul.f32 %v2600, 1.442695
    %v2613 = vpow.pop %v2612
    %v2614 = vmul.f32 %v2601, 1.442695
    %v2615 = vpow.pop %v2614
    %v2616 = vmul.f32 %v2602, 1.442695
    %v2617 = vpow.pop %v2616
    %v2618 = vmul.f32 %v2603, 1.442695
    %v2619 = vpow.pop %v2618
    %v2620 = vsel %vm2219, %v2469, 0.0
    %v2621 = vsel %vm2219, %v2471, 0.0
    %v2622 = vadd.f32 %v2620, %v2621
    %v2623 = vsel %vm2219, %v2473, 0.0
    %v2624 = vadd.f32 %v2622, %v2623
    %v2625 = vsel %vm2219, %v2475, 0.0
    %v2626 = vadd.f32 %v2624, %v2625
    %v2627 = vsel %vm2219, %v2477, 0.0
    %v2628 = vadd.f32 %v2626, %v2627
    %v2629 = vsel %vm2219, %v2479, 0.0
    %v2630 = vadd.f32 %v2628, %v2629
    %v2631 = vsel %vm2219, %v2481, 0.0
    %v2632 = vadd.f32 %v2630, %v2631
    %v2633 = vsel %vm2219, %v2483, 0.0
    %v2634 = vadd.f32 %v2632, %v2633
    %v2635 = vrot.slane %v2634, 4
    %v2636 = vadd.f32 %v2634, %v2635
    %v2637 = vrot.slane %v2636, 2
    %v2638 = vadd.f32 %v2636, %v2637
    %v2639 = vrot.slane %v2638, 1
    %v2640 = vadd.f32 %v2638, %v2639
    %v2641 = vsel %vm2219, %v2485, 0.0
    %v2642 = vsel %vm2219, %v2487, 0.0
    %v2643 = vadd.f32 %v2641, %v2642
    %v2644 = vsel %vm2219, %v2489, 0.0
    %v2645 = vadd.f32 %v2643, %v2644
    %v2646 = vsel %vm2219, %v2491, 0.0
    %v2647 = vadd.f32 %v2645, %v2646
    %v2648 = vsel %vm2219, %v2493, 0.0
    %v2649 = vadd.f32 %v2647, %v2648
    %v2650 = vsel %vm2219, %v2495, 0.0
    %v2651 = vadd.f32 %v2649, %v2650
    %v2652 = vsel %vm2219, %v2497, 0.0
    %v2653 = vadd.f32 %v2651, %v2652
    %v2654 = vsel %vm2219, %v2499, 0.0
    %v2655 = vadd.f32 %v2653, %v2654
    %v2656 = vrot.slane %v2655, 4
    %v2657 = vadd.f32 %v2655, %v2656
    %v2658 = vrot.slane %v2657, 2
    %v2659 = vadd.f32 %v2657, %v2658
    %v2660 = vrot.slane %v2659, 1
    %v2661 = vadd.f32 %v2659, %v2660
    %v2662 = vsel %vm2219, %v2501, 0.0
    %v2663 = vsel %vm2219, %v2503, 0.0
    %v2664 = vadd.f32 %v2662, %v2663
    %v2665 = vsel %vm2219, %v2505, 0.0
    %v2666 = vadd.f32 %v2664, %v2665
    %v2667 = vsel %vm2219, %v2507, 0.0
    %v2668 = vadd.f32 %v2666, %v2667
    %v2669 = vsel %vm2219, %v2509, 0.0
    %v2670 = vadd.f32 %v2668, %v2669
    %v2671 = vsel %vm2219, %v2511, 0.0
    %v2672 = vadd.f32 %v2670, %v2671
    %v2673 = vsel %vm2219, %v2513, 0.0
    %v2674 = vadd.f32 %v2672, %v2673
    %v2675 = vsel %vm2219, %v2515, 0.0
    %v2676 = vadd.f32 %v2674, %v2675
    %v2677 = vrot.slane %v2676, 4
    %v2678 = vadd.f32 %v2676, %v2677
    %v2679 = vrot.slane %v2678, 2
    %v2680 = vadd.f32 %v2678, %v2679
    %v2681 = vrot.slane %v2680, 1
    %v2682 = vadd.f32 %v2680, %v2681
    %v2683 = vsel %vm2219, %v2517, 0.0
    %v2684 = vsel %vm2219, %v2519, 0.0
    %v2685 = vadd.f32 %v2683, %v2684
    %v2686 = vsel %vm2219, %v2521, 0.0
    %v2687 = vadd.f32 %v2685, %v2686
    %v2688 = vsel %vm2219, %v2523, 0.0
    %v2689 = vadd.f32 %v2687, %v2688
    %v2690 = vsel %vm2219, %v2525, 0.0
    %v2691 = vadd.f32 %v2689, %v2690
    %v2692 = vsel %vm2219, %v2527, 0.0
    %v2693 = vadd.f32 %v2691, %v2692
    %v2694 = vsel %vm2219, %v2529, 0.0
    %v2695 = vadd.f32 %v2693, %v2694
    %v2696 = vsel %vm2219, %v2531, 0.0
    %v2697 = vadd.f32 %v2695, %v2696
    %v2698 = vrot.slane %v2697, 4
    %v2699 = vadd.f32 %v2697, %v2698
    %v2700 = vrot.slane %v2699, 2
    %v2701 = vadd.f32 %v2699, %v2700
    %v2702 = vrot.slane %v2701, 1
    %v2703 = vadd.f32 %v2701, %v2702
    %v2704 = vsel %vm2219, %v2533, 0.0
    %v2705 = vsel %vm2219, %v2535, 0.0
    %v2706 = vadd.f32 %v2704, %v2705
    %v2707 = vsel %vm2219, %v2537, 0.0
    %v2708 = vadd.f32 %v2706, %v2707
    %v2709 = vsel %vm2219, %v2539, 0.0
    %v2710 = vadd.f32 %v2708, %v2709
    %v2711 = vsel %vm2219, %v2541, 0.0
    %v2712 = vadd.f32 %v2710, %v2711
    %v2713 = vsel %vm2219, %v2543, 0.0
    %v2714 = vadd.f32 %v2712, %v2713
    %v2715 = vsel %vm2219, %v2545, 0.0
    %v2716 = vadd.f32 %v2714, %v2715
    %v2717 = vsel %vm2219, %v2547, 0.0
    %v2718 = vadd.f32 %v2716, %v2717
    %v2719 = vrot.slane %v2718, 4
    %v2720 = vadd.f32 %v2718, %v2719
    %v2721 = vrot.slane %v2720, 2
    %v2722 = vadd.f32 %v2720, %v2721
    %v2723 = vrot.slane %v2722, 1
    %v2724 = vadd.f32 %v2722, %v2723
    %v2725 = vsel %vm2219, %v2549, 0.0
    %v2726 = vsel %vm2219, %v2551, 0.0
    %v2727 = vadd.f32 %v2725, %v2726
    %v2728 = vsel %vm2219, %v2553, 0.0
    %v2729 = vadd.f32 %v2727, %v2728
    %v2730 = vsel %vm2219, %v2555, 0.0
    %v2731 = vadd.f32 %v2729, %v2730
    %v2732 = vsel %vm2219, %v2557, 0.0
    %v2733 = vadd.f32 %v2731, %v2732
    %v2734 = vsel %vm2219, %v2559, 0.0
    %v2735 = vadd.f32 %v2733, %v2734
    %v2736 = vsel %vm2219, %v2561, 0.0
    %v2737 = vadd.f32 %v2735, %v2736
    %v2738 = vsel %vm2219, %v2563, 0.0
    %v2739 = vadd.f32 %v2737, %v2738
    %v2740 = vrot.slane %v2739, 4
    %v2741 = vadd.f32 %v2739, %v2740
    %v2742 = vrot.slane %v2741, 2
    %v2743 = vadd.f32 %v2741, %v2742
    %v2744 = vrot.slane %v2743, 1
    %v2745 = vadd.f32 %v2743, %v2744
    %v2746 = vsel %vm2219, %v2565, 0.0
    %v2747 = vsel %vm2219, %v2567, 0.0
    %v2748 = vadd.f32 %v2746, %v2747
    %v2749 = vsel %vm2219, %v2569, 0.0
    %v2750 = vadd.f32 %v2748, %v2749
    %v2751 = vsel %vm2219, %v2571, 0.0
    %v2752 = vadd.f32 %v2750, %v2751
    %v2753 = vsel %vm2219, %v2573, 0.0
    %v2754 = vadd.f32 %v2752, %v2753
    %v2755 = vsel %vm2219, %v2575, 0.0
    %v2756 = vadd.f32 %v2754, %v2755
    %v2757 = vsel %vm2219, %v2577, 0.0
    %v2758 = vadd.f32 %v2756, %v2757
    %v2759 = vsel %vm2219, %v2579, 0.0
    %v2760 = vadd.f32 %v2758, %v2759
    %v2761 = vrot.slane %v2760, 4
    %v2762 = vadd.f32 %v2760, %v2761
    %v2763 = vrot.slane %v2762, 2
    %v2764 = vadd.f32 %v2762, %v2763
    %v2765 = vrot.slane %v2764, 1
    %v2766 = vadd.f32 %v2764, %v2765
    %v2767 = vsel %vm2219, %v2581, 0.0
    %v2768 = vsel %vm2219, %v2583, 0.0
    %v2769 = vadd.f32 %v2767, %v2768
    %v2770 = vsel %vm2219, %v2585, 0.0
    %v2771 = vadd.f32 %v2769, %v2770
    %v2772 = vsel %vm2219, %v2587, 0.0
    %v2773 = vadd.f32 %v2771, %v2772
    %v2774 = vsel %vm2219, %v2589, 0.0
    %v2775 = vadd.f32 %v2773, %v2774
    %v2776 = vsel %vm2219, %v2591, 0.0
    %v2777 = vadd.f32 %v2775, %v2776
    %v2778 = vsel %vm2219, %v2593, 0.0
    %v2779 = vadd.f32 %v2777, %v2778
    %v2780 = vsel %vm2219, %v2595, 0.0
    %v2781 = vadd.f32 %v2779, %v2780
    %v2782 = vrot.slane %v2781, 4
    %v2783 = vadd.f32 %v2781, %v2782
    %v2784 = vrot.slane %v2783, 2
    %v2785 = vadd.f32 %v2783, %v2784
    %v2786 = vrot.slane %v2785, 1
    %v2787 = vadd.f32 %v2785, %v2786
    %v2788 = vadd.f32 %v2640, %v2605
    %v2789 = vadd.f32 %v2661, %v2607
    %v2790 = vadd.f32 %v2682, %v2609
    %v2791 = vadd.f32 %v2703, %v2611
    %v2792 = vadd.f32 %v2724, %v2613
    %v2793 = vadd.f32 %v2745, %v2615
    %v2794 = vadd.f32 %v2766, %v2617
    %v2795 = vadd.f32 %v2787, %v2619
    %v2796 = vrcp.pop %v2788
    %v2797 = vrcp.pop %v2789
    %v2798 = vrcp.pop %v2790
    %v2799 = vrcp.pop %v2791
    %v2800 = vrcp.pop %v2792
    %v2801 = vrcp.pop %v2793
    %v2802 = vrcp.pop %v2794
    %v2803 = vrcp.pop %v2795
    %v2804 = vperm.slane %v2796, 0
    %v2805 = vperm.slane %v2797, 0
    %v2806 = vperm.slane %v2798, 0
    %v2807 = vperm.slane %v2799, 0
    %v2808 = vperm.slane %v2800, 0
    %v2809 = vperm.slane %v2801, 0
    %v2810 = vperm.slane %v2802, 0
    %v2811 = vperm.slane %v2803, 0
    %v2812 = vmul.f32 %v2469, %v2804
    %v2813 = vmul.f32 %v2471, %v2804
    %v2814 = vmul.f32 %v2473, %v2804
    %v2815 = vmul.f32 %v2475, %v2804
    %v2816 = vmul.f32 %v2477, %v2804
    %v2817 = vmul.f32 %v2479, %v2804
    %v2818 = vmul.f32 %v2481, %v2804
    %v2819 = vmul.f32 %v2483, %v2804
    %v2820 = vmul.f32 %v2485, %v2805
    %v2821 = vmul.f32 %v2487, %v2805
    %v2822 = vmul.f32 %v2489, %v2805
    %v2823 = vmul.f32 %v2491, %v2805
    %v2824 = vmul.f32 %v2493, %v2805
    %v2825 = vmul.f32 %v2495, %v2805
    %v2826 = vmul.f32 %v2497, %v2805
    %v2827 = vmul.f32 %v2499, %v2805
    %v2828 = vmul.f32 %v2501, %v2806
    %v2829 = vmul.f32 %v2503, %v2806
    %v2830 = vmul.f32 %v2505, %v2806
    %v2831 = vmul.f32 %v2507, %v2806
    %v2832 = vmul.f32 %v2509, %v2806
    %v2833 = vmul.f32 %v2511, %v2806
    %v2834 = vmul.f32 %v2513, %v2806
    %v2835 = vmul.f32 %v2515, %v2806
    %v2836 = vmul.f32 %v2517, %v2807
    %v2837 = vmul.f32 %v2519, %v2807
    %v2838 = vmul.f32 %v2521, %v2807
    %v2839 = vmul.f32 %v2523, %v2807
    %v2840 = vmul.f32 %v2525, %v2807
    %v2841 = vmul.f32 %v2527, %v2807
    %v2842 = vmul.f32 %v2529, %v2807
    %v2843 = vmul.f32 %v2531, %v2807
    %v2844 = vmul.f32 %v2533, %v2808
    %v2845 = vmul.f32 %v2535, %v2808
    %v2846 = vmul.f32 %v2537, %v2808
    %v2847 = vmul.f32 %v2539, %v2808
    %v2848 = vmul.f32 %v2541, %v2808
    %v2849 = vmul.f32 %v2543, %v2808
    %v2850 = vmul.f32 %v2545, %v2808
    %v2851 = vmul.f32 %v2547, %v2808
    %v2852 = vmul.f32 %v2549, %v2809
    %v2853 = vmul.f32 %v2551, %v2809
    %v2854 = vmul.f32 %v2553, %v2809
    %v2855 = vmul.f32 %v2555, %v2809
    %v2856 = vmul.f32 %v2557, %v2809
    %v2857 = vmul.f32 %v2559, %v2809
    %v2858 = vmul.f32 %v2561, %v2809
    %v2859 = vmul.f32 %v2563, %v2809
    %v2860 = vmul.f32 %v2565, %v2810
    %v2861 = vmul.f32 %v2567, %v2810
    %v2862 = vmul.f32 %v2569, %v2810
    %v2863 = vmul.f32 %v2571, %v2810
    %v2864 = vmul.f32 %v2573, %v2810
    %v2865 = vmul.f32 %v2575, %v2810
    %v2866 = vmul.f32 %v2577, %v2810
    %v2867 = vmul.f32 %v2579, %v2810
    %v2868 = vmul.f32 %v2581, %v2811
    %v2869 = vmul.f32 %v2583, %v2811
    %v2870 = vmul.f32 %v2585, %v2811
    %v2871 = vmul.f32 %v2587, %v2811
    %v2872 = vmul.f32 %v2589, %v2811
    %v2873 = vmul.f32 %v2591, %v2811
    %v2874 = vmul.f32 %v2593, %v2811
    %v2875 = vmul.f32 %v2595, %v2811
    %v2876 = vmul.f32 %v2605, %v2796
    %v2877 = vmul.f32 %v2607, %v2797
    %v2878 = vmul.f32 %v2609, %v2798
    %v2879 = vmul.f32 %v2611, %v2799
    %v2880 = vmul.f32 %v2613, %v2800
    %v2881 = vmul.f32 %v2615, %v2801
    %v2882 = vmul.f32 %v2617, %v2802
    %v2883 = vmul.f32 %v2619, %v2803
    %v2884 = vpack.c.bf16 %v2813, %v2812
    %v2885 = vpack.c.bf16 %v2815, %v2814
    %v2886 = vpack.c.bf16 %v2817, %v2816
    %v2887 = vpack.c.bf16 %v2819, %v2818
    %v2888 = vpack.c.bf16 %v2821, %v2820
    %v2889 = vpack.c.bf16 %v2823, %v2822
    %v2890 = vpack.c.bf16 %v2825, %v2824
    %v2891 = vpack.c.bf16 %v2827, %v2826
    %v2892 = vpack.c.bf16 %v2829, %v2828
    %v2893 = vpack.c.bf16 %v2831, %v2830
    %v2894 = vpack.c.bf16 %v2833, %v2832
    %v2895 = vpack.c.bf16 %v2835, %v2834
    %v2896 = vpack.c.bf16 %v2837, %v2836
    %v2897 = vpack.c.bf16 %v2839, %v2838
    %v2898 = vpack.c.bf16 %v2841, %v2840
    %v2899 = vpack.c.bf16 %v2843, %v2842
    %v2900 = vpack.c.bf16 %v2845, %v2844
    %v2901 = vpack.c.bf16 %v2847, %v2846
    %v2902 = vpack.c.bf16 %v2849, %v2848
    %v2903 = vpack.c.bf16 %v2851, %v2850
    %v2904 = vpack.c.bf16 %v2853, %v2852
    %v2905 = vpack.c.bf16 %v2855, %v2854
    %v2906 = vpack.c.bf16 %v2857, %v2856
    %v2907 = vpack.c.bf16 %v2859, %v2858
    %v2908 = vpack.c.bf16 %v2861, %v2860
    %v2909 = vpack.c.bf16 %v2863, %v2862
    %v2910 = vpack.c.bf16 %v2865, %v2864
    %v2911 = vpack.c.bf16 %v2867, %v2866
    %v2912 = vpack.c.bf16 %v2869, %v2868
    %v2913 = vpack.c.bf16 %v2871, %v2870
    %v2914 = vpack.c.bf16 %v2873, %v2872
    %v2915 = vpack.c.bf16 %v2875, %v2874
    %v2917 = vsel %vm2219, %v2884, 0
    %v2920 = vsel %vm2219, %v2885, 0
    %v2923 = vsel %vm2219, %v2886, 0
    %v2926 = vsel %vm2219, %v2887, 0
    %v2929 = vsel %vm2219, %v2888, 0
    %v2932 = vsel %vm2219, %v2889, 0
    %v2935 = vsel %vm2219, %v2890, 0
    %v2938 = vsel %vm2219, %v2891, 0
    %v2941 = vsel %vm2219, %v2892, 0
    %v2944 = vsel %vm2219, %v2893, 0
    %v2947 = vsel %vm2219, %v2894, 0
    %v2950 = vsel %vm2219, %v2895, 0
    %v2953 = vsel %vm2219, %v2896, 0
    %v2956 = vsel %vm2219, %v2897, 0
    %v2959 = vsel %vm2219, %v2898, 0
    %v2962 = vsel %vm2219, %v2899, 0
    %v2965 = vsel %vm2219, %v2900, 0
    %v2968 = vsel %vm2219, %v2901, 0
    %v2971 = vsel %vm2219, %v2902, 0
    %v2974 = vsel %vm2219, %v2903, 0
    %v2977 = vsel %vm2219, %v2904, 0
    %v2980 = vsel %vm2219, %v2905, 0
    %v2983 = vsel %vm2219, %v2906, 0
    %v2986 = vsel %vm2219, %v2907, 0
    %v2989 = vsel %vm2219, %v2908, 0
    %v2992 = vsel %vm2219, %v2909, 0
    %v2995 = vsel %vm2219, %v2910, 0
    %v2998 = vsel %vm2219, %v2911, 0
    %v3001 = vsel %vm2219, %v2912, 0
    %v3004 = vsel %vm2219, %v2913, 0
    %v3007 = vsel %vm2219, %v2914, 0
    %v3010 = vsel %vm2219, %v2915, 0
    %vm3012 = vcmask 1041408
    %v3014 = vsel %vm3012, %v1075, 0
    %3016 = vmatpush.bf16.msra.mxu0 0
    %3017 = vmatpush.bf16.msra.mxu0 0
    %3018 = vmatpush.bf16.msra.mxu0 0
    %3019 = vmatpush.bf16.msra.mxu0 0
    %3020 = vmatpush.bf16.msra.mxu0 0
    %3021 = vmatpush.bf16.msra.mxu0 0
    %3022 = vmatpush.bf16.msra.mxu0 0
    %3023 = vmatpush.bf16.msra.mxu0 %v3014
    %3024 = vmatmul.bf16.gmra.mxu0 %v2917
    %v3025 = vpop.f32.mrf.mxu0
    %v3026 = vadd.f32 0.0, %v3025
    %v3027 = vpop.f32.mrf.mxu0
    %v3028 = vadd.f32 0.0, %v3027
    %3029 = vmatmul.bf16.gmra.mxu0 %v2920
    %v3030 = vpop.f32.mrf.mxu0
    %v3031 = vadd.f32 0.0, %v3030
    %v3032 = vpop.f32.mrf.mxu0
    %v3033 = vadd.f32 0.0, %v3032
    %3034 = vmatmul.bf16.gmra.mxu0 %v2923
    %v3035 = vpop.f32.mrf.mxu0
    %v3036 = vadd.f32 0.0, %v3035
    %v3037 = vpop.f32.mrf.mxu0
    %v3038 = vadd.f32 0.0, %v3037
    %3039 = vmatmul.bf16.gmra.mxu0 %v2926
    %v3040 = vpop.f32.mrf.mxu0
    %v3041 = vadd.f32 0.0, %v3040
    %v3042 = vpop.f32.mrf.mxu0
    %v3043 = vadd.f32 0.0, %v3042
    %3044 = vmatmul.bf16.gmra.mxu0 %v2929
    %v3045 = vpop.f32.mrf.mxu0
    %v3046 = vadd.f32 0.0, %v3045
    %v3047 = vpop.f32.mrf.mxu0
    %v3048 = vadd.f32 0.0, %v3047
    %3049 = vmatmul.bf16.gmra.mxu0 %v2932
    %v3050 = vpop.f32.mrf.mxu0
    %v3051 = vadd.f32 0.0, %v3050
    %v3052 = vpop.f32.mrf.mxu0
    %v3053 = vadd.f32 0.0, %v3052
    %3054 = vmatmul.bf16.gmra.mxu0 %v2935
    %v3055 = vpop.f32.mrf.mxu0
    %v3056 = vadd.f32 0.0, %v3055
    %v3057 = vpop.f32.mrf.mxu0
    %v3058 = vadd.f32 0.0, %v3057
    %3059 = vmatmul.bf16.gmra.mxu0 %v2938
    %v3060 = vpop.f32.mrf.mxu0
    %v3061 = vadd.f32 0.0, %v3060
    %v3062 = vpop.f32.mrf.mxu0
    %v3063 = vadd.f32 0.0, %v3062
    %3064 = vmatmul.bf16.gmra.mxu0 %v2941
    %v3065 = vpop.f32.mrf.mxu0
    %v3066 = vadd.f32 0.0, %v3065
    %v3067 = vpop.f32.mrf.mxu0
    %v3068 = vadd.f32 0.0, %v3067
    %3069 = vmatmul.bf16.gmra.mxu0 %v2944
    %v3070 = vpop.f32.mrf.mxu0
    %v3071 = vadd.f32 0.0, %v3070
    %v3072 = vpop.f32.mrf.mxu0
    %v3073 = vadd.f32 0.0, %v3072
    %3074 = vmatmul.bf16.gmra.mxu0 %v2947
    %v3075 = vpop.f32.mrf.mxu0
    %v3076 = vadd.f32 0.0, %v3075
    %v3077 = vpop.f32.mrf.mxu0
    %v3078 = vadd.f32 0.0, %v3077
    %3079 = vmatmul.bf16.gmra.mxu0 %v2950
    %v3080 = vpop.f32.mrf.mxu0
    %v3081 = vadd.f32 0.0, %v3080
    %v3082 = vpop.f32.mrf.mxu0
    %v3083 = vadd.f32 0.0, %v3082
    %3084 = vmatmul.bf16.gmra.mxu0 %v2953
    %v3085 = vpop.f32.mrf.mxu0
    %v3086 = vadd.f32 0.0, %v3085
    %v3087 = vpop.f32.mrf.mxu0
    %v3088 = vadd.f32 0.0, %v3087
    %3089 = vmatmul.bf16.gmra.mxu0 %v2956
    %v3090 = vpop.f32.mrf.mxu0
    %v3091 = vadd.f32 0.0, %v3090
    %v3092 = vpop.f32.mrf.mxu0
    %v3093 = vadd.f32 0.0, %v3092
    %3094 = vmatmul.bf16.gmra.mxu0 %v2959
    %v3095 = vpop.f32.mrf.mxu0
    %v3096 = vadd.f32 0.0, %v3095
    %v3097 = vpop.f32.mrf.mxu0
    %v3098 = vadd.f32 0.0, %v3097
    %3099 = vmatmul.bf16.gmra.mxu0 %v2962
    %v3100 = vpop.f32.mrf.mxu0
    %v3101 = vadd.f32 0.0, %v3100
    %v3102 = vpop.f32.mrf.mxu0
    %v3103 = vadd.f32 0.0, %v3102
    %3104 = vmatmul.bf16.gmra.mxu0 %v2965
    %v3105 = vpop.f32.mrf.mxu0
    %v3106 = vadd.f32 0.0, %v3105
    %v3107 = vpop.f32.mrf.mxu0
    %v3108 = vadd.f32 0.0, %v3107
    %3109 = vmatmul.bf16.gmra.mxu0 %v2968
    %v3110 = vpop.f32.mrf.mxu0
    %v3111 = vadd.f32 0.0, %v3110
    %v3112 = vpop.f32.mrf.mxu0
    %v3113 = vadd.f32 0.0, %v3112
    %3114 = vmatmul.bf16.gmra.mxu0 %v2971
    %v3115 = vpop.f32.mrf.mxu0
    %v3116 = vadd.f32 0.0, %v3115
    %v3117 = vpop.f32.mrf.mxu0
    %v3118 = vadd.f32 0.0, %v3117
    %3119 = vmatmul.bf16.gmra.mxu0 %v2974
    %v3120 = vpop.f32.mrf.mxu0
    %v3121 = vadd.f32 0.0, %v3120
    %v3122 = vpop.f32.mrf.mxu0
    %v3123 = vadd.f32 0.0, %v3122
    %3124 = vmatmul.bf16.gmra.mxu0 %v2977
    %v3125 = vpop.f32.mrf.mxu0
    %v3126 = vadd.f32 0.0, %v3125
    %v3127 = vpop.f32.mrf.mxu0
    %v3128 = vadd.f32 0.0, %v3127
    %3129 = vmatmul.bf16.gmra.mxu0 %v2980
    %v3130 = vpop.f32.mrf.mxu0
    %v3131 = vadd.f32 0.0, %v3130
    %v3132 = vpop.f32.mrf.mxu0
    %v3133 = vadd.f32 0.0, %v3132
    %3134 = vmatmul.bf16.gmra.mxu0 %v2983
    %v3135 = vpop.f32.mrf.mxu0
    %v3136 = vadd.f32 0.0, %v3135
    %v3137 = vpop.f32.mrf.mxu0
    %v3138 = vadd.f32 0.0, %v3137
    %3139 = vmatmul.bf16.gmra.mxu0 %v2986
    %v3140 = vpop.f32.mrf.mxu0
    %v3141 = vadd.f32 0.0, %v3140
    %v3142 = vpop.f32.mrf.mxu0
    %v3143 = vadd.f32 0.0, %v3142
    %3144 = vmatmul.bf16.gmra.mxu0 %v2989
    %v3145 = vpop.f32.mrf.mxu0
    %v3146 = vadd.f32 0.0, %v3145
    %v3147 = vpop.f32.mrf.mxu0
    %v3148 = vadd.f32 0.0, %v3147
    %3149 = vmatmul.bf16.gmra.mxu0 %v2992
    %v3150 = vpop.f32.mrf.mxu0
    %v3151 = vadd.f32 0.0, %v3150
    %v3152 = vpop.f32.mrf.mxu0
    %v3153 = vadd.f32 0.0, %v3152
    %3154 = vmatmul.bf16.gmra.mxu0 %v2995
    %v3155 = vpop.f32.mrf.mxu0
    %v3156 = vadd.f32 0.0, %v3155
    %v3157 = vpop.f32.mrf.mxu0
    %v3158 = vadd.f32 0.0, %v3157
    %3159 = vmatmul.bf16.gmra.mxu0 %v2998
    %v3160 = vpop.f32.mrf.mxu0
    %v3161 = vadd.f32 0.0, %v3160
    %v3162 = vpop.f32.mrf.mxu0
    %v3163 = vadd.f32 0.0, %v3162
    %3164 = vmatmul.bf16.gmra.mxu0 %v3001
    %v3165 = vpop.f32.mrf.mxu0
    %v3166 = vadd.f32 0.0, %v3165
    %v3167 = vpop.f32.mrf.mxu0
    %v3168 = vadd.f32 0.0, %v3167
    %3169 = vmatmul.bf16.gmra.mxu0 %v3004
    %v3170 = vpop.f32.mrf.mxu0
    %v3171 = vadd.f32 0.0, %v3170
    %v3172 = vpop.f32.mrf.mxu0
    %v3173 = vadd.f32 0.0, %v3172
    %3174 = vmatmul.bf16.gmra.mxu0 %v3007
    %v3175 = vpop.f32.mrf.mxu0
    %v3176 = vadd.f32 0.0, %v3175
    %v3177 = vpop.f32.mrf.mxu0
    %v3178 = vadd.f32 0.0, %v3177
    %3179 = vmatmul.bf16.gmra.mxu0 %v3010
    %v3180 = vpop.f32.mrf.mxu0
    %v3181 = vadd.f32 0.0, %v3180
    %v3182 = vpop.f32.mrf.mxu0
    %v3183 = vadd.f32 0.0, %v3182
    %3184 = vdwg.mxu0
    %v3185 = vpack.c.bf16 %v3026, %v3026
    %v3186 = vpack.c.bf16 %v3028, %v3028
    %v3187 = vpack.c.bf16 %v3031, %v3031
    %v3188 = vpack.c.bf16 %v3033, %v3033
    %v3189 = vpack.c.bf16 %v3036, %v3036
    %v3190 = vpack.c.bf16 %v3038, %v3038
    %v3191 = vpack.c.bf16 %v3041, %v3041
    %v3192 = vpack.c.bf16 %v3043, %v3043
    %v3193 = vpack.c.bf16 %v3046, %v3046
    %v3194 = vpack.c.bf16 %v3048, %v3048
    %v3195 = vpack.c.bf16 %v3051, %v3051
    %v3196 = vpack.c.bf16 %v3053, %v3053
    %v3197 = vpack.c.bf16 %v3056, %v3056
    %v3198 = vpack.c.bf16 %v3058, %v3058
    %v3199 = vpack.c.bf16 %v3061, %v3061
    %v3200 = vpack.c.bf16 %v3063, %v3063
    %v3201 = vpack.c.bf16 %v3066, %v3066
    %v3202 = vpack.c.bf16 %v3068, %v3068
    %v3203 = vpack.c.bf16 %v3071, %v3071
    %v3204 = vpack.c.bf16 %v3073, %v3073
    %v3205 = vpack.c.bf16 %v3076, %v3076
    %v3206 = vpack.c.bf16 %v3078, %v3078
    %v3207 = vpack.c.bf16 %v3081, %v3081
    %v3208 = vpack.c.bf16 %v3083, %v3083
    %v3209 = vpack.c.bf16 %v3086, %v3086
    %v3210 = vpack.c.bf16 %v3088, %v3088
    %v3211 = vpack.c.bf16 %v3091, %v3091
    %v3212 = vpack.c.bf16 %v3093, %v3093
    %v3213 = vpack.c.bf16 %v3096, %v3096
    %v3214 = vpack.c.bf16 %v3098, %v3098
    %v3215 = vpack.c.bf16 %v3101, %v3101
    %v3216 = vpack.c.bf16 %v3103, %v3103
    %v3217 = vpack.c.bf16 %v3106, %v3106
    %v3218 = vpack.c.bf16 %v3108, %v3108
    %v3219 = vpack.c.bf16 %v3111, %v3111
    %v3220 = vpack.c.bf16 %v3113, %v3113
    %v3221 = vpack.c.bf16 %v3116, %v3116
    %v3222 = vpack.c.bf16 %v3118, %v3118
    %v3223 = vpack.c.bf16 %v3121, %v3121
    %v3224 = vpack.c.bf16 %v3123, %v3123
    %v3225 = vpack.c.bf16 %v3126, %v3126
    %v3226 = vpack.c.bf16 %v3128, %v3128
    %v3227 = vpack.c.bf16 %v3131, %v3131
    %v3228 = vpack.c.bf16 %v3133, %v3133
    %v3229 = vpack.c.bf16 %v3136, %v3136
    %v3230 = vpack.c.bf16 %v3138, %v3138
    %v3231 = vpack.c.bf16 %v3141, %v3141
    %v3232 = vpack.c.bf16 %v3143, %v3143
    %v3233 = vpack.c.bf16 %v3146, %v3146
    %v3234 = vpack.c.bf16 %v3148, %v3148
    %v3235 = vpack.c.bf16 %v3151, %v3151
    %v3236 = vpack.c.bf16 %v3153, %v3153
    %v3237 = vpack.c.bf16 %v3156, %v3156
    %v3238 = vpack.c.bf16 %v3158, %v3158
    %v3239 = vpack.c.bf16 %v3161, %v3161
    %v3240 = vpack.c.bf16 %v3163, %v3163
    %v3241 = vpack.c.bf16 %v3166, %v3166
    %v3242 = vpack.c.bf16 %v3168, %v3168
    %v3243 = vpack.c.bf16 %v3171, %v3171
    %v3244 = vpack.c.bf16 %v3173, %v3173
    %v3245 = vpack.c.bf16 %v3176, %v3176
    %v3246 = vpack.c.bf16 %v3178, %v3178
    %v3247 = vpack.c.bf16 %v3181, %v3181
    %v3248 = vpack.c.bf16 %v3183, %v3183
    %v3249 = vpack.c.bf16 %v2876, %v2876
    %v3250 = vpack.c.bf16 %v2877, %v2877
    %v3251 = vpack.c.bf16 %v2878, %v2878
    %v3252 = vpack.c.bf16 %v2879, %v2879
    %v3253 = vpack.c.bf16 %v2880, %v2880
    %v3254 = vpack.c.bf16 %v2881, %v2881
    %v3255 = vpack.c.bf16 %v2882, %v2882
    %v3256 = vpack.c.bf16 %v2883, %v2883
    %v3265 = vunpack.c.l.b16 %v3249
    %v3266 = vunpack.c.l.b16 %v3250
    %v3267 = vunpack.c.l.b16 %v3251
    %v3268 = vunpack.c.l.b16 %v3252
    %v3269 = vunpack.c.l.b16 %v3253
    %v3270 = vunpack.c.l.b16 %v3254
    %v3271 = vunpack.c.l.b16 %v3255
    %v3272 = vunpack.c.l.b16 %v3256
    %v3273 = vrot.slane %v3266, 7
    %v3274 = vsel %vm530, %v3273, %v3265
    %v3275 = vrot.slane %v3267, 6
    %v3276 = vsel %vm533, %v3275, %v3274
    %v3277 = vrot.slane %v3268, 5
    %v3278 = vsel %vm536, %v3277, %v3276
    %v3279 = vrot.slane %v3269, 4
    %v3280 = vsel %vm539, %v3279, %v3278
    %v3281 = vrot.slane %v3270, 3
    %v3282 = vsel %vm542, %v3281, %v3280
    %v3283 = vrot.slane %v3271, 2
    %v3284 = vsel %vm545, %v3283, %v3282
    %v3285 = vrot.slane %v3272, 1
    %v3286 = vsel %vm548, %v3285, %v3284
    %v3287 = vpack.c.b16 %v3286, %v3286
    %v3289 = vsel %vm2219, %v3287, 0
    %3291 = vmatpush.bf16.msra.mxu0 0
    %3292 = vmatpush.bf16.msra.mxu0 0
    %3293 = vmatpush.bf16.msra.mxu0 0
    %3294 = vmatpush.bf16.msra.mxu0 0
    %3295 = vmatpush.bf16.msra.mxu0 0
    %3296 = vmatpush.bf16.msra.mxu0 0
    %3297 = vmatpush.bf16.msra.mxu0 0
    %3298 = vmatpush.bf16.msra.mxu0 %v3014
    %3299 = vmatmul.bf16.gmra.mxu0 %v3289
    %v3300 = vpop.f32.mrf.mxu0
    %v3301 = vadd.f32 0.0, %v3300
    %v3302 = vpop.f32.mrf.mxu0
    %3303 = vdwg.mxu0
    %v3304 = vpack.c.bf16 %v3301, %v3301
    %v3305 = vunpack.c.l.bf16 %v3185
    %v3306 = vunpack.c.l.bf16 %v3186
    %v3307 = vunpack.c.l.bf16 %v3187
    %v3308 = vunpack.c.l.bf16 %v3188
    %v3309 = vunpack.c.l.bf16 %v3189
    %v3310 = vunpack.c.l.bf16 %v3190
    %v3311 = vunpack.c.l.bf16 %v3191
    %v3312 = vunpack.c.l.bf16 %v3192
    %v3313 = vunpack.c.l.bf16 %v3193
    %v3314 = vunpack.c.l.bf16 %v3194
    %v3315 = vunpack.c.l.bf16 %v3195
    %v3316 = vunpack.c.l.bf16 %v3196
    %v3317 = vunpack.c.l.bf16 %v3197
    %v3318 = vunpack.c.l.bf16 %v3198
    %v3319 = vunpack.c.l.bf16 %v3199
    %v3320 = vunpack.c.l.bf16 %v3200
    %v3321 = vunpack.c.l.bf16 %v3201
    %v3322 = vunpack.c.l.bf16 %v3202
    %v3323 = vunpack.c.l.bf16 %v3203
    %v3324 = vunpack.c.l.bf16 %v3204
    %v3325 = vunpack.c.l.bf16 %v3205
    %v3326 = vunpack.c.l.bf16 %v3206
    %v3327 = vunpack.c.l.bf16 %v3207
    %v3328 = vunpack.c.l.bf16 %v3208
    %v3329 = vunpack.c.l.bf16 %v3209
    %v3330 = vunpack.c.l.bf16 %v3210
    %v3331 = vunpack.c.l.bf16 %v3211
    %v3332 = vunpack.c.l.bf16 %v3212
    %v3333 = vunpack.c.l.bf16 %v3213
    %v3334 = vunpack.c.l.bf16 %v3214
    %v3335 = vunpack.c.l.bf16 %v3215
    %v3336 = vunpack.c.l.bf16 %v3216
    %v3337 = vunpack.c.l.bf16 %v3217
    %v3338 = vunpack.c.l.bf16 %v3218
    %v3339 = vunpack.c.l.bf16 %v3219
    %v3340 = vunpack.c.l.bf16 %v3220
    %v3341 = vunpack.c.l.bf16 %v3221
    %v3342 = vunpack.c.l.bf16 %v3222
    %v3343 = vunpack.c.l.bf16 %v3223
    %v3344 = vunpack.c.l.bf16 %v3224
    %v3345 = vunpack.c.l.bf16 %v3225
    %v3346 = vunpack.c.l.bf16 %v3226
    %v3347 = vunpack.c.l.bf16 %v3227
    %v3348 = vunpack.c.l.bf16 %v3228
    %v3349 = vunpack.c.l.bf16 %v3229
    %v3350 = vunpack.c.l.bf16 %v3230
    %v3351 = vunpack.c.l.bf16 %v3231
    %v3352 = vunpack.c.l.bf16 %v3232
    %v3353 = vunpack.c.l.bf16 %v3233
    %v3354 = vunpack.c.l.bf16 %v3234
    %v3355 = vunpack.c.l.bf16 %v3235
    %v3356 = vunpack.c.l.bf16 %v3236
    %v3357 = vunpack.c.l.bf16 %v3237
    %v3358 = vunpack.c.l.bf16 %v3238
    %v3359 = vunpack.c.l.bf16 %v3239
    %v3360 = vunpack.c.l.bf16 %v3240
    %v3361 = vunpack.c.l.bf16 %v3241
    %v3362 = vunpack.c.l.bf16 %v3242
    %v3363 = vunpack.c.l.bf16 %v3243
    %v3364 = vunpack.c.l.bf16 %v3244
    %v3365 = vunpack.c.l.bf16 %v3245
    %v3366 = vunpack.c.l.bf16 %v3246
    %v3367 = vunpack.c.l.bf16 %v3247
    %v3368 = vunpack.c.l.bf16 %v3248
    %3369 = vrot.lane.b32.xlu0 %v1156, 96
    %v3370 = vpop.permute.xlu0 %3369
    %3371 = vrot.lane.b32.xlu0 %v1157, 96
    %v3372 = vpop.permute.xlu0 %3371
    %3373 = vrot.lane.b32.xlu0 %v1158, 96
    %v3374 = vpop.permute.xlu0 %3373
    %3375 = vrot.lane.b32.xlu0 %v1159, 96
    %v3376 = vpop.permute.xlu0 %3375
    %3377 = vrot.lane.b32.xlu0 %v1160, 96
    %v3378 = vpop.permute.xlu0 %3377
    %3379 = vrot.lane.b32.xlu0 %v1161, 96
    %v3380 = vpop.permute.xlu0 %3379
    %3381 = vrot.lane.b32.xlu0 %v1162, 96
    %v3382 = vpop.permute.xlu0 %3381
    %3383 = vrot.lane.b32.xlu0 %v1163, 96
    %v3384 = vpop.permute.xlu0 %3383
    %3385 = vrot.lane.b32.xlu0 %v1164, 96
    %v3386 = vpop.permute.xlu0 %3385
    %3387 = vrot.lane.b32.xlu0 %v1165, 96
    %v3388 = vpop.permute.xlu0 %3387
    %3389 = vrot.lane.b32.xlu0 %v1166, 96
    %v3390 = vpop.permute.xlu0 %3389
    %3391 = vrot.lane.b32.xlu0 %v1167, 96
    %v3392 = vpop.permute.xlu0 %3391
    %3393 = vrot.lane.b32.xlu0 %v1168, 96
    %v3394 = vpop.permute.xlu0 %3393
    %3395 = vrot.lane.b32.xlu0 %v1169, 96
    %v3396 = vpop.permute.xlu0 %3395
    %3397 = vrot.lane.b32.xlu0 %v1170, 96
    %v3398 = vpop.permute.xlu0 %3397
    %3399 = vrot.lane.b32.xlu0 %v1171, 96
    %v3400 = vpop.permute.xlu0 %3399
    %3401 = vrot.lane.b32.xlu0 %v1172, 96
    %v3402 = vpop.permute.xlu0 %3401
    %3403 = vrot.lane.b32.xlu0 %v1173, 96
    %v3404 = vpop.permute.xlu0 %3403
    %3405 = vrot.lane.b32.xlu0 %v1174, 96
    %v3406 = vpop.permute.xlu0 %3405
    %3407 = vrot.lane.b32.xlu0 %v1175, 96
    %v3408 = vpop.permute.xlu0 %3407
    %3409 = vrot.lane.b32.xlu0 %v1176, 96
    %v3410 = vpop.permute.xlu0 %3409
    %3411 = vrot.lane.b32.xlu0 %v1177, 96
    %v3412 = vpop.permute.xlu0 %3411
    %3413 = vrot.lane.b32.xlu0 %v1178, 96
    %v3414 = vpop.permute.xlu0 %3413
    %3415 = vrot.lane.b32.xlu0 %v1179, 96
    %v3416 = vpop.permute.xlu0 %3415
    %3417 = vrot.lane.b32.xlu0 %v1180, 96
    %v3418 = vpop.permute.xlu0 %3417
    %3419 = vrot.lane.b32.xlu0 %v1181, 96
    %v3420 = vpop.permute.xlu0 %3419
    %3421 = vrot.lane.b32.xlu0 %v1182, 96
    %v3422 = vpop.permute.xlu0 %3421
    %3423 = vrot.lane.b32.xlu0 %v1183, 96
    %v3424 = vpop.permute.xlu0 %3423
    %3425 = vrot.lane.b32.xlu0 %v1184, 96
    %v3426 = vpop.permute.xlu0 %3425
    %3427 = vrot.lane.b32.xlu0 %v1185, 96
    %v3428 = vpop.permute.xlu0 %3427
    %3429 = vrot.lane.b32.xlu0 %v1186, 96
    %v3430 = vpop.permute.xlu0 %3429
    %3431 = vrot.lane.b32.xlu0 %v1187, 96
    %v3432 = vpop.permute.xlu0 %3431
    %3433 = vrot.lane.b32.xlu0 %v1188, 96
    %v3434 = vpop.permute.xlu0 %3433
    %3435 = vrot.lane.b32.xlu0 %v1189, 96
    %v3436 = vpop.permute.xlu0 %3435
    %3437 = vrot.lane.b32.xlu0 %v1190, 96
    %v3438 = vpop.permute.xlu0 %3437
    %3439 = vrot.lane.b32.xlu0 %v1191, 96
    %v3440 = vpop.permute.xlu0 %3439
    %3441 = vrot.lane.b32.xlu0 %v1192, 96
    %v3442 = vpop.permute.xlu0 %3441
    %3443 = vrot.lane.b32.xlu0 %v1193, 96
    %v3444 = vpop.permute.xlu0 %3443
    %3445 = vrot.lane.b32.xlu0 %v1194, 96
    %v3446 = vpop.permute.xlu0 %3445
    %3447 = vrot.lane.b32.xlu0 %v1195, 96
    %v3448 = vpop.permute.xlu0 %3447
    %3449 = vrot.lane.b32.xlu0 %v1196, 96
    %v3450 = vpop.permute.xlu0 %3449
    %3451 = vrot.lane.b32.xlu0 %v1197, 96
    %v3452 = vpop.permute.xlu0 %3451
    %3453 = vrot.lane.b32.xlu0 %v1198, 96
    %v3454 = vpop.permute.xlu0 %3453
    %3455 = vrot.lane.b32.xlu0 %v1199, 96
    %v3456 = vpop.permute.xlu0 %3455
    %3457 = vrot.lane.b32.xlu0 %v1200, 96
    %v3458 = vpop.permute.xlu0 %3457
    %3459 = vrot.lane.b32.xlu0 %v1201, 96
    %v3460 = vpop.permute.xlu0 %3459
    %3461 = vrot.lane.b32.xlu0 %v1202, 96
    %v3462 = vpop.permute.xlu0 %3461
    %3463 = vrot.lane.b32.xlu0 %v1203, 96
    %v3464 = vpop.permute.xlu0 %3463
    %3465 = vrot.lane.b32.xlu0 %v1204, 96
    %v3466 = vpop.permute.xlu0 %3465
    %3467 = vrot.lane.b32.xlu0 %v1205, 96
    %v3468 = vpop.permute.xlu0 %3467
    %3469 = vrot.lane.b32.xlu0 %v1206, 96
    %v3470 = vpop.permute.xlu0 %3469
    %3471 = vrot.lane.b32.xlu0 %v1207, 96
    %v3472 = vpop.permute.xlu0 %3471
    %3473 = vrot.lane.b32.xlu0 %v1208, 96
    %v3474 = vpop.permute.xlu0 %3473
    %3475 = vrot.lane.b32.xlu0 %v1209, 96
    %v3476 = vpop.permute.xlu0 %3475
    %3477 = vrot.lane.b32.xlu0 %v1210, 96
    %v3478 = vpop.permute.xlu0 %3477
    %3479 = vrot.lane.b32.xlu0 %v1211, 96
    %v3480 = vpop.permute.xlu0 %3479
    %3481 = vrot.lane.b32.xlu0 %v1212, 96
    %v3482 = vpop.permute.xlu0 %3481
    %3483 = vrot.lane.b32.xlu0 %v1213, 96
    %v3484 = vpop.permute.xlu0 %3483
    %3485 = vrot.lane.b32.xlu0 %v1214, 96
    %v3486 = vpop.permute.xlu0 %3485
    %3487 = vrot.lane.b32.xlu0 %v1215, 96
    %v3488 = vpop.permute.xlu0 %3487
    %3489 = vrot.lane.b32.xlu0 %v1216, 96
    %v3490 = vpop.permute.xlu0 %3489
    %3491 = vrot.lane.b32.xlu0 %v1217, 96
    %v3492 = vpop.permute.xlu0 %3491
    %3493 = vrot.lane.b32.xlu0 %v1218, 96
    %v3494 = vpop.permute.xlu0 %3493
    %3495 = vrot.lane.b32.xlu0 %v1219, 96
    %v3496 = vpop.permute.xlu0 %3495
    %v3561 = vmul.f32 %v3305, %v3370
    %v3562 = vmul.f32 %v3306, %v3372
    %v3563 = vmul.f32 %v3307, %v3374
    %v3564 = vmul.f32 %v3308, %v3376
    %v3565 = vmul.f32 %v3309, %v3378
    %v3566 = vmul.f32 %v3310, %v3380
    %v3567 = vmul.f32 %v3311, %v3382
    %v3568 = vmul.f32 %v3312, %v3384
    %v3569 = vmul.f32 %v3313, %v3386
    %v3570 = vmul.f32 %v3314, %v3388
    %v3571 = vmul.f32 %v3315, %v3390
    %v3572 = vmul.f32 %v3316, %v3392
    %v3573 = vmul.f32 %v3317, %v3394
    %v3574 = vmul.f32 %v3318, %v3396
    %v3575 = vmul.f32 %v3319, %v3398
    %v3576 = vmul.f32 %v3320, %v3400
    %v3577 = vmul.f32 %v3321, %v3402
    %v3578 = vmul.f32 %v3322, %v3404
    %v3579 = vmul.f32 %v3323, %v3406
    %v3580 = vmul.f32 %v3324, %v3408
    %v3581 = vmul.f32 %v3325, %v3410
    %v3582 = vmul.f32 %v3326, %v3412
    %v3583 = vmul.f32 %v3327, %v3414
    %v3584 = vmul.f32 %v3328, %v3416
    %v3585 = vmul.f32 %v3329, %v3418
    %v3586 = vmul.f32 %v3330, %v3420
    %v3587 = vmul.f32 %v3331, %v3422
    %v3588 = vmul.f32 %v3332, %v3424
    %v3589 = vmul.f32 %v3333, %v3426
    %v3590 = vmul.f32 %v3334, %v3428
    %v3591 = vmul.f32 %v3335, %v3430
    %v3592 = vmul.f32 %v3336, %v3432
    %v3593 = vmul.f32 %v3337, %v3434
    %v3594 = vmul.f32 %v3338, %v3436
    %v3595 = vmul.f32 %v3339, %v3438
    %v3596 = vmul.f32 %v3340, %v3440
    %v3597 = vmul.f32 %v3341, %v3442
    %v3598 = vmul.f32 %v3342, %v3444
    %v3599 = vmul.f32 %v3343, %v3446
    %v3600 = vmul.f32 %v3344, %v3448
    %v3601 = vmul.f32 %v3345, %v3450
    %v3602 = vmul.f32 %v3346, %v3452
    %v3603 = vmul.f32 %v3347, %v3454
    %v3604 = vmul.f32 %v3348, %v3456
    %v3605 = vmul.f32 %v3349, %v3458
    %v3606 = vmul.f32 %v3350, %v3460
    %v3607 = vmul.f32 %v3351, %v3462
    %v3608 = vmul.f32 %v3352, %v3464
    %v3609 = vmul.f32 %v3353, %v3466
    %v3610 = vmul.f32 %v3354, %v3468
    %v3611 = vmul.f32 %v3355, %v3470
    %v3612 = vmul.f32 %v3356, %v3472
    %v3613 = vmul.f32 %v3357, %v3474
    %v3614 = vmul.f32 %v3358, %v3476
    %v3615 = vmul.f32 %v3359, %v3478
    %v3616 = vmul.f32 %v3360, %v3480
    %v3617 = vmul.f32 %v3361, %v3482
    %v3618 = vmul.f32 %v3362, %v3484
    %v3619 = vmul.f32 %v3363, %v3486
    %v3620 = vmul.f32 %v3364, %v3488
    %v3621 = vmul.f32 %v3365, %v3490
    %v3622 = vmul.f32 %v3366, %v3492
    %v3623 = vmul.f32 %v3367, %v3494
    %v3624 = vmul.f32 %v3368, %v3496
    %v3625 = vpack.c.bf16 %v3562, %v3561
    %v3626 = vpack.c.bf16 %v3564, %v3563
    %v3627 = vpack.c.bf16 %v3566, %v3565
    %v3628 = vpack.c.bf16 %v3568, %v3567
    %v3629 = vpack.c.bf16 %v3570, %v3569
    %v3630 = vpack.c.bf16 %v3572, %v3571
    %v3631 = vpack.c.bf16 %v3574, %v3573
    %v3632 = vpack.c.bf16 %v3576, %v3575
    %v3633 = vpack.c.bf16 %v3578, %v3577
    %v3634 = vpack.c.bf16 %v3580, %v3579
    %v3635 = vpack.c.bf16 %v3582, %v3581
    %v3636 = vpack.c.bf16 %v3584, %v3583
    %v3637 = vpack.c.bf16 %v3586, %v3585
    %v3638 = vpack.c.bf16 %v3588, %v3587
    %v3639 = vpack.c.bf16 %v3590, %v3589
    %v3640 = vpack.c.bf16 %v3592, %v3591
    %v3641 = vpack.c.bf16 %v3594, %v3593
    %v3642 = vpack.c.bf16 %v3596, %v3595
    %v3643 = vpack.c.bf16 %v3598, %v3597
    %v3644 = vpack.c.bf16 %v3600, %v3599
    %v3645 = vpack.c.bf16 %v3602, %v3601
    %v3646 = vpack.c.bf16 %v3604, %v3603
    %v3647 = vpack.c.bf16 %v3606, %v3605
    %v3648 = vpack.c.bf16 %v3608, %v3607
    %v3649 = vpack.c.bf16 %v3610, %v3609
    %v3650 = vpack.c.bf16 %v3612, %v3611
    %v3651 = vpack.c.bf16 %v3614, %v3613
    %v3652 = vpack.c.bf16 %v3616, %v3615
    %v3653 = vpack.c.bf16 %v3618, %v3617
    %v3654 = vpack.c.bf16 %v3620, %v3619
    %v3655 = vpack.c.bf16 %v3622, %v3621
    %v3656 = vpack.c.bf16 %v3624, %v3623
    %v3657 = vunpack.c.l.bf16 %v3625
    %v3658 = vunpack.c.h.bf16 %v3625
    %v3659 = vunpack.c.l.bf16 %v3626
    %v3660 = vunpack.c.h.bf16 %v3626
    %v3661 = vunpack.c.l.bf16 %v3627
    %v3662 = vunpack.c.h.bf16 %v3627
    %v3663 = vunpack.c.l.bf16 %v3628
    %v3664 = vunpack.c.h.bf16 %v3628
    %v3665 = vunpack.c.l.bf16 %v3629
    %v3666 = vunpack.c.h.bf16 %v3629
    %v3667 = vunpack.c.l.bf16 %v3630
    %v3668 = vunpack.c.h.bf16 %v3630
    %v3669 = vunpack.c.l.bf16 %v3631
    %v3670 = vunpack.c.h.bf16 %v3631
    %v3671 = vunpack.c.l.bf16 %v3632
    %v3672 = vunpack.c.h.bf16 %v3632
    %v3673 = vunpack.c.l.bf16 %v3633
    %v3674 = vunpack.c.h.bf16 %v3633
    %v3675 = vunpack.c.l.bf16 %v3634
    %v3676 = vunpack.c.h.bf16 %v3634
    %v3677 = vunpack.c.l.bf16 %v3635
    %v3678 = vunpack.c.h.bf16 %v3635
    %v3679 = vunpack.c.l.bf16 %v3636
    %v3680 = vunpack.c.h.bf16 %v3636
    %v3681 = vunpack.c.l.bf16 %v3637
    %v3682 = vunpack.c.h.bf16 %v3637
    %v3683 = vunpack.c.l.bf16 %v3638
    %v3684 = vunpack.c.h.bf16 %v3638
    %v3685 = vunpack.c.l.bf16 %v3639
    %v3686 = vunpack.c.h.bf16 %v3639
    %v3687 = vunpack.c.l.bf16 %v3640
    %v3688 = vunpack.c.h.bf16 %v3640
    %v3689 = vunpack.c.l.bf16 %v3641
    %v3690 = vunpack.c.h.bf16 %v3641
    %v3691 = vunpack.c.l.bf16 %v3642
    %v3692 = vunpack.c.h.bf16 %v3642
    %v3693 = vunpack.c.l.bf16 %v3643
    %v3694 = vunpack.c.h.bf16 %v3643
    %v3695 = vunpack.c.l.bf16 %v3644
    %v3696 = vunpack.c.h.bf16 %v3644
    %v3697 = vunpack.c.l.bf16 %v3645
    %v3698 = vunpack.c.h.bf16 %v3645
    %v3699 = vunpack.c.l.bf16 %v3646
    %v3700 = vunpack.c.h.bf16 %v3646
    %v3701 = vunpack.c.l.bf16 %v3647
    %v3702 = vunpack.c.h.bf16 %v3647
    %v3703 = vunpack.c.l.bf16 %v3648
    %v3704 = vunpack.c.h.bf16 %v3648
    %v3705 = vunpack.c.l.bf16 %v3649
    %v3706 = vunpack.c.h.bf16 %v3649
    %v3707 = vunpack.c.l.bf16 %v3650
    %v3708 = vunpack.c.h.bf16 %v3650
    %v3709 = vunpack.c.l.bf16 %v3651
    %v3710 = vunpack.c.h.bf16 %v3651
    %v3711 = vunpack.c.l.bf16 %v3652
    %v3712 = vunpack.c.h.bf16 %v3652
    %v3713 = vunpack.c.l.bf16 %v3653
    %v3714 = vunpack.c.h.bf16 %v3653
    %v3715 = vunpack.c.l.bf16 %v3654
    %v3716 = vunpack.c.h.bf16 %v3654
    %v3717 = vunpack.c.l.bf16 %v3655
    %v3718 = vunpack.c.h.bf16 %v3655
    %v3719 = vunpack.c.l.bf16 %v3656
    %v3720 = vunpack.c.h.bf16 %v3656
    %v3721 = vsel %vm165, %v3657, 0.0
    %v3722 = vsel %vm165, %v3658, 0.0
    %v3723 = vadd.f32 %v3721, %v3722
    %v3724 = vsel %vm165, %v3659, 0.0
    %v3725 = vadd.f32 %v3723, %v3724
    %v3726 = vsel %vm165, %v3660, 0.0
    %v3727 = vadd.f32 %v3725, %v3726
    %v3728 = vsel %vm165, %v3661, 0.0
    %v3729 = vadd.f32 %v3727, %v3728
    %v3730 = vsel %vm165, %v3662, 0.0
    %v3731 = vadd.f32 %v3729, %v3730
    %v3732 = vsel %vm165, %v3663, 0.0
    %v3733 = vadd.f32 %v3731, %v3732
    %v3734 = vsel %vm165, %v3664, 0.0
    %v3735 = vadd.f32 %v3733, %v3734
    %v3736 = vrot.slane %v3735, 4
    %v3737 = vadd.f32 %v3735, %v3736
    %v3738 = vrot.slane %v3737, 2
    %v3739 = vadd.f32 %v3737, %v3738
    %v3740 = vrot.slane %v3739, 1
    %v3741 = vadd.f32 %v3739, %v3740
    %v3742 = vsel %vm165, %v3665, 0.0
    %v3743 = vsel %vm165, %v3666, 0.0
    %v3744 = vadd.f32 %v3742, %v3743
    %v3745 = vsel %vm165, %v3667, 0.0
    %v3746 = vadd.f32 %v3744, %v3745
    %v3747 = vsel %vm165, %v3668, 0.0
    %v3748 = vadd.f32 %v3746, %v3747
    %v3749 = vsel %vm165, %v3669, 0.0
    %v3750 = vadd.f32 %v3748, %v3749
    %v3751 = vsel %vm165, %v3670, 0.0
    %v3752 = vadd.f32 %v3750, %v3751
    %v3753 = vsel %vm165, %v3671, 0.0
    %v3754 = vadd.f32 %v3752, %v3753
    %v3755 = vsel %vm165, %v3672, 0.0
    %v3756 = vadd.f32 %v3754, %v3755
    %v3757 = vrot.slane %v3756, 4
    %v3758 = vadd.f32 %v3756, %v3757
    %v3759 = vrot.slane %v3758, 2
    %v3760 = vadd.f32 %v3758, %v3759
    %v3761 = vrot.slane %v3760, 1
    %v3762 = vadd.f32 %v3760, %v3761
    %v3763 = vsel %vm165, %v3673, 0.0
    %v3764 = vsel %vm165, %v3674, 0.0
    %v3765 = vadd.f32 %v3763, %v3764
    %v3766 = vsel %vm165, %v3675, 0.0
    %v3767 = vadd.f32 %v3765, %v3766
    %v3768 = vsel %vm165, %v3676, 0.0
    %v3769 = vadd.f32 %v3767, %v3768
    %v3770 = vsel %vm165, %v3677, 0.0
    %v3771 = vadd.f32 %v3769, %v3770
    %v3772 = vsel %vm165, %v3678, 0.0
    %v3773 = vadd.f32 %v3771, %v3772
    %v3774 = vsel %vm165, %v3679, 0.0
    %v3775 = vadd.f32 %v3773, %v3774
    %v3776 = vsel %vm165, %v3680, 0.0
    %v3777 = vadd.f32 %v3775, %v3776
    %v3778 = vrot.slane %v3777, 4
    %v3779 = vadd.f32 %v3777, %v3778
    %v3780 = vrot.slane %v3779, 2
    %v3781 = vadd.f32 %v3779, %v3780
    %v3782 = vrot.slane %v3781, 1
    %v3783 = vadd.f32 %v3781, %v3782
    %v3784 = vsel %vm165, %v3681, 0.0
    %v3785 = vsel %vm165, %v3682, 0.0
    %v3786 = vadd.f32 %v3784, %v3785
    %v3787 = vsel %vm165, %v3683, 0.0
    %v3788 = vadd.f32 %v3786, %v3787
    %v3789 = vsel %vm165, %v3684, 0.0
    %v3790 = vadd.f32 %v3788, %v3789
    %v3791 = vsel %vm165, %v3685, 0.0
    %v3792 = vadd.f32 %v3790, %v3791
    %v3793 = vsel %vm165, %v3686, 0.0
    %v3794 = vadd.f32 %v3792, %v3793
    %v3795 = vsel %vm165, %v3687, 0.0
    %v3796 = vadd.f32 %v3794, %v3795
    %v3797 = vsel %vm165, %v3688, 0.0
    %v3798 = vadd.f32 %v3796, %v3797
    %v3799 = vrot.slane %v3798, 4
    %v3800 = vadd.f32 %v3798, %v3799
    %v3801 = vrot.slane %v3800, 2
    %v3802 = vadd.f32 %v3800, %v3801
    %v3803 = vrot.slane %v3802, 1
    %v3804 = vadd.f32 %v3802, %v3803
    %v3805 = vsel %vm165, %v3689, 0.0
    %v3806 = vsel %vm165, %v3690, 0.0
    %v3807 = vadd.f32 %v3805, %v3806
    %v3808 = vsel %vm165, %v3691, 0.0
    %v3809 = vadd.f32 %v3807, %v3808
    %v3810 = vsel %vm165, %v3692, 0.0
    %v3811 = vadd.f32 %v3809, %v3810
    %v3812 = vsel %vm165, %v3693, 0.0
    %v3813 = vadd.f32 %v3811, %v3812
    %v3814 = vsel %vm165, %v3694, 0.0
    %v3815 = vadd.f32 %v3813, %v3814
    %v3816 = vsel %vm165, %v3695, 0.0
    %v3817 = vadd.f32 %v3815, %v3816
    %v3818 = vsel %vm165, %v3696, 0.0
    %v3819 = vadd.f32 %v3817, %v3818
    %v3820 = vrot.slane %v3819, 4
    %v3821 = vadd.f32 %v3819, %v3820
    %v3822 = vrot.slane %v3821, 2
    %v3823 = vadd.f32 %v3821, %v3822
    %v3824 = vrot.slane %v3823, 1
    %v3825 = vadd.f32 %v3823, %v3824
    %v3826 = vsel %vm165, %v3697, 0.0
    %v3827 = vsel %vm165, %v3698, 0.0
    %v3828 = vadd.f32 %v3826, %v3827
    %v3829 = vsel %vm165, %v3699, 0.0
    %v3830 = vadd.f32 %v3828, %v3829
    %v3831 = vsel %vm165, %v3700, 0.0
    %v3832 = vadd.f32 %v3830, %v3831
    %v3833 = vsel %vm165, %v3701, 0.0
    %v3834 = vadd.f32 %v3832, %v3833
    %v3835 = vsel %vm165, %v3702, 0.0
    %v3836 = vadd.f32 %v3834, %v3835
    %v3837 = vsel %vm165, %v3703, 0.0
    %v3838 = vadd.f32 %v3836, %v3837
    %v3839 = vsel %vm165, %v3704, 0.0
    %v3840 = vadd.f32 %v3838, %v3839
    %v3841 = vrot.slane %v3840, 4
    %v3842 = vadd.f32 %v3840, %v3841
    %v3843 = vrot.slane %v3842, 2
    %v3844 = vadd.f32 %v3842, %v3843
    %v3845 = vrot.slane %v3844, 1
    %v3846 = vadd.f32 %v3844, %v3845
    %v3847 = vsel %vm165, %v3705, 0.0
    %v3848 = vsel %vm165, %v3706, 0.0
    %v3849 = vadd.f32 %v3847, %v3848
    %v3850 = vsel %vm165, %v3707, 0.0
    %v3851 = vadd.f32 %v3849, %v3850
    %v3852 = vsel %vm165, %v3708, 0.0
    %v3853 = vadd.f32 %v3851, %v3852
    %v3854 = vsel %vm165, %v3709, 0.0
    %v3855 = vadd.f32 %v3853, %v3854
    %v3856 = vsel %vm165, %v3710, 0.0
    %v3857 = vadd.f32 %v3855, %v3856
    %v3858 = vsel %vm165, %v3711, 0.0
    %v3859 = vadd.f32 %v3857, %v3858
    %v3860 = vsel %vm165, %v3712, 0.0
    %v3861 = vadd.f32 %v3859, %v3860
    %v3862 = vrot.slane %v3861, 4
    %v3863 = vadd.f32 %v3861, %v3862
    %v3864 = vrot.slane %v3863, 2
    %v3865 = vadd.f32 %v3863, %v3864
    %v3866 = vrot.slane %v3865, 1
    %v3867 = vadd.f32 %v3865, %v3866
    %v3868 = vsel %vm165, %v3713, 0.0
    %v3869 = vsel %vm165, %v3714, 0.0
    %v3870 = vadd.f32 %v3868, %v3869
    %v3871 = vsel %vm165, %v3715, 0.0
    %v3872 = vadd.f32 %v3870, %v3871
    %v3873 = vsel %vm165, %v3716, 0.0
    %v3874 = vadd.f32 %v3872, %v3873
    %v3875 = vsel %vm165, %v3717, 0.0
    %v3876 = vadd.f32 %v3874, %v3875
    %v3877 = vsel %vm165, %v3718, 0.0
    %v3878 = vadd.f32 %v3876, %v3877
    %v3879 = vsel %vm165, %v3719, 0.0
    %v3880 = vadd.f32 %v3878, %v3879
    %v3881 = vsel %vm165, %v3720, 0.0
    %v3882 = vadd.f32 %v3880, %v3881
    %v3883 = vrot.slane %v3882, 4
    %v3884 = vadd.f32 %v3882, %v3883
    %v3885 = vrot.slane %v3884, 2
    %v3886 = vadd.f32 %v3884, %v3885
    %v3887 = vrot.slane %v3886, 1
    %v3888 = vadd.f32 %v3886, %v3887
    %v3889 = vunpack.c.l.bf16 %v3304
    %3890 = vrot.lane.b32.xlu0 %v2178, 96
    %v3891 = vpop.permute.xlu0 %3890
    %v3893 = vmul.f32 %v3889, %v3891
    %v3894 = vpack.c.bf16 %v3893, %v3893
    %v3895 = vunpack.c.l.bf16 %v3894
    %v3897 = vrot.slane %v3895, 1
    %v3898 = vrot.slane %v3895, 2
    %v3899 = vrot.slane %v3895, 3
    %v3900 = vrot.slane %v3895, 4
    %v3901 = vrot.slane %v3895, 5
    %v3902 = vrot.slane %v3895, 6
    %v3903 = vrot.slane %v3895, 7
    %v3912 = vadd.f32 %v3741, %v3895
    %v3913 = vadd.f32 %v3762, %v3897
    %v3914 = vadd.f32 %v3783, %v3898
    %v3915 = vadd.f32 %v3804, %v3899
    %v3916 = vadd.f32 %v3825, %v3900
    %v3917 = vadd.f32 %v3846, %v3901
    %v3918 = vadd.f32 %v3867, %v3902
    %v3919 = vadd.f32 %v3888, %v3903
    %v3920 = vpack.c.bf16 %v3912, %v3912
    %v3921 = vpack.c.bf16 %v3913, %v3913
    %v3922 = vpack.c.bf16 %v3914, %v3914
    %v3923 = vpack.c.bf16 %v3915, %v3915
    %v3924 = vpack.c.bf16 %v3916, %v3916
    %v3925 = vpack.c.bf16 %v3917, %v3917
    %v3926 = vpack.c.bf16 %v3918, %v3918
    %v3927 = vpack.c.bf16 %v3919, %v3919
    %v3928 = vld [vmem:[%s5] sm:$0xf]
    %v3929 = vld [vmem:[%s5 + $0x4] sm:$0xf]
    %v3930 = vld [vmem:[%s5 + $0x8] sm:$0xf]
    %v3931 = vld [vmem:[%s5 + $0xc] sm:$0xf]
    %v3932 = vld [vmem:[%s6] sm:$0x1]
    %v3934 = vperm.slane %v3932, 0
    %v3944 = vunpack.c.l.b16 %v3920
    %v3945 = vunpack.c.l.b16 %v3921
    %v3946 = vunpack.c.l.b16 %v3922
    %v3947 = vunpack.c.l.b16 %v3923
    %v3948 = vunpack.c.l.b16 %v3924
    %v3949 = vunpack.c.l.b16 %v3925
    %v3950 = vunpack.c.l.b16 %v3926
    %v3951 = vunpack.c.l.b16 %v3927
    %v3952 = vrot.slane %v3945, 7
    %v3953 = vsel %vm530, %v3952, %v3944
    %v3954 = vrot.slane %v3946, 6
    %v3955 = vsel %vm533, %v3954, %v3953
    %v3956 = vrot.slane %v3947, 5
    %v3957 = vsel %vm536, %v3956, %v3955
    %v3958 = vrot.slane %v3948, 4
    %v3959 = vsel %vm539, %v3958, %v3957
    %v3960 = vrot.slane %v3949, 3
    %v3961 = vsel %vm542, %v3960, %v3959
    %v3962 = vrot.slane %v3950, 2
    %v3963 = vsel %vm545, %v3962, %v3961
    %v3964 = vrot.slane %v3951, 1
    %v3965 = vsel %vm548, %v3964, %v3963
    %v3966 = vpack.c.b16 %v3965, %v3965
    %v3971 = vunpack.c.l.b16 %v3928
    %v3972 = vunpack.c.l.b16 %v3929
    %v3973 = vunpack.c.l.b16 %v3930
    %v3974 = vunpack.c.l.b16 %v3931
    %v3975 = vpack.c.b16 %v3972, %v3971
    %v3976 = vpack.c.b16 %v3974, %v3973
    %v3980 = vsel %vm165, %v3966, 0
    %3982 = vmatpush.bf16.msra.mxu0 0
    %3983 = vmatpush.bf16.msra.mxu0 0
    %3984 = vmatpush.bf16.msra.mxu0 0
    %3985 = vmatpush.bf16.msra.mxu0 0
    %3986 = vmatpush.bf16.msra.mxu0 0
    %3987 = vmatpush.bf16.msra.mxu0 0
    %3988 = vmatpush.bf16.msra.mxu0 %v3976
    %3989 = vmatpush.bf16.msra.mxu0 %v3975
    %3990 = vmatmul.bf16.gmra.mxu0 %v3980
    %v3991 = vpop.f32.mrf.mxu0
    %v3992 = vadd.f32 %v3934, %v3991
    %v3993 = vpop.f32.mrf.mxu0
    %3994 = vdwg.mxu0
    %vm3995 = vcmask 130048
    %3996 = vst.msk [vmem:[#allocation2] sm:$0xff] %vm3995, %v3992
    // Predicated region
    $region42: #{tpu_custom_call.1} parent=1 // pred_check
      _
    $region43: #{tpu_custom_call.1} parent=1 // pred_check_branch
      %3998 = sbr.rel (0) target = $region45
    $region44: #{tpu_custom_call.1} parent=1 // pred_region
      %4000 = vsyncadd [#allocation3], 0
      %s4002 = sshll.u32 [#allocation2], 4
      %s4003 = int_to_ptr.vmem [resolvable:$true] %s4002
      %s4004 = sshll.u32 %s10, 4
      %s4005 = int_to_ptr.hbm [resolvable:$true] %s4004
      %4007 = dma.vmem_to_hbm [thread:$0]  %s4003, 128, %s4005, [#allocation3]
    $region45: #{tpu_custom_call.1} parent=1 // pred_fallthru
      _
    // Predicated region
    $region46: #{tpu_custom_call.1} parent=1 // pred_check
      _
    $region47: #{tpu_custom_call.1} parent=1 // pred_check_branch
      %4009 = sbr.rel (0) target = $region49
    $region48: #{tpu_custom_call.1} parent=1 // pred_region
      %4011 = dma.done [#allocation3], 128
    $region49: #{tpu_custom_call.1} parent=1 // pred_fallthru
      _
    %4012 = vsyncpa [#allocation3], 1

</llo_original>
